<compile_context>
chip_gen: v7x
topology: tpu7x:2x2x1
jax: 0.10.0
libtpu: 0.0.40
codegen_flags: <defaults>
</compile_context>

<pallas_src>
import jax
import jax.numpy as jnp
from jax import lax
from jax.experimental import pallas as pl
from jax.experimental.pallas import tpu as pltpu

EPS = 1e-5
# Review item 1 (bf16 weights / matmul operands).  Off by default: see header note.
USE_BF16_WEIGHTS = False


def _stats_chunk_rows(cin: int) -> int:
    """Largest multiple-of-8 divisor of cin that is <= 512 (keeps one chunk <= ~64 vregs)."""
    if cin % 8 != 0:
        return cin
    best = 8
    for ch in range(8, min(cin, 512) + 1, 8):
        if cin % ch == 0:
            best = ch
    return best


def _tensorcores_sharing_grid() -> int:
    """2 on chips where a 'parallel' grid axis is sharded across two TensorCores (v7x);
    1 on single-TC chips (v5e/v6e) or when the device kind is unknown."""
    try:
        kind = jax.devices()[0].device_kind.lower()
    except Exception:
        return 1
    return 2 if "7" in kind else 1


def bn_relu_conv1x1_kernel(x_ref, gamma_ref, beta_ref, w_ref, o_ref, s_ref, ss_ref):
    # x_ref:     (Cin, M)   activations, channel-major (free view of NCHW for N=1)
    # gamma_ref: (Cin, 1)   BN affine scale
    # beta_ref:  (Cin, 1)   BN affine shift
    # w_ref:     (Cb, Cin)  1x1-conv weight rows handled by this grid step / core
    # o_ref:     (Cb, M)
    # s_ref/ss_ref: (Cin, 1) VMEM scratch: per-channel sum(x) and sum(x*x)
    cin, m = x_ref.shape
    ch = _stats_chunk_rows(cin)
    n_chunks = cin // ch

    # --- single fused pass over x: per-channel sum and sum-of-squares ----------------
    # (previously two full jnp.sum streams over the padded x block; fused to one vld pass)
    for i in range(n_chunks):                     # static trip count -> straight-line code
        r0 = i * ch
        xc = x_ref[pl.ds(r0, ch), :]                                   # (ch, M)
        s_ref[pl.ds(r0, ch), :] = jnp.sum(xc, axis=1, keepdims=True)
        ss_ref[pl.ds(r0, ch), :] = jnp.sum(xc * xc, axis=1, keepdims=True)

    # --- BatchNorm (training mode: batch stats over N*H*W, biased variance) ----------
    inv_m = 1.0 / jnp.float32(m)
    mean = s_ref[...] * inv_m                                          # (Cin, 1)
    var = ss_ref[...] * inv_m - mean * mean                            # (Cin, 1)
    var = jnp.maximum(var, 0.0)       # guard: cancellation can make E[x^2]-mean^2 < 0
    inv_std = lax.rsqrt(var + EPS)
    scale = gamma_ref[...] * inv_std                                   # (Cin, 1)
    shift = beta_ref[...] - mean * scale                               # (Cin, 1)

    # --- normalize + ReLU (f32 elementwise path on all chips; v5e has no bf16 VPU) ---
    y = jnp.maximum(x_ref[...] * scale + shift, 0.0)                   # (Cin, M)

    # --- 1x1 conv == W @ Y on the MXU; output already (Cb, M) -> no transpose --------
    # f32 accumulation always; operands follow the weight dtype (f32 by default).
    o_ref[...] = jnp.dot(w_ref[...], y.astype(w_ref.dtype),
                         preferred_element_type=jnp.float32)


def bn_relu_conv1x1(x_nchw, gamma, beta, w_oihw):
    """x_nchw: (N, Cin, H, W) f32; gamma/beta: (Cin,); w_oihw: (Cout, Cin, 1, 1)."""
    N, C, H, W = x_nchw.shape
    Cout = w_oihw.shape[0]
    M = N * H * W

    if N == 1:
        x_cm = x_nchw.reshape(C, M)               # free view: no data movement
    else:
        # N > 1: NCHW is not contiguous as (C, N*H*W); one transpose needed.
        x_cm = jnp.transpose(x_nchw, (1, 0, 2, 3)).reshape(C, M)

    w_mat = w_oihw.reshape(Cout, C)               # (Cout, Cin) — natural layout
    if USE_BF16_WEIGHTS:
        w_mat = w_mat.astype(jnp.bfloat16)        # halves the dominant HBM read
    gamma_c = gamma.reshape(C, 1)
    beta_c = beta.reshape(C, 1)

    # Split Cout across TensorCores only where the grid is actually sharded (v7x).
    n_split = _tensorcores_sharing_grid()
    if n_split > 1 and Cout % (8 * n_split) != 0:
        n_split = 1
    co_blk = Cout // n_split

    cost = pl.CostEstimate(
        flops=2 * Cout * C * M + 8 * C * M,
        transcendentals=C,                        # rsqrt per channel
        bytes_accessed=4 * (C * M + Cout * M + 2 * C) + w_mat.dtype.itemsize * Cout * C,
    )

    out_cm = pl.pallas_call(
        bn_relu_conv1x1_kernel,
        out_shape=jax.ShapeDtypeStruct((Cout, M), jnp.float32),
        grid=(n_split,),
        in_specs=[
            pl.BlockSpec((C, M), lambda j: (0, 0)),        # x: same block for every j
            pl.BlockSpec((C, 1), lambda j: (0, 0)),        # gamma
            pl.BlockSpec((C, 1), lambda j: (0, 0)),        # beta
            pl.BlockSpec((co_blk, C), lambda j: (j, 0)),   # weight rows per core/step
        ],
        out_specs=pl.BlockSpec((co_blk, M), lambda j: (j, 0)),
        scratch_shapes=[
            pltpu.VMEM((C, 1), jnp.float32),               # sum(x)   per channel
            pltpu.VMEM((C, 1), jnp.float32),               # sum(x^2) per channel
        ],
        compiler_params=pltpu.CompilerParams(
            dimension_semantics=("parallel",) if n_split > 1 else ("arbitrary",)),
        cost_estimate=cost,
    )(x_cm, gamma_c, beta_c, w_mat)

    if N == 1:
        return out_cm.reshape(1, Cout, H, W)      # free view back to NCHW
    return jnp.transpose(out_cm.reshape(Cout, N, H, W), (1, 0, 2, 3))


def reference(x_nchw, gamma, beta, w_oihw):
    """Plain-JAX reference matching PyTorch training-mode BN -> ReLU -> 1x1 conv."""
    mean = jnp.mean(x_nchw, axis=(0, 2, 3), keepdims=True)
    var = jnp.mean((x_nchw - mean) ** 2, axis=(0, 2, 3), keepdims=True)  # biased
    xn = (x_nchw - mean) / jnp.sqrt(var + EPS)
    xn = xn * gamma.reshape(1, -1, 1, 1) + beta.reshape(1, -1, 1, 1)
    xr = jnp.maximum(xn, 0.0)
    w = w_oihw.reshape(w_oihw.shape[0], w_oihw.shape[1])  # (Cout, Cin)
    return jnp.einsum("nchw,oc->nohw", xr, w)


if __name__ == "__main__":
    # Module-consistent shapes: input (1, 1312, 7, 7), conv 1312 -> 128 (1x1).
    N, Cin, H, W = 1, 1312, 7, 7
    Cout = 128

    key = jax.random.PRNGKey(0)
    kx, kg, kb, kw = jax.random.split(key, 4)
    x = jax.random.normal(kx, (N, Cin, H, W), dtype=jnp.float32)
    gamma = 1.0 + 0.1 * jax.random.normal(kg, (Cin,), dtype=jnp.float32)
    beta = 0.1 * jax.random.normal(kb, (Cin,), dtype=jnp.float32)
    w = jax.random.normal(kw, (Cout, Cin, 1, 1), dtype=jnp.float32) * (1.0 / Cin) ** 0.5

    out = jax.block_until_ready(bn_relu_conv1x1(x, gamma, beta, w))
    ref = jax.block_until_ready(reference(x, gamma, beta, w))

    assert out.shape == (N, Cout, H, W), out.shape
    assert jnp.allclose(out, ref, atol=1e-3, rtol=1e-3), float(jnp.max(jnp.abs(out - ref)))
    print("KERNEL_OK")
</pallas_src>

<mosaic_0001>
module attributes {stable_mosaic.version = 11 : i64} {
  func.func @bn_relu_conv1x1_kernel(%arg0: i32, %arg1: memref<1312x49xf32, #tpu.memory_space<vmem>>, %arg2: memref<1312x1xf32, #tpu.memory_space<vmem>>, %arg3: memref<1312x1xf32, #tpu.memory_space<vmem>>, %arg4: memref<128x1312xf32, #tpu.memory_space<vmem>>, %arg5: memref<128x49xf32, #tpu.memory_space<vmem>>, %arg6: memref<1312x1xf32, #tpu.memory_space<vmem>>, %arg7: memref<1312x1xf32, #tpu.memory_space<vmem>>) attributes {dimension_semantics = [#tpu.dimension_semantics<arbitrary>], iteration_bounds = array<i64: 1>, scalar_prefetch = 0 : i64, scratch_operands = 2 : i64, tpu.core_type = #tpu.core_type<tc>, window_params = [{pipeline_mode = #tpu.pipeline_mode<synchronous>, transform_indices = @transform_0, window_bounds = array<i64: 1312, 49>}, {pipeline_mode = #tpu.pipeline_mode<synchronous>, transform_indices = @transform_1, window_bounds = array<i64: 1312, 1>}, {pipeline_mode = #tpu.pipeline_mode<synchronous>, transform_indices = @transform_2, window_bounds = array<i64: 1312, 1>}, {transform_indices = @transform_3, window_bounds = array<i64: 128, 1312>}, {transform_indices = @transform_4, window_bounds = array<i64: 128, 49>}]} {
    %c0 = arith.constant 0 : index
    %c0_0 = arith.constant 0 : index
    %0 = vector.load %arg1[%c0, %c0_0] : memref<1312x49xf32, #tpu.memory_space<vmem>>, vector<328x49xf32>
    %cst = arith.constant dense<0.000000e+00> : vector<328xf32>
    %1 = vector.multi_reduction <add>, %0, %cst [1] : vector<328x49xf32> to vector<328xf32>
    %2 = vector.shape_cast %1 : vector<328xf32> to vector<328x1xf32>
    %c0_1 = arith.constant 0 : index
    %c0_2 = arith.constant 0 : index
    %3 = vector.load %arg6[%c0_1, %c0_2] : memref<1312x1xf32, #tpu.memory_space<vmem>>, vector<328x1xf32>
    tpu.vector_store %arg6[%c0_1, %c0_2], %2 {strides = array<i32>} : memref<1312x1xf32, #tpu.memory_space<vmem>>, vector<328x1xf32>,
    %4 = arith.mulf %0, %0 : vector<328x49xf32>
    %cst_3 = arith.constant dense<0.000000e+00> : vector<328xf32>
    %5 = vector.multi_reduction <add>, %4, %cst_3 [1] : vector<328x49xf32> to vector<328xf32>
    %6 = vector.shape_cast %5 : vector<328xf32> to vector<328x1xf32>
    %c0_4 = arith.constant 0 : index
    %c0_5 = arith.constant 0 : index
    %7 = vector.load %arg7[%c0_4, %c0_5] : memref<1312x1xf32, #tpu.memory_space<vmem>>, vector<328x1xf32>
    tpu.vector_store %arg7[%c0_4, %c0_5], %6 {strides = array<i32>} : memref<1312x1xf32, #tpu.memory_space<vmem>>, vector<328x1xf32>,
    %c328 = arith.constant 328 : index
    %c0_6 = arith.constant 0 : index
    %8 = vector.load %arg1[%c328, %c0_6] : memref<1312x49xf32, #tpu.memory_space<vmem>>, vector<328x49xf32>
    %cst_7 = arith.constant dense<0.000000e+00> : vector<328xf32>
    %9 = vector.multi_reduction <add>, %8, %cst_7 [1] : vector<328x49xf32> to vector<328xf32>
    %10 = vector.shape_cast %9 : vector<328xf32> to vector<328x1xf32>
    %c328_8 = arith.constant 328 : index
    %c0_9 = arith.constant 0 : index
    %11 = vector.load %arg6[%c328_8, %c0_9] : memref<1312x1xf32, #tpu.memory_space<vmem>>, vector<328x1xf32>
    tpu.vector_store %arg6[%c328_8, %c0_9], %10 {strides = array<i32>} : memref<1312x1xf32, #tpu.memory_space<vmem>>, vector<328x1xf32>,
    %12 = arith.mulf %8, %8 : vector<328x49xf32>
    %cst_10 = arith.constant dense<0.000000e+00> : vector<328xf32>
    %13 = vector.multi_reduction <add>, %12, %cst_10 [1] : vector<328x49xf32> to vector<328xf32>
    %14 = vector.shape_cast %13 : vector<328xf32> to vector<328x1xf32>
    %c328_11 = arith.constant 328 : index
    %c0_12 = arith.constant 0 : index
    %15 = vector.load %arg7[%c328_11, %c0_12] : memref<1312x1xf32, #tpu.memory_space<vmem>>, vector<328x1xf32>
    tpu.vector_store %arg7[%c328_11, %c0_12], %14 {strides = array<i32>} : memref<1312x1xf32, #tpu.memory_space<vmem>>, vector<328x1xf32>,
    %c656 = arith.constant 656 : index
    %c0_13 = arith.constant 0 : index
    %16 = vector.load %arg1[%c656, %c0_13] : memref<1312x49xf32, #tpu.memory_space<vmem>>, vector<328x49xf32>
    %cst_14 = arith.constant dense<0.000000e+00> : vector<328xf32>
    %17 = vector.multi_reduction <add>, %16, %cst_14 [1] : vector<328x49xf32> to vector<328xf32>
    %18 = vector.shape_cast %17 : vector<328xf32> to vector<328x1xf32>
    %c656_15 = arith.constant 656 : index
    %c0_16 = arith.constant 0 : index
    %19 = vector.load %arg6[%c656_15, %c0_16] : memref<1312x1xf32, #tpu.memory_space<vmem>>, vector<328x1xf32>
    tpu.vector_store %arg6[%c656_15, %c0_16], %18 {strides = array<i32>} : memref<1312x1xf32, #tpu.memory_space<vmem>>, vector<328x1xf32>,
    %20 = arith.mulf %16, %16 : vector<328x49xf32>
    %cst_17 = arith.constant dense<0.000000e+00> : vector<328xf32>
    %21 = vector.multi_reduction <add>, %20, %cst_17 [1] : vector<328x49xf32> to vector<328xf32>
    %22 = vector.shape_cast %21 : vector<328xf32> to vector<328x1xf32>
    %c656_18 = arith.constant 656 : index
    %c0_19 = arith.constant 0 : index
    %23 = vector.load %arg7[%c656_18, %c0_19] : memref<1312x1xf32, #tpu.memory_space<vmem>>, vector<328x1xf32>
    tpu.vector_store %arg7[%c656_18, %c0_19], %22 {strides = array<i32>} : memref<1312x1xf32, #tpu.memory_space<vmem>>, vector<328x1xf32>,
    %c984 = arith.constant 984 : index
    %c0_20 = arith.constant 0 : index
    %24 = vector.load %arg1[%c984, %c0_20] : memref<1312x49xf32, #tpu.memory_space<vmem>>, vector<328x49xf32>
    %cst_21 = arith.constant dense<0.000000e+00> : vector<328xf32>
    %25 = vector.multi_reduction <add>, %24, %cst_21 [1] : vector<328x49xf32> to vector<328xf32>
    %26 = vector.shape_cast %25 : vector<328xf32> to vector<328x1xf32>
    %c984_22 = arith.constant 984 : index
    %c0_23 = arith.constant 0 : index
    %27 = vector.load %arg6[%c984_22, %c0_23] : memref<1312x1xf32, #tpu.memory_space<vmem>>, vector<328x1xf32>
    tpu.vector_store %arg6[%c984_22, %c0_23], %26 {strides = array<i32>} : memref<1312x1xf32, #tpu.memory_space<vmem>>, vector<328x1xf32>,
    %28 = arith.mulf %24, %24 : vector<328x49xf32>
    %cst_24 = arith.constant dense<0.000000e+00> : vector<328xf32>
    %29 = vector.multi_reduction <add>, %28, %cst_24 [1] : vector<328x49xf32> to vector<328xf32>
    %30 = vector.shape_cast %29 : vector<328xf32> to vector<328x1xf32>
    %c984_25 = arith.constant 984 : index
    %c0_26 = arith.constant 0 : index
    %31 = vector.load %arg7[%c984_25, %c0_26] : memref<1312x1xf32, #tpu.memory_space<vmem>>, vector<328x1xf32>
    tpu.vector_store %arg7[%c984_25, %c0_26], %30 {strides = array<i32>} : memref<1312x1xf32, #tpu.memory_space<vmem>>, vector<328x1xf32>,
    %cst_27 = arith.constant 1.000000e+00 : f32
    %cst_28 = arith.constant 4.900000e+01 : f32
    %32 = arith.divf %cst_27, %cst_28 : f32
    %c0_29 = arith.constant 0 : index
    %c0_30 = arith.constant 0 : index
    %33 = vector.load %arg6[%c0_29, %c0_30] : memref<1312x1xf32, #tpu.memory_space<vmem>>, vector<1312x1xf32>
    %34 = vector.broadcast %32 : f32 to vector<1312x1xf32>
    %35 = arith.mulf %33, %34 : vector<1312x1xf32>
    %c0_31 = arith.constant 0 : index
    %c0_32 = arith.constant 0 : index
    %36 = vector.load %arg7[%c0_31, %c0_32] : memref<1312x1xf32, #tpu.memory_space<vmem>>, vector<1312x1xf32>
    %37 = vector.broadcast %32 : f32 to vector<1312x1xf32>
    %38 = arith.mulf %36, %37 : vector<1312x1xf32>
    %39 = arith.mulf %35, %35 : vector<1312x1xf32>
    %40 = arith.subf %38, %39 : vector<1312x1xf32>
    %cst_33 = arith.constant 0.000000e+00 : f32
    %41 = vector.broadcast %cst_33 : f32 to vector<1312x1xf32>
    %42 = arith.maximumf %40, %41 : vector<1312x1xf32>
    %cst_34 = arith.constant 9.99999974E-6 : f32
    %43 = vector.broadcast %cst_34 : f32 to vector<1312x1xf32>
    %44 = arith.addf %42, %43 : vector<1312x1xf32>
    %45 = math.rsqrt %44 : vector<1312x1xf32>
    %c0_35 = arith.constant 0 : index
    %c0_36 = arith.constant 0 : index
    %46 = vector.load %arg2[%c0_35, %c0_36] : memref<1312x1xf32, #tpu.memory_space<vmem>>, vector<1312x1xf32>
    %47 = arith.mulf %46, %45 : vector<1312x1xf32>
    %c0_37 = arith.constant 0 : index
    %c0_38 = arith.constant 0 : index
    %48 = vector.load %arg3[%c0_37, %c0_38] : memref<1312x1xf32, #tpu.memory_space<vmem>>, vector<1312x1xf32>
    %49 = arith.mulf %35, %47 : vector<1312x1xf32>
    %50 = arith.subf %48, %49 : vector<1312x1xf32>
    %c0_39 = arith.constant 0 : index
    %c0_40 = arith.constant 0 : index
    %51 = vector.load %arg1[%c0_39, %c0_40] : memref<1312x49xf32, #tpu.memory_space<vmem>>, vector<1312x49xf32>
    %52 = vector.broadcast %47 : vector<1312x1xf32> to vector<1312x49xf32>
    %53 = arith.mulf %51, %52 : vector<1312x49xf32>
    %54 = vector.broadcast %50 : vector<1312x1xf32> to vector<1312x49xf32>
    %55 = arith.addf %53, %54 : vector<1312x49xf32>
    %cst_41 = arith.constant 0.000000e+00 : f32
    %56 = vector.broadcast %cst_41 : f32 to vector<1312x49xf32>
    %57 = arith.maximumf %55, %56 : vector<1312x49xf32>
    %c0_42 = arith.constant 0 : index
    %c0_43 = arith.constant 0 : index
    %58 = vector.load %arg4[%c0_42, %c0_43] : memref<128x1312xf32, #tpu.memory_space<vmem>>, vector<128x1312xf32>
    %cst_44 = arith.constant dense<0.000000e+00> : vector<128x49xf32>
    %59 = tpu.matmul %58, %57, %cst_44 {dimension_numbers = #tpu.dot_dimension_numbers<[1], [0], [0], [1], [0, 0, 1, 1], [], []>} : vector<128x1312xf32>, vector<1312x49xf32>, vector<128x49xf32> -> vector<128x49xf32>
    %c0_45 = arith.constant 0 : index
    %c0_46 = arith.constant 0 : index
    %60 = vector.load %arg5[%c0_45, %c0_46] : memref<128x49xf32, #tpu.memory_space<vmem>>, vector<128x49xf32>
    tpu.vector_store %arg5[%c0_45, %c0_46], %59 {strides = array<i32>} : memref<128x49xf32, #tpu.memory_space<vmem>>, vector<128x49xf32>,
    return
  }
  func.func @transform_0(%arg0: i32) -> (i32, i32) {
    %c0_i32 = arith.constant 0 : i32
    %c0_i32_0 = arith.constant 0 : i32
    %c0_i32_1 = arith.constant 0 : i32
    return %c0_i32, %c0_i32_0 : i32, i32
  }
  func.func @transform_1(%arg0: i32) -> (i32, i32) {
    %c0_i32 = arith.constant 0 : i32
    %c0_i32_0 = arith.constant 0 : i32
    %c0_i32_1 = arith.constant 0 : i32
    return %c0_i32, %c0_i32_0 : i32, i32
  }
  func.func @transform_2(%arg0: i32) -> (i32, i32) {
    %c0_i32 = arith.constant 0 : i32
    %c0_i32_0 = arith.constant 0 : i32
    %c0_i32_1 = arith.constant 0 : i32
    return %c0_i32, %c0_i32_0 : i32, i32
  }
  func.func @transform_3(%arg0: i32) -> (i32, i32) {
    %c0_i32 = arith.constant 0 : i32
    %c0_i32_0 = arith.constant 0 : i32
    return %arg0, %c0_i32 : i32, i32
  }
  func.func @transform_4(%arg0: i32) -> (i32, i32) {
    %c0_i32 = arith.constant 0 : i32
    %c0_i32_0 = arith.constant 0 : i32
    return %arg0, %c0_i32 : i32, i32
  }
}

</mosaic_0001>

<llo_original>
// kernel: tpu_custom_call.1
$region0: #{tpu_custom_call.1}
  #allocation0 [shape = 'u32[]', space=smem, size = 0x4, offset = 0x4, fixed_abs, tag = 'smem constant byte address 0x4 - core index']
  #allocation1 [shape = 'u32[144,128]{1,0:T(1,128)}', space=vmem, size = 0x12000, scoped, tag = 'internal scratch']
  #allocation2 [shape = 'f32[1312,1]{1,0:T(8,128)}', space=vmem, size = 0xa4000, scoped, tag = 'scratch operand']
  #allocation3 [shape = 'f32[1312,1]{1,0:T(8,128)}', space=vmem, size = 0xa4000, scoped, tag = 'scratch operand']
  %s0 = inlined_call_operand.vmem [shape: f32[1312,49], index: 0, kind: input, shape index: {}]
  %s1 = inlined_call_operand.vmem [shape: f32[1312,1], index: 1, kind: input, shape index: {}]
  %s2 = inlined_call_operand.vmem [shape: f32[1312,1], index: 2, kind: input, shape index: {}]
  %s3 = inlined_call_operand.vmem [shape: f32[128,1312], index: 3, kind: input, shape index: {}]
  %s4 = inlined_call_operand.vmem [shape: f32[128,49], index: 4, kind: output, shape index: {}]
  %s5 = sld [smem:[#allocation0]]
  $region26: #{tpu_custom_call.1} parent=0
    _
  %s7 = ssub.s32 1, %s5
  %s8 = scalar_select 0, %s7, %s5
  // Predicated region
  $region2: #{tpu_custom_call.1} parent=0 // pred_check
    _
  $region3: #{tpu_custom_call.1} parent=0 // pred_check_branch
    %10 = sbr.rel (0) target = $region5
  $region4: #{tpu_custom_call.1} parent=0 // pred_region
    _
  $region5: #{tpu_custom_call.1} parent=0 // pred_fallthru
    _
  // Predicated region
  $region6: #{tpu_custom_call.1} parent=0 // pred_check
    _
  $region7: #{tpu_custom_call.1} parent=0 // pred_check_branch
    %12 = sbr.rel (0) target = $region9
  $region8: #{tpu_custom_call.1} parent=0 // pred_region
    _
  $region9: #{tpu_custom_call.1} parent=0 // pred_fallthru
    _
  // Predicated region
  $region10: #{tpu_custom_call.1} parent=0 // pred_check
    _
  $region11: #{tpu_custom_call.1} parent=0 // pred_check_branch
    %14 = sbr.rel (0) target = $region13
  $region12: #{tpu_custom_call.1} parent=0 // pred_region
    _
  $region13: #{tpu_custom_call.1} parent=0 // pred_fallthru
    _
  // Predicated region
  $region14: #{tpu_custom_call.1} parent=0 // pred_check
    _
  $region15: #{tpu_custom_call.1} parent=0 // pred_check_branch
    %16 = sbr.rel (0) target = $region17
  $region16: #{tpu_custom_call.1} parent=0 // pred_region
    _
  $region17: #{tpu_custom_call.1} parent=0 // pred_fallthru
    _
  %v17 = vld [vmem:[%s0] sm:$0xff]
  %v18 = vld [vmem:[%s0 + $0x8] sm:$0xff]
  %v19 = vld [vmem:[%s0 + $0x10] sm:$0xff]
  %v20 = vld [vmem:[%s0 + $0x18] sm:$0xff]
  %v21 = vld [vmem:[%s0 + $0x20] sm:$0xff]
  %v22 = vld [vmem:[%s0 + $0x28] sm:$0xff]
  %v23 = vld [vmem:[%s0 + $0x30] sm:$0xff]
  %v24 = vld [vmem:[%s0 + $0x38] sm:$0xff]
  %v25 = vld [vmem:[%s0 + $0x40] sm:$0xff]
  %v26 = vld [vmem:[%s0 + $0x48] sm:$0xff]
  %v27 = vld [vmem:[%s0 + $0x50] sm:$0xff]
  %v28 = vld [vmem:[%s0 + $0x58] sm:$0xff]
  %v29 = vld [vmem:[%s0 + $0x60] sm:$0xff]
  %v30 = vld [vmem:[%s0 + $0x68] sm:$0xff]
  %v31 = vld [vmem:[%s0 + $0x70] sm:$0xff]
  %v32 = vld [vmem:[%s0 + $0x78] sm:$0xff]
  %v33 = vld [vmem:[%s0 + $0x80] sm:$0xff]
  %v34 = vld [vmem:[%s0 + $0x88] sm:$0xff]
  %v35 = vld [vmem:[%s0 + $0x90] sm:$0xff]
  %v36 = vld [vmem:[%s0 + $0x98] sm:$0xff]
  %v37 = vld [vmem:[%s0 + $0xa0] sm:$0xff]
  %v38 = vld [vmem:[%s0 + $0xa8] sm:$0xff]
  %v39 = vld [vmem:[%s0 + $0xb0] sm:$0xff]
  %v40 = vld [vmem:[%s0 + $0xb8] sm:$0xff]
  %v41 = vld [vmem:[%s0 + $0xc0] sm:$0xff]
  %v42 = vld [vmem:[%s0 + $0xc8] sm:$0xff]
  %v43 = vld [vmem:[%s0 + $0xd0] sm:$0xff]
  %v44 = vld [vmem:[%s0 + $0xd8] sm:$0xff]
  %v45 = vld [vmem:[%s0 + $0xe0] sm:$0xff]
  %v46 = vld [vmem:[%s0 + $0xe8] sm:$0xff]
  %v47 = vld [vmem:[%s0 + $0xf0] sm:$0xff]
  %v48 = vld [vmem:[%s0 + $0xf8] sm:$0xff]
  %v49 = vld [vmem:[%s0 + $0x100] sm:$0xff]
  %v50 = vld [vmem:[%s0 + $0x108] sm:$0xff]
  %v51 = vld [vmem:[%s0 + $0x110] sm:$0xff]
  %v52 = vld [vmem:[%s0 + $0x118] sm:$0xff]
  %v53 = vld [vmem:[%s0 + $0x120] sm:$0xff]
  %v54 = vld [vmem:[%s0 + $0x128] sm:$0xff]
  %v55 = vld [vmem:[%s0 + $0x130] sm:$0xff]
  %v56 = vld [vmem:[%s0 + $0x138] sm:$0xff]
  %v57 = vld [vmem:[%s0 + $0x140] sm:$0xff]
  %vm58 = vcmask 400384
  %v59 = vsel %vm58, %v17, 0.0
  %60 = vadd.xlane.f32.xlu0 %v59
  %v61 = vpop.xlane.xlu0 %60
  %v62 = vsel %vm58, %v18, 0.0
  %63 = vadd.xlane.f32.xlu0 %v62
  %v64 = vpop.xlane.xlu0 %63
  %v65 = vsel %vm58, %v19, 0.0
  %66 = vadd.xlane.f32.xlu0 %v65
  %v67 = vpop.xlane.xlu0 %66
  %v68 = vsel %vm58, %v20, 0.0
  %69 = vadd.xlane.f32.xlu0 %v68
  %v70 = vpop.xlane.xlu0 %69
  %v71 = vsel %vm58, %v21, 0.0
  %72 = vadd.xlane.f32.xlu0 %v71
  %v73 = vpop.xlane.xlu0 %72
  %v74 = vsel %vm58, %v22, 0.0
  %75 = vadd.xlane.f32.xlu0 %v74
  %v76 = vpop.xlane.xlu0 %75
  %v77 = vsel %vm58, %v23, 0.0
  %78 = vadd.xlane.f32.xlu0 %v77
  %v79 = vpop.xlane.xlu0 %78
  %v80 = vsel %vm58, %v24, 0.0
  %81 = vadd.xlane.f32.xlu0 %v80
  %v82 = vpop.xlane.xlu0 %81
  %v83 = vsel %vm58, %v25, 0.0
  %84 = vadd.xlane.f32.xlu0 %v83
  %v85 = vpop.xlane.xlu0 %84
  %v86 = vsel %vm58, %v26, 0.0
  %87 = vadd.xlane.f32.xlu0 %v86
  %v88 = vpop.xlane.xlu0 %87
  %v89 = vsel %vm58, %v27, 0.0
  %90 = vadd.xlane.f32.xlu0 %v89
  %v91 = vpop.xlane.xlu0 %90
  %v92 = vsel %vm58, %v28, 0.0
  %93 = vadd.xlane.f32.xlu0 %v92
  %v94 = vpop.xlane.xlu0 %93
  %v95 = vsel %vm58, %v29, 0.0
  %96 = vadd.xlane.f32.xlu0 %v95
  %v97 = vpop.xlane.xlu0 %96
  %v98 = vsel %vm58, %v30, 0.0
  %99 = vadd.xlane.f32.xlu0 %v98
  %v100 = vpop.xlane.xlu0 %99
  %v101 = vsel %vm58, %v31, 0.0
  %102 = vadd.xlane.f32.xlu0 %v101
  %v103 = vpop.xlane.xlu0 %102
  %v104 = vsel %vm58, %v32, 0.0
  %105 = vadd.xlane.f32.xlu0 %v104
  %v106 = vpop.xlane.xlu0 %105
  %v107 = vsel %vm58, %v33, 0.0
  %108 = vadd.xlane.f32.xlu0 %v107
  %v109 = vpop.xlane.xlu0 %108
  %v110 = vsel %vm58, %v34, 0.0
  %111 = vadd.xlane.f32.xlu0 %v110
  %v112 = vpop.xlane.xlu0 %111
  %v113 = vsel %vm58, %v35, 0.0
  %114 = vadd.xlane.f32.xlu0 %v113
  %v115 = vpop.xlane.xlu0 %114
  %v116 = vsel %vm58, %v36, 0.0
  %117 = vadd.xlane.f32.xlu0 %v116
  %v118 = vpop.xlane.xlu0 %117
  %v119 = vsel %vm58, %v37, 0.0
  %120 = vadd.xlane.f32.xlu0 %v119
  %v121 = vpop.xlane.xlu0 %120
  %v122 = vsel %vm58, %v38, 0.0
  %123 = vadd.xlane.f32.xlu0 %v122
  %v124 = vpop.xlane.xlu0 %123
  %v125 = vsel %vm58, %v39, 0.0
  %126 = vadd.xlane.f32.xlu0 %v125
  %v127 = vpop.xlane.xlu0 %126
  %v128 = vsel %vm58, %v40, 0.0
  %129 = vadd.xlane.f32.xlu0 %v128
  %v130 = vpop.xlane.xlu0 %129
  %v131 = vsel %vm58, %v41, 0.0
  %132 = vadd.xlane.f32.xlu0 %v131
  %v133 = vpop.xlane.xlu0 %132
  %v134 = vsel %vm58, %v42, 0.0
  %135 = vadd.xlane.f32.xlu0 %v134
  %v136 = vpop.xlane.xlu0 %135
  %v137 = vsel %vm58, %v43, 0.0
  %138 = vadd.xlane.f32.xlu0 %v137
  %v139 = vpop.xlane.xlu0 %138
  %v140 = vsel %vm58, %v44, 0.0
  %141 = vadd.xlane.f32.xlu0 %v140
  %v142 = vpop.xlane.xlu0 %141
  %v143 = vsel %vm58, %v45, 0.0
  %144 = vadd.xlane.f32.xlu0 %v143
  %v145 = vpop.xlane.xlu0 %144
  %v146 = vsel %vm58, %v46, 0.0
  %147 = vadd.xlane.f32.xlu0 %v146
  %v148 = vpop.xlane.xlu0 %147
  %v149 = vsel %vm58, %v47, 0.0
  %150 = vadd.xlane.f32.xlu0 %v149
  %v151 = vpop.xlane.xlu0 %150
  %v152 = vsel %vm58, %v48, 0.0
  %153 = vadd.xlane.f32.xlu0 %v152
  %v154 = vpop.xlane.xlu0 %153
  %v155 = vsel %vm58, %v49, 0.0
  %156 = vadd.xlane.f32.xlu0 %v155
  %v157 = vpop.xlane.xlu0 %156
  %v158 = vsel %vm58, %v50, 0.0
  %159 = vadd.xlane.f32.xlu0 %v158
  %v160 = vpop.xlane.xlu0 %159
  %v161 = vsel %vm58, %v51, 0.0
  %162 = vadd.xlane.f32.xlu0 %v161
  %v163 = vpop.xlane.xlu0 %162
  %v164 = vsel %vm58, %v52, 0.0
  %165 = vadd.xlane.f32.xlu0 %v164
  %v166 = vpop.xlane.xlu0 %165
  %v167 = vsel %vm58, %v53, 0.0
  %168 = vadd.xlane.f32.xlu0 %v167
  %v169 = vpop.xlane.xlu0 %168
  %v170 = vsel %vm58, %v54, 0.0
  %171 = vadd.xlane.f32.xlu0 %v170
  %v172 = vpop.xlane.xlu0 %171
  %v173 = vsel %vm58, %v55, 0.0
  %174 = vadd.xlane.f32.xlu0 %v173
  %v175 = vpop.xlane.xlu0 %174
  %v176 = vsel %vm58, %v56, 0.0
  %177 = vadd.xlane.f32.xlu0 %v176
  %v178 = vpop.xlane.xlu0 %177
  %v179 = vsel %vm58, %v57, 0.0
  %180 = vadd.xlane.f32.xlu0 %v179
  %v181 = vpop.xlane.xlu0 %180
  %vm182 = vcmask 7168
  %183 = vst.msk [vmem:[#allocation2] sm:$0xff] %vm182, %v61
  %184 = vst.msk [vmem:[#allocation2 + $0x8] sm:$0xff] %vm182, %v64
  %185 = vst.msk [vmem:[#allocation2 + $0x10] sm:$0xff] %vm182, %v67
  %186 = vst.msk [vmem:[#allocation2 + $0x18] sm:$0xff] %vm182, %v70
  %187 = vst.msk [vmem:[#allocation2 + $0x20] sm:$0xff] %vm182, %v73
  %188 = vst.msk [vmem:[#allocation2 + $0x28] sm:$0xff] %vm182, %v76
  %189 = vst.msk [vmem:[#allocation2 + $0x30] sm:$0xff] %vm182, %v79
  %190 = vst.msk [vmem:[#allocation2 + $0x38] sm:$0xff] %vm182, %v82
  %191 = vst.msk [vmem:[#allocation2 + $0x40] sm:$0xff] %vm182, %v85
  %192 = vst.msk [vmem:[#allocation2 + $0x48] sm:$0xff] %vm182, %v88
  %193 = vst.msk [vmem:[#allocation2 + $0x50] sm:$0xff] %vm182, %v91
  %194 = vst.msk [vmem:[#allocation2 + $0x58] sm:$0xff] %vm182, %v94
  %195 = vst.msk [vmem:[#allocation2 + $0x60] sm:$0xff] %vm182, %v97
  %196 = vst.msk [vmem:[#allocation2 + $0x68] sm:$0xff] %vm182, %v100
  %197 = vst.msk [vmem:[#allocation2 + $0x70] sm:$0xff] %vm182, %v103
  %198 = vst.msk [vmem:[#allocation2 + $0x78] sm:$0xff] %vm182, %v106
  %199 = vst.msk [vmem:[#allocation2 + $0x80] sm:$0xff] %vm182, %v109
  %200 = vst.msk [vmem:[#allocation2 + $0x88] sm:$0xff] %vm182, %v112
  %201 = vst.msk [vmem:[#allocation2 + $0x90] sm:$0xff] %vm182, %v115
  %202 = vst.msk [vmem:[#allocation2 + $0x98] sm:$0xff] %vm182, %v118
  %203 = vst.msk [vmem:[#allocation2 + $0xa0] sm:$0xff] %vm182, %v121
  %204 = vst.msk [vmem:[#allocation2 + $0xa8] sm:$0xff] %vm182, %v124
  %205 = vst.msk [vmem:[#allocation2 + $0xb0] sm:$0xff] %vm182, %v127
  %206 = vst.msk [vmem:[#allocation2 + $0xb8] sm:$0xff] %vm182, %v130
  %207 = vst.msk [vmem:[#allocation2 + $0xc0] sm:$0xff] %vm182, %v133
  %208 = vst.msk [vmem:[#allocation2 + $0xc8] sm:$0xff] %vm182, %v136
  %209 = vst.msk [vmem:[#allocation2 + $0xd0] sm:$0xff] %vm182, %v139
  %210 = vst.msk [vmem:[#allocation2 + $0xd8] sm:$0xff] %vm182, %v142
  %211 = vst.msk [vmem:[#allocation2 + $0xe0] sm:$0xff] %vm182, %v145
  %212 = vst.msk [vmem:[#allocation2 + $0xe8] sm:$0xff] %vm182, %v148
  %213 = vst.msk [vmem:[#allocation2 + $0xf0] sm:$0xff] %vm182, %v151
  %214 = vst.msk [vmem:[#allocation2 + $0xf8] sm:$0xff] %vm182, %v154
  %215 = vst.msk [vmem:[#allocation2 + $0x100] sm:$0xff] %vm182, %v157
  %216 = vst.msk [vmem:[#allocation2 + $0x108] sm:$0xff] %vm182, %v160
  %217 = vst.msk [vmem:[#allocation2 + $0x110] sm:$0xff] %vm182, %v163
  %218 = vst.msk [vmem:[#allocation2 + $0x118] sm:$0xff] %vm182, %v166
  %219 = vst.msk [vmem:[#allocation2 + $0x120] sm:$0xff] %vm182, %v169
  %220 = vst.msk [vmem:[#allocation2 + $0x128] sm:$0xff] %vm182, %v172
  %221 = vst.msk [vmem:[#allocation2 + $0x130] sm:$0xff] %vm182, %v175
  %222 = vst.msk [vmem:[#allocation2 + $0x138] sm:$0xff] %vm182, %v178
  %223 = vst.msk [vmem:[#allocation2 + $0x140] sm:$0xff] %vm182, %v181
  %v224 = vmul.f32 %v17, %v17
  %v225 = vmul.f32 %v18, %v18
  %v226 = vmul.f32 %v19, %v19
  %v227 = vmul.f32 %v20, %v20
  %v228 = vmul.f32 %v21, %v21
  %v229 = vmul.f32 %v22, %v22
  %v230 = vmul.f32 %v23, %v23
  %v231 = vmul.f32 %v24, %v24
  %v232 = vmul.f32 %v25, %v25
  %v233 = vmul.f32 %v26, %v26
  %v234 = vmul.f32 %v27, %v27
  %v235 = vmul.f32 %v28, %v28
  %v236 = vmul.f32 %v29, %v29
  %v237 = vmul.f32 %v30, %v30
  %v238 = vmul.f32 %v31, %v31
  %v239 = vmul.f32 %v32, %v32
  %v240 = vmul.f32 %v33, %v33
  %v241 = vmul.f32 %v34, %v34
  %v242 = vmul.f32 %v35, %v35
  %v243 = vmul.f32 %v36, %v36
  %v244 = vmul.f32 %v37, %v37
  %v245 = vmul.f32 %v38, %v38
  %v246 = vmul.f32 %v39, %v39
  %v247 = vmul.f32 %v40, %v40
  %v248 = vmul.f32 %v41, %v41
  %v249 = vmul.f32 %v42, %v42
  %v250 = vmul.f32 %v43, %v43
  %v251 = vmul.f32 %v44, %v44
  %v252 = vmul.f32 %v45, %v45
  %v253 = vmul.f32 %v46, %v46
  %v254 = vmul.f32 %v47, %v47
  %v255 = vmul.f32 %v48, %v48
  %v256 = vmul.f32 %v49, %v49
  %v257 = vmul.f32 %v50, %v50
  %v258 = vmul.f32 %v51, %v51
  %v259 = vmul.f32 %v52, %v52
  %v260 = vmul.f32 %v53, %v53
  %v261 = vmul.f32 %v54, %v54
  %v262 = vmul.f32 %v55, %v55
  %v263 = vmul.f32 %v56, %v56
  %v264 = vmul.f32 %v57, %v57
  %v265 = vsel %vm58, %v224, 0.0
  %266 = vadd.xlane.f32.xlu0 %v265
  %v267 = vpop.xlane.xlu0 %266
  %v268 = vsel %vm58, %v225, 0.0
  %269 = vadd.xlane.f32.xlu0 %v268
  %v270 = vpop.xlane.xlu0 %269
  %v271 = vsel %vm58, %v226, 0.0
  %272 = vadd.xlane.f32.xlu0 %v271
  %v273 = vpop.xlane.xlu0 %272
  %v274 = vsel %vm58, %v227, 0.0
  %275 = vadd.xlane.f32.xlu0 %v274
  %v276 = vpop.xlane.xlu0 %275
  %v277 = vsel %vm58, %v228, 0.0
  %278 = vadd.xlane.f32.xlu0 %v277
  %v279 = vpop.xlane.xlu0 %278
  %v280 = vsel %vm58, %v229, 0.0
  %281 = vadd.xlane.f32.xlu0 %v280
  %v282 = vpop.xlane.xlu0 %281
  %v283 = vsel %vm58, %v230, 0.0
  %284 = vadd.xlane.f32.xlu0 %v283
  %v285 = vpop.xlane.xlu0 %284
  %v286 = vsel %vm58, %v231, 0.0
  %287 = vadd.xlane.f32.xlu0 %v286
  %v288 = vpop.xlane.xlu0 %287
  %v289 = vsel %vm58, %v232, 0.0
  %290 = vadd.xlane.f32.xlu0 %v289
  %v291 = vpop.xlane.xlu0 %290
  %v292 = vsel %vm58, %v233, 0.0
  %293 = vadd.xlane.f32.xlu0 %v292
  %v294 = vpop.xlane.xlu0 %293
  %v295 = vsel %vm58, %v234, 0.0
  %296 = vadd.xlane.f32.xlu0 %v295
  %v297 = vpop.xlane.xlu0 %296
  %v298 = vsel %vm58, %v235, 0.0
  %299 = vadd.xlane.f32.xlu0 %v298
  %v300 = vpop.xlane.xlu0 %299
  %v301 = vsel %vm58, %v236, 0.0
  %302 = vadd.xlane.f32.xlu0 %v301
  %v303 = vpop.xlane.xlu0 %302
  %v304 = vsel %vm58, %v237, 0.0
  %305 = vadd.xlane.f32.xlu0 %v304
  %v306 = vpop.xlane.xlu0 %305
  %v307 = vsel %vm58, %v238, 0.0
  %308 = vadd.xlane.f32.xlu0 %v307
  %v309 = vpop.xlane.xlu0 %308
  %v310 = vsel %vm58, %v239, 0.0
  %311 = vadd.xlane.f32.xlu0 %v310
  %v312 = vpop.xlane.xlu0 %311
  %v313 = vsel %vm58, %v240, 0.0
  %314 = vadd.xlane.f32.xlu0 %v313
  %v315 = vpop.xlane.xlu0 %314
  %v316 = vsel %vm58, %v241, 0.0
  %317 = vadd.xlane.f32.xlu0 %v316
  %v318 = vpop.xlane.xlu0 %317
  %v319 = vsel %vm58, %v242, 0.0
  %320 = vadd.xlane.f32.xlu0 %v319
  %v321 = vpop.xlane.xlu0 %320
  %v322 = vsel %vm58, %v243, 0.0
  %323 = vadd.xlane.f32.xlu0 %v322
  %v324 = vpop.xlane.xlu0 %323
  %v325 = vsel %vm58, %v244, 0.0
  %326 = vadd.xlane.f32.xlu0 %v325
  %v327 = vpop.xlane.xlu0 %326
  %v328 = vsel %vm58, %v245, 0.0
  %329 = vadd.xlane.f32.xlu0 %v328
  %v330 = vpop.xlane.xlu0 %329
  %v331 = vsel %vm58, %v246, 0.0
  %332 = vadd.xlane.f32.xlu0 %v331
  %v333 = vpop.xlane.xlu0 %332
  %v334 = vsel %vm58, %v247, 0.0
  %335 = vadd.xlane.f32.xlu0 %v334
  %v336 = vpop.xlane.xlu0 %335
  %v337 = vsel %vm58, %v248, 0.0
  %338 = vadd.xlane.f32.xlu0 %v337
  %v339 = vpop.xlane.xlu0 %338
  %v340 = vsel %vm58, %v249, 0.0
  %341 = vadd.xlane.f32.xlu0 %v340
  %v342 = vpop.xlane.xlu0 %341
  %v343 = vsel %vm58, %v250, 0.0
  %344 = vadd.xlane.f32.xlu0 %v343
  %v345 = vpop.xlane.xlu0 %344
  %v346 = vsel %vm58, %v251, 0.0
  %347 = vadd.xlane.f32.xlu0 %v346
  %v348 = vpop.xlane.xlu0 %347
  %v349 = vsel %vm58, %v252, 0.0
  %350 = vadd.xlane.f32.xlu0 %v349
  %v351 = vpop.xlane.xlu0 %350
  %v352 = vsel %vm58, %v253, 0.0
  %353 = vadd.xlane.f32.xlu0 %v352
  %v354 = vpop.xlane.xlu0 %353
  %v355 = vsel %vm58, %v254, 0.0
  %356 = vadd.xlane.f32.xlu0 %v355
  %v357 = vpop.xlane.xlu0 %356
  %v358 = vsel %vm58, %v255, 0.0
  %359 = vadd.xlane.f32.xlu0 %v358
  %v360 = vpop.xlane.xlu0 %359
  %v361 = vsel %vm58, %v256, 0.0
  %362 = vadd.xlane.f32.xlu0 %v361
  %v363 = vpop.xlane.xlu0 %362
  %v364 = vsel %vm58, %v257, 0.0
  %365 = vadd.xlane.f32.xlu0 %v364
  %v366 = vpop.xlane.xlu0 %365
  %v367 = vsel %vm58, %v258, 0.0
  %368 = vadd.xlane.f32.xlu0 %v367
  %v369 = vpop.xlane.xlu0 %368
  %v370 = vsel %vm58, %v259, 0.0
  %371 = vadd.xlane.f32.xlu0 %v370
  %v372 = vpop.xlane.xlu0 %371
  %v373 = vsel %vm58, %v260, 0.0
  %374 = vadd.xlane.f32.xlu0 %v373
  %v375 = vpop.xlane.xlu0 %374
  %v376 = vsel %vm58, %v261, 0.0
  %377 = vadd.xlane.f32.xlu0 %v376
  %v378 = vpop.xlane.xlu0 %377
  %v379 = vsel %vm58, %v262, 0.0
  %380 = vadd.xlane.f32.xlu0 %v379
  %v381 = vpop.xlane.xlu0 %380
  %v382 = vsel %vm58, %v263, 0.0
  %383 = vadd.xlane.f32.xlu0 %v382
  %v384 = vpop.xlane.xlu0 %383
  %v385 = vsel %vm58, %v264, 0.0
  %386 = vadd.xlane.f32.xlu0 %v385
  %v387 = vpop.xlane.xlu0 %386
  %388 = vst.msk [vmem:[#allocation3] sm:$0xff] %vm182, %v267
  %389 = vst.msk [vmem:[#allocation3 + $0x8] sm:$0xff] %vm182, %v270
  %390 = vst.msk [vmem:[#allocation3 + $0x10] sm:$0xff] %vm182, %v273
  %391 = vst.msk [vmem:[#allocation3 + $0x18] sm:$0xff] %vm182, %v276
  %392 = vst.msk [vmem:[#allocation3 + $0x20] sm:$0xff] %vm182, %v279
  %393 = vst.msk [vmem:[#allocation3 + $0x28] sm:$0xff] %vm182, %v282
  %394 = vst.msk [vmem:[#allocation3 + $0x30] sm:$0xff] %vm182, %v285
  %395 = vst.msk [vmem:[#allocation3 + $0x38] sm:$0xff] %vm182, %v288
  %396 = vst.msk [vmem:[#allocation3 + $0x40] sm:$0xff] %vm182, %v291
  %397 = vst.msk [vmem:[#allocation3 + $0x48] sm:$0xff] %vm182, %v294
  %398 = vst.msk [vmem:[#allocation3 + $0x50] sm:$0xff] %vm182, %v297
  %399 = vst.msk [vmem:[#allocation3 + $0x58] sm:$0xff] %vm182, %v300
  %400 = vst.msk [vmem:[#allocation3 + $0x60] sm:$0xff] %vm182, %v303
  %401 = vst.msk [vmem:[#allocation3 + $0x68] sm:$0xff] %vm182, %v306
  %402 = vst.msk [vmem:[#allocation3 + $0x70] sm:$0xff] %vm182, %v309
  %403 = vst.msk [vmem:[#allocation3 + $0x78] sm:$0xff] %vm182, %v312
  %404 = vst.msk [vmem:[#allocation3 + $0x80] sm:$0xff] %vm182, %v315
  %405 = vst.msk [vmem:[#allocation3 + $0x88] sm:$0xff] %vm182, %v318
  %406 = vst.msk [vmem:[#allocation3 + $0x90] sm:$0xff] %vm182, %v321
  %407 = vst.msk [vmem:[#allocation3 + $0x98] sm:$0xff] %vm182, %v324
  %408 = vst.msk [vmem:[#allocation3 + $0xa0] sm:$0xff] %vm182, %v327
  %409 = vst.msk [vmem:[#allocation3 + $0xa8] sm:$0xff] %vm182, %v330
  %410 = vst.msk [vmem:[#allocation3 + $0xb0] sm:$0xff] %vm182, %v333
  %411 = vst.msk [vmem:[#allocation3 + $0xb8] sm:$0xff] %vm182, %v336
  %412 = vst.msk [vmem:[#allocation3 + $0xc0] sm:$0xff] %vm182, %v339
  %413 = vst.msk [vmem:[#allocation3 + $0xc8] sm:$0xff] %vm182, %v342
  %414 = vst.msk [vmem:[#allocation3 + $0xd0] sm:$0xff] %vm182, %v345
  %415 = vst.msk [vmem:[#allocation3 + $0xd8] sm:$0xff] %vm182, %v348
  %416 = vst.msk [vmem:[#allocation3 + $0xe0] sm:$0xff] %vm182, %v351
  %417 = vst.msk [vmem:[#allocation3 + $0xe8] sm:$0xff] %vm182, %v354
  %418 = vst.msk [vmem:[#allocation3 + $0xf0] sm:$0xff] %vm182, %v357
  %419 = vst.msk [vmem:[#allocation3 + $0xf8] sm:$0xff] %vm182, %v360
  %420 = vst.msk [vmem:[#allocation3 + $0x100] sm:$0xff] %vm182, %v363
  %421 = vst.msk [vmem:[#allocation3 + $0x108] sm:$0xff] %vm182, %v366
  %422 = vst.msk [vmem:[#allocation3 + $0x110] sm:$0xff] %vm182, %v369
  %423 = vst.msk [vmem:[#allocation3 + $0x118] sm:$0xff] %vm182, %v372
  %424 = vst.msk [vmem:[#allocation3 + $0x120] sm:$0xff] %vm182, %v375
  %425 = vst.msk [vmem:[#allocation3 + $0x128] sm:$0xff] %vm182, %v378
  %426 = vst.msk [vmem:[#allocation3 + $0x130] sm:$0xff] %vm182, %v381
  %427 = vst.msk [vmem:[#allocation3 + $0x138] sm:$0xff] %vm182, %v384
  %428 = vst.msk [vmem:[#allocation3 + $0x140] sm:$0xff] %vm182, %v387
  %v429 = vld [vmem:[%s0 + $0x148] sm:$0xff]
  %v430 = vld [vmem:[%s0 + $0x150] sm:$0xff]
  %v431 = vld [vmem:[%s0 + $0x158] sm:$0xff]
  %v432 = vld [vmem:[%s0 + $0x160] sm:$0xff]
  %v433 = vld [vmem:[%s0 + $0x168] sm:$0xff]
  %v434 = vld [vmem:[%s0 + $0x170] sm:$0xff]
  %v435 = vld [vmem:[%s0 + $0x178] sm:$0xff]
  %v436 = vld [vmem:[%s0 + $0x180] sm:$0xff]
  %v437 = vld [vmem:[%s0 + $0x188] sm:$0xff]
  %v438 = vld [vmem:[%s0 + $0x190] sm:$0xff]
  %v439 = vld [vmem:[%s0 + $0x198] sm:$0xff]
  %v440 = vld [vmem:[%s0 + $0x1a0] sm:$0xff]
  %v441 = vld [vmem:[%s0 + $0x1a8] sm:$0xff]
  %v442 = vld [vmem:[%s0 + $0x1b0] sm:$0xff]
  %v443 = vld [vmem:[%s0 + $0x1b8] sm:$0xff]
  %v444 = vld [vmem:[%s0 + $0x1c0] sm:$0xff]
  %v445 = vld [vmem:[%s0 + $0x1c8] sm:$0xff]
  %v446 = vld [vmem:[%s0 + $0x1d0] sm:$0xff]
  %v447 = vld [vmem:[%s0 + $0x1d8] sm:$0xff]
  %v448 = vld [vmem:[%s0 + $0x1e0] sm:$0xff]
  %v449 = vld [vmem:[%s0 + $0x1e8] sm:$0xff]
  %v450 = vld [vmem:[%s0 + $0x1f0] sm:$0xff]
  %v451 = vld [vmem:[%s0 + $0x1f8] sm:$0xff]
  %v452 = vld [vmem:[%s0 + $0x200] sm:$0xff]
  %v453 = vld [vmem:[%s0 + $0x208] sm:$0xff]
  %v454 = vld [vmem:[%s0 + $0x210] sm:$0xff]
  %v455 = vld [vmem:[%s0 + $0x218] sm:$0xff]
  %v456 = vld [vmem:[%s0 + $0x220] sm:$0xff]
  %v457 = vld [vmem:[%s0 + $0x228] sm:$0xff]
  %v458 = vld [vmem:[%s0 + $0x230] sm:$0xff]
  %v459 = vld [vmem:[%s0 + $0x238] sm:$0xff]
  %v460 = vld [vmem:[%s0 + $0x240] sm:$0xff]
  %v461 = vld [vmem:[%s0 + $0x248] sm:$0xff]
  %v462 = vld [vmem:[%s0 + $0x250] sm:$0xff]
  %v463 = vld [vmem:[%s0 + $0x258] sm:$0xff]
  %v464 = vld [vmem:[%s0 + $0x260] sm:$0xff]
  %v465 = vld [vmem:[%s0 + $0x268] sm:$0xff]
  %v466 = vld [vmem:[%s0 + $0x270] sm:$0xff]
  %v467 = vld [vmem:[%s0 + $0x278] sm:$0xff]
  %v468 = vld [vmem:[%s0 + $0x280] sm:$0xff]
  %v469 = vld [vmem:[%s0 + $0x288] sm:$0xff]
  %v470 = vsel %vm58, %v429, 0.0
  %471 = vadd.xlane.f32.xlu0 %v470
  %v472 = vpop.xlane.xlu0 %471
  %v473 = vsel %vm58, %v430, 0.0
  %474 = vadd.xlane.f32.xlu0 %v473
  %v475 = vpop.xlane.xlu0 %474
  %v476 = vsel %vm58, %v431, 0.0
  %477 = vadd.xlane.f32.xlu0 %v476
  %v478 = vpop.xlane.xlu0 %477
  %v479 = vsel %vm58, %v432, 0.0
  %480 = vadd.xlane.f32.xlu0 %v479
  %v481 = vpop.xlane.xlu0 %480
  %v482 = vsel %vm58, %v433, 0.0
  %483 = vadd.xlane.f32.xlu0 %v482
  %v484 = vpop.xlane.xlu0 %483
  %v485 = vsel %vm58, %v434, 0.0
  %486 = vadd.xlane.f32.xlu0 %v485
  %v487 = vpop.xlane.xlu0 %486
  %v488 = vsel %vm58, %v435, 0.0
  %489 = vadd.xlane.f32.xlu0 %v488
  %v490 = vpop.xlane.xlu0 %489
  %v491 = vsel %vm58, %v436, 0.0
  %492 = vadd.xlane.f32.xlu0 %v491
  %v493 = vpop.xlane.xlu0 %492
  %v494 = vsel %vm58, %v437, 0.0
  %495 = vadd.xlane.f32.xlu0 %v494
  %v496 = vpop.xlane.xlu0 %495
  %v497 = vsel %vm58, %v438, 0.0
  %498 = vadd.xlane.f32.xlu0 %v497
  %v499 = vpop.xlane.xlu0 %498
  %v500 = vsel %vm58, %v439, 0.0
  %501 = vadd.xlane.f32.xlu0 %v500
  %v502 = vpop.xlane.xlu0 %501
  %v503 = vsel %vm58, %v440, 0.0
  %504 = vadd.xlane.f32.xlu0 %v503
  %v505 = vpop.xlane.xlu0 %504
  %v506 = vsel %vm58, %v441, 0.0
  %507 = vadd.xlane.f32.xlu0 %v506
  %v508 = vpop.xlane.xlu0 %507
  %v509 = vsel %vm58, %v442, 0.0
  %510 = vadd.xlane.f32.xlu0 %v509
  %v511 = vpop.xlane.xlu0 %510
  %v512 = vsel %vm58, %v443, 0.0
  %513 = vadd.xlane.f32.xlu0 %v512
  %v514 = vpop.xlane.xlu0 %513
  %v515 = vsel %vm58, %v444, 0.0
  %516 = vadd.xlane.f32.xlu0 %v515
  %v517 = vpop.xlane.xlu0 %516
  %v518 = vsel %vm58, %v445, 0.0
  %519 = vadd.xlane.f32.xlu0 %v518
  %v520 = vpop.xlane.xlu0 %519
  %v521 = vsel %vm58, %v446, 0.0
  %522 = vadd.xlane.f32.xlu0 %v521
  %v523 = vpop.xlane.xlu0 %522
  %v524 = vsel %vm58, %v447, 0.0
  %525 = vadd.xlane.f32.xlu0 %v524
  %v526 = vpop.xlane.xlu0 %525
  %v527 = vsel %vm58, %v448, 0.0
  %528 = vadd.xlane.f32.xlu0 %v527
  %v529 = vpop.xlane.xlu0 %528
  %v530 = vsel %vm58, %v449, 0.0
  %531 = vadd.xlane.f32.xlu0 %v530
  %v532 = vpop.xlane.xlu0 %531
  %v533 = vsel %vm58, %v450, 0.0
  %534 = vadd.xlane.f32.xlu0 %v533
  %v535 = vpop.xlane.xlu0 %534
  %v536 = vsel %vm58, %v451, 0.0
  %537 = vadd.xlane.f32.xlu0 %v536
  %v538 = vpop.xlane.xlu0 %537
  %v539 = vsel %vm58, %v452, 0.0
  %540 = vadd.xlane.f32.xlu0 %v539
  %v541 = vpop.xlane.xlu0 %540
  %v542 = vsel %vm58, %v453, 0.0
  %543 = vadd.xlane.f32.xlu0 %v542
  %v544 = vpop.xlane.xlu0 %543
  %v545 = vsel %vm58, %v454, 0.0
  %546 = vadd.xlane.f32.xlu0 %v545
  %v547 = vpop.xlane.xlu0 %546
  %v548 = vsel %vm58, %v455, 0.0
  %549 = vadd.xlane.f32.xlu0 %v548
  %v550 = vpop.xlane.xlu0 %549
  %v551 = vsel %vm58, %v456, 0.0
  %552 = vadd.xlane.f32.xlu0 %v551
  %v553 = vpop.xlane.xlu0 %552
  %v554 = vsel %vm58, %v457, 0.0
  %555 = vadd.xlane.f32.xlu0 %v554
  %v556 = vpop.xlane.xlu0 %555
  %v557 = vsel %vm58, %v458, 0.0
  %558 = vadd.xlane.f32.xlu0 %v557
  %v559 = vpop.xlane.xlu0 %558
  %v560 = vsel %vm58, %v459, 0.0
  %561 = vadd.xlane.f32.xlu0 %v560
  %v562 = vpop.xlane.xlu0 %561
  %v563 = vsel %vm58, %v460, 0.0
  %564 = vadd.xlane.f32.xlu0 %v563
  %v565 = vpop.xlane.xlu0 %564
  %v566 = vsel %vm58, %v461, 0.0
  %567 = vadd.xlane.f32.xlu0 %v566
  %v568 = vpop.xlane.xlu0 %567
  %v569 = vsel %vm58, %v462, 0.0
  %570 = vadd.xlane.f32.xlu0 %v569
  %v571 = vpop.xlane.xlu0 %570
  %v572 = vsel %vm58, %v463, 0.0
  %573 = vadd.xlane.f32.xlu0 %v572
  %v574 = vpop.xlane.xlu0 %573
  %v575 = vsel %vm58, %v464, 0.0
  %576 = vadd.xlane.f32.xlu0 %v575
  %v577 = vpop.xlane.xlu0 %576
  %v578 = vsel %vm58, %v465, 0.0
  %579 = vadd.xlane.f32.xlu0 %v578
  %v580 = vpop.xlane.xlu0 %579
  %v581 = vsel %vm58, %v466, 0.0
  %582 = vadd.xlane.f32.xlu0 %v581
  %v583 = vpop.xlane.xlu0 %582
  %v584 = vsel %vm58, %v467, 0.0
  %585 = vadd.xlane.f32.xlu0 %v584
  %v586 = vpop.xlane.xlu0 %585
  %v587 = vsel %vm58, %v468, 0.0
  %588 = vadd.xlane.f32.xlu0 %v587
  %v589 = vpop.xlane.xlu0 %588
  %v590 = vsel %vm58, %v469, 0.0
  %591 = vadd.xlane.f32.xlu0 %v590
  %v592 = vpop.xlane.xlu0 %591
  %593 = vst.msk [vmem:[#allocation2 + $0x148] sm:$0xff] %vm182, %v472
  %594 = vst.msk [vmem:[#allocation2 + $0x150] sm:$0xff] %vm182, %v475
  %595 = vst.msk [vmem:[#allocation2 + $0x158] sm:$0xff] %vm182, %v478
  %596 = vst.msk [vmem:[#allocation2 + $0x160] sm:$0xff] %vm182, %v481
  %597 = vst.msk [vmem:[#allocation2 + $0x168] sm:$0xff] %vm182, %v484
  %598 = vst.msk [vmem:[#allocation2 + $0x170] sm:$0xff] %vm182, %v487
  %599 = vst.msk [vmem:[#allocation2 + $0x178] sm:$0xff] %vm182, %v490
  %600 = vst.msk [vmem:[#allocation2 + $0x180] sm:$0xff] %vm182, %v493
  %601 = vst.msk [vmem:[#allocation2 + $0x188] sm:$0xff] %vm182, %v496
  %602 = vst.msk [vmem:[#allocation2 + $0x190] sm:$0xff] %vm182, %v499
  %603 = vst.msk [vmem:[#allocation2 + $0x198] sm:$0xff] %vm182, %v502
  %604 = vst.msk [vmem:[#allocation2 + $0x1a0] sm:$0xff] %vm182, %v505
  %605 = vst.msk [vmem:[#allocation2 + $0x1a8] sm:$0xff] %vm182, %v508
  %606 = vst.msk [vmem:[#allocation2 + $0x1b0] sm:$0xff] %vm182, %v511
  %607 = vst.msk [vmem:[#allocation2 + $0x1b8] sm:$0xff] %vm182, %v514
  %608 = vst.msk [vmem:[#allocation2 + $0x1c0] sm:$0xff] %vm182, %v517
  %609 = vst.msk [vmem:[#allocation2 + $0x1c8] sm:$0xff] %vm182, %v520
  %610 = vst.msk [vmem:[#allocation2 + $0x1d0] sm:$0xff] %vm182, %v523
  %611 = vst.msk [vmem:[#allocation2 + $0x1d8] sm:$0xff] %vm182, %v526
  %612 = vst.msk [vmem:[#allocation2 + $0x1e0] sm:$0xff] %vm182, %v529
  %613 = vst.msk [vmem:[#allocation2 + $0x1e8] sm:$0xff] %vm182, %v532
  %614 = vst.msk [vmem:[#allocation2 + $0x1f0] sm:$0xff] %vm182, %v535
  %615 = vst.msk [vmem:[#allocation2 + $0x1f8] sm:$0xff] %vm182, %v538
  %616 = vst.msk [vmem:[#allocation2 + $0x200] sm:$0xff] %vm182, %v541
  %617 = vst.msk [vmem:[#allocation2 + $0x208] sm:$0xff] %vm182, %v544
  %618 = vst.msk [vmem:[#allocation2 + $0x210] sm:$0xff] %vm182, %v547
  %619 = vst.msk [vmem:[#allocation2 + $0x218] sm:$0xff] %vm182, %v550
  %620 = vst.msk [vmem:[#allocation2 + $0x220] sm:$0xff] %vm182, %v553
  %621 = vst.msk [vmem:[#allocation2 + $0x228] sm:$0xff] %vm182, %v556
  %622 = vst.msk [vmem:[#allocation2 + $0x230] sm:$0xff] %vm182, %v559
  %623 = vst.msk [vmem:[#allocation2 + $0x238] sm:$0xff] %vm182, %v562
  %624 = vst.msk [vmem:[#allocation2 + $0x240] sm:$0xff] %vm182, %v565
  %625 = vst.msk [vmem:[#allocation2 + $0x248] sm:$0xff] %vm182, %v568
  %626 = vst.msk [vmem:[#allocation2 + $0x250] sm:$0xff] %vm182, %v571
  %627 = vst.msk [vmem:[#allocation2 + $0x258] sm:$0xff] %vm182, %v574
  %628 = vst.msk [vmem:[#allocation2 + $0x260] sm:$0xff] %vm182, %v577
  %629 = vst.msk [vmem:[#allocation2 + $0x268] sm:$0xff] %vm182, %v580
  %630 = vst.msk [vmem:[#allocation2 + $0x270] sm:$0xff] %vm182, %v583
  %631 = vst.msk [vmem:[#allocation2 + $0x278] sm:$0xff] %vm182, %v586
  %632 = vst.msk [vmem:[#allocation2 + $0x280] sm:$0xff] %vm182, %v589
  %633 = vst.msk [vmem:[#allocation2 + $0x288] sm:$0xff] %vm182, %v592
  %v634 = vmul.f32 %v429, %v429
  %v635 = vmul.f32 %v430, %v430
  %v636 = vmul.f32 %v431, %v431
  %v637 = vmul.f32 %v432, %v432
  %v638 = vmul.f32 %v433, %v433
  %v639 = vmul.f32 %v434, %v434
  %v640 = vmul.f32 %v435, %v435
  %v641 = vmul.f32 %v436, %v436
  %v642 = vmul.f32 %v437, %v437
  %v643 = vmul.f32 %v438, %v438
  %v644 = vmul.f32 %v439, %v439
  %v645 = vmul.f32 %v440, %v440
  %v646 = vmul.f32 %v441, %v441
  %v647 = vmul.f32 %v442, %v442
  %v648 = vmul.f32 %v443, %v443
  %v649 = vmul.f32 %v444, %v444
  %v650 = vmul.f32 %v445, %v445
  %v651 = vmul.f32 %v446, %v446
  %v652 = vmul.f32 %v447, %v447
  %v653 = vmul.f32 %v448, %v448
  %v654 = vmul.f32 %v449, %v449
  %v655 = vmul.f32 %v450, %v450
  %v656 = vmul.f32 %v451, %v451
  %v657 = vmul.f32 %v452, %v452
  %v658 = vmul.f32 %v453, %v453
  %v659 = vmul.f32 %v454, %v454
  %v660 = vmul.f32 %v455, %v455
  %v661 = vmul.f32 %v456, %v456
  %v662 = vmul.f32 %v457, %v457
  %v663 = vmul.f32 %v458, %v458
  %v664 = vmul.f32 %v459, %v459
  %v665 = vmul.f32 %v460, %v460
  %v666 = vmul.f32 %v461, %v461
  %v667 = vmul.f32 %v462, %v462
  %v668 = vmul.f32 %v463, %v463
  %v669 = vmul.f32 %v464, %v464
  %v670 = vmul.f32 %v465, %v465
  %v671 = vmul.f32 %v466, %v466
  %v672 = vmul.f32 %v467, %v467
  %v673 = vmul.f32 %v468, %v468
  %v674 = vmul.f32 %v469, %v469
  %v675 = vsel %vm58, %v634, 0.0
  %676 = vadd.xlane.f32.xlu0 %v675
  %v677 = vpop.xlane.xlu0 %676
  %v678 = vsel %vm58, %v635, 0.0
  %679 = vadd.xlane.f32.xlu0 %v678
  %v680 = vpop.xlane.xlu0 %679
  %v681 = vsel %vm58, %v636, 0.0
  %682 = vadd.xlane.f32.xlu0 %v681
  %v683 = vpop.xlane.xlu0 %682
  %v684 = vsel %vm58, %v637, 0.0
  %685 = vadd.xlane.f32.xlu0 %v684
  %v686 = vpop.xlane.xlu0 %685
  %v687 = vsel %vm58, %v638, 0.0
  %688 = vadd.xlane.f32.xlu0 %v687
  %v689 = vpop.xlane.xlu0 %688
  %v690 = vsel %vm58, %v639, 0.0
  %691 = vadd.xlane.f32.xlu0 %v690
  %v692 = vpop.xlane.xlu0 %691
  %v693 = vsel %vm58, %v640, 0.0
  %694 = vadd.xlane.f32.xlu0 %v693
  %v695 = vpop.xlane.xlu0 %694
  %v696 = vsel %vm58, %v641, 0.0
  %697 = vadd.xlane.f32.xlu0 %v696
  %v698 = vpop.xlane.xlu0 %697
  %v699 = vsel %vm58, %v642, 0.0
  %700 = vadd.xlane.f32.xlu0 %v699
  %v701 = vpop.xlane.xlu0 %700
  %v702 = vsel %vm58, %v643, 0.0
  %703 = vadd.xlane.f32.xlu0 %v702
  %v704 = vpop.xlane.xlu0 %703
  %v705 = vsel %vm58, %v644, 0.0
  %706 = vadd.xlane.f32.xlu0 %v705
  %v707 = vpop.xlane.xlu0 %706
  %v708 = vsel %vm58, %v645, 0.0
  %709 = vadd.xlane.f32.xlu0 %v708
  %v710 = vpop.xlane.xlu0 %709
  %v711 = vsel %vm58, %v646, 0.0
  %712 = vadd.xlane.f32.xlu0 %v711
  %v713 = vpop.xlane.xlu0 %712
  %v714 = vsel %vm58, %v647, 0.0
  %715 = vadd.xlane.f32.xlu0 %v714
  %v716 = vpop.xlane.xlu0 %715
  %v717 = vsel %vm58, %v648, 0.0
  %718 = vadd.xlane.f32.xlu0 %v717
  %v719 = vpop.xlane.xlu0 %718
  %v720 = vsel %vm58, %v649, 0.0
  %721 = vadd.xlane.f32.xlu0 %v720
  %v722 = vpop.xlane.xlu0 %721
  %v723 = vsel %vm58, %v650, 0.0
  %724 = vadd.xlane.f32.xlu0 %v723
  %v725 = vpop.xlane.xlu0 %724
  %v726 = vsel %vm58, %v651, 0.0
  %727 = vadd.xlane.f32.xlu0 %v726
  %v728 = vpop.xlane.xlu0 %727
  %v729 = vsel %vm58, %v652, 0.0
  %730 = vadd.xlane.f32.xlu0 %v729
  %v731 = vpop.xlane.xlu0 %730
  %v732 = vsel %vm58, %v653, 0.0
  %733 = vadd.xlane.f32.xlu0 %v732
  %v734 = vpop.xlane.xlu0 %733
  %v735 = vsel %vm58, %v654, 0.0
  %736 = vadd.xlane.f32.xlu0 %v735
  %v737 = vpop.xlane.xlu0 %736
  %v738 = vsel %vm58, %v655, 0.0
  %739 = vadd.xlane.f32.xlu0 %v738
  %v740 = vpop.xlane.xlu0 %739
  %v741 = vsel %vm58, %v656, 0.0
  %742 = vadd.xlane.f32.xlu0 %v741
  %v743 = vpop.xlane.xlu0 %742
  %v744 = vsel %vm58, %v657, 0.0
  %745 = vadd.xlane.f32.xlu0 %v744
  %v746 = vpop.xlane.xlu0 %745
  %v747 = vsel %vm58, %v658, 0.0
  %748 = vadd.xlane.f32.xlu0 %v747
  %v749 = vpop.xlane.xlu0 %748
  %v750 = vsel %vm58, %v659, 0.0
  %751 = vadd.xlane.f32.xlu0 %v750
  %v752 = vpop.xlane.xlu0 %751
  %v753 = vsel %vm58, %v660, 0.0
  %754 = vadd.xlane.f32.xlu0 %v753
  %v755 = vpop.xlane.xlu0 %754
  %v756 = vsel %vm58, %v661, 0.0
  %757 = vadd.xlane.f32.xlu0 %v756
  %v758 = vpop.xlane.xlu0 %757
  %v759 = vsel %vm58, %v662, 0.0
  %760 = vadd.xlane.f32.xlu0 %v759
  %v761 = vpop.xlane.xlu0 %760
  %v762 = vsel %vm58, %v663, 0.0
  %763 = vadd.xlane.f32.xlu0 %v762
  %v764 = vpop.xlane.xlu0 %763
  %v765 = vsel %vm58, %v664, 0.0
  %766 = vadd.xlane.f32.xlu0 %v765
  %v767 = vpop.xlane.xlu0 %766
  %v768 = vsel %vm58, %v665, 0.0
  %769 = vadd.xlane.f32.xlu0 %v768
  %v770 = vpop.xlane.xlu0 %769
  %v771 = vsel %vm58, %v666, 0.0
  %772 = vadd.xlane.f32.xlu0 %v771
  %v773 = vpop.xlane.xlu0 %772
  %v774 = vsel %vm58, %v667, 0.0
  %775 = vadd.xlane.f32.xlu0 %v774
  %v776 = vpop.xlane.xlu0 %775
  %v777 = vsel %vm58, %v668, 0.0
  %778 = vadd.xlane.f32.xlu0 %v777
  %v779 = vpop.xlane.xlu0 %778
  %v780 = vsel %vm58, %v669, 0.0
  %781 = vadd.xlane.f32.xlu0 %v780
  %v782 = vpop.xlane.xlu0 %781
  %v783 = vsel %vm58, %v670, 0.0
  %784 = vadd.xlane.f32.xlu0 %v783
  %v785 = vpop.xlane.xlu0 %784
  %v786 = vsel %vm58, %v671, 0.0
  %787 = vadd.xlane.f32.xlu0 %v786
  %v788 = vpop.xlane.xlu0 %787
  %v789 = vsel %vm58, %v672, 0.0
  %790 = vadd.xlane.f32.xlu0 %v789
  %v791 = vpop.xlane.xlu0 %790
  %v792 = vsel %vm58, %v673, 0.0
  %793 = vadd.xlane.f32.xlu0 %v792
  %v794 = vpop.xlane.xlu0 %793
  %v795 = vsel %vm58, %v674, 0.0
  %796 = vadd.xlane.f32.xlu0 %v795
  %v797 = vpop.xlane.xlu0 %796
  %798 = vst.msk [vmem:[#allocation3 + $0x148] sm:$0xff] %vm182, %v677
  %799 = vst.msk [vmem:[#allocation3 + $0x150] sm:$0xff] %vm182, %v680
  %800 = vst.msk [vmem:[#allocation3 + $0x158] sm:$0xff] %vm182, %v683
  %801 = vst.msk [vmem:[#allocation3 + $0x160] sm:$0xff] %vm182, %v686
  %802 = vst.msk [vmem:[#allocation3 + $0x168] sm:$0xff] %vm182, %v689
  %803 = vst.msk [vmem:[#allocation3 + $0x170] sm:$0xff] %vm182, %v692
  %804 = vst.msk [vmem:[#allocation3 + $0x178] sm:$0xff] %vm182, %v695
  %805 = vst.msk [vmem:[#allocation3 + $0x180] sm:$0xff] %vm182, %v698
  %806 = vst.msk [vmem:[#allocation3 + $0x188] sm:$0xff] %vm182, %v701
  %807 = vst.msk [vmem:[#allocation3 + $0x190] sm:$0xff] %vm182, %v704
  %808 = vst.msk [vmem:[#allocation3 + $0x198] sm:$0xff] %vm182, %v707
  %809 = vst.msk [vmem:[#allocation3 + $0x1a0] sm:$0xff] %vm182, %v710
  %810 = vst.msk [vmem:[#allocation3 + $0x1a8] sm:$0xff] %vm182, %v713
  %811 = vst.msk [vmem:[#allocation3 + $0x1b0] sm:$0xff] %vm182, %v716
  %812 = vst.msk [vmem:[#allocation3 + $0x1b8] sm:$0xff] %vm182, %v719
  %813 = vst.msk [vmem:[#allocation3 + $0x1c0] sm:$0xff] %vm182, %v722
  %814 = vst.msk [vmem:[#allocation3 + $0x1c8] sm:$0xff] %vm182, %v725
  %815 = vst.msk [vmem:[#allocation3 + $0x1d0] sm:$0xff] %vm182, %v728
  %816 = vst.msk [vmem:[#allocation3 + $0x1d8] sm:$0xff] %vm182, %v731
  %817 = vst.msk [vmem:[#allocation3 + $0x1e0] sm:$0xff] %vm182, %v734
  %818 = vst.msk [vmem:[#allocation3 + $0x1e8] sm:$0xff] %vm182, %v737
  %819 = vst.msk [vmem:[#allocation3 + $0x1f0] sm:$0xff] %vm182, %v740
  %820 = vst.msk [vmem:[#allocation3 + $0x1f8] sm:$0xff] %vm182, %v743
  %821 = vst.msk [vmem:[#allocation3 + $0x200] sm:$0xff] %vm182, %v746
  %822 = vst.msk [vmem:[#allocation3 + $0x208] sm:$0xff] %vm182, %v749
  %823 = vst.msk [vmem:[#allocation3 + $0x210] sm:$0xff] %vm182, %v752
  %824 = vst.msk [vmem:[#allocation3 + $0x218] sm:$0xff] %vm182, %v755
  %825 = vst.msk [vmem:[#allocation3 + $0x220] sm:$0xff] %vm182, %v758
  %826 = vst.msk [vmem:[#allocation3 + $0x228] sm:$0xff] %vm182, %v761
  %827 = vst.msk [vmem:[#allocation3 + $0x230] sm:$0xff] %vm182, %v764
  %828 = vst.msk [vmem:[#allocation3 + $0x238] sm:$0xff] %vm182, %v767
  %829 = vst.msk [vmem:[#allocation3 + $0x240] sm:$0xff] %vm182, %v770
  %830 = vst.msk [vmem:[#allocation3 + $0x248] sm:$0xff] %vm182, %v773
  %831 = vst.msk [vmem:[#allocation3 + $0x250] sm:$0xff] %vm182, %v776
  %832 = vst.msk [vmem:[#allocation3 + $0x258] sm:$0xff] %vm182, %v779
  %833 = vst.msk [vmem:[#allocation3 + $0x260] sm:$0xff] %vm182, %v782
  %834 = vst.msk [vmem:[#allocation3 + $0x268] sm:$0xff] %vm182, %v785
  %835 = vst.msk [vmem:[#allocation3 + $0x270] sm:$0xff] %vm182, %v788
  %836 = vst.msk [vmem:[#allocation3 + $0x278] sm:$0xff] %vm182, %v791
  %837 = vst.msk [vmem:[#allocation3 + $0x280] sm:$0xff] %vm182, %v794
  %838 = vst.msk [vmem:[#allocation3 + $0x288] sm:$0xff] %vm182, %v797
  %v839 = vld [vmem:[%s0 + $0x290] sm:$0xff]
  %v840 = vld [vmem:[%s0 + $0x298] sm:$0xff]
  %v841 = vld [vmem:[%s0 + $0x2a0] sm:$0xff]
  %v842 = vld [vmem:[%s0 + $0x2a8] sm:$0xff]
  %v843 = vld [vmem:[%s0 + $0x2b0] sm:$0xff]
  %v844 = vld [vmem:[%s0 + $0x2b8] sm:$0xff]
  %v845 = vld [vmem:[%s0 + $0x2c0] sm:$0xff]
  %v846 = vld [vmem:[%s0 + $0x2c8] sm:$0xff]
  %v847 = vld [vmem:[%s0 + $0x2d0] sm:$0xff]
  %v848 = vld [vmem:[%s0 + $0x2d8] sm:$0xff]
  %v849 = vld [vmem:[%s0 + $0x2e0] sm:$0xff]
  %v850 = vld [vmem:[%s0 + $0x2e8] sm:$0xff]
  %v851 = vld [vmem:[%s0 + $0x2f0] sm:$0xff]
  %v852 = vld [vmem:[%s0 + $0x2f8] sm:$0xff]
  %v853 = vld [vmem:[%s0 + $0x300] sm:$0xff]
  %v854 = vld [vmem:[%s0 + $0x308] sm:$0xff]
  %v855 = vld [vmem:[%s0 + $0x310] sm:$0xff]
  %v856 = vld [vmem:[%s0 + $0x318] sm:$0xff]
  %v857 = vld [vmem:[%s0 + $0x320] sm:$0xff]
  %v858 = vld [vmem:[%s0 + $0x328] sm:$0xff]
  %v859 = vld [vmem:[%s0 + $0x330] sm:$0xff]
  %v860 = vld [vmem:[%s0 + $0x338] sm:$0xff]
  %v861 = vld [vmem:[%s0 + $0x340] sm:$0xff]
  %v862 = vld [vmem:[%s0 + $0x348] sm:$0xff]
  %v863 = vld [vmem:[%s0 + $0x350] sm:$0xff]
  %v864 = vld [vmem:[%s0 + $0x358] sm:$0xff]
  %v865 = vld [vmem:[%s0 + $0x360] sm:$0xff]
  %v866 = vld [vmem:[%s0 + $0x368] sm:$0xff]
  %v867 = vld [vmem:[%s0 + $0x370] sm:$0xff]
  %v868 = vld [vmem:[%s0 + $0x378] sm:$0xff]
  %v869 = vld [vmem:[%s0 + $0x380] sm:$0xff]
  %v870 = vld [vmem:[%s0 + $0x388] sm:$0xff]
  %v871 = vld [vmem:[%s0 + $0x390] sm:$0xff]
  %v872 = vld [vmem:[%s0 + $0x398] sm:$0xff]
  %v873 = vld [vmem:[%s0 + $0x3a0] sm:$0xff]
  %v874 = vld [vmem:[%s0 + $0x3a8] sm:$0xff]
  %v875 = vld [vmem:[%s0 + $0x3b0] sm:$0xff]
  %v876 = vld [vmem:[%s0 + $0x3b8] sm:$0xff]
  %v877 = vld [vmem:[%s0 + $0x3c0] sm:$0xff]
  %v878 = vld [vmem:[%s0 + $0x3c8] sm:$0xff]
  %v879 = vld [vmem:[%s0 + $0x3d0] sm:$0xff]
  %v880 = vsel %vm58, %v839, 0.0
  %881 = vadd.xlane.f32.xlu0 %v880
  %v882 = vpop.xlane.xlu0 %881
  %v883 = vsel %vm58, %v840, 0.0
  %884 = vadd.xlane.f32.xlu0 %v883
  %v885 = vpop.xlane.xlu0 %884
  %v886 = vsel %vm58, %v841, 0.0
  %887 = vadd.xlane.f32.xlu0 %v886
  %v888 = vpop.xlane.xlu0 %887
  %v889 = vsel %vm58, %v842, 0.0
  %890 = vadd.xlane.f32.xlu0 %v889
  %v891 = vpop.xlane.xlu0 %890
  %v892 = vsel %vm58, %v843, 0.0
  %893 = vadd.xlane.f32.xlu0 %v892
  %v894 = vpop.xlane.xlu0 %893
  %v895 = vsel %vm58, %v844, 0.0
  %896 = vadd.xlane.f32.xlu0 %v895
  %v897 = vpop.xlane.xlu0 %896
  %v898 = vsel %vm58, %v845, 0.0
  %899 = vadd.xlane.f32.xlu0 %v898
  %v900 = vpop.xlane.xlu0 %899
  %v901 = vsel %vm58, %v846, 0.0
  %902 = vadd.xlane.f32.xlu0 %v901
  %v903 = vpop.xlane.xlu0 %902
  %v904 = vsel %vm58, %v847, 0.0
  %905 = vadd.xlane.f32.xlu0 %v904
  %v906 = vpop.xlane.xlu0 %905
  %v907 = vsel %vm58, %v848, 0.0
  %908 = vadd.xlane.f32.xlu0 %v907
  %v909 = vpop.xlane.xlu0 %908
  %v910 = vsel %vm58, %v849, 0.0
  %911 = vadd.xlane.f32.xlu0 %v910
  %v912 = vpop.xlane.xlu0 %911
  %v913 = vsel %vm58, %v850, 0.0
  %914 = vadd.xlane.f32.xlu0 %v913
  %v915 = vpop.xlane.xlu0 %914
  %v916 = vsel %vm58, %v851, 0.0
  %917 = vadd.xlane.f32.xlu0 %v916
  %v918 = vpop.xlane.xlu0 %917
  %v919 = vsel %vm58, %v852, 0.0
  %920 = vadd.xlane.f32.xlu0 %v919
  %v921 = vpop.xlane.xlu0 %920
  %v922 = vsel %vm58, %v853, 0.0
  %923 = vadd.xlane.f32.xlu0 %v922
  %v924 = vpop.xlane.xlu0 %923
  %v925 = vsel %vm58, %v854, 0.0
  %926 = vadd.xlane.f32.xlu0 %v925
  %v927 = vpop.xlane.xlu0 %926
  %v928 = vsel %vm58, %v855, 0.0
  %929 = vadd.xlane.f32.xlu0 %v928
  %v930 = vpop.xlane.xlu0 %929
  %v931 = vsel %vm58, %v856, 0.0
  %932 = vadd.xlane.f32.xlu0 %v931
  %v933 = vpop.xlane.xlu0 %932
  %v934 = vsel %vm58, %v857, 0.0
  %935 = vadd.xlane.f32.xlu0 %v934
  %v936 = vpop.xlane.xlu0 %935
  %v937 = vsel %vm58, %v858, 0.0
  %938 = vadd.xlane.f32.xlu0 %v937
  %v939 = vpop.xlane.xlu0 %938
  %v940 = vsel %vm58, %v859, 0.0
  %941 = vadd.xlane.f32.xlu0 %v940
  %v942 = vpop.xlane.xlu0 %941
  %v943 = vsel %vm58, %v860, 0.0
  %944 = vadd.xlane.f32.xlu0 %v943
  %v945 = vpop.xlane.xlu0 %944
  %v946 = vsel %vm58, %v861, 0.0
  %947 = vadd.xlane.f32.xlu0 %v946
  %v948 = vpop.xlane.xlu0 %947
  %v949 = vsel %vm58, %v862, 0.0
  %950 = vadd.xlane.f32.xlu0 %v949
  %v951 = vpop.xlane.xlu0 %950
  %v952 = vsel %vm58, %v863, 0.0
  %953 = vadd.xlane.f32.xlu0 %v952
  %v954 = vpop.xlane.xlu0 %953
  %v955 = vsel %vm58, %v864, 0.0
  %956 = vadd.xlane.f32.xlu0 %v955
  %v957 = vpop.xlane.xlu0 %956
  %v958 = vsel %vm58, %v865, 0.0
  %959 = vadd.xlane.f32.xlu0 %v958
  %v960 = vpop.xlane.xlu0 %959
  %v961 = vsel %vm58, %v866, 0.0
  %962 = vadd.xlane.f32.xlu0 %v961
  %v963 = vpop.xlane.xlu0 %962
  %v964 = vsel %vm58, %v867, 0.0
  %965 = vadd.xlane.f32.xlu0 %v964
  %v966 = vpop.xlane.xlu0 %965
  %v967 = vsel %vm58, %v868, 0.0
  %968 = vadd.xlane.f32.xlu0 %v967
  %v969 = vpop.xlane.xlu0 %968
  %v970 = vsel %vm58, %v869, 0.0
  %971 = vadd.xlane.f32.xlu0 %v970
  %v972 = vpop.xlane.xlu0 %971
  %v973 = vsel %vm58, %v870, 0.0
  %974 = vadd.xlane.f32.xlu0 %v973
  %v975 = vpop.xlane.xlu0 %974
  %v976 = vsel %vm58, %v871, 0.0
  %977 = vadd.xlane.f32.xlu0 %v976
  %v978 = vpop.xlane.xlu0 %977
  %v979 = vsel %vm58, %v872, 0.0
  %980 = vadd.xlane.f32.xlu0 %v979
  %v981 = vpop.xlane.xlu0 %980
  %v982 = vsel %vm58, %v873, 0.0
  %983 = vadd.xlane.f32.xlu0 %v982
  %v984 = vpop.xlane.xlu0 %983
  %v985 = vsel %vm58, %v874, 0.0
  %986 = vadd.xlane.f32.xlu0 %v985
  %v987 = vpop.xlane.xlu0 %986
  %v988 = vsel %vm58, %v875, 0.0
  %989 = vadd.xlane.f32.xlu0 %v988
  %v990 = vpop.xlane.xlu0 %989
  %v991 = vsel %vm58, %v876, 0.0
  %992 = vadd.xlane.f32.xlu0 %v991
  %v993 = vpop.xlane.xlu0 %992
  %v994 = vsel %vm58, %v877, 0.0
  %995 = vadd.xlane.f32.xlu0 %v994
  %v996 = vpop.xlane.xlu0 %995
  %v997 = vsel %vm58, %v878, 0.0
  %998 = vadd.xlane.f32.xlu0 %v997
  %v999 = vpop.xlane.xlu0 %998
  %v1000 = vsel %vm58, %v879, 0.0
  %1001 = vadd.xlane.f32.xlu0 %v1000
  %v1002 = vpop.xlane.xlu0 %1001
  %1003 = vst.msk [vmem:[#allocation2 + $0x290] sm:$0xff] %vm182, %v882
  %1004 = vst.msk [vmem:[#allocation2 + $0x298] sm:$0xff] %vm182, %v885
  %1005 = vst.msk [vmem:[#allocation2 + $0x2a0] sm:$0xff] %vm182, %v888
  %1006 = vst.msk [vmem:[#allocation2 + $0x2a8] sm:$0xff] %vm182, %v891
  %1007 = vst.msk [vmem:[#allocation2 + $0x2b0] sm:$0xff] %vm182, %v894
  %1008 = vst.msk [vmem:[#allocation2 + $0x2b8] sm:$0xff] %vm182, %v897
  %1009 = vst.msk [vmem:[#allocation2 + $0x2c0] sm:$0xff] %vm182, %v900
  %1010 = vst.msk [vmem:[#allocation2 + $0x2c8] sm:$0xff] %vm182, %v903
  %1011 = vst.msk [vmem:[#allocation2 + $0x2d0] sm:$0xff] %vm182, %v906
  %1012 = vst.msk [vmem:[#allocation2 + $0x2d8] sm:$0xff] %vm182, %v909
  %1013 = vst.msk [vmem:[#allocation2 + $0x2e0] sm:$0xff] %vm182, %v912
  %1014 = vst.msk [vmem:[#allocation2 + $0x2e8] sm:$0xff] %vm182, %v915
  %1015 = vst.msk [vmem:[#allocation2 + $0x2f0] sm:$0xff] %vm182, %v918
  %1016 = vst.msk [vmem:[#allocation2 + $0x2f8] sm:$0xff] %vm182, %v921
  %1017 = vst.msk [vmem:[#allocation2 + $0x300] sm:$0xff] %vm182, %v924
  %1018 = vst.msk [vmem:[#allocation2 + $0x308] sm:$0xff] %vm182, %v927
  %1019 = vst.msk [vmem:[#allocation2 + $0x310] sm:$0xff] %vm182, %v930
  %1020 = vst.msk [vmem:[#allocation2 + $0x318] sm:$0xff] %vm182, %v933
  %1021 = vst.msk [vmem:[#allocation2 + $0x320] sm:$0xff] %vm182, %v936
  %1022 = vst.msk [vmem:[#allocation2 + $0x328] sm:$0xff] %vm182, %v939
  %1023 = vst.msk [vmem:[#allocation2 + $0x330] sm:$0xff] %vm182, %v942
  %1024 = vst.msk [vmem:[#allocation2 + $0x338] sm:$0xff] %vm182, %v945
  %1025 = vst.msk [vmem:[#allocation2 + $0x340] sm:$0xff] %vm182, %v948
  %1026 = vst.msk [vmem:[#allocation2 + $0x348] sm:$0xff] %vm182, %v951
  %1027 = vst.msk [vmem:[#allocation2 + $0x350] sm:$0xff] %vm182, %v954
  %1028 = vst.msk [vmem:[#allocation2 + $0x358] sm:$0xff] %vm182, %v957
  %1029 = vst.msk [vmem:[#allocation2 + $0x360] sm:$0xff] %vm182, %v960
  %1030 = vst.msk [vmem:[#allocation2 + $0x368] sm:$0xff] %vm182, %v963
  %1031 = vst.msk [vmem:[#allocation2 + $0x370] sm:$0xff] %vm182, %v966
  %1032 = vst.msk [vmem:[#allocation2 + $0x378] sm:$0xff] %vm182, %v969
  %1033 = vst.msk [vmem:[#allocation2 + $0x380] sm:$0xff] %vm182, %v972
  %1034 = vst.msk [vmem:[#allocation2 + $0x388] sm:$0xff] %vm182, %v975
  %1035 = vst.msk [vmem:[#allocation2 + $0x390] sm:$0xff] %vm182, %v978
  %1036 = vst.msk [vmem:[#allocation2 + $0x398] sm:$0xff] %vm182, %v981
  %1037 = vst.msk [vmem:[#allocation2 + $0x3a0] sm:$0xff] %vm182, %v984
  %1038 = vst.msk [vmem:[#allocation2 + $0x3a8] sm:$0xff] %vm182, %v987
  %1039 = vst.msk [vmem:[#allocation2 + $0x3b0] sm:$0xff] %vm182, %v990
  %1040 = vst.msk [vmem:[#allocation2 + $0x3b8] sm:$0xff] %vm182, %v993
  %1041 = vst.msk [vmem:[#allocation2 + $0x3c0] sm:$0xff] %vm182, %v996
  %1042 = vst.msk [vmem:[#allocation2 + $0x3c8] sm:$0xff] %vm182, %v999
  %1043 = vst.msk [vmem:[#allocation2 + $0x3d0] sm:$0xff] %vm182, %v1002
  %v1044 = vmul.f32 %v839, %v839
  %v1045 = vmul.f32 %v840, %v840
  %v1046 = vmul.f32 %v841, %v841
  %v1047 = vmul.f32 %v842, %v842
  %v1048 = vmul.f32 %v843, %v843
  %v1049 = vmul.f32 %v844, %v844
  %v1050 = vmul.f32 %v845, %v845
  %v1051 = vmul.f32 %v846, %v846
  %v1052 = vmul.f32 %v847, %v847
  %v1053 = vmul.f32 %v848, %v848
  %v1054 = vmul.f32 %v849, %v849
  %v1055 = vmul.f32 %v850, %v850
  %v1056 = vmul.f32 %v851, %v851
  %v1057 = vmul.f32 %v852, %v852
  %v1058 = vmul.f32 %v853, %v853
  %v1059 = vmul.f32 %v854, %v854
  %v1060 = vmul.f32 %v855, %v855
  %v1061 = vmul.f32 %v856, %v856
  %v1062 = vmul.f32 %v857, %v857
  %v1063 = vmul.f32 %v858, %v858
  %v1064 = vmul.f32 %v859, %v859
  %v1065 = vmul.f32 %v860, %v860
  %v1066 = vmul.f32 %v861, %v861
  %v1067 = vmul.f32 %v862, %v862
  %v1068 = vmul.f32 %v863, %v863
  %v1069 = vmul.f32 %v864, %v864
  %v1070 = vmul.f32 %v865, %v865
  %v1071 = vmul.f32 %v866, %v866
  %v1072 = vmul.f32 %v867, %v867
  %v1073 = vmul.f32 %v868, %v868
  %v1074 = vmul.f32 %v869, %v869
  %v1075 = vmul.f32 %v870, %v870
  %v1076 = vmul.f32 %v871, %v871
  %v1077 = vmul.f32 %v872, %v872
  %v1078 = vmul.f32 %v873, %v873
  %v1079 = vmul.f32 %v874, %v874
  %v1080 = vmul.f32 %v875, %v875
  %v1081 = vmul.f32 %v876, %v876
  %v1082 = vmul.f32 %v877, %v877
  %v1083 = vmul.f32 %v878, %v878
  %v1084 = vmul.f32 %v879, %v879
  %v1085 = vsel %vm58, %v1044, 0.0
  %1086 = vadd.xlane.f32.xlu0 %v1085
  %v1087 = vpop.xlane.xlu0 %1086
  %v1088 = vsel %vm58, %v1045, 0.0
  %1089 = vadd.xlane.f32.xlu0 %v1088
  %v1090 = vpop.xlane.xlu0 %1089
  %v1091 = vsel %vm58, %v1046, 0.0
  %1092 = vadd.xlane.f32.xlu0 %v1091
  %v1093 = vpop.xlane.xlu0 %1092
  %v1094 = vsel %vm58, %v1047, 0.0
  %1095 = vadd.xlane.f32.xlu0 %v1094
  %v1096 = vpop.xlane.xlu0 %1095
  %v1097 = vsel %vm58, %v1048, 0.0
  %1098 = vadd.xlane.f32.xlu0 %v1097
  %v1099 = vpop.xlane.xlu0 %1098
  %v1100 = vsel %vm58, %v1049, 0.0
  %1101 = vadd.xlane.f32.xlu0 %v1100
  %v1102 = vpop.xlane.xlu0 %1101
  %v1103 = vsel %vm58, %v1050, 0.0
  %1104 = vadd.xlane.f32.xlu0 %v1103
  %v1105 = vpop.xlane.xlu0 %1104
  %v1106 = vsel %vm58, %v1051, 0.0
  %1107 = vadd.xlane.f32.xlu0 %v1106
  %v1108 = vpop.xlane.xlu0 %1107
  %v1109 = vsel %vm58, %v1052, 0.0
  %1110 = vadd.xlane.f32.xlu0 %v1109
  %v1111 = vpop.xlane.xlu0 %1110
  %v1112 = vsel %vm58, %v1053, 0.0
  %1113 = vadd.xlane.f32.xlu0 %v1112
  %v1114 = vpop.xlane.xlu0 %1113
  %v1115 = vsel %vm58, %v1054, 0.0
  %1116 = vadd.xlane.f32.xlu0 %v1115
  %v1117 = vpop.xlane.xlu0 %1116
  %v1118 = vsel %vm58, %v1055, 0.0
  %1119 = vadd.xlane.f32.xlu0 %v1118
  %v1120 = vpop.xlane.xlu0 %1119
  %v1121 = vsel %vm58, %v1056, 0.0
  %1122 = vadd.xlane.f32.xlu0 %v1121
  %v1123 = vpop.xlane.xlu0 %1122
  %v1124 = vsel %vm58, %v1057, 0.0
  %1125 = vadd.xlane.f32.xlu0 %v1124
  %v1126 = vpop.xlane.xlu0 %1125
  %v1127 = vsel %vm58, %v1058, 0.0
  %1128 = vadd.xlane.f32.xlu0 %v1127
  %v1129 = vpop.xlane.xlu0 %1128
  %v1130 = vsel %vm58, %v1059, 0.0
  %1131 = vadd.xlane.f32.xlu0 %v1130
  %v1132 = vpop.xlane.xlu0 %1131
  %v1133 = vsel %vm58, %v1060, 0.0
  %1134 = vadd.xlane.f32.xlu0 %v1133
  %v1135 = vpop.xlane.xlu0 %1134
  %v1136 = vsel %vm58, %v1061, 0.0
  %1137 = vadd.xlane.f32.xlu0 %v1136
  %v1138 = vpop.xlane.xlu0 %1137
  %v1139 = vsel %vm58, %v1062, 0.0
  %1140 = vadd.xlane.f32.xlu0 %v1139
  %v1141 = vpop.xlane.xlu0 %1140
  %v1142 = vsel %vm58, %v1063, 0.0
  %1143 = vadd.xlane.f32.xlu0 %v1142
  %v1144 = vpop.xlane.xlu0 %1143
  %v1145 = vsel %vm58, %v1064, 0.0
  %1146 = vadd.xlane.f32.xlu0 %v1145
  %v1147 = vpop.xlane.xlu0 %1146
  %v1148 = vsel %vm58, %v1065, 0.0
  %1149 = vadd.xlane.f32.xlu0 %v1148
  %v1150 = vpop.xlane.xlu0 %1149
  %v1151 = vsel %vm58, %v1066, 0.0
  %1152 = vadd.xlane.f32.xlu0 %v1151
  %v1153 = vpop.xlane.xlu0 %1152
  %v1154 = vsel %vm58, %v1067, 0.0
  %1155 = vadd.xlane.f32.xlu0 %v1154
  %v1156 = vpop.xlane.xlu0 %1155
  %v1157 = vsel %vm58, %v1068, 0.0
  %1158 = vadd.xlane.f32.xlu0 %v1157
  %v1159 = vpop.xlane.xlu0 %1158
  %v1160 = vsel %vm58, %v1069, 0.0
  %1161 = vadd.xlane.f32.xlu0 %v1160
  %v1162 = vpop.xlane.xlu0 %1161
  %v1163 = vsel %vm58, %v1070, 0.0
  %1164 = vadd.xlane.f32.xlu0 %v1163
  %v1165 = vpop.xlane.xlu0 %1164
  %v1166 = vsel %vm58, %v1071, 0.0
  %1167 = vadd.xlane.f32.xlu0 %v1166
  %v1168 = vpop.xlane.xlu0 %1167
  %v1169 = vsel %vm58, %v1072, 0.0
  %1170 = vadd.xlane.f32.xlu0 %v1169
  %v1171 = vpop.xlane.xlu0 %1170
  %v1172 = vsel %vm58, %v1073, 0.0
  %1173 = vadd.xlane.f32.xlu0 %v1172
  %v1174 = vpop.xlane.xlu0 %1173
  %v1175 = vsel %vm58, %v1074, 0.0
  %1176 = vadd.xlane.f32.xlu0 %v1175
  %v1177 = vpop.xlane.xlu0 %1176
  %v1178 = vsel %vm58, %v1075, 0.0
  %1179 = vadd.xlane.f32.xlu0 %v1178
  %v1180 = vpop.xlane.xlu0 %1179
  %v1181 = vsel %vm58, %v1076, 0.0
  %1182 = vadd.xlane.f32.xlu0 %v1181
  %v1183 = vpop.xlane.xlu0 %1182
  %v1184 = vsel %vm58, %v1077, 0.0
  %1185 = vadd.xlane.f32.xlu0 %v1184
  %v1186 = vpop.xlane.xlu0 %1185
  %v1187 = vsel %vm58, %v1078, 0.0
  %1188 = vadd.xlane.f32.xlu0 %v1187
  %v1189 = vpop.xlane.xlu0 %1188
  %v1190 = vsel %vm58, %v1079, 0.0
  %1191 = vadd.xlane.f32.xlu0 %v1190
  %v1192 = vpop.xlane.xlu0 %1191
  %v1193 = vsel %vm58, %v1080, 0.0
  %1194 = vadd.xlane.f32.xlu0 %v1193
  %v1195 = vpop.xlane.xlu0 %1194
  %v1196 = vsel %vm58, %v1081, 0.0
  %1197 = vadd.xlane.f32.xlu0 %v1196
  %v1198 = vpop.xlane.xlu0 %1197
  %v1199 = vsel %vm58, %v1082, 0.0
  %1200 = vadd.xlane.f32.xlu0 %v1199
  %v1201 = vpop.xlane.xlu0 %1200
  %v1202 = vsel %vm58, %v1083, 0.0
  %1203 = vadd.xlane.f32.xlu0 %v1202
  %v1204 = vpop.xlane.xlu0 %1203
  %v1205 = vsel %vm58, %v1084, 0.0
  %1206 = vadd.xlane.f32.xlu0 %v1205
  %v1207 = vpop.xlane.xlu0 %1206
  %1208 = vst.msk [vmem:[#allocation3 + $0x290] sm:$0xff] %vm182, %v1087
  %1209 = vst.msk [vmem:[#allocation3 + $0x298] sm:$0xff] %vm182, %v1090
  %1210 = vst.msk [vmem:[#allocation3 + $0x2a0] sm:$0xff] %vm182, %v1093
  %1211 = vst.msk [vmem:[#allocation3 + $0x2a8] sm:$0xff] %vm182, %v1096
  %1212 = vst.msk [vmem:[#allocation3 + $0x2b0] sm:$0xff] %vm182, %v1099
  %1213 = vst.msk [vmem:[#allocation3 + $0x2b8] sm:$0xff] %vm182, %v1102
  %1214 = vst.msk [vmem:[#allocation3 + $0x2c0] sm:$0xff] %vm182, %v1105
  %1215 = vst.msk [vmem:[#allocation3 + $0x2c8] sm:$0xff] %vm182, %v1108
  %1216 = vst.msk [vmem:[#allocation3 + $0x2d0] sm:$0xff] %vm182, %v1111
  %1217 = vst.msk [vmem:[#allocation3 + $0x2d8] sm:$0xff] %vm182, %v1114
  %1218 = vst.msk [vmem:[#allocation3 + $0x2e0] sm:$0xff] %vm182, %v1117
  %1219 = vst.msk [vmem:[#allocation3 + $0x2e8] sm:$0xff] %vm182, %v1120
  %1220 = vst.msk [vmem:[#allocation3 + $0x2f0] sm:$0xff] %vm182, %v1123
  %1221 = vst.msk [vmem:[#allocation3 + $0x2f8] sm:$0xff] %vm182, %v1126
  %1222 = vst.msk [vmem:[#allocation3 + $0x300] sm:$0xff] %vm182, %v1129
  %1223 = vst.msk [vmem:[#allocation3 + $0x308] sm:$0xff] %vm182, %v1132
  %1224 = vst.msk [vmem:[#allocation3 + $0x310] sm:$0xff] %vm182, %v1135
  %1225 = vst.msk [vmem:[#allocation3 + $0x318] sm:$0xff] %vm182, %v1138
  %1226 = vst.msk [vmem:[#allocation3 + $0x320] sm:$0xff] %vm182, %v1141
  %1227 = vst.msk [vmem:[#allocation3 + $0x328] sm:$0xff] %vm182, %v1144
  %1228 = vst.msk [vmem:[#allocation3 + $0x330] sm:$0xff] %vm182, %v1147
  %1229 = vst.msk [vmem:[#allocation3 + $0x338] sm:$0xff] %vm182, %v1150
  %1230 = vst.msk [vmem:[#allocation3 + $0x340] sm:$0xff] %vm182, %v1153
  %1231 = vst.msk [vmem:[#allocation3 + $0x348] sm:$0xff] %vm182, %v1156
  %1232 = vst.msk [vmem:[#allocation3 + $0x350] sm:$0xff] %vm182, %v1159
  %1233 = vst.msk [vmem:[#allocation3 + $0x358] sm:$0xff] %vm182, %v1162
  %1234 = vst.msk [vmem:[#allocation3 + $0x360] sm:$0xff] %vm182, %v1165
  %1235 = vst.msk [vmem:[#allocation3 + $0x368] sm:$0xff] %vm182, %v1168
  %1236 = vst.msk [vmem:[#allocation3 + $0x370] sm:$0xff] %vm182, %v1171
  %1237 = vst.msk [vmem:[#allocation3 + $0x378] sm:$0xff] %vm182, %v1174
  %1238 = vst.msk [vmem:[#allocation3 + $0x380] sm:$0xff] %vm182, %v1177
  %1239 = vst.msk [vmem:[#allocation3 + $0x388] sm:$0xff] %vm182, %v1180
  %1240 = vst.msk [vmem:[#allocation3 + $0x390] sm:$0xff] %vm182, %v1183
  %1241 = vst.msk [vmem:[#allocation3 + $0x398] sm:$0xff] %vm182, %v1186
  %1242 = vst.msk [vmem:[#allocation3 + $0x3a0] sm:$0xff] %vm182, %v1189
  %1243 = vst.msk [vmem:[#allocation3 + $0x3a8] sm:$0xff] %vm182, %v1192
  %1244 = vst.msk [vmem:[#allocation3 + $0x3b0] sm:$0xff] %vm182, %v1195
  %1245 = vst.msk [vmem:[#allocation3 + $0x3b8] sm:$0xff] %vm182, %v1198
  %1246 = vst.msk [vmem:[#allocation3 + $0x3c0] sm:$0xff] %vm182, %v1201
  %1247 = vst.msk [vmem:[#allocation3 + $0x3c8] sm:$0xff] %vm182, %v1204
  %1248 = vst.msk [vmem:[#allocation3 + $0x3d0] sm:$0xff] %vm182, %v1207
  %v1249 = vld [vmem:[%s0 + $0x3d8] sm:$0xff]
  %v1250 = vld [vmem:[%s0 + $0x3e0] sm:$0xff]
  %v1251 = vld [vmem:[%s0 + $0x3e8] sm:$0xff]
  %v1252 = vld [vmem:[%s0 + $0x3f0] sm:$0xff]
  %v1253 = vld [vmem:[%s0 + $0x3f8] sm:$0xff]
  %v1254 = vld [vmem:[%s0 + $0x400] sm:$0xff]
  %v1255 = vld [vmem:[%s0 + $0x408] sm:$0xff]
  %v1256 = vld [vmem:[%s0 + $0x410] sm:$0xff]
  %v1257 = vld [vmem:[%s0 + $0x418] sm:$0xff]
  %v1258 = vld [vmem:[%s0 + $0x420] sm:$0xff]
  %v1259 = vld [vmem:[%s0 + $0x428] sm:$0xff]
  %v1260 = vld [vmem:[%s0 + $0x430] sm:$0xff]
  %v1261 = vld [vmem:[%s0 + $0x438] sm:$0xff]
  %v1262 = vld [vmem:[%s0 + $0x440] sm:$0xff]
  %v1263 = vld [vmem:[%s0 + $0x448] sm:$0xff]
  %v1264 = vld [vmem:[%s0 + $0x450] sm:$0xff]
  %v1265 = vld [vmem:[%s0 + $0x458] sm:$0xff]
  %v1266 = vld [vmem:[%s0 + $0x460] sm:$0xff]
  %v1267 = vld [vmem:[%s0 + $0x468] sm:$0xff]
  %v1268 = vld [vmem:[%s0 + $0x470] sm:$0xff]
  %v1269 = vld [vmem:[%s0 + $0x478] sm:$0xff]
  %v1270 = vld [vmem:[%s0 + $0x480] sm:$0xff]
  %v1271 = vld [vmem:[%s0 + $0x488] sm:$0xff]
  %v1272 = vld [vmem:[%s0 + $0x490] sm:$0xff]
  %v1273 = vld [vmem:[%s0 + $0x498] sm:$0xff]
  %v1274 = vld [vmem:[%s0 + $0x4a0] sm:$0xff]
  %v1275 = vld [vmem:[%s0 + $0x4a8] sm:$0xff]
  %v1276 = vld [vmem:[%s0 + $0x4b0] sm:$0xff]
  %v1277 = vld [vmem:[%s0 + $0x4b8] sm:$0xff]
  %v1278 = vld [vmem:[%s0 + $0x4c0] sm:$0xff]
  %v1279 = vld [vmem:[%s0 + $0x4c8] sm:$0xff]
  %v1280 = vld [vmem:[%s0 + $0x4d0] sm:$0xff]
  %v1281 = vld [vmem:[%s0 + $0x4d8] sm:$0xff]
  %v1282 = vld [vmem:[%s0 + $0x4e0] sm:$0xff]
  %v1283 = vld [vmem:[%s0 + $0x4e8] sm:$0xff]
  %v1284 = vld [vmem:[%s0 + $0x4f0] sm:$0xff]
  %v1285 = vld [vmem:[%s0 + $0x4f8] sm:$0xff]
  %v1286 = vld [vmem:[%s0 + $0x500] sm:$0xff]
  %v1287 = vld [vmem:[%s0 + $0x508] sm:$0xff]
  %v1288 = vld [vmem:[%s0 + $0x510] sm:$0xff]
  %v1289 = vld [vmem:[%s0 + $0x518] sm:$0xff]
  %v1290 = vsel %vm58, %v1249, 0.0
  %1291 = vadd.xlane.f32.xlu0 %v1290
  %v1292 = vpop.xlane.xlu0 %1291
  %v1293 = vsel %vm58, %v1250, 0.0
  %1294 = vadd.xlane.f32.xlu0 %v1293
  %v1295 = vpop.xlane.xlu0 %1294
  %v1296 = vsel %vm58, %v1251, 0.0
  %1297 = vadd.xlane.f32.xlu0 %v1296
  %v1298 = vpop.xlane.xlu0 %1297
  %v1299 = vsel %vm58, %v1252, 0.0
  %1300 = vadd.xlane.f32.xlu0 %v1299
  %v1301 = vpop.xlane.xlu0 %1300
  %v1302 = vsel %vm58, %v1253, 0.0
  %1303 = vadd.xlane.f32.xlu0 %v1302
  %v1304 = vpop.xlane.xlu0 %1303
  %v1305 = vsel %vm58, %v1254, 0.0
  %1306 = vadd.xlane.f32.xlu0 %v1305
  %v1307 = vpop.xlane.xlu0 %1306
  %v1308 = vsel %vm58, %v1255, 0.0
  %1309 = vadd.xlane.f32.xlu0 %v1308
  %v1310 = vpop.xlane.xlu0 %1309
  %v1311 = vsel %vm58, %v1256, 0.0
  %1312 = vadd.xlane.f32.xlu0 %v1311
  %v1313 = vpop.xlane.xlu0 %1312
  %v1314 = vsel %vm58, %v1257, 0.0
  %1315 = vadd.xlane.f32.xlu0 %v1314
  %v1316 = vpop.xlane.xlu0 %1315
  %v1317 = vsel %vm58, %v1258, 0.0
  %1318 = vadd.xlane.f32.xlu0 %v1317
  %v1319 = vpop.xlane.xlu0 %1318
  %v1320 = vsel %vm58, %v1259, 0.0
  %1321 = vadd.xlane.f32.xlu0 %v1320
  %v1322 = vpop.xlane.xlu0 %1321
  %v1323 = vsel %vm58, %v1260, 0.0
  %1324 = vadd.xlane.f32.xlu0 %v1323
  %v1325 = vpop.xlane.xlu0 %1324
  %v1326 = vsel %vm58, %v1261, 0.0
  %1327 = vadd.xlane.f32.xlu0 %v1326
  %v1328 = vpop.xlane.xlu0 %1327
  %v1329 = vsel %vm58, %v1262, 0.0
  %1330 = vadd.xlane.f32.xlu0 %v1329
  %v1331 = vpop.xlane.xlu0 %1330
  %v1332 = vsel %vm58, %v1263, 0.0
  %1333 = vadd.xlane.f32.xlu0 %v1332
  %v1334 = vpop.xlane.xlu0 %1333
  %v1335 = vsel %vm58, %v1264, 0.0
  %1336 = vadd.xlane.f32.xlu0 %v1335
  %v1337 = vpop.xlane.xlu0 %1336
  %v1338 = vsel %vm58, %v1265, 0.0
  %1339 = vadd.xlane.f32.xlu0 %v1338
  %v1340 = vpop.xlane.xlu0 %1339
  %v1341 = vsel %vm58, %v1266, 0.0
  %1342 = vadd.xlane.f32.xlu0 %v1341
  %v1343 = vpop.xlane.xlu0 %1342
  %v1344 = vsel %vm58, %v1267, 0.0
  %1345 = vadd.xlane.f32.xlu0 %v1344
  %v1346 = vpop.xlane.xlu0 %1345
  %v1347 = vsel %vm58, %v1268, 0.0
  %1348 = vadd.xlane.f32.xlu0 %v1347
  %v1349 = vpop.xlane.xlu0 %1348
  %v1350 = vsel %vm58, %v1269, 0.0
  %1351 = vadd.xlane.f32.xlu0 %v1350
  %v1352 = vpop.xlane.xlu0 %1351
  %v1353 = vsel %vm58, %v1270, 0.0
  %1354 = vadd.xlane.f32.xlu0 %v1353
  %v1355 = vpop.xlane.xlu0 %1354
  %v1356 = vsel %vm58, %v1271, 0.0
  %1357 = vadd.xlane.f32.xlu0 %v1356
  %v1358 = vpop.xlane.xlu0 %1357
  %v1359 = vsel %vm58, %v1272, 0.0
  %1360 = vadd.xlane.f32.xlu0 %v1359
  %v1361 = vpop.xlane.xlu0 %1360
  %v1362 = vsel %vm58, %v1273, 0.0
  %1363 = vadd.xlane.f32.xlu0 %v1362
  %v1364 = vpop.xlane.xlu0 %1363
  %v1365 = vsel %vm58, %v1274, 0.0
  %1366 = vadd.xlane.f32.xlu0 %v1365
  %v1367 = vpop.xlane.xlu0 %1366
  %v1368 = vsel %vm58, %v1275, 0.0
  %1369 = vadd.xlane.f32.xlu0 %v1368
  %v1370 = vpop.xlane.xlu0 %1369
  %v1371 = vsel %vm58, %v1276, 0.0
  %1372 = vadd.xlane.f32.xlu0 %v1371
  %v1373 = vpop.xlane.xlu0 %1372
  %v1374 = vsel %vm58, %v1277, 0.0
  %1375 = vadd.xlane.f32.xlu0 %v1374
  %v1376 = vpop.xlane.xlu0 %1375
  %v1377 = vsel %vm58, %v1278, 0.0
  %1378 = vadd.xlane.f32.xlu0 %v1377
  %v1379 = vpop.xlane.xlu0 %1378
  %v1380 = vsel %vm58, %v1279, 0.0
  %1381 = vadd.xlane.f32.xlu0 %v1380
  %v1382 = vpop.xlane.xlu0 %1381
  %v1383 = vsel %vm58, %v1280, 0.0
  %1384 = vadd.xlane.f32.xlu0 %v1383
  %v1385 = vpop.xlane.xlu0 %1384
  %v1386 = vsel %vm58, %v1281, 0.0
  %1387 = vadd.xlane.f32.xlu0 %v1386
  %v1388 = vpop.xlane.xlu0 %1387
  %v1389 = vsel %vm58, %v1282, 0.0
  %1390 = vadd.xlane.f32.xlu0 %v1389
  %v1391 = vpop.xlane.xlu0 %1390
  %v1392 = vsel %vm58, %v1283, 0.0
  %1393 = vadd.xlane.f32.xlu0 %v1392
  %v1394 = vpop.xlane.xlu0 %1393
  %v1395 = vsel %vm58, %v1284, 0.0
  %1396 = vadd.xlane.f32.xlu0 %v1395
  %v1397 = vpop.xlane.xlu0 %1396
  %v1398 = vsel %vm58, %v1285, 0.0
  %1399 = vadd.xlane.f32.xlu0 %v1398
  %v1400 = vpop.xlane.xlu0 %1399
  %v1401 = vsel %vm58, %v1286, 0.0
  %1402 = vadd.xlane.f32.xlu0 %v1401
  %v1403 = vpop.xlane.xlu0 %1402
  %v1404 = vsel %vm58, %v1287, 0.0
  %1405 = vadd.xlane.f32.xlu0 %v1404
  %v1406 = vpop.xlane.xlu0 %1405
  %v1407 = vsel %vm58, %v1288, 0.0
  %1408 = vadd.xlane.f32.xlu0 %v1407
  %v1409 = vpop.xlane.xlu0 %1408
  %v1410 = vsel %vm58, %v1289, 0.0
  %1411 = vadd.xlane.f32.xlu0 %v1410
  %v1412 = vpop.xlane.xlu0 %1411
  %1413 = vst.msk [vmem:[#allocation2 + $0x3d8] sm:$0xff] %vm182, %v1292
  %1414 = vst.msk [vmem:[#allocation2 + $0x3e0] sm:$0xff] %vm182, %v1295
  %1415 = vst.msk [vmem:[#allocation2 + $0x3e8] sm:$0xff] %vm182, %v1298
  %1416 = vst.msk [vmem:[#allocation2 + $0x3f0] sm:$0xff] %vm182, %v1301
  %1417 = vst.msk [vmem:[#allocation2 + $0x3f8] sm:$0xff] %vm182, %v1304
  %1418 = vst.msk [vmem:[#allocation2 + $0x400] sm:$0xff] %vm182, %v1307
  %1419 = vst.msk [vmem:[#allocation2 + $0x408] sm:$0xff] %vm182, %v1310
  %1420 = vst.msk [vmem:[#allocation2 + $0x410] sm:$0xff] %vm182, %v1313
  %1421 = vst.msk [vmem:[#allocation2 + $0x418] sm:$0xff] %vm182, %v1316
  %1422 = vst.msk [vmem:[#allocation2 + $0x420] sm:$0xff] %vm182, %v1319
  %1423 = vst.msk [vmem:[#allocation2 + $0x428] sm:$0xff] %vm182, %v1322
  %1424 = vst.msk [vmem:[#allocation2 + $0x430] sm:$0xff] %vm182, %v1325
  %1425 = vst.msk [vmem:[#allocation2 + $0x438] sm:$0xff] %vm182, %v1328
  %1426 = vst.msk [vmem:[#allocation2 + $0x440] sm:$0xff] %vm182, %v1331
  %1427 = vst.msk [vmem:[#allocation2 + $0x448] sm:$0xff] %vm182, %v1334
  %1428 = vst.msk [vmem:[#allocation2 + $0x450] sm:$0xff] %vm182, %v1337
  %1429 = vst.msk [vmem:[#allocation2 + $0x458] sm:$0xff] %vm182, %v1340
  %1430 = vst.msk [vmem:[#allocation2 + $0x460] sm:$0xff] %vm182, %v1343
  %1431 = vst.msk [vmem:[#allocation2 + $0x468] sm:$0xff] %vm182, %v1346
  %1432 = vst.msk [vmem:[#allocation2 + $0x470] sm:$0xff] %vm182, %v1349
  %1433 = vst.msk [vmem:[#allocation2 + $0x478] sm:$0xff] %vm182, %v1352
  %1434 = vst.msk [vmem:[#allocation2 + $0x480] sm:$0xff] %vm182, %v1355
  %1435 = vst.msk [vmem:[#allocation2 + $0x488] sm:$0xff] %vm182, %v1358
  %1436 = vst.msk [vmem:[#allocation2 + $0x490] sm:$0xff] %vm182, %v1361
  %1437 = vst.msk [vmem:[#allocation2 + $0x498] sm:$0xff] %vm182, %v1364
  %1438 = vst.msk [vmem:[#allocation2 + $0x4a0] sm:$0xff] %vm182, %v1367
  %1439 = vst.msk [vmem:[#allocation2 + $0x4a8] sm:$0xff] %vm182, %v1370
  %1440 = vst.msk [vmem:[#allocation2 + $0x4b0] sm:$0xff] %vm182, %v1373
  %1441 = vst.msk [vmem:[#allocation2 + $0x4b8] sm:$0xff] %vm182, %v1376
  %1442 = vst.msk [vmem:[#allocation2 + $0x4c0] sm:$0xff] %vm182, %v1379
  %1443 = vst.msk [vmem:[#allocation2 + $0x4c8] sm:$0xff] %vm182, %v1382
  %1444 = vst.msk [vmem:[#allocation2 + $0x4d0] sm:$0xff] %vm182, %v1385
  %1445 = vst.msk [vmem:[#allocation2 + $0x4d8] sm:$0xff] %vm182, %v1388
  %1446 = vst.msk [vmem:[#allocation2 + $0x4e0] sm:$0xff] %vm182, %v1391
  %1447 = vst.msk [vmem:[#allocation2 + $0x4e8] sm:$0xff] %vm182, %v1394
  %1448 = vst.msk [vmem:[#allocation2 + $0x4f0] sm:$0xff] %vm182, %v1397
  %1449 = vst.msk [vmem:[#allocation2 + $0x4f8] sm:$0xff] %vm182, %v1400
  %1450 = vst.msk [vmem:[#allocation2 + $0x500] sm:$0xff] %vm182, %v1403
  %1451 = vst.msk [vmem:[#allocation2 + $0x508] sm:$0xff] %vm182, %v1406
  %1452 = vst.msk [vmem:[#allocation2 + $0x510] sm:$0xff] %vm182, %v1409
  %1453 = vst.msk [vmem:[#allocation2 + $0x518] sm:$0xff] %vm182, %v1412
  %v1454 = vmul.f32 %v1249, %v1249
  %v1455 = vmul.f32 %v1250, %v1250
  %v1456 = vmul.f32 %v1251, %v1251
  %v1457 = vmul.f32 %v1252, %v1252
  %v1458 = vmul.f32 %v1253, %v1253
  %v1459 = vmul.f32 %v1254, %v1254
  %v1460 = vmul.f32 %v1255, %v1255
  %v1461 = vmul.f32 %v1256, %v1256
  %v1462 = vmul.f32 %v1257, %v1257
  %v1463 = vmul.f32 %v1258, %v1258
  %v1464 = vmul.f32 %v1259, %v1259
  %v1465 = vmul.f32 %v1260, %v1260
  %v1466 = vmul.f32 %v1261, %v1261
  %v1467 = vmul.f32 %v1262, %v1262
  %v1468 = vmul.f32 %v1263, %v1263
  %v1469 = vmul.f32 %v1264, %v1264
  %v1470 = vmul.f32 %v1265, %v1265
  %v1471 = vmul.f32 %v1266, %v1266
  %v1472 = vmul.f32 %v1267, %v1267
  %v1473 = vmul.f32 %v1268, %v1268
  %v1474 = vmul.f32 %v1269, %v1269
  %v1475 = vmul.f32 %v1270, %v1270
  %v1476 = vmul.f32 %v1271, %v1271
  %v1477 = vmul.f32 %v1272, %v1272
  %v1478 = vmul.f32 %v1273, %v1273
  %v1479 = vmul.f32 %v1274, %v1274
  %v1480 = vmul.f32 %v1275, %v1275
  %v1481 = vmul.f32 %v1276, %v1276
  %v1482 = vmul.f32 %v1277, %v1277
  %v1483 = vmul.f32 %v1278, %v1278
  %v1484 = vmul.f32 %v1279, %v1279
  %v1485 = vmul.f32 %v1280, %v1280
  %v1486 = vmul.f32 %v1281, %v1281
  %v1487 = vmul.f32 %v1282, %v1282
  %v1488 = vmul.f32 %v1283, %v1283
  %v1489 = vmul.f32 %v1284, %v1284
  %v1490 = vmul.f32 %v1285, %v1285
  %v1491 = vmul.f32 %v1286, %v1286
  %v1492 = vmul.f32 %v1287, %v1287
  %v1493 = vmul.f32 %v1288, %v1288
  %v1494 = vmul.f32 %v1289, %v1289
  %v1495 = vsel %vm58, %v1454, 0.0
  %1496 = vadd.xlane.f32.xlu0 %v1495
  %v1497 = vpop.xlane.xlu0 %1496
  %v1498 = vsel %vm58, %v1455, 0.0
  %1499 = vadd.xlane.f32.xlu0 %v1498
  %v1500 = vpop.xlane.xlu0 %1499
  %v1501 = vsel %vm58, %v1456, 0.0
  %1502 = vadd.xlane.f32.xlu0 %v1501
  %v1503 = vpop.xlane.xlu0 %1502
  %v1504 = vsel %vm58, %v1457, 0.0
  %1505 = vadd.xlane.f32.xlu0 %v1504
  %v1506 = vpop.xlane.xlu0 %1505
  %v1507 = vsel %vm58, %v1458, 0.0
  %1508 = vadd.xlane.f32.xlu0 %v1507
  %v1509 = vpop.xlane.xlu0 %1508
  %v1510 = vsel %vm58, %v1459, 0.0
  %1511 = vadd.xlane.f32.xlu0 %v1510
  %v1512 = vpop.xlane.xlu0 %1511
  %v1513 = vsel %vm58, %v1460, 0.0
  %1514 = vadd.xlane.f32.xlu0 %v1513
  %v1515 = vpop.xlane.xlu0 %1514
  %v1516 = vsel %vm58, %v1461, 0.0
  %1517 = vadd.xlane.f32.xlu0 %v1516
  %v1518 = vpop.xlane.xlu0 %1517
  %v1519 = vsel %vm58, %v1462, 0.0
  %1520 = vadd.xlane.f32.xlu0 %v1519
  %v1521 = vpop.xlane.xlu0 %1520
  %v1522 = vsel %vm58, %v1463, 0.0
  %1523 = vadd.xlane.f32.xlu0 %v1522
  %v1524 = vpop.xlane.xlu0 %1523
  %v1525 = vsel %vm58, %v1464, 0.0
  %1526 = vadd.xlane.f32.xlu0 %v1525
  %v1527 = vpop.xlane.xlu0 %1526
  %v1528 = vsel %vm58, %v1465, 0.0
  %1529 = vadd.xlane.f32.xlu0 %v1528
  %v1530 = vpop.xlane.xlu0 %1529
  %v1531 = vsel %vm58, %v1466, 0.0
  %1532 = vadd.xlane.f32.xlu0 %v1531
  %v1533 = vpop.xlane.xlu0 %1532
  %v1534 = vsel %vm58, %v1467, 0.0
  %1535 = vadd.xlane.f32.xlu0 %v1534
  %v1536 = vpop.xlane.xlu0 %1535
  %v1537 = vsel %vm58, %v1468, 0.0
  %1538 = vadd.xlane.f32.xlu0 %v1537
  %v1539 = vpop.xlane.xlu0 %1538
  %v1540 = vsel %vm58, %v1469, 0.0
  %1541 = vadd.xlane.f32.xlu0 %v1540
  %v1542 = vpop.xlane.xlu0 %1541
  %v1543 = vsel %vm58, %v1470, 0.0
  %1544 = vadd.xlane.f32.xlu0 %v1543
  %v1545 = vpop.xlane.xlu0 %1544
  %v1546 = vsel %vm58, %v1471, 0.0
  %1547 = vadd.xlane.f32.xlu0 %v1546
  %v1548 = vpop.xlane.xlu0 %1547
  %v1549 = vsel %vm58, %v1472, 0.0
  %1550 = vadd.xlane.f32.xlu0 %v1549
  %v1551 = vpop.xlane.xlu0 %1550
  %v1552 = vsel %vm58, %v1473, 0.0
  %1553 = vadd.xlane.f32.xlu0 %v1552
  %v1554 = vpop.xlane.xlu0 %1553
  %v1555 = vsel %vm58, %v1474, 0.0
  %1556 = vadd.xlane.f32.xlu0 %v1555
  %v1557 = vpop.xlane.xlu0 %1556
  %v1558 = vsel %vm58, %v1475, 0.0
  %1559 = vadd.xlane.f32.xlu0 %v1558
  %v1560 = vpop.xlane.xlu0 %1559
  %v1561 = vsel %vm58, %v1476, 0.0
  %1562 = vadd.xlane.f32.xlu0 %v1561
  %v1563 = vpop.xlane.xlu0 %1562
  %v1564 = vsel %vm58, %v1477, 0.0
  %1565 = vadd.xlane.f32.xlu0 %v1564
  %v1566 = vpop.xlane.xlu0 %1565
  %v1567 = vsel %vm58, %v1478, 0.0
  %1568 = vadd.xlane.f32.xlu0 %v1567
  %v1569 = vpop.xlane.xlu0 %1568
  %v1570 = vsel %vm58, %v1479, 0.0
  %1571 = vadd.xlane.f32.xlu0 %v1570
  %v1572 = vpop.xlane.xlu0 %1571
  %v1573 = vsel %vm58, %v1480, 0.0
  %1574 = vadd.xlane.f32.xlu0 %v1573
  %v1575 = vpop.xlane.xlu0 %1574
  %v1576 = vsel %vm58, %v1481, 0.0
  %1577 = vadd.xlane.f32.xlu0 %v1576
  %v1578 = vpop.xlane.xlu0 %1577
  %v1579 = vsel %vm58, %v1482, 0.0
  %1580 = vadd.xlane.f32.xlu0 %v1579
  %v1581 = vpop.xlane.xlu0 %1580
  %v1582 = vsel %vm58, %v1483, 0.0
  %1583 = vadd.xlane.f32.xlu0 %v1582
  %v1584 = vpop.xlane.xlu0 %1583
  %v1585 = vsel %vm58, %v1484, 0.0
  %1586 = vadd.xlane.f32.xlu0 %v1585
  %v1587 = vpop.xlane.xlu0 %1586
  %v1588 = vsel %vm58, %v1485, 0.0
  %1589 = vadd.xlane.f32.xlu0 %v1588
  %v1590 = vpop.xlane.xlu0 %1589
  %v1591 = vsel %vm58, %v1486, 0.0
  %1592 = vadd.xlane.f32.xlu0 %v1591
  %v1593 = vpop.xlane.xlu0 %1592
  %v1594 = vsel %vm58, %v1487, 0.0
  %1595 = vadd.xlane.f32.xlu0 %v1594
  %v1596 = vpop.xlane.xlu0 %1595
  %v1597 = vsel %vm58, %v1488, 0.0
  %1598 = vadd.xlane.f32.xlu0 %v1597
  %v1599 = vpop.xlane.xlu0 %1598
  %v1600 = vsel %vm58, %v1489, 0.0
  %1601 = vadd.xlane.f32.xlu0 %v1600
  %v1602 = vpop.xlane.xlu0 %1601
  %v1603 = vsel %vm58, %v1490, 0.0
  %1604 = vadd.xlane.f32.xlu0 %v1603
  %v1605 = vpop.xlane.xlu0 %1604
  %v1606 = vsel %vm58, %v1491, 0.0
  %1607 = vadd.xlane.f32.xlu0 %v1606
  %v1608 = vpop.xlane.xlu0 %1607
  %v1609 = vsel %vm58, %v1492, 0.0
  %1610 = vadd.xlane.f32.xlu0 %v1609
  %v1611 = vpop.xlane.xlu0 %1610
  %v1612 = vsel %vm58, %v1493, 0.0
  %1613 = vadd.xlane.f32.xlu0 %v1612
  %v1614 = vpop.xlane.xlu0 %1613
  %v1615 = vsel %vm58, %v1494, 0.0
  %1616 = vadd.xlane.f32.xlu0 %v1615
  %v1617 = vpop.xlane.xlu0 %1616
  %1618 = vst.msk [vmem:[#allocation3 + $0x3d8] sm:$0xff] %vm182, %v1497
  %1619 = vst.msk [vmem:[#allocation3 + $0x3e0] sm:$0xff] %vm182, %v1500
  %1620 = vst.msk [vmem:[#allocation3 + $0x3e8] sm:$0xff] %vm182, %v1503
  %1621 = vst.msk [vmem:[#allocation3 + $0x3f0] sm:$0xff] %vm182, %v1506
  %1622 = vst.msk [vmem:[#allocation3 + $0x3f8] sm:$0xff] %vm182, %v1509
  %1623 = vst.msk [vmem:[#allocation3 + $0x400] sm:$0xff] %vm182, %v1512
  %1624 = vst.msk [vmem:[#allocation3 + $0x408] sm:$0xff] %vm182, %v1515
  %1625 = vst.msk [vmem:[#allocation3 + $0x410] sm:$0xff] %vm182, %v1518
  %1626 = vst.msk [vmem:[#allocation3 + $0x418] sm:$0xff] %vm182, %v1521
  %1627 = vst.msk [vmem:[#allocation3 + $0x420] sm:$0xff] %vm182, %v1524
  %1628 = vst.msk [vmem:[#allocation3 + $0x428] sm:$0xff] %vm182, %v1527
  %1629 = vst.msk [vmem:[#allocation3 + $0x430] sm:$0xff] %vm182, %v1530
  %1630 = vst.msk [vmem:[#allocation3 + $0x438] sm:$0xff] %vm182, %v1533
  %1631 = vst.msk [vmem:[#allocation3 + $0x440] sm:$0xff] %vm182, %v1536
  %1632 = vst.msk [vmem:[#allocation3 + $0x448] sm:$0xff] %vm182, %v1539
  %1633 = vst.msk [vmem:[#allocation3 + $0x450] sm:$0xff] %vm182, %v1542
  %1634 = vst.msk [vmem:[#allocation3 + $0x458] sm:$0xff] %vm182, %v1545
  %1635 = vst.msk [vmem:[#allocation3 + $0x460] sm:$0xff] %vm182, %v1548
  %1636 = vst.msk [vmem:[#allocation3 + $0x468] sm:$0xff] %vm182, %v1551
  %1637 = vst.msk [vmem:[#allocation3 + $0x470] sm:$0xff] %vm182, %v1554
  %1638 = vst.msk [vmem:[#allocation3 + $0x478] sm:$0xff] %vm182, %v1557
  %1639 = vst.msk [vmem:[#allocation3 + $0x480] sm:$0xff] %vm182, %v1560
  %1640 = vst.msk [vmem:[#allocation3 + $0x488] sm:$0xff] %vm182, %v1563
  %1641 = vst.msk [vmem:[#allocation3 + $0x490] sm:$0xff] %vm182, %v1566
  %1642 = vst.msk [vmem:[#allocation3 + $0x498] sm:$0xff] %vm182, %v1569
  %1643 = vst.msk [vmem:[#allocation3 + $0x4a0] sm:$0xff] %vm182, %v1572
  %1644 = vst.msk [vmem:[#allocation3 + $0x4a8] sm:$0xff] %vm182, %v1575
  %1645 = vst.msk [vmem:[#allocation3 + $0x4b0] sm:$0xff] %vm182, %v1578
  %1646 = vst.msk [vmem:[#allocation3 + $0x4b8] sm:$0xff] %vm182, %v1581
  %1647 = vst.msk [vmem:[#allocation3 + $0x4c0] sm:$0xff] %vm182, %v1584
  %1648 = vst.msk [vmem:[#allocation3 + $0x4c8] sm:$0xff] %vm182, %v1587
  %1649 = vst.msk [vmem:[#allocation3 + $0x4d0] sm:$0xff] %vm182, %v1590
  %1650 = vst.msk [vmem:[#allocation3 + $0x4d8] sm:$0xff] %vm182, %v1593
  %1651 = vst.msk [vmem:[#allocation3 + $0x4e0] sm:$0xff] %vm182, %v1596
  %1652 = vst.msk [vmem:[#allocation3 + $0x4e8] sm:$0xff] %vm182, %v1599
  %1653 = vst.msk [vmem:[#allocation3 + $0x4f0] sm:$0xff] %vm182, %v1602
  %1654 = vst.msk [vmem:[#allocation3 + $0x4f8] sm:$0xff] %vm182, %v1605
  %1655 = vst.msk [vmem:[#allocation3 + $0x500] sm:$0xff] %vm182, %v1608
  %1656 = vst.msk [vmem:[#allocation3 + $0x508] sm:$0xff] %vm182, %v1611
  %1657 = vst.msk [vmem:[#allocation3 + $0x510] sm:$0xff] %vm182, %v1614
  %1658 = vst.msk [vmem:[#allocation3 + $0x518] sm:$0xff] %vm182, %v1617
  %v1659 = vld [vmem:[#allocation2] sm:$0xff]
  %v1660 = vld [vmem:[#allocation2 + $0x8] sm:$0xff]
  %v1661 = vld [vmem:[#allocation2 + $0x10] sm:$0xff]
  %v1662 = vld [vmem:[#allocation2 + $0x18] sm:$0xff]
  %v1663 = vld [vmem:[#allocation2 + $0x20] sm:$0xff]
  %v1664 = vld [vmem:[#allocation2 + $0x28] sm:$0xff]
  %v1665 = vld [vmem:[#allocation2 + $0x30] sm:$0xff]
  %v1666 = vld [vmem:[#allocation2 + $0x38] sm:$0xff]
  %v1667 = vld [vmem:[#allocation2 + $0x40] sm:$0xff]
  %v1668 = vld [vmem:[#allocation2 + $0x48] sm:$0xff]
  %v1669 = vld [vmem:[#allocation2 + $0x50] sm:$0xff]
  %v1670 = vld [vmem:[#allocation2 + $0x58] sm:$0xff]
  %v1671 = vld [vmem:[#allocation2 + $0x60] sm:$0xff]
  %v1672 = vld [vmem:[#allocation2 + $0x68] sm:$0xff]
  %v1673 = vld [vmem:[#allocation2 + $0x70] sm:$0xff]
  %v1674 = vld [vmem:[#allocation2 + $0x78] sm:$0xff]
  %v1675 = vld [vmem:[#allocation2 + $0x80] sm:$0xff]
  %v1676 = vld [vmem:[#allocation2 + $0x88] sm:$0xff]
  %v1677 = vld [vmem:[#allocation2 + $0x90] sm:$0xff]
  %v1678 = vld [vmem:[#allocation2 + $0x98] sm:$0xff]
  %v1679 = vld [vmem:[#allocation2 + $0xa0] sm:$0xff]
  %v1680 = vld [vmem:[#allocation2 + $0xa8] sm:$0xff]
  %v1681 = vld [vmem:[#allocation2 + $0xb0] sm:$0xff]
  %v1682 = vld [vmem:[#allocation2 + $0xb8] sm:$0xff]
  %v1683 = vld [vmem:[#allocation2 + $0xc0] sm:$0xff]
  %v1684 = vld [vmem:[#allocation2 + $0xc8] sm:$0xff]
  %v1685 = vld [vmem:[#allocation2 + $0xd0] sm:$0xff]
  %v1686 = vld [vmem:[#allocation2 + $0xd8] sm:$0xff]
  %v1687 = vld [vmem:[#allocation2 + $0xe0] sm:$0xff]
  %v1688 = vld [vmem:[#allocation2 + $0xe8] sm:$0xff]
  %v1689 = vld [vmem:[#allocation2 + $0xf0] sm:$0xff]
  %v1690 = vld [vmem:[#allocation2 + $0xf8] sm:$0xff]
  %v1691 = vld [vmem:[#allocation2 + $0x100] sm:$0xff]
  %v1692 = vld [vmem:[#allocation2 + $0x108] sm:$0xff]
  %v1693 = vld [vmem:[#allocation2 + $0x110] sm:$0xff]
  %v1694 = vld [vmem:[#allocation2 + $0x118] sm:$0xff]
  %v1695 = vld [vmem:[#allocation2 + $0x120] sm:$0xff]
  %v1696 = vld [vmem:[#allocation2 + $0x128] sm:$0xff]
  %v1697 = vld [vmem:[#allocation2 + $0x130] sm:$0xff]
  %v1698 = vld [vmem:[#allocation2 + $0x138] sm:$0xff]
  %v1699 = vld [vmem:[#allocation2 + $0x140] sm:$0xff]
  %v1700 = vld [vmem:[#allocation2 + $0x148] sm:$0xff]
  %v1701 = vld [vmem:[#allocation2 + $0x150] sm:$0xff]
  %v1702 = vld [vmem:[#allocation2 + $0x158] sm:$0xff]
  %v1703 = vld [vmem:[#allocation2 + $0x160] sm:$0xff]
  %v1704 = vld [vmem:[#allocation2 + $0x168] sm:$0xff]
  %v1705 = vld [vmem:[#allocation2 + $0x170] sm:$0xff]
  %v1706 = vld [vmem:[#allocation2 + $0x178] sm:$0xff]
  %v1707 = vld [vmem:[#allocation2 + $0x180] sm:$0xff]
  %v1708 = vld [vmem:[#allocation2 + $0x188] sm:$0xff]
  %v1709 = vld [vmem:[#allocation2 + $0x190] sm:$0xff]
  %v1710 = vld [vmem:[#allocation2 + $0x198] sm:$0xff]
  %v1711 = vld [vmem:[#allocation2 + $0x1a0] sm:$0xff]
  %v1712 = vld [vmem:[#allocation2 + $0x1a8] sm:$0xff]
  %v1713 = vld [vmem:[#allocation2 + $0x1b0] sm:$0xff]
  %v1714 = vld [vmem:[#allocation2 + $0x1b8] sm:$0xff]
  %v1715 = vld [vmem:[#allocation2 + $0x1c0] sm:$0xff]
  %v1716 = vld [vmem:[#allocation2 + $0x1c8] sm:$0xff]
  %v1717 = vld [vmem:[#allocation2 + $0x1d0] sm:$0xff]
  %v1718 = vld [vmem:[#allocation2 + $0x1d8] sm:$0xff]
  %v1719 = vld [vmem:[#allocation2 + $0x1e0] sm:$0xff]
  %v1720 = vld [vmem:[#allocation2 + $0x1e8] sm:$0xff]
  %v1721 = vld [vmem:[#allocation2 + $0x1f0] sm:$0xff]
  %v1722 = vld [vmem:[#allocation2 + $0x1f8] sm:$0xff]
  %v1723 = vld [vmem:[#allocation2 + $0x200] sm:$0xff]
  %v1724 = vld [vmem:[#allocation2 + $0x208] sm:$0xff]
  %v1725 = vld [vmem:[#allocation2 + $0x210] sm:$0xff]
  %v1726 = vld [vmem:[#allocation2 + $0x218] sm:$0xff]
  %v1727 = vld [vmem:[#allocation2 + $0x220] sm:$0xff]
  %v1728 = vld [vmem:[#allocation2 + $0x228] sm:$0xff]
  %v1729 = vld [vmem:[#allocation2 + $0x230] sm:$0xff]
  %v1730 = vld [vmem:[#allocation2 + $0x238] sm:$0xff]
  %v1731 = vld [vmem:[#allocation2 + $0x240] sm:$0xff]
  %v1732 = vld [vmem:[#allocation2 + $0x248] sm:$0xff]
  %v1733 = vld [vmem:[#allocation2 + $0x250] sm:$0xff]
  %v1734 = vld [vmem:[#allocation2 + $0x258] sm:$0xff]
  %v1735 = vld [vmem:[#allocation2 + $0x260] sm:$0xff]
  %v1736 = vld [vmem:[#allocation2 + $0x268] sm:$0xff]
  %v1737 = vld [vmem:[#allocation2 + $0x270] sm:$0xff]
  %v1738 = vld [vmem:[#allocation2 + $0x278] sm:$0xff]
  %v1739 = vld [vmem:[#allocation2 + $0x280] sm:$0xff]
  %v1740 = vld [vmem:[#allocation2 + $0x288] sm:$0xff]
  %v1741 = vld [vmem:[#allocation2 + $0x290] sm:$0xff]
  %v1742 = vld [vmem:[#allocation2 + $0x298] sm:$0xff]
  %v1743 = vld [vmem:[#allocation2 + $0x2a0] sm:$0xff]
  %v1744 = vld [vmem:[#allocation2 + $0x2a8] sm:$0xff]
  %v1745 = vld [vmem:[#allocation2 + $0x2b0] sm:$0xff]
  %v1746 = vld [vmem:[#allocation2 + $0x2b8] sm:$0xff]
  %v1747 = vld [vmem:[#allocation2 + $0x2c0] sm:$0xff]
  %v1748 = vld [vmem:[#allocation2 + $0x2c8] sm:$0xff]
  %v1749 = vld [vmem:[#allocation2 + $0x2d0] sm:$0xff]
  %v1750 = vld [vmem:[#allocation2 + $0x2d8] sm:$0xff]
  %v1751 = vld [vmem:[#allocation2 + $0x2e0] sm:$0xff]
  %v1752 = vld [vmem:[#allocation2 + $0x2e8] sm:$0xff]
  %v1753 = vld [vmem:[#allocation2 + $0x2f0] sm:$0xff]
  %v1754 = vld [vmem:[#allocation2 + $0x2f8] sm:$0xff]
  %v1755 = vld [vmem:[#allocation2 + $0x300] sm:$0xff]
  %v1756 = vld [vmem:[#allocation2 + $0x308] sm:$0xff]
  %v1757 = vld [vmem:[#allocation2 + $0x310] sm:$0xff]
  %v1758 = vld [vmem:[#allocation2 + $0x318] sm:$0xff]
  %v1759 = vld [vmem:[#allocation2 + $0x320] sm:$0xff]
  %v1760 = vld [vmem:[#allocation2 + $0x328] sm:$0xff]
  %v1761 = vld [vmem:[#allocation2 + $0x330] sm:$0xff]
  %v1762 = vld [vmem:[#allocation2 + $0x338] sm:$0xff]
  %v1763 = vld [vmem:[#allocation2 + $0x340] sm:$0xff]
  %v1764 = vld [vmem:[#allocation2 + $0x348] sm:$0xff]
  %v1765 = vld [vmem:[#allocation2 + $0x350] sm:$0xff]
  %v1766 = vld [vmem:[#allocation2 + $0x358] sm:$0xff]
  %v1767 = vld [vmem:[#allocation2 + $0x360] sm:$0xff]
  %v1768 = vld [vmem:[#allocation2 + $0x368] sm:$0xff]
  %v1769 = vld [vmem:[#allocation2 + $0x370] sm:$0xff]
  %v1770 = vld [vmem:[#allocation2 + $0x378] sm:$0xff]
  %v1771 = vld [vmem:[#allocation2 + $0x380] sm:$0xff]
  %v1772 = vld [vmem:[#allocation2 + $0x388] sm:$0xff]
  %v1773 = vld [vmem:[#allocation2 + $0x390] sm:$0xff]
  %v1774 = vld [vmem:[#allocation2 + $0x398] sm:$0xff]
  %v1775 = vld [vmem:[#allocation2 + $0x3a0] sm:$0xff]
  %v1776 = vld [vmem:[#allocation2 + $0x3a8] sm:$0xff]
  %v1777 = vld [vmem:[#allocation2 + $0x3b0] sm:$0xff]
  %v1778 = vld [vmem:[#allocation2 + $0x3b8] sm:$0xff]
  %v1779 = vld [vmem:[#allocation2 + $0x3c0] sm:$0xff]
  %v1780 = vld [vmem:[#allocation2 + $0x3c8] sm:$0xff]
  %v1781 = vld [vmem:[#allocation2 + $0x3d0] sm:$0xff]
  %v1782 = vld [vmem:[#allocation2 + $0x3d8] sm:$0xff]
  %v1783 = vld [vmem:[#allocation2 + $0x3e0] sm:$0xff]
  %v1784 = vld [vmem:[#allocation2 + $0x3e8] sm:$0xff]
  %v1785 = vld [vmem:[#allocation2 + $0x3f0] sm:$0xff]
  %v1786 = vld [vmem:[#allocation2 + $0x3f8] sm:$0xff]
  %v1787 = vld [vmem:[#allocation2 + $0x400] sm:$0xff]
  %v1788 = vld [vmem:[#allocation2 + $0x408] sm:$0xff]
  %v1789 = vld [vmem:[#allocation2 + $0x410] sm:$0xff]
  %v1790 = vld [vmem:[#allocation2 + $0x418] sm:$0xff]
  %v1791 = vld [vmem:[#allocation2 + $0x420] sm:$0xff]
  %v1792 = vld [vmem:[#allocation2 + $0x428] sm:$0xff]
  %v1793 = vld [vmem:[#allocation2 + $0x430] sm:$0xff]
  %v1794 = vld [vmem:[#allocation2 + $0x438] sm:$0xff]
  %v1795 = vld [vmem:[#allocation2 + $0x440] sm:$0xff]
  %v1796 = vld [vmem:[#allocation2 + $0x448] sm:$0xff]
  %v1797 = vld [vmem:[#allocation2 + $0x450] sm:$0xff]
  %v1798 = vld [vmem:[#allocation2 + $0x458] sm:$0xff]
  %v1799 = vld [vmem:[#allocation2 + $0x460] sm:$0xff]
  %v1800 = vld [vmem:[#allocation2 + $0x468] sm:$0xff]
  %v1801 = vld [vmem:[#allocation2 + $0x470] sm:$0xff]
  %v1802 = vld [vmem:[#allocation2 + $0x478] sm:$0xff]
  %v1803 = vld [vmem:[#allocation2 + $0x480] sm:$0xff]
  %v1804 = vld [vmem:[#allocation2 + $0x488] sm:$0xff]
  %v1805 = vld [vmem:[#allocation2 + $0x490] sm:$0xff]
  %v1806 = vld [vmem:[#allocation2 + $0x498] sm:$0xff]
  %v1807 = vld [vmem:[#allocation2 + $0x4a0] sm:$0xff]
  %v1808 = vld [vmem:[#allocation2 + $0x4a8] sm:$0xff]
  %v1809 = vld [vmem:[#allocation2 + $0x4b0] sm:$0xff]
  %v1810 = vld [vmem:[#allocation2 + $0x4b8] sm:$0xff]
  %v1811 = vld [vmem:[#allocation2 + $0x4c0] sm:$0xff]
  %v1812 = vld [vmem:[#allocation2 + $0x4c8] sm:$0xff]
  %v1813 = vld [vmem:[#allocation2 + $0x4d0] sm:$0xff]
  %v1814 = vld [vmem:[#allocation2 + $0x4d8] sm:$0xff]
  %v1815 = vld [vmem:[#allocation2 + $0x4e0] sm:$0xff]
  %v1816 = vld [vmem:[#allocation2 + $0x4e8] sm:$0xff]
  %v1817 = vld [vmem:[#allocation2 + $0x4f0] sm:$0xff]
  %v1818 = vld [vmem:[#allocation2 + $0x4f8] sm:$0xff]
  %v1819 = vld [vmem:[#allocation2 + $0x500] sm:$0xff]
  %v1820 = vld [vmem:[#allocation2 + $0x508] sm:$0xff]
  %v1821 = vld [vmem:[#allocation2 + $0x510] sm:$0xff]
  %v1822 = vld [vmem:[#allocation2 + $0x518] sm:$0xff]
  %v1823 = vmul.f32 %v1659, 0.020408163
  %v1824 = vmul.f32 %v1660, 0.020408163
  %v1825 = vmul.f32 %v1661, 0.020408163
  %v1826 = vmul.f32 %v1662, 0.020408163
  %v1827 = vmul.f32 %v1663, 0.020408163
  %v1828 = vmul.f32 %v1664, 0.020408163
  %v1829 = vmul.f32 %v1665, 0.020408163
  %v1830 = vmul.f32 %v1666, 0.020408163
  %v1831 = vmul.f32 %v1667, 0.020408163
  %v1832 = vmul.f32 %v1668, 0.020408163
  %v1833 = vmul.f32 %v1669, 0.020408163
  %v1834 = vmul.f32 %v1670, 0.020408163
  %v1835 = vmul.f32 %v1671, 0.020408163
  %v1836 = vmul.f32 %v1672, 0.020408163
  %v1837 = vmul.f32 %v1673, 0.020408163
  %v1838 = vmul.f32 %v1674, 0.020408163
  %v1839 = vmul.f32 %v1675, 0.020408163
  %v1840 = vmul.f32 %v1676, 0.020408163
  %v1841 = vmul.f32 %v1677, 0.020408163
  %v1842 = vmul.f32 %v1678, 0.020408163
  %v1843 = vmul.f32 %v1679, 0.020408163
  %v1844 = vmul.f32 %v1680, 0.020408163
  %v1845 = vmul.f32 %v1681, 0.020408163
  %v1846 = vmul.f32 %v1682, 0.020408163
  %v1847 = vmul.f32 %v1683, 0.020408163
  %v1848 = vmul.f32 %v1684, 0.020408163
  %v1849 = vmul.f32 %v1685, 0.020408163
  %v1850 = vmul.f32 %v1686, 0.020408163
  %v1851 = vmul.f32 %v1687, 0.020408163
  %v1852 = vmul.f32 %v1688, 0.020408163
  %v1853 = vmul.f32 %v1689, 0.020408163
  %v1854 = vmul.f32 %v1690, 0.020408163
  %v1855 = vmul.f32 %v1691, 0.020408163
  %v1856 = vmul.f32 %v1692, 0.020408163
  %v1857 = vmul.f32 %v1693, 0.020408163
  %v1858 = vmul.f32 %v1694, 0.020408163
  %v1859 = vmul.f32 %v1695, 0.020408163
  %v1860 = vmul.f32 %v1696, 0.020408163
  %v1861 = vmul.f32 %v1697, 0.020408163
  %v1862 = vmul.f32 %v1698, 0.020408163
  %v1863 = vmul.f32 %v1699, 0.020408163
  %v1864 = vmul.f32 %v1700, 0.020408163
  %v1865 = vmul.f32 %v1701, 0.020408163
  %v1866 = vmul.f32 %v1702, 0.020408163
  %v1867 = vmul.f32 %v1703, 0.020408163
  %v1868 = vmul.f32 %v1704, 0.020408163
  %v1869 = vmul.f32 %v1705, 0.020408163
  %v1870 = vmul.f32 %v1706, 0.020408163
  %v1871 = vmul.f32 %v1707, 0.020408163
  %v1872 = vmul.f32 %v1708, 0.020408163
  %v1873 = vmul.f32 %v1709, 0.020408163
  %v1874 = vmul.f32 %v1710, 0.020408163
  %v1875 = vmul.f32 %v1711, 0.020408163
  %v1876 = vmul.f32 %v1712, 0.020408163
  %v1877 = vmul.f32 %v1713, 0.020408163
  %v1878 = vmul.f32 %v1714, 0.020408163
  %v1879 = vmul.f32 %v1715, 0.020408163
  %v1880 = vmul.f32 %v1716, 0.020408163
  %v1881 = vmul.f32 %v1717, 0.020408163
  %v1882 = vmul.f32 %v1718, 0.020408163
  %v1883 = vmul.f32 %v1719, 0.020408163
  %v1884 = vmul.f32 %v1720, 0.020408163
  %v1885 = vmul.f32 %v1721, 0.020408163
  %v1886 = vmul.f32 %v1722, 0.020408163
  %v1887 = vmul.f32 %v1723, 0.020408163
  %v1888 = vmul.f32 %v1724, 0.020408163
  %v1889 = vmul.f32 %v1725, 0.020408163
  %v1890 = vmul.f32 %v1726, 0.020408163
  %v1891 = vmul.f32 %v1727, 0.020408163
  %v1892 = vmul.f32 %v1728, 0.020408163
  %v1893 = vmul.f32 %v1729, 0.020408163
  %v1894 = vmul.f32 %v1730, 0.020408163
  %v1895 = vmul.f32 %v1731, 0.020408163
  %v1896 = vmul.f32 %v1732, 0.020408163
  %v1897 = vmul.f32 %v1733, 0.020408163
  %v1898 = vmul.f32 %v1734, 0.020408163
  %v1899 = vmul.f32 %v1735, 0.020408163
  %v1900 = vmul.f32 %v1736, 0.020408163
  %v1901 = vmul.f32 %v1737, 0.020408163
  %v1902 = vmul.f32 %v1738, 0.020408163
  %v1903 = vmul.f32 %v1739, 0.020408163
  %v1904 = vmul.f32 %v1740, 0.020408163
  %v1905 = vmul.f32 %v1741, 0.020408163
  %v1906 = vmul.f32 %v1742, 0.020408163
  %v1907 = vmul.f32 %v1743, 0.020408163
  %v1908 = vmul.f32 %v1744, 0.020408163
  %v1909 = vmul.f32 %v1745, 0.020408163
  %v1910 = vmul.f32 %v1746, 0.020408163
  %v1911 = vmul.f32 %v1747, 0.020408163
  %v1912 = vmul.f32 %v1748, 0.020408163
  %v1913 = vmul.f32 %v1749, 0.020408163
  %v1914 = vmul.f32 %v1750, 0.020408163
  %v1915 = vmul.f32 %v1751, 0.020408163
  %v1916 = vmul.f32 %v1752, 0.020408163
  %v1917 = vmul.f32 %v1753, 0.020408163
  %v1918 = vmul.f32 %v1754, 0.020408163
  %v1919 = vmul.f32 %v1755, 0.020408163
  %v1920 = vmul.f32 %v1756, 0.020408163
  %v1921 = vmul.f32 %v1757, 0.020408163
  %v1922 = vmul.f32 %v1758, 0.020408163
  %v1923 = vmul.f32 %v1759, 0.020408163
  %v1924 = vmul.f32 %v1760, 0.020408163
  %v1925 = vmul.f32 %v1761, 0.020408163
  %v1926 = vmul.f32 %v1762, 0.020408163
  %v1927 = vmul.f32 %v1763, 0.020408163
  %v1928 = vmul.f32 %v1764, 0.020408163
  %v1929 = vmul.f32 %v1765, 0.020408163
  %v1930 = vmul.f32 %v1766, 0.020408163
  %v1931 = vmul.f32 %v1767, 0.020408163
  %v1932 = vmul.f32 %v1768, 0.020408163
  %v1933 = vmul.f32 %v1769, 0.020408163
  %v1934 = vmul.f32 %v1770, 0.020408163
  %v1935 = vmul.f32 %v1771, 0.020408163
  %v1936 = vmul.f32 %v1772, 0.020408163
  %v1937 = vmul.f32 %v1773, 0.020408163
  %v1938 = vmul.f32 %v1774, 0.020408163
  %v1939 = vmul.f32 %v1775, 0.020408163
  %v1940 = vmul.f32 %v1776, 0.020408163
  %v1941 = vmul.f32 %v1777, 0.020408163
  %v1942 = vmul.f32 %v1778, 0.020408163
  %v1943 = vmul.f32 %v1779, 0.020408163
  %v1944 = vmul.f32 %v1780, 0.020408163
  %v1945 = vmul.f32 %v1781, 0.020408163
  %v1946 = vmul.f32 %v1782, 0.020408163
  %v1947 = vmul.f32 %v1783, 0.020408163
  %v1948 = vmul.f32 %v1784, 0.020408163
  %v1949 = vmul.f32 %v1785, 0.020408163
  %v1950 = vmul.f32 %v1786, 0.020408163
  %v1951 = vmul.f32 %v1787, 0.020408163
  %v1952 = vmul.f32 %v1788, 0.020408163
  %v1953 = vmul.f32 %v1789, 0.020408163
  %v1954 = vmul.f32 %v1790, 0.020408163
  %v1955 = vmul.f32 %v1791, 0.020408163
  %v1956 = vmul.f32 %v1792, 0.020408163
  %v1957 = vmul.f32 %v1793, 0.020408163
  %v1958 = vmul.f32 %v1794, 0.020408163
  %v1959 = vmul.f32 %v1795, 0.020408163
  %v1960 = vmul.f32 %v1796, 0.020408163
  %v1961 = vmul.f32 %v1797, 0.020408163
  %v1962 = vmul.f32 %v1798, 0.020408163
  %v1963 = vmul.f32 %v1799, 0.020408163
  %v1964 = vmul.f32 %v1800, 0.020408163
  %v1965 = vmul.f32 %v1801, 0.020408163
  %v1966 = vmul.f32 %v1802, 0.020408163
  %v1967 = vmul.f32 %v1803, 0.020408163
  %v1968 = vmul.f32 %v1804, 0.020408163
  %v1969 = vmul.f32 %v1805, 0.020408163
  %v1970 = vmul.f32 %v1806, 0.020408163
  %v1971 = vmul.f32 %v1807, 0.020408163
  %v1972 = vmul.f32 %v1808, 0.020408163
  %v1973 = vmul.f32 %v1809, 0.020408163
  %v1974 = vmul.f32 %v1810, 0.020408163
  %v1975 = vmul.f32 %v1811, 0.020408163
  %v1976 = vmul.f32 %v1812, 0.020408163
  %v1977 = vmul.f32 %v1813, 0.020408163
  %v1978 = vmul.f32 %v1814, 0.020408163
  %v1979 = vmul.f32 %v1815, 0.020408163
  %v1980 = vmul.f32 %v1816, 0.020408163
  %v1981 = vmul.f32 %v1817, 0.020408163
  %v1982 = vmul.f32 %v1818, 0.020408163
  %v1983 = vmul.f32 %v1819, 0.020408163
  %v1984 = vmul.f32 %v1820, 0.020408163
  %v1985 = vmul.f32 %v1821, 0.020408163
  %v1986 = vmul.f32 %v1822, 0.020408163
  %v1987 = vld [vmem:[#allocation3] sm:$0xff]
  %v1988 = vld [vmem:[#allocation3 + $0x8] sm:$0xff]
  %v1989 = vld [vmem:[#allocation3 + $0x10] sm:$0xff]
  %v1990 = vld [vmem:[#allocation3 + $0x18] sm:$0xff]
  %v1991 = vld [vmem:[#allocation3 + $0x20] sm:$0xff]
  %v1992 = vld [vmem:[#allocation3 + $0x28] sm:$0xff]
  %v1993 = vld [vmem:[#allocation3 + $0x30] sm:$0xff]
  %v1994 = vld [vmem:[#allocation3 + $0x38] sm:$0xff]
  %v1995 = vld [vmem:[#allocation3 + $0x40] sm:$0xff]
  %v1996 = vld [vmem:[#allocation3 + $0x48] sm:$0xff]
  %v1997 = vld [vmem:[#allocation3 + $0x50] sm:$0xff]
  %v1998 = vld [vmem:[#allocation3 + $0x58] sm:$0xff]
  %v1999 = vld [vmem:[#allocation3 + $0x60] sm:$0xff]
  %v2000 = vld [vmem:[#allocation3 + $0x68] sm:$0xff]
  %v2001 = vld [vmem:[#allocation3 + $0x70] sm:$0xff]
  %v2002 = vld [vmem:[#allocation3 + $0x78] sm:$0xff]
  %v2003 = vld [vmem:[#allocation3 + $0x80] sm:$0xff]
  %v2004 = vld [vmem:[#allocation3 + $0x88] sm:$0xff]
  %v2005 = vld [vmem:[#allocation3 + $0x90] sm:$0xff]
  %v2006 = vld [vmem:[#allocation3 + $0x98] sm:$0xff]
  %v2007 = vld [vmem:[#allocation3 + $0xa0] sm:$0xff]
  %v2008 = vld [vmem:[#allocation3 + $0xa8] sm:$0xff]
  %v2009 = vld [vmem:[#allocation3 + $0xb0] sm:$0xff]
  %v2010 = vld [vmem:[#allocation3 + $0xb8] sm:$0xff]
  %v2011 = vld [vmem:[#allocation3 + $0xc0] sm:$0xff]
  %v2012 = vld [vmem:[#allocation3 + $0xc8] sm:$0xff]
  %v2013 = vld [vmem:[#allocation3 + $0xd0] sm:$0xff]
  %v2014 = vld [vmem:[#allocation3 + $0xd8] sm:$0xff]
  %v2015 = vld [vmem:[#allocation3 + $0xe0] sm:$0xff]
  %v2016 = vld [vmem:[#allocation3 + $0xe8] sm:$0xff]
  %v2017 = vld [vmem:[#allocation3 + $0xf0] sm:$0xff]
  %v2018 = vld [vmem:[#allocation3 + $0xf8] sm:$0xff]
  %v2019 = vld [vmem:[#allocation3 + $0x100] sm:$0xff]
  %v2020 = vld [vmem:[#allocation3 + $0x108] sm:$0xff]
  %v2021 = vld [vmem:[#allocation3 + $0x110] sm:$0xff]
  %v2022 = vld [vmem:[#allocation3 + $0x118] sm:$0xff]
  %v2023 = vld [vmem:[#allocation3 + $0x120] sm:$0xff]
  %v2024 = vld [vmem:[#allocation3 + $0x128] sm:$0xff]
  %v2025 = vld [vmem:[#allocation3 + $0x130] sm:$0xff]
  %v2026 = vld [vmem:[#allocation3 + $0x138] sm:$0xff]
  %v2027 = vld [vmem:[#allocation3 + $0x140] sm:$0xff]
  %v2028 = vld [vmem:[#allocation3 + $0x148] sm:$0xff]
  %v2029 = vld [vmem:[#allocation3 + $0x150] sm:$0xff]
  %v2030 = vld [vmem:[#allocation3 + $0x158] sm:$0xff]
  %v2031 = vld [vmem:[#allocation3 + $0x160] sm:$0xff]
  %v2032 = vld [vmem:[#allocation3 + $0x168] sm:$0xff]
  %v2033 = vld [vmem:[#allocation3 + $0x170] sm:$0xff]
  %v2034 = vld [vmem:[#allocation3 + $0x178] sm:$0xff]
  %v2035 = vld [vmem:[#allocation3 + $0x180] sm:$0xff]
  %v2036 = vld [vmem:[#allocation3 + $0x188] sm:$0xff]
  %v2037 = vld [vmem:[#allocation3 + $0x190] sm:$0xff]
  %v2038 = vld [vmem:[#allocation3 + $0x198] sm:$0xff]
  %v2039 = vld [vmem:[#allocation3 + $0x1a0] sm:$0xff]
  %v2040 = vld [vmem:[#allocation3 + $0x1a8] sm:$0xff]
  %v2041 = vld [vmem:[#allocation3 + $0x1b0] sm:$0xff]
  %v2042 = vld [vmem:[#allocation3 + $0x1b8] sm:$0xff]
  %v2043 = vld [vmem:[#allocation3 + $0x1c0] sm:$0xff]
  %v2044 = vld [vmem:[#allocation3 + $0x1c8] sm:$0xff]
  %v2045 = vld [vmem:[#allocation3 + $0x1d0] sm:$0xff]
  %v2046 = vld [vmem:[#allocation3 + $0x1d8] sm:$0xff]
  %v2047 = vld [vmem:[#allocation3 + $0x1e0] sm:$0xff]
  %v2048 = vld [vmem:[#allocation3 + $0x1e8] sm:$0xff]
  %v2049 = vld [vmem:[#allocation3 + $0x1f0] sm:$0xff]
  %v2050 = vld [vmem:[#allocation3 + $0x1f8] sm:$0xff]
  %v2051 = vld [vmem:[#allocation3 + $0x200] sm:$0xff]
  %v2052 = vld [vmem:[#allocation3 + $0x208] sm:$0xff]
  %v2053 = vld [vmem:[#allocation3 + $0x210] sm:$0xff]
  %v2054 = vld [vmem:[#allocation3 + $0x218] sm:$0xff]
  %v2055 = vld [vmem:[#allocation3 + $0x220] sm:$0xff]
  %v2056 = vld [vmem:[#allocation3 + $0x228] sm:$0xff]
  %v2057 = vld [vmem:[#allocation3 + $0x230] sm:$0xff]
  %v2058 = vld [vmem:[#allocation3 + $0x238] sm:$0xff]
  %v2059 = vld [vmem:[#allocation3 + $0x240] sm:$0xff]
  %v2060 = vld [vmem:[#allocation3 + $0x248] sm:$0xff]
  %v2061 = vld [vmem:[#allocation3 + $0x250] sm:$0xff]
  %v2062 = vld [vmem:[#allocation3 + $0x258] sm:$0xff]
  %v2063 = vld [vmem:[#allocation3 + $0x260] sm:$0xff]
  %v2064 = vld [vmem:[#allocation3 + $0x268] sm:$0xff]
  %v2065 = vld [vmem:[#allocation3 + $0x270] sm:$0xff]
  %v2066 = vld [vmem:[#allocation3 + $0x278] sm:$0xff]
  %v2067 = vld [vmem:[#allocation3 + $0x280] sm:$0xff]
  %v2068 = vld [vmem:[#allocation3 + $0x288] sm:$0xff]
  %v2069 = vld [vmem:[#allocation3 + $0x290] sm:$0xff]
  %v2070 = vld [vmem:[#allocation3 + $0x298] sm:$0xff]
  %v2071 = vld [vmem:[#allocation3 + $0x2a0] sm:$0xff]
  %v2072 = vld [vmem:[#allocation3 + $0x2a8] sm:$0xff]
  %v2073 = vld [vmem:[#allocation3 + $0x2b0] sm:$0xff]
  %v2074 = vld [vmem:[#allocation3 + $0x2b8] sm:$0xff]
  %v2075 = vld [vmem:[#allocation3 + $0x2c0] sm:$0xff]
  %v2076 = vld [vmem:[#allocation3 + $0x2c8] sm:$0xff]
  %v2077 = vld [vmem:[#allocation3 + $0x2d0] sm:$0xff]
  %v2078 = vld [vmem:[#allocation3 + $0x2d8] sm:$0xff]
  %v2079 = vld [vmem:[#allocation3 + $0x2e0] sm:$0xff]
  %v2080 = vld [vmem:[#allocation3 + $0x2e8] sm:$0xff]
  %v2081 = vld [vmem:[#allocation3 + $0x2f0] sm:$0xff]
  %v2082 = vld [vmem:[#allocation3 + $0x2f8] sm:$0xff]
  %v2083 = vld [vmem:[#allocation3 + $0x300] sm:$0xff]
  %v2084 = vld [vmem:[#allocation3 + $0x308] sm:$0xff]
  %v2085 = vld [vmem:[#allocation3 + $0x310] sm:$0xff]
  %v2086 = vld [vmem:[#allocation3 + $0x318] sm:$0xff]
  %v2087 = vld [vmem:[#allocation3 + $0x320] sm:$0xff]
  %v2088 = vld [vmem:[#allocation3 + $0x328] sm:$0xff]
  %v2089 = vld [vmem:[#allocation3 + $0x330] sm:$0xff]
  %v2090 = vld [vmem:[#allocation3 + $0x338] sm:$0xff]
  %v2091 = vld [vmem:[#allocation3 + $0x340] sm:$0xff]
  %v2092 = vld [vmem:[#allocation3 + $0x348] sm:$0xff]
  %v2093 = vld [vmem:[#allocation3 + $0x350] sm:$0xff]
  %v2094 = vld [vmem:[#allocation3 + $0x358] sm:$0xff]
  %v2095 = vld [vmem:[#allocation3 + $0x360] sm:$0xff]
  %v2096 = vld [vmem:[#allocation3 + $0x368] sm:$0xff]
  %v2097 = vld [vmem:[#allocation3 + $0x370] sm:$0xff]
  %v2098 = vld [vmem:[#allocation3 + $0x378] sm:$0xff]
  %v2099 = vld [vmem:[#allocation3 + $0x380] sm:$0xff]
  %v2100 = vld [vmem:[#allocation3 + $0x388] sm:$0xff]
  %v2101 = vld [vmem:[#allocation3 + $0x390] sm:$0xff]
  %v2102 = vld [vmem:[#allocation3 + $0x398] sm:$0xff]
  %v2103 = vld [vmem:[#allocation3 + $0x3a0] sm:$0xff]
  %v2104 = vld [vmem:[#allocation3 + $0x3a8] sm:$0xff]
  %v2105 = vld [vmem:[#allocation3 + $0x3b0] sm:$0xff]
  %v2106 = vld [vmem:[#allocation3 + $0x3b8] sm:$0xff]
  %v2107 = vld [vmem:[#allocation3 + $0x3c0] sm:$0xff]
  %v2108 = vld [vmem:[#allocation3 + $0x3c8] sm:$0xff]
  %v2109 = vld [vmem:[#allocation3 + $0x3d0] sm:$0xff]
  %v2110 = vld [vmem:[#allocation3 + $0x3d8] sm:$0xff]
  %v2111 = vld [vmem:[#allocation3 + $0x3e0] sm:$0xff]
  %v2112 = vld [vmem:[#allocation3 + $0x3e8] sm:$0xff]
  %v2113 = vld [vmem:[#allocation3 + $0x3f0] sm:$0xff]
  %v2114 = vld [vmem:[#allocation3 + $0x3f8] sm:$0xff]
  %v2115 = vld [vmem:[#allocation3 + $0x400] sm:$0xff]
  %v2116 = vld [vmem:[#allocation3 + $0x408] sm:$0xff]
  %v2117 = vld [vmem:[#allocation3 + $0x410] sm:$0xff]
  %v2118 = vld [vmem:[#allocation3 + $0x418] sm:$0xff]
  %v2119 = vld [vmem:[#allocation3 + $0x420] sm:$0xff]
  %v2120 = vld [vmem:[#allocation3 + $0x428] sm:$0xff]
  %v2121 = vld [vmem:[#allocation3 + $0x430] sm:$0xff]
  %v2122 = vld [vmem:[#allocation3 + $0x438] sm:$0xff]
  %v2123 = vld [vmem:[#allocation3 + $0x440] sm:$0xff]
  %v2124 = vld [vmem:[#allocation3 + $0x448] sm:$0xff]
  %v2125 = vld [vmem:[#allocation3 + $0x450] sm:$0xff]
  %v2126 = vld [vmem:[#allocation3 + $0x458] sm:$0xff]
  %v2127 = vld [vmem:[#allocation3 + $0x460] sm:$0xff]
  %v2128 = vld [vmem:[#allocation3 + $0x468] sm:$0xff]
  %v2129 = vld [vmem:[#allocation3 + $0x470] sm:$0xff]
  %v2130 = vld [vmem:[#allocation3 + $0x478] sm:$0xff]
  %v2131 = vld [vmem:[#allocation3 + $0x480] sm:$0xff]
  %v2132 = vld [vmem:[#allocation3 + $0x488] sm:$0xff]
  %v2133 = vld [vmem:[#allocation3 + $0x490] sm:$0xff]
  %v2134 = vld [vmem:[#allocation3 + $0x498] sm:$0xff]
  %v2135 = vld [vmem:[#allocation3 + $0x4a0] sm:$0xff]
  %v2136 = vld [vmem:[#allocation3 + $0x4a8] sm:$0xff]
  %v2137 = vld [vmem:[#allocation3 + $0x4b0] sm:$0xff]
  %v2138 = vld [vmem:[#allocation3 + $0x4b8] sm:$0xff]
  %v2139 = vld [vmem:[#allocation3 + $0x4c0] sm:$0xff]
  %v2140 = vld [vmem:[#allocation3 + $0x4c8] sm:$0xff]
  %v2141 = vld [vmem:[#allocation3 + $0x4d0] sm:$0xff]
  %v2142 = vld [vmem:[#allocation3 + $0x4d8] sm:$0xff]
  %v2143 = vld [vmem:[#allocation3 + $0x4e0] sm:$0xff]
  %v2144 = vld [vmem:[#allocation3 + $0x4e8] sm:$0xff]
  %v2145 = vld [vmem:[#allocation3 + $0x4f0] sm:$0xff]
  %v2146 = vld [vmem:[#allocation3 + $0x4f8] sm:$0xff]
  %v2147 = vld [vmem:[#allocation3 + $0x500] sm:$0xff]
  %v2148 = vld [vmem:[#allocation3 + $0x508] sm:$0xff]
  %v2149 = vld [vmem:[#allocation3 + $0x510] sm:$0xff]
  %v2150 = vld [vmem:[#allocation3 + $0x518] sm:$0xff]
  %v2151 = vmul.f32 %v1987, 0.020408163
  %v2152 = vmul.f32 %v1988, 0.020408163
  %v2153 = vmul.f32 %v1989, 0.020408163
  %v2154 = vmul.f32 %v1990, 0.020408163
  %v2155 = vmul.f32 %v1991, 0.020408163
  %v2156 = vmul.f32 %v1992, 0.020408163
  %v2157 = vmul.f32 %v1993, 0.020408163
  %v2158 = vmul.f32 %v1994, 0.020408163
  %v2159 = vmul.f32 %v1995, 0.020408163
  %v2160 = vmul.f32 %v1996, 0.020408163
  %v2161 = vmul.f32 %v1997, 0.020408163
  %v2162 = vmul.f32 %v1998, 0.020408163
  %v2163 = vmul.f32 %v1999, 0.020408163
  %v2164 = vmul.f32 %v2000, 0.020408163
  %v2165 = vmul.f32 %v2001, 0.020408163
  %v2166 = vmul.f32 %v2002, 0.020408163
  %v2167 = vmul.f32 %v2003, 0.020408163
  %v2168 = vmul.f32 %v2004, 0.020408163
  %v2169 = vmul.f32 %v2005, 0.020408163
  %v2170 = vmul.f32 %v2006, 0.020408163
  %v2171 = vmul.f32 %v2007, 0.020408163
  %v2172 = vmul.f32 %v2008, 0.020408163
  %v2173 = vmul.f32 %v2009, 0.020408163
  %v2174 = vmul.f32 %v2010, 0.020408163
  %v2175 = vmul.f32 %v2011, 0.020408163
  %v2176 = vmul.f32 %v2012, 0.020408163
  %v2177 = vmul.f32 %v2013, 0.020408163
  %v2178 = vmul.f32 %v2014, 0.020408163
  %v2179 = vmul.f32 %v2015, 0.020408163
  %v2180 = vmul.f32 %v2016, 0.020408163
  %v2181 = vmul.f32 %v2017, 0.020408163
  %v2182 = vmul.f32 %v2018, 0.020408163
  %v2183 = vmul.f32 %v2019, 0.020408163
  %v2184 = vmul.f32 %v2020, 0.020408163
  %v2185 = vmul.f32 %v2021, 0.020408163
  %v2186 = vmul.f32 %v2022, 0.020408163
  %v2187 = vmul.f32 %v2023, 0.020408163
  %v2188 = vmul.f32 %v2024, 0.020408163
  %v2189 = vmul.f32 %v2025, 0.020408163
  %v2190 = vmul.f32 %v2026, 0.020408163
  %v2191 = vmul.f32 %v2027, 0.020408163
  %v2192 = vmul.f32 %v2028, 0.020408163
  %v2193 = vmul.f32 %v2029, 0.020408163
  %v2194 = vmul.f32 %v2030, 0.020408163
  %v2195 = vmul.f32 %v2031, 0.020408163
  %v2196 = vmul.f32 %v2032, 0.020408163
  %v2197 = vmul.f32 %v2033, 0.020408163
  %v2198 = vmul.f32 %v2034, 0.020408163
  %v2199 = vmul.f32 %v2035, 0.020408163
  %v2200 = vmul.f32 %v2036, 0.020408163
  %v2201 = vmul.f32 %v2037, 0.020408163
  %v2202 = vmul.f32 %v2038, 0.020408163
  %v2203 = vmul.f32 %v2039, 0.020408163
  %v2204 = vmul.f32 %v2040, 0.020408163
  %v2205 = vmul.f32 %v2041, 0.020408163
  %v2206 = vmul.f32 %v2042, 0.020408163
  %v2207 = vmul.f32 %v2043, 0.020408163
  %v2208 = vmul.f32 %v2044, 0.020408163
  %v2209 = vmul.f32 %v2045, 0.020408163
  %v2210 = vmul.f32 %v2046, 0.020408163
  %v2211 = vmul.f32 %v2047, 0.020408163
  %v2212 = vmul.f32 %v2048, 0.020408163
  %v2213 = vmul.f32 %v2049, 0.020408163
  %v2214 = vmul.f32 %v2050, 0.020408163
  %v2215 = vmul.f32 %v2051, 0.020408163
  %v2216 = vmul.f32 %v2052, 0.020408163
  %v2217 = vmul.f32 %v2053, 0.020408163
  %v2218 = vmul.f32 %v2054, 0.020408163
  %v2219 = vmul.f32 %v2055, 0.020408163
  %v2220 = vmul.f32 %v2056, 0.020408163
  %v2221 = vmul.f32 %v2057, 0.020408163
  %v2222 = vmul.f32 %v2058, 0.020408163
  %v2223 = vmul.f32 %v2059, 0.020408163
  %v2224 = vmul.f32 %v2060, 0.020408163
  %v2225 = vmul.f32 %v2061, 0.020408163
  %v2226 = vmul.f32 %v2062, 0.020408163
  %v2227 = vmul.f32 %v2063, 0.020408163
  %v2228 = vmul.f32 %v2064, 0.020408163
  %v2229 = vmul.f32 %v2065, 0.020408163
  %v2230 = vmul.f32 %v2066, 0.020408163
  %v2231 = vmul.f32 %v2067, 0.020408163
  %v2232 = vmul.f32 %v2068, 0.020408163
  %v2233 = vmul.f32 %v2069, 0.020408163
  %v2234 = vmul.f32 %v2070, 0.020408163
  %v2235 = vmul.f32 %v2071, 0.020408163
  %v2236 = vmul.f32 %v2072, 0.020408163
  %v2237 = vmul.f32 %v2073, 0.020408163
  %v2238 = vmul.f32 %v2074, 0.020408163
  %v2239 = vmul.f32 %v2075, 0.020408163
  %v2240 = vmul.f32 %v2076, 0.020408163
  %v2241 = vmul.f32 %v2077, 0.020408163
  %v2242 = vmul.f32 %v2078, 0.020408163
  %v2243 = vmul.f32 %v2079, 0.020408163
  %v2244 = vmul.f32 %v2080, 0.020408163
  %v2245 = vmul.f32 %v2081, 0.020408163
  %v2246 = vmul.f32 %v2082, 0.020408163
  %v2247 = vmul.f32 %v2083, 0.020408163
  %v2248 = vmul.f32 %v2084, 0.020408163
  %v2249 = vmul.f32 %v2085, 0.020408163
  %v2250 = vmul.f32 %v2086, 0.020408163
  %v2251 = vmul.f32 %v2087, 0.020408163
  %v2252 = vmul.f32 %v2088, 0.020408163
  %v2253 = vmul.f32 %v2089, 0.020408163
  %v2254 = vmul.f32 %v2090, 0.020408163
  %v2255 = vmul.f32 %v2091, 0.020408163
  %v2256 = vmul.f32 %v2092, 0.020408163
  %v2257 = vmul.f32 %v2093, 0.020408163
  %v2258 = vmul.f32 %v2094, 0.020408163
  %v2259 = vmul.f32 %v2095, 0.020408163
  %v2260 = vmul.f32 %v2096, 0.020408163
  %v2261 = vmul.f32 %v2097, 0.020408163
  %v2262 = vmul.f32 %v2098, 0.020408163
  %v2263 = vmul.f32 %v2099, 0.020408163
  %v2264 = vmul.f32 %v2100, 0.020408163
  %v2265 = vmul.f32 %v2101, 0.020408163
  %v2266 = vmul.f32 %v2102, 0.020408163
  %v2267 = vmul.f32 %v2103, 0.020408163
  %v2268 = vmul.f32 %v2104, 0.020408163
  %v2269 = vmul.f32 %v2105, 0.020408163
  %v2270 = vmul.f32 %v2106, 0.020408163
  %v2271 = vmul.f32 %v2107, 0.020408163
  %v2272 = vmul.f32 %v2108, 0.020408163
  %v2273 = vmul.f32 %v2109, 0.020408163
  %v2274 = vmul.f32 %v2110, 0.020408163
  %v2275 = vmul.f32 %v2111, 0.020408163
  %v2276 = vmul.f32 %v2112, 0.020408163
  %v2277 = vmul.f32 %v2113, 0.020408163
  %v2278 = vmul.f32 %v2114, 0.020408163
  %v2279 = vmul.f32 %v2115, 0.020408163
  %v2280 = vmul.f32 %v2116, 0.020408163
  %v2281 = vmul.f32 %v2117, 0.020408163
  %v2282 = vmul.f32 %v2118, 0.020408163
  %v2283 = vmul.f32 %v2119, 0.020408163
  %v2284 = vmul.f32 %v2120, 0.020408163
  %v2285 = vmul.f32 %v2121, 0.020408163
  %v2286 = vmul.f32 %v2122, 0.020408163
  %v2287 = vmul.f32 %v2123, 0.020408163
  %v2288 = vmul.f32 %v2124, 0.020408163
  %v2289 = vmul.f32 %v2125, 0.020408163
  %v2290 = vmul.f32 %v2126, 0.020408163
  %v2291 = vmul.f32 %v2127, 0.020408163
  %v2292 = vmul.f32 %v2128, 0.020408163
  %v2293 = vmul.f32 %v2129, 0.020408163
  %v2294 = vmul.f32 %v2130, 0.020408163
  %v2295 = vmul.f32 %v2131, 0.020408163
  %v2296 = vmul.f32 %v2132, 0.020408163
  %v2297 = vmul.f32 %v2133, 0.020408163
  %v2298 = vmul.f32 %v2134, 0.020408163
  %v2299 = vmul.f32 %v2135, 0.020408163
  %v2300 = vmul.f32 %v2136, 0.020408163
  %v2301 = vmul.f32 %v2137, 0.020408163
  %v2302 = vmul.f32 %v2138, 0.020408163
  %v2303 = vmul.f32 %v2139, 0.020408163
  %v2304 = vmul.f32 %v2140, 0.020408163
  %v2305 = vmul.f32 %v2141, 0.020408163
  %v2306 = vmul.f32 %v2142, 0.020408163
  %v2307 = vmul.f32 %v2143, 0.020408163
  %v2308 = vmul.f32 %v2144, 0.020408163
  %v2309 = vmul.f32 %v2145, 0.020408163
  %v2310 = vmul.f32 %v2146, 0.020408163
  %v2311 = vmul.f32 %v2147, 0.020408163
  %v2312 = vmul.f32 %v2148, 0.020408163
  %v2313 = vmul.f32 %v2149, 0.020408163
  %v2314 = vmul.f32 %v2150, 0.020408163
  %v2315 = vmul.f32 %v1823, %v1823
  %v2316 = vmul.f32 %v1824, %v1824
  %v2317 = vmul.f32 %v1825, %v1825
  %v2318 = vmul.f32 %v1826, %v1826
  %v2319 = vmul.f32 %v1827, %v1827
  %v2320 = vmul.f32 %v1828, %v1828
  %v2321 = vmul.f32 %v1829, %v1829
  %v2322 = vmul.f32 %v1830, %v1830
  %v2323 = vmul.f32 %v1831, %v1831
  %v2324 = vmul.f32 %v1832, %v1832
  %v2325 = vmul.f32 %v1833, %v1833
  %v2326 = vmul.f32 %v1834, %v1834
  %v2327 = vmul.f32 %v1835, %v1835
  %v2328 = vmul.f32 %v1836, %v1836
  %v2329 = vmul.f32 %v1837, %v1837
  %v2330 = vmul.f32 %v1838, %v1838
  %v2331 = vmul.f32 %v1839, %v1839
  %v2332 = vmul.f32 %v1840, %v1840
  %v2333 = vmul.f32 %v1841, %v1841
  %v2334 = vmul.f32 %v1842, %v1842
  %v2335 = vmul.f32 %v1843, %v1843
  %v2336 = vmul.f32 %v1844, %v1844
  %v2337 = vmul.f32 %v1845, %v1845
  %v2338 = vmul.f32 %v1846, %v1846
  %v2339 = vmul.f32 %v1847, %v1847
  %v2340 = vmul.f32 %v1848, %v1848
  %v2341 = vmul.f32 %v1849, %v1849
  %v2342 = vmul.f32 %v1850, %v1850
  %v2343 = vmul.f32 %v1851, %v1851
  %v2344 = vmul.f32 %v1852, %v1852
  %v2345 = vmul.f32 %v1853, %v1853
  %v2346 = vmul.f32 %v1854, %v1854
  %v2347 = vmul.f32 %v1855, %v1855
  %v2348 = vmul.f32 %v1856, %v1856
  %v2349 = vmul.f32 %v1857, %v1857
  %v2350 = vmul.f32 %v1858, %v1858
  %v2351 = vmul.f32 %v1859, %v1859
  %v2352 = vmul.f32 %v1860, %v1860
  %v2353 = vmul.f32 %v1861, %v1861
  %v2354 = vmul.f32 %v1862, %v1862
  %v2355 = vmul.f32 %v1863, %v1863
  %v2356 = vmul.f32 %v1864, %v1864
  %v2357 = vmul.f32 %v1865, %v1865
  %v2358 = vmul.f32 %v1866, %v1866
  %v2359 = vmul.f32 %v1867, %v1867
  %v2360 = vmul.f32 %v1868, %v1868
  %v2361 = vmul.f32 %v1869, %v1869
  %v2362 = vmul.f32 %v1870, %v1870
  %v2363 = vmul.f32 %v1871, %v1871
  %v2364 = vmul.f32 %v1872, %v1872
  %v2365 = vmul.f32 %v1873, %v1873
  %v2366 = vmul.f32 %v1874, %v1874
  %v2367 = vmul.f32 %v1875, %v1875
  %v2368 = vmul.f32 %v1876, %v1876
  %v2369 = vmul.f32 %v1877, %v1877
  %v2370 = vmul.f32 %v1878, %v1878
  %v2371 = vmul.f32 %v1879, %v1879
  %v2372 = vmul.f32 %v1880, %v1880
  %v2373 = vmul.f32 %v1881, %v1881
  %v2374 = vmul.f32 %v1882, %v1882
  %v2375 = vmul.f32 %v1883, %v1883
  %v2376 = vmul.f32 %v1884, %v1884
  %v2377 = vmul.f32 %v1885, %v1885
  %v2378 = vmul.f32 %v1886, %v1886
  %v2379 = vmul.f32 %v1887, %v1887
  %v2380 = vmul.f32 %v1888, %v1888
  %v2381 = vmul.f32 %v1889, %v1889
  %v2382 = vmul.f32 %v1890, %v1890
  %v2383 = vmul.f32 %v1891, %v1891
  %v2384 = vmul.f32 %v1892, %v1892
  %v2385 = vmul.f32 %v1893, %v1893
  %v2386 = vmul.f32 %v1894, %v1894
  %v2387 = vmul.f32 %v1895, %v1895
  %v2388 = vmul.f32 %v1896, %v1896
  %v2389 = vmul.f32 %v1897, %v1897
  %v2390 = vmul.f32 %v1898, %v1898
  %v2391 = vmul.f32 %v1899, %v1899
  %v2392 = vmul.f32 %v1900, %v1900
  %v2393 = vmul.f32 %v1901, %v1901
  %v2394 = vmul.f32 %v1902, %v1902
  %v2395 = vmul.f32 %v1903, %v1903
  %v2396 = vmul.f32 %v1904, %v1904
  %v2397 = vmul.f32 %v1905, %v1905
  %v2398 = vmul.f32 %v1906, %v1906
  %v2399 = vmul.f32 %v1907, %v1907
  %v2400 = vmul.f32 %v1908, %v1908
  %v2401 = vmul.f32 %v1909, %v1909
  %v2402 = vmul.f32 %v1910, %v1910
  %v2403 = vmul.f32 %v1911, %v1911
  %v2404 = vmul.f32 %v1912, %v1912
  %v2405 = vmul.f32 %v1913, %v1913
  %v2406 = vmul.f32 %v1914, %v1914
  %v2407 = vmul.f32 %v1915, %v1915
  %v2408 = vmul.f32 %v1916, %v1916
  %v2409 = vmul.f32 %v1917, %v1917
  %v2410 = vmul.f32 %v1918, %v1918
  %v2411 = vmul.f32 %v1919, %v1919
  %v2412 = vmul.f32 %v1920, %v1920
  %v2413 = vmul.f32 %v1921, %v1921
  %v2414 = vmul.f32 %v1922, %v1922
  %v2415 = vmul.f32 %v1923, %v1923
  %v2416 = vmul.f32 %v1924, %v1924
  %v2417 = vmul.f32 %v1925, %v1925
  %v2418 = vmul.f32 %v1926, %v1926
  %v2419 = vmul.f32 %v1927, %v1927
  %v2420 = vmul.f32 %v1928, %v1928
  %v2421 = vmul.f32 %v1929, %v1929
  %v2422 = vmul.f32 %v1930, %v1930
  %v2423 = vmul.f32 %v1931, %v1931
  %v2424 = vmul.f32 %v1932, %v1932
  %v2425 = vmul.f32 %v1933, %v1933
  %v2426 = vmul.f32 %v1934, %v1934
  %v2427 = vmul.f32 %v1935, %v1935
  %v2428 = vmul.f32 %v1936, %v1936
  %v2429 = vmul.f32 %v1937, %v1937
  %v2430 = vmul.f32 %v1938, %v1938
  %v2431 = vmul.f32 %v1939, %v1939
  %v2432 = vmul.f32 %v1940, %v1940
  %v2433 = vmul.f32 %v1941, %v1941
  %v2434 = vmul.f32 %v1942, %v1942
  %v2435 = vmul.f32 %v1943, %v1943
  %v2436 = vmul.f32 %v1944, %v1944
  %v2437 = vmul.f32 %v1945, %v1945
  %v2438 = vmul.f32 %v1946, %v1946
  %v2439 = vmul.f32 %v1947, %v1947
  %v2440 = vmul.f32 %v1948, %v1948
  %v2441 = vmul.f32 %v1949, %v1949
  %v2442 = vmul.f32 %v1950, %v1950
  %v2443 = vmul.f32 %v1951, %v1951
  %v2444 = vmul.f32 %v1952, %v1952
  %v2445 = vmul.f32 %v1953, %v1953
  %v2446 = vmul.f32 %v1954, %v1954
  %v2447 = vmul.f32 %v1955, %v1955
  %v2448 = vmul.f32 %v1956, %v1956
  %v2449 = vmul.f32 %v1957, %v1957
  %v2450 = vmul.f32 %v1958, %v1958
  %v2451 = vmul.f32 %v1959, %v1959
  %v2452 = vmul.f32 %v1960, %v1960
  %v2453 = vmul.f32 %v1961, %v1961
  %v2454 = vmul.f32 %v1962, %v1962
  %v2455 = vmul.f32 %v1963, %v1963
  %v2456 = vmul.f32 %v1964, %v1964
  %v2457 = vmul.f32 %v1965, %v1965
  %v2458 = vmul.f32 %v1966, %v1966
  %v2459 = vmul.f32 %v1967, %v1967
  %v2460 = vmul.f32 %v1968, %v1968
  %v2461 = vmul.f32 %v1969, %v1969
  %v2462 = vmul.f32 %v1970, %v1970
  %v2463 = vmul.f32 %v1971, %v1971
  %v2464 = vmul.f32 %v1972, %v1972
  %v2465 = vmul.f32 %v1973, %v1973
  %v2466 = vmul.f32 %v1974, %v1974
  %v2467 = vmul.f32 %v1975, %v1975
  %v2468 = vmul.f32 %v1976, %v1976
  %v2469 = vmul.f32 %v1977, %v1977
  %v2470 = vmul.f32 %v1978, %v1978
  %v2471 = vmul.f32 %v1979, %v1979
  %v2472 = vmul.f32 %v1980, %v1980
  %v2473 = vmul.f32 %v1981, %v1981
  %v2474 = vmul.f32 %v1982, %v1982
  %v2475 = vmul.f32 %v1983, %v1983
  %v2476 = vmul.f32 %v1984, %v1984
  %v2477 = vmul.f32 %v1985, %v1985
  %v2478 = vmul.f32 %v1986, %v1986
  %v2479 = vsub.f32 %v2151, %v2315
  %v2480 = vsub.f32 %v2152, %v2316
  %v2481 = vsub.f32 %v2153, %v2317
  %v2482 = vsub.f32 %v2154, %v2318
  %v2483 = vsub.f32 %v2155, %v2319
  %v2484 = vsub.f32 %v2156, %v2320
  %v2485 = vsub.f32 %v2157, %v2321
  %v2486 = vsub.f32 %v2158, %v2322
  %v2487 = vsub.f32 %v2159, %v2323
  %v2488 = vsub.f32 %v2160, %v2324
  %v2489 = vsub.f32 %v2161, %v2325
  %v2490 = vsub.f32 %v2162, %v2326
  %v2491 = vsub.f32 %v2163, %v2327
  %v2492 = vsub.f32 %v2164, %v2328
  %v2493 = vsub.f32 %v2165, %v2329
  %v2494 = vsub.f32 %v2166, %v2330
  %v2495 = vsub.f32 %v2167, %v2331
  %v2496 = vsub.f32 %v2168, %v2332
  %v2497 = vsub.f32 %v2169, %v2333
  %v2498 = vsub.f32 %v2170, %v2334
  %v2499 = vsub.f32 %v2171, %v2335
  %v2500 = vsub.f32 %v2172, %v2336
  %v2501 = vsub.f32 %v2173, %v2337
  %v2502 = vsub.f32 %v2174, %v2338
  %v2503 = vsub.f32 %v2175, %v2339
  %v2504 = vsub.f32 %v2176, %v2340
  %v2505 = vsub.f32 %v2177, %v2341
  %v2506 = vsub.f32 %v2178, %v2342
  %v2507 = vsub.f32 %v2179, %v2343
  %v2508 = vsub.f32 %v2180, %v2344
  %v2509 = vsub.f32 %v2181, %v2345
  %v2510 = vsub.f32 %v2182, %v2346
  %v2511 = vsub.f32 %v2183, %v2347
  %v2512 = vsub.f32 %v2184, %v2348
  %v2513 = vsub.f32 %v2185, %v2349
  %v2514 = vsub.f32 %v2186, %v2350
  %v2515 = vsub.f32 %v2187, %v2351
  %v2516 = vsub.f32 %v2188, %v2352
  %v2517 = vsub.f32 %v2189, %v2353
  %v2518 = vsub.f32 %v2190, %v2354
  %v2519 = vsub.f32 %v2191, %v2355
  %v2520 = vsub.f32 %v2192, %v2356
  %v2521 = vsub.f32 %v2193, %v2357
  %v2522 = vsub.f32 %v2194, %v2358
  %v2523 = vsub.f32 %v2195, %v2359
  %v2524 = vsub.f32 %v2196, %v2360
  %v2525 = vsub.f32 %v2197, %v2361
  %v2526 = vsub.f32 %v2198, %v2362
  %v2527 = vsub.f32 %v2199, %v2363
  %v2528 = vsub.f32 %v2200, %v2364
  %v2529 = vsub.f32 %v2201, %v2365
  %v2530 = vsub.f32 %v2202, %v2366
  %v2531 = vsub.f32 %v2203, %v2367
  %v2532 = vsub.f32 %v2204, %v2368
  %v2533 = vsub.f32 %v2205, %v2369
  %v2534 = vsub.f32 %v2206, %v2370
  %v2535 = vsub.f32 %v2207, %v2371
  %v2536 = vsub.f32 %v2208, %v2372
  %v2537 = vsub.f32 %v2209, %v2373
  %v2538 = vsub.f32 %v2210, %v2374
  %v2539 = vsub.f32 %v2211, %v2375
  %v2540 = vsub.f32 %v2212, %v2376
  %v2541 = vsub.f32 %v2213, %v2377
  %v2542 = vsub.f32 %v2214, %v2378
  %v2543 = vsub.f32 %v2215, %v2379
  %v2544 = vsub.f32 %v2216, %v2380
  %v2545 = vsub.f32 %v2217, %v2381
  %v2546 = vsub.f32 %v2218, %v2382
  %v2547 = vsub.f32 %v2219, %v2383
  %v2548 = vsub.f32 %v2220, %v2384
  %v2549 = vsub.f32 %v2221, %v2385
  %v2550 = vsub.f32 %v2222, %v2386
  %v2551 = vsub.f32 %v2223, %v2387
  %v2552 = vsub.f32 %v2224, %v2388
  %v2553 = vsub.f32 %v2225, %v2389
  %v2554 = vsub.f32 %v2226, %v2390
  %v2555 = vsub.f32 %v2227, %v2391
  %v2556 = vsub.f32 %v2228, %v2392
  %v2557 = vsub.f32 %v2229, %v2393
  %v2558 = vsub.f32 %v2230, %v2394
  %v2559 = vsub.f32 %v2231, %v2395
  %v2560 = vsub.f32 %v2232, %v2396
  %v2561 = vsub.f32 %v2233, %v2397
  %v2562 = vsub.f32 %v2234, %v2398
  %v2563 = vsub.f32 %v2235, %v2399
  %v2564 = vsub.f32 %v2236, %v2400
  %v2565 = vsub.f32 %v2237, %v2401
  %v2566 = vsub.f32 %v2238, %v2402
  %v2567 = vsub.f32 %v2239, %v2403
  %v2568 = vsub.f32 %v2240, %v2404
  %v2569 = vsub.f32 %v2241, %v2405
  %v2570 = vsub.f32 %v2242, %v2406
  %v2571 = vsub.f32 %v2243, %v2407
  %v2572 = vsub.f32 %v2244, %v2408
  %v2573 = vsub.f32 %v2245, %v2409
  %v2574 = vsub.f32 %v2246, %v2410
  %v2575 = vsub.f32 %v2247, %v2411
  %v2576 = vsub.f32 %v2248, %v2412
  %v2577 = vsub.f32 %v2249, %v2413
  %v2578 = vsub.f32 %v2250, %v2414
  %v2579 = vsub.f32 %v2251, %v2415
  %v2580 = vsub.f32 %v2252, %v2416
  %v2581 = vsub.f32 %v2253, %v2417
  %v2582 = vsub.f32 %v2254, %v2418
  %v2583 = vsub.f32 %v2255, %v2419
  %v2584 = vsub.f32 %v2256, %v2420
  %v2585 = vsub.f32 %v2257, %v2421
  %v2586 = vsub.f32 %v2258, %v2422
  %v2587 = vsub.f32 %v2259, %v2423
  %v2588 = vsub.f32 %v2260, %v2424
  %v2589 = vsub.f32 %v2261, %v2425
  %v2590 = vsub.f32 %v2262, %v2426
  %v2591 = vsub.f32 %v2263, %v2427
  %v2592 = vsub.f32 %v2264, %v2428
  %v2593 = vsub.f32 %v2265, %v2429
  %v2594 = vsub.f32 %v2266, %v2430
  %v2595 = vsub.f32 %v2267, %v2431
  %v2596 = vsub.f32 %v2268, %v2432
  %v2597 = vsub.f32 %v2269, %v2433
  %v2598 = vsub.f32 %v2270, %v2434
  %v2599 = vsub.f32 %v2271, %v2435
  %v2600 = vsub.f32 %v2272, %v2436
  %v2601 = vsub.f32 %v2273, %v2437
  %v2602 = vsub.f32 %v2274, %v2438
  %v2603 = vsub.f32 %v2275, %v2439
  %v2604 = vsub.f32 %v2276, %v2440
  %v2605 = vsub.f32 %v2277, %v2441
  %v2606 = vsub.f32 %v2278, %v2442
  %v2607 = vsub.f32 %v2279, %v2443
  %v2608 = vsub.f32 %v2280, %v2444
  %v2609 = vsub.f32 %v2281, %v2445
  %v2610 = vsub.f32 %v2282, %v2446
  %v2611 = vsub.f32 %v2283, %v2447
  %v2612 = vsub.f32 %v2284, %v2448
  %v2613 = vsub.f32 %v2285, %v2449
  %v2614 = vsub.f32 %v2286, %v2450
  %v2615 = vsub.f32 %v2287, %v2451
  %v2616 = vsub.f32 %v2288, %v2452
  %v2617 = vsub.f32 %v2289, %v2453
  %v2618 = vsub.f32 %v2290, %v2454
  %v2619 = vsub.f32 %v2291, %v2455
  %v2620 = vsub.f32 %v2292, %v2456
  %v2621 = vsub.f32 %v2293, %v2457
  %v2622 = vsub.f32 %v2294, %v2458
  %v2623 = vsub.f32 %v2295, %v2459
  %v2624 = vsub.f32 %v2296, %v2460
  %v2625 = vsub.f32 %v2297, %v2461
  %v2626 = vsub.f32 %v2298, %v2462
  %v2627 = vsub.f32 %v2299, %v2463
  %v2628 = vsub.f32 %v2300, %v2464
  %v2629 = vsub.f32 %v2301, %v2465
  %v2630 = vsub.f32 %v2302, %v2466
  %v2631 = vsub.f32 %v2303, %v2467
  %v2632 = vsub.f32 %v2304, %v2468
  %v2633 = vsub.f32 %v2305, %v2469
  %v2634 = vsub.f32 %v2306, %v2470
  %v2635 = vsub.f32 %v2307, %v2471
  %v2636 = vsub.f32 %v2308, %v2472
  %v2637 = vsub.f32 %v2309, %v2473
  %v2638 = vsub.f32 %v2310, %v2474
  %v2639 = vsub.f32 %v2311, %v2475
  %v2640 = vsub.f32 %v2312, %v2476
  %v2641 = vsub.f32 %v2313, %v2477
  %v2642 = vsub.f32 %v2314, %v2478
  %v2643 = vmax.f32 %v2479, 0.0
  %v2644 = vmax.f32 %v2480, 0.0
  %v2645 = vmax.f32 %v2481, 0.0
  %v2646 = vmax.f32 %v2482, 0.0
  %v2647 = vmax.f32 %v2483, 0.0
  %v2648 = vmax.f32 %v2484, 0.0
  %v2649 = vmax.f32 %v2485, 0.0
  %v2650 = vmax.f32 %v2486, 0.0
  %v2651 = vmax.f32 %v2487, 0.0
  %v2652 = vmax.f32 %v2488, 0.0
  %v2653 = vmax.f32 %v2489, 0.0
  %v2654 = vmax.f32 %v2490, 0.0
  %v2655 = vmax.f32 %v2491, 0.0
  %v2656 = vmax.f32 %v2492, 0.0
  %v2657 = vmax.f32 %v2493, 0.0
  %v2658 = vmax.f32 %v2494, 0.0
  %v2659 = vmax.f32 %v2495, 0.0
  %v2660 = vmax.f32 %v2496, 0.0
  %v2661 = vmax.f32 %v2497, 0.0
  %v2662 = vmax.f32 %v2498, 0.0
  %v2663 = vmax.f32 %v2499, 0.0
  %v2664 = vmax.f32 %v2500, 0.0
  %v2665 = vmax.f32 %v2501, 0.0
  %v2666 = vmax.f32 %v2502, 0.0
  %v2667 = vmax.f32 %v2503, 0.0
  %v2668 = vmax.f32 %v2504, 0.0
  %v2669 = vmax.f32 %v2505, 0.0
  %v2670 = vmax.f32 %v2506, 0.0
  %v2671 = vmax.f32 %v2507, 0.0
  %v2672 = vmax.f32 %v2508, 0.0
  %v2673 = vmax.f32 %v2509, 0.0
  %v2674 = vmax.f32 %v2510, 0.0
  %v2675 = vmax.f32 %v2511, 0.0
  %v2676 = vmax.f32 %v2512, 0.0
  %v2677 = vmax.f32 %v2513, 0.0
  %v2678 = vmax.f32 %v2514, 0.0
  %v2679 = vmax.f32 %v2515, 0.0
  %v2680 = vmax.f32 %v2516, 0.0
  %v2681 = vmax.f32 %v2517, 0.0
  %v2682 = vmax.f32 %v2518, 0.0
  %v2683 = vmax.f32 %v2519, 0.0
  %v2684 = vmax.f32 %v2520, 0.0
  %v2685 = vmax.f32 %v2521, 0.0
  %v2686 = vmax.f32 %v2522, 0.0
  %v2687 = vmax.f32 %v2523, 0.0
  %v2688 = vmax.f32 %v2524, 0.0
  %v2689 = vmax.f32 %v2525, 0.0
  %v2690 = vmax.f32 %v2526, 0.0
  %v2691 = vmax.f32 %v2527, 0.0
  %v2692 = vmax.f32 %v2528, 0.0
  %v2693 = vmax.f32 %v2529, 0.0
  %v2694 = vmax.f32 %v2530, 0.0
  %v2695 = vmax.f32 %v2531, 0.0
  %v2696 = vmax.f32 %v2532, 0.0
  %v2697 = vmax.f32 %v2533, 0.0
  %v2698 = vmax.f32 %v2534, 0.0
  %v2699 = vmax.f32 %v2535, 0.0
  %v2700 = vmax.f32 %v2536, 0.0
  %v2701 = vmax.f32 %v2537, 0.0
  %v2702 = vmax.f32 %v2538, 0.0
  %v2703 = vmax.f32 %v2539, 0.0
  %v2704 = vmax.f32 %v2540, 0.0
  %v2705 = vmax.f32 %v2541, 0.0
  %v2706 = vmax.f32 %v2542, 0.0
  %v2707 = vmax.f32 %v2543, 0.0
  %v2708 = vmax.f32 %v2544, 0.0
  %v2709 = vmax.f32 %v2545, 0.0
  %v2710 = vmax.f32 %v2546, 0.0
  %v2711 = vmax.f32 %v2547, 0.0
  %v2712 = vmax.f32 %v2548, 0.0
  %v2713 = vmax.f32 %v2549, 0.0
  %v2714 = vmax.f32 %v2550, 0.0
  %v2715 = vmax.f32 %v2551, 0.0
  %v2716 = vmax.f32 %v2552, 0.0
  %v2717 = vmax.f32 %v2553, 0.0
  %v2718 = vmax.f32 %v2554, 0.0
  %v2719 = vmax.f32 %v2555, 0.0
  %v2720 = vmax.f32 %v2556, 0.0
  %v2721 = vmax.f32 %v2557, 0.0
  %v2722 = vmax.f32 %v2558, 0.0
  %v2723 = vmax.f32 %v2559, 0.0
  %v2724 = vmax.f32 %v2560, 0.0
  %v2725 = vmax.f32 %v2561, 0.0
  %v2726 = vmax.f32 %v2562, 0.0
  %v2727 = vmax.f32 %v2563, 0.0
  %v2728 = vmax.f32 %v2564, 0.0
  %v2729 = vmax.f32 %v2565, 0.0
  %v2730 = vmax.f32 %v2566, 0.0
  %v2731 = vmax.f32 %v2567, 0.0
  %v2732 = vmax.f32 %v2568, 0.0
  %v2733 = vmax.f32 %v2569, 0.0
  %v2734 = vmax.f32 %v2570, 0.0
  %v2735 = vmax.f32 %v2571, 0.0
  %v2736 = vmax.f32 %v2572, 0.0
  %v2737 = vmax.f32 %v2573, 0.0
  %v2738 = vmax.f32 %v2574, 0.0
  %v2739 = vmax.f32 %v2575, 0.0
  %v2740 = vmax.f32 %v2576, 0.0
  %v2741 = vmax.f32 %v2577, 0.0
  %v2742 = vmax.f32 %v2578, 0.0
  %v2743 = vmax.f32 %v2579, 0.0
  %v2744 = vmax.f32 %v2580, 0.0
  %v2745 = vmax.f32 %v2581, 0.0
  %v2746 = vmax.f32 %v2582, 0.0
  %v2747 = vmax.f32 %v2583, 0.0
  %v2748 = vmax.f32 %v2584, 0.0
  %v2749 = vmax.f32 %v2585, 0.0
  %v2750 = vmax.f32 %v2586, 0.0
  %v2751 = vmax.f32 %v2587, 0.0
  %v2752 = vmax.f32 %v2588, 0.0
  %v2753 = vmax.f32 %v2589, 0.0
  %v2754 = vmax.f32 %v2590, 0.0
  %v2755 = vmax.f32 %v2591, 0.0
  %v2756 = vmax.f32 %v2592, 0.0
  %v2757 = vmax.f32 %v2593, 0.0
  %v2758 = vmax.f32 %v2594, 0.0
  %v2759 = vmax.f32 %v2595, 0.0
  %v2760 = vmax.f32 %v2596, 0.0
  %v2761 = vmax.f32 %v2597, 0.0
  %v2762 = vmax.f32 %v2598, 0.0
  %v2763 = vmax.f32 %v2599, 0.0
  %v2764 = vmax.f32 %v2600, 0.0
  %v2765 = vmax.f32 %v2601, 0.0
  %v2766 = vmax.f32 %v2602, 0.0
  %v2767 = vmax.f32 %v2603, 0.0
  %v2768 = vmax.f32 %v2604, 0.0
  %v2769 = vmax.f32 %v2605, 0.0
  %v2770 = vmax.f32 %v2606, 0.0
  %v2771 = vmax.f32 %v2607, 0.0
  %v2772 = vmax.f32 %v2608, 0.0
  %v2773 = vmax.f32 %v2609, 0.0
  %v2774 = vmax.f32 %v2610, 0.0
  %v2775 = vmax.f32 %v2611, 0.0
  %v2776 = vmax.f32 %v2612, 0.0
  %v2777 = vmax.f32 %v2613, 0.0
  %v2778 = vmax.f32 %v2614, 0.0
  %v2779 = vmax.f32 %v2615, 0.0
  %v2780 = vmax.f32 %v2616, 0.0
  %v2781 = vmax.f32 %v2617, 0.0
  %v2782 = vmax.f32 %v2618, 0.0
  %v2783 = vmax.f32 %v2619, 0.0
  %v2784 = vmax.f32 %v2620, 0.0
  %v2785 = vmax.f32 %v2621, 0.0
  %v2786 = vmax.f32 %v2622, 0.0
  %v2787 = vmax.f32 %v2623, 0.0
  %v2788 = vmax.f32 %v2624, 0.0
  %v2789 = vmax.f32 %v2625, 0.0
  %v2790 = vmax.f32 %v2626, 0.0
  %v2791 = vmax.f32 %v2627, 0.0
  %v2792 = vmax.f32 %v2628, 0.0
  %v2793 = vmax.f32 %v2629, 0.0
  %v2794 = vmax.f32 %v2630, 0.0
  %v2795 = vmax.f32 %v2631, 0.0
  %v2796 = vmax.f32 %v2632, 0.0
  %v2797 = vmax.f32 %v2633, 0.0
  %v2798 = vmax.f32 %v2634, 0.0
  %v2799 = vmax.f32 %v2635, 0.0
  %v2800 = vmax.f32 %v2636, 0.0
  %v2801 = vmax.f32 %v2637, 0.0
  %v2802 = vmax.f32 %v2638, 0.0
  %v2803 = vmax.f32 %v2639, 0.0
  %v2804 = vmax.f32 %v2640, 0.0
  %v2805 = vmax.f32 %v2641, 0.0
  %v2806 = vmax.f32 %v2642, 0.0
  %v2807 = vadd.f32 %v2643, 1e-05
  %v2808 = vadd.f32 %v2644, 1e-05
  %v2809 = vadd.f32 %v2645, 1e-05
  %v2810 = vadd.f32 %v2646, 1e-05
  %v2811 = vadd.f32 %v2647, 1e-05
  %v2812 = vadd.f32 %v2648, 1e-05
  %v2813 = vadd.f32 %v2649, 1e-05
  %v2814 = vadd.f32 %v2650, 1e-05
  %v2815 = vadd.f32 %v2651, 1e-05
  %v2816 = vadd.f32 %v2652, 1e-05
  %v2817 = vadd.f32 %v2653, 1e-05
  %v2818 = vadd.f32 %v2654, 1e-05
  %v2819 = vadd.f32 %v2655, 1e-05
  %v2820 = vadd.f32 %v2656, 1e-05
  %v2821 = vadd.f32 %v2657, 1e-05
  %v2822 = vadd.f32 %v2658, 1e-05
  %v2823 = vadd.f32 %v2659, 1e-05
  %v2824 = vadd.f32 %v2660, 1e-05
  %v2825 = vadd.f32 %v2661, 1e-05
  %v2826 = vadd.f32 %v2662, 1e-05
  %v2827 = vadd.f32 %v2663, 1e-05
  %v2828 = vadd.f32 %v2664, 1e-05
  %v2829 = vadd.f32 %v2665, 1e-05
  %v2830 = vadd.f32 %v2666, 1e-05
  %v2831 = vadd.f32 %v2667, 1e-05
  %v2832 = vadd.f32 %v2668, 1e-05
  %v2833 = vadd.f32 %v2669, 1e-05
  %v2834 = vadd.f32 %v2670, 1e-05
  %v2835 = vadd.f32 %v2671, 1e-05
  %v2836 = vadd.f32 %v2672, 1e-05
  %v2837 = vadd.f32 %v2673, 1e-05
  %v2838 = vadd.f32 %v2674, 1e-05
  %v2839 = vadd.f32 %v2675, 1e-05
  %v2840 = vadd.f32 %v2676, 1e-05
  %v2841 = vadd.f32 %v2677, 1e-05
  %v2842 = vadd.f32 %v2678, 1e-05
  %v2843 = vadd.f32 %v2679, 1e-05
  %v2844 = vadd.f32 %v2680, 1e-05
  %v2845 = vadd.f32 %v2681, 1e-05
  %v2846 = vadd.f32 %v2682, 1e-05
  %v2847 = vadd.f32 %v2683, 1e-05
  %v2848 = vadd.f32 %v2684, 1e-05
  %v2849 = vadd.f32 %v2685, 1e-05
  %v2850 = vadd.f32 %v2686, 1e-05
  %v2851 = vadd.f32 %v2687, 1e-05
  %v2852 = vadd.f32 %v2688, 1e-05
  %v2853 = vadd.f32 %v2689, 1e-05
  %v2854 = vadd.f32 %v2690, 1e-05
  %v2855 = vadd.f32 %v2691, 1e-05
  %v2856 = vadd.f32 %v2692, 1e-05
  %v2857 = vadd.f32 %v2693, 1e-05
  %v2858 = vadd.f32 %v2694, 1e-05
  %v2859 = vadd.f32 %v2695, 1e-05
  %v2860 = vadd.f32 %v2696, 1e-05
  %v2861 = vadd.f32 %v2697, 1e-05
  %v2862 = vadd.f32 %v2698, 1e-05
  %v2863 = vadd.f32 %v2699, 1e-05
  %v2864 = vadd.f32 %v2700, 1e-05
  %v2865 = vadd.f32 %v2701, 1e-05
  %v2866 = vadd.f32 %v2702, 1e-05
  %v2867 = vadd.f32 %v2703, 1e-05
  %v2868 = vadd.f32 %v2704, 1e-05
  %v2869 = vadd.f32 %v2705, 1e-05
  %v2870 = vadd.f32 %v2706, 1e-05
  %v2871 = vadd.f32 %v2707, 1e-05
  %v2872 = vadd.f32 %v2708, 1e-05
  %v2873 = vadd.f32 %v2709, 1e-05
  %v2874 = vadd.f32 %v2710, 1e-05
  %v2875 = vadd.f32 %v2711, 1e-05
  %v2876 = vadd.f32 %v2712, 1e-05
  %v2877 = vadd.f32 %v2713, 1e-05
  %v2878 = vadd.f32 %v2714, 1e-05
  %v2879 = vadd.f32 %v2715, 1e-05
  %v2880 = vadd.f32 %v2716, 1e-05
  %v2881 = vadd.f32 %v2717, 1e-05
  %v2882 = vadd.f32 %v2718, 1e-05
  %v2883 = vadd.f32 %v2719, 1e-05
  %v2884 = vadd.f32 %v2720, 1e-05
  %v2885 = vadd.f32 %v2721, 1e-05
  %v2886 = vadd.f32 %v2722, 1e-05
  %v2887 = vadd.f32 %v2723, 1e-05
  %v2888 = vadd.f32 %v2724, 1e-05
  %v2889 = vadd.f32 %v2725, 1e-05
  %v2890 = vadd.f32 %v2726, 1e-05
  %v2891 = vadd.f32 %v2727, 1e-05
  %v2892 = vadd.f32 %v2728, 1e-05
  %v2893 = vadd.f32 %v2729, 1e-05
  %v2894 = vadd.f32 %v2730, 1e-05
  %v2895 = vadd.f32 %v2731, 1e-05
  %v2896 = vadd.f32 %v2732, 1e-05
  %v2897 = vadd.f32 %v2733, 1e-05
  %v2898 = vadd.f32 %v2734, 1e-05
  %v2899 = vadd.f32 %v2735, 1e-05
  %v2900 = vadd.f32 %v2736, 1e-05
  %v2901 = vadd.f32 %v2737, 1e-05
  %v2902 = vadd.f32 %v2738, 1e-05
  %v2903 = vadd.f32 %v2739, 1e-05
  %v2904 = vadd.f32 %v2740, 1e-05
  %v2905 = vadd.f32 %v2741, 1e-05
  %v2906 = vadd.f32 %v2742, 1e-05
  %v2907 = vadd.f32 %v2743, 1e-05
  %v2908 = vadd.f32 %v2744, 1e-05
  %v2909 = vadd.f32 %v2745, 1e-05
  %v2910 = vadd.f32 %v2746, 1e-05
  %v2911 = vadd.f32 %v2747, 1e-05
  %v2912 = vadd.f32 %v2748, 1e-05
  %v2913 = vadd.f32 %v2749, 1e-05
  %v2914 = vadd.f32 %v2750, 1e-05
  %v2915 = vadd.f32 %v2751, 1e-05
  %v2916 = vadd.f32 %v2752, 1e-05
  %v2917 = vadd.f32 %v2753, 1e-05
  %v2918 = vadd.f32 %v2754, 1e-05
  %v2919 = vadd.f32 %v2755, 1e-05
  %v2920 = vadd.f32 %v2756, 1e-05
  %v2921 = vadd.f32 %v2757, 1e-05
  %v2922 = vadd.f32 %v2758, 1e-05
  %v2923 = vadd.f32 %v2759, 1e-05
  %v2924 = vadd.f32 %v2760, 1e-05
  %v2925 = vadd.f32 %v2761, 1e-05
  %v2926 = vadd.f32 %v2762, 1e-05
  %v2927 = vadd.f32 %v2763, 1e-05
  %v2928 = vadd.f32 %v2764, 1e-05
  %v2929 = vadd.f32 %v2765, 1e-05
  %v2930 = vadd.f32 %v2766, 1e-05
  %v2931 = vadd.f32 %v2767, 1e-05
  %v2932 = vadd.f32 %v2768, 1e-05
  %v2933 = vadd.f32 %v2769, 1e-05
  %v2934 = vadd.f32 %v2770, 1e-05
  %v2935 = vadd.f32 %v2771, 1e-05
  %v2936 = vadd.f32 %v2772, 1e-05
  %v2937 = vadd.f32 %v2773, 1e-05
  %v2938 = vadd.f32 %v2774, 1e-05
  %v2939 = vadd.f32 %v2775, 1e-05
  %v2940 = vadd.f32 %v2776, 1e-05
  %v2941 = vadd.f32 %v2777, 1e-05
  %v2942 = vadd.f32 %v2778, 1e-05
  %v2943 = vadd.f32 %v2779, 1e-05
  %v2944 = vadd.f32 %v2780, 1e-05
  %v2945 = vadd.f32 %v2781, 1e-05
  %v2946 = vadd.f32 %v2782, 1e-05
  %v2947 = vadd.f32 %v2783, 1e-05
  %v2948 = vadd.f32 %v2784, 1e-05
  %v2949 = vadd.f32 %v2785, 1e-05
  %v2950 = vadd.f32 %v2786, 1e-05
  %v2951 = vadd.f32 %v2787, 1e-05
  %v2952 = vadd.f32 %v2788, 1e-05
  %v2953 = vadd.f32 %v2789, 1e-05
  %v2954 = vadd.f32 %v2790, 1e-05
  %v2955 = vadd.f32 %v2791, 1e-05
  %v2956 = vadd.f32 %v2792, 1e-05
  %v2957 = vadd.f32 %v2793, 1e-05
  %v2958 = vadd.f32 %v2794, 1e-05
  %v2959 = vadd.f32 %v2795, 1e-05
  %v2960 = vadd.f32 %v2796, 1e-05
  %v2961 = vadd.f32 %v2797, 1e-05
  %v2962 = vadd.f32 %v2798, 1e-05
  %v2963 = vadd.f32 %v2799, 1e-05
  %v2964 = vadd.f32 %v2800, 1e-05
  %v2965 = vadd.f32 %v2801, 1e-05
  %v2966 = vadd.f32 %v2802, 1e-05
  %v2967 = vadd.f32 %v2803, 1e-05
  %v2968 = vadd.f32 %v2804, 1e-05
  %v2969 = vadd.f32 %v2805, 1e-05
  %v2970 = vadd.f32 %v2806, 1e-05
  %v2971 = vrsqrt.pop %v2807
  %v2972 = vrsqrt.pop %v2808
  %v2973 = vrsqrt.pop %v2809
  %v2974 = vrsqrt.pop %v2810
  %v2975 = vrsqrt.pop %v2811
  %v2976 = vrsqrt.pop %v2812
  %v2977 = vrsqrt.pop %v2813
  %v2978 = vrsqrt.pop %v2814
  %v2979 = vrsqrt.pop %v2815
  %v2980 = vrsqrt.pop %v2816
  %v2981 = vrsqrt.pop %v2817
  %v2982 = vrsqrt.pop %v2818
  %v2983 = vrsqrt.pop %v2819
  %v2984 = vrsqrt.pop %v2820
  %v2985 = vrsqrt.pop %v2821
  %v2986 = vrsqrt.pop %v2822
  %v2987 = vrsqrt.pop %v2823
  %v2988 = vrsqrt.pop %v2824
  %v2989 = vrsqrt.pop %v2825
  %v2990 = vrsqrt.pop %v2826
  %v2991 = vrsqrt.pop %v2827
  %v2992 = vrsqrt.pop %v2828
  %v2993 = vrsqrt.pop %v2829
  %v2994 = vrsqrt.pop %v2830
  %v2995 = vrsqrt.pop %v2831
  %v2996 = vrsqrt.pop %v2832
  %v2997 = vrsqrt.pop %v2833
  %v2998 = vrsqrt.pop %v2834
  %v2999 = vrsqrt.pop %v2835
  %v3000 = vrsqrt.pop %v2836
  %v3001 = vrsqrt.pop %v2837
  %v3002 = vrsqrt.pop %v2838
  %v3003 = vrsqrt.pop %v2839
  %v3004 = vrsqrt.pop %v2840
  %v3005 = vrsqrt.pop %v2841
  %v3006 = vrsqrt.pop %v2842
  %v3007 = vrsqrt.pop %v2843
  %v3008 = vrsqrt.pop %v2844
  %v3009 = vrsqrt.pop %v2845
  %v3010 = vrsqrt.pop %v2846
  %v3011 = vrsqrt.pop %v2847
  %v3012 = vrsqrt.pop %v2848
  %v3013 = vrsqrt.pop %v2849
  %v3014 = vrsqrt.pop %v2850
  %v3015 = vrsqrt.pop %v2851
  %v3016 = vrsqrt.pop %v2852
  %v3017 = vrsqrt.pop %v2853
  %v3018 = vrsqrt.pop %v2854
  %v3019 = vrsqrt.pop %v2855
  %v3020 = vrsqrt.pop %v2856
  %v3021 = vrsqrt.pop %v2857
  %v3022 = vrsqrt.pop %v2858
  %v3023 = vrsqrt.pop %v2859
  %v3024 = vrsqrt.pop %v2860
  %v3025 = vrsqrt.pop %v2861
  %v3026 = vrsqrt.pop %v2862
  %v3027 = vrsqrt.pop %v2863
  %v3028 = vrsqrt.pop %v2864
  %v3029 = vrsqrt.pop %v2865
  %v3030 = vrsqrt.pop %v2866
  %v3031 = vrsqrt.pop %v2867
  %v3032 = vrsqrt.pop %v2868
  %v3033 = vrsqrt.pop %v2869
  %v3034 = vrsqrt.pop %v2870
  %v3035 = vrsqrt.pop %v2871
  %v3036 = vrsqrt.pop %v2872
  %v3037 = vrsqrt.pop %v2873
  %v3038 = vrsqrt.pop %v2874
  %v3039 = vrsqrt.pop %v2875
  %v3040 = vrsqrt.pop %v2876
  %v3041 = vrsqrt.pop %v2877
  %v3042 = vrsqrt.pop %v2878
  %v3043 = vrsqrt.pop %v2879
  %v3044 = vrsqrt.pop %v2880
  %v3045 = vrsqrt.pop %v2881
  %v3046 = vrsqrt.pop %v2882
  %v3047 = vrsqrt.pop %v2883
  %v3048 = vrsqrt.pop %v2884
  %v3049 = vrsqrt.pop %v2885
  %v3050 = vrsqrt.pop %v2886
  %v3051 = vrsqrt.pop %v2887
  %v3052 = vrsqrt.pop %v2888
  %v3053 = vrsqrt.pop %v2889
  %v3054 = vrsqrt.pop %v2890
  %v3055 = vrsqrt.pop %v2891
  %v3056 = vrsqrt.pop %v2892
  %v3057 = vrsqrt.pop %v2893
  %v3058 = vrsqrt.pop %v2894
  %v3059 = vrsqrt.pop %v2895
  %v3060 = vrsqrt.pop %v2896
  %v3061 = vrsqrt.pop %v2897
  %v3062 = vrsqrt.pop %v2898
  %v3063 = vrsqrt.pop %v2899
  %v3064 = vrsqrt.pop %v2900
  %v3065 = vrsqrt.pop %v2901
  %v3066 = vrsqrt.pop %v2902
  %v3067 = vrsqrt.pop %v2903
  %v3068 = vrsqrt.pop %v2904
  %v3069 = vrsqrt.pop %v2905
  %v3070 = vrsqrt.pop %v2906
  %v3071 = vrsqrt.pop %v2907
  %v3072 = vrsqrt.pop %v2908
  %v3073 = vrsqrt.pop %v2909
  %v3074 = vrsqrt.pop %v2910
  %v3075 = vrsqrt.pop %v2911
  %v3076 = vrsqrt.pop %v2912
  %v3077 = vrsqrt.pop %v2913
  %v3078 = vrsqrt.pop %v2914
  %v3079 = vrsqrt.pop %v2915
  %v3080 = vrsqrt.pop %v2916
  %v3081 = vrsqrt.pop %v2917
  %v3082 = vrsqrt.pop %v2918
  %v3083 = vrsqrt.pop %v2919
  %v3084 = vrsqrt.pop %v2920
  %v3085 = vrsqrt.pop %v2921
  %v3086 = vrsqrt.pop %v2922
  %v3087 = vrsqrt.pop %v2923
  %v3088 = vrsqrt.pop %v2924
  %v3089 = vrsqrt.pop %v2925
  %v3090 = vrsqrt.pop %v2926
  %v3091 = vrsqrt.pop %v2927
  %v3092 = vrsqrt.pop %v2928
  %v3093 = vrsqrt.pop %v2929
  %v3094 = vrsqrt.pop %v2930
  %v3095 = vrsqrt.pop %v2931
  %v3096 = vrsqrt.pop %v2932
  %v3097 = vrsqrt.pop %v2933
  %v3098 = vrsqrt.pop %v2934
  %v3099 = vrsqrt.pop %v2935
  %v3100 = vrsqrt.pop %v2936
  %v3101 = vrsqrt.pop %v2937
  %v3102 = vrsqrt.pop %v2938
  %v3103 = vrsqrt.pop %v2939
  %v3104 = vrsqrt.pop %v2940
  %v3105 = vrsqrt.pop %v2941
  %v3106 = vrsqrt.pop %v2942
  %v3107 = vrsqrt.pop %v2943
  %v3108 = vrsqrt.pop %v2944
  %v3109 = vrsqrt.pop %v2945
  %v3110 = vrsqrt.pop %v2946
  %v3111 = vrsqrt.pop %v2947
  %v3112 = vrsqrt.pop %v2948
  %v3113 = vrsqrt.pop %v2949
  %v3114 = vrsqrt.pop %v2950
  %v3115 = vrsqrt.pop %v2951
  %v3116 = vrsqrt.pop %v2952
  %v3117 = vrsqrt.pop %v2953
  %v3118 = vrsqrt.pop %v2954
  %v3119 = vrsqrt.pop %v2955
  %v3120 = vrsqrt.pop %v2956
  %v3121 = vrsqrt.pop %v2957
  %v3122 = vrsqrt.pop %v2958
  %v3123 = vrsqrt.pop %v2959
  %v3124 = vrsqrt.pop %v2960
  %v3125 = vrsqrt.pop %v2961
  %v3126 = vrsqrt.pop %v2962
  %v3127 = vrsqrt.pop %v2963
  %v3128 = vrsqrt.pop %v2964
  %v3129 = vrsqrt.pop %v2965
  %v3130 = vrsqrt.pop %v2966
  %v3131 = vrsqrt.pop %v2967
  %v3132 = vrsqrt.pop %v2968
  %v3133 = vrsqrt.pop %v2969
  %v3134 = vrsqrt.pop %v2970
  %v3135 = vld [vmem:[%s1] sm:$0xff]
  %v3136 = vld [vmem:[%s1 + $0x8] sm:$0xff]
  %v3137 = vld [vmem:[%s1 + $0x10] sm:$0xff]
  %v3138 = vld [vmem:[%s1 + $0x18] sm:$0xff]
  %v3139 = vld [vmem:[%s1 + $0x20] sm:$0xff]
  %v3140 = vld [vmem:[%s1 + $0x28] sm:$0xff]
  %v3141 = vld [vmem:[%s1 + $0x30] sm:$0xff]
  %v3142 = vld [vmem:[%s1 + $0x38] sm:$0xff]
  %v3143 = vld [vmem:[%s1 + $0x40] sm:$0xff]
  %v3144 = vld [vmem:[%s1 + $0x48] sm:$0xff]
  %v3145 = vld [vmem:[%s1 + $0x50] sm:$0xff]
  %v3146 = vld [vmem:[%s1 + $0x58] sm:$0xff]
  %v3147 = vld [vmem:[%s1 + $0x60] sm:$0xff]
  %v3148 = vld [vmem:[%s1 + $0x68] sm:$0xff]
  %v3149 = vld [vmem:[%s1 + $0x70] sm:$0xff]
  %v3150 = vld [vmem:[%s1 + $0x78] sm:$0xff]
  %v3151 = vld [vmem:[%s1 + $0x80] sm:$0xff]
  %v3152 = vld [vmem:[%s1 + $0x88] sm:$0xff]
  %v3153 = vld [vmem:[%s1 + $0x90] sm:$0xff]
  %v3154 = vld [vmem:[%s1 + $0x98] sm:$0xff]
  %v3155 = vld [vmem:[%s1 + $0xa0] sm:$0xff]
  %v3156 = vld [vmem:[%s1 + $0xa8] sm:$0xff]
  %v3157 = vld [vmem:[%s1 + $0xb0] sm:$0xff]
  %v3158 = vld [vmem:[%s1 + $0xb8] sm:$0xff]
  %v3159 = vld [vmem:[%s1 + $0xc0] sm:$0xff]
  %v3160 = vld [vmem:[%s1 + $0xc8] sm:$0xff]
  %v3161 = vld [vmem:[%s1 + $0xd0] sm:$0xff]
  %v3162 = vld [vmem:[%s1 + $0xd8] sm:$0xff]
  %v3163 = vld [vmem:[%s1 + $0xe0] sm:$0xff]
  %v3164 = vld [vmem:[%s1 + $0xe8] sm:$0xff]
  %v3165 = vld [vmem:[%s1 + $0xf0] sm:$0xff]
  %v3166 = vld [vmem:[%s1 + $0xf8] sm:$0xff]
  %v3167 = vld [vmem:[%s1 + $0x100] sm:$0xff]
  %v3168 = vld [vmem:[%s1 + $0x108] sm:$0xff]
  %v3169 = vld [vmem:[%s1 + $0x110] sm:$0xff]
  %v3170 = vld [vmem:[%s1 + $0x118] sm:$0xff]
  %v3171 = vld [vmem:[%s1 + $0x120] sm:$0xff]
  %v3172 = vld [vmem:[%s1 + $0x128] sm:$0xff]
  %v3173 = vld [vmem:[%s1 + $0x130] sm:$0xff]
  %v3174 = vld [vmem:[%s1 + $0x138] sm:$0xff]
  %v3175 = vld [vmem:[%s1 + $0x140] sm:$0xff]
  %v3176 = vld [vmem:[%s1 + $0x148] sm:$0xff]
  %v3177 = vld [vmem:[%s1 + $0x150] sm:$0xff]
  %v3178 = vld [vmem:[%s1 + $0x158] sm:$0xff]
  %v3179 = vld [vmem:[%s1 + $0x160] sm:$0xff]
  %v3180 = vld [vmem:[%s1 + $0x168] sm:$0xff]
  %v3181 = vld [vmem:[%s1 + $0x170] sm:$0xff]
  %v3182 = vld [vmem:[%s1 + $0x178] sm:$0xff]
  %v3183 = vld [vmem:[%s1 + $0x180] sm:$0xff]
  %v3184 = vld [vmem:[%s1 + $0x188] sm:$0xff]
  %v3185 = vld [vmem:[%s1 + $0x190] sm:$0xff]
  %v3186 = vld [vmem:[%s1 + $0x198] sm:$0xff]
  %v3187 = vld [vmem:[%s1 + $0x1a0] sm:$0xff]
  %v3188 = vld [vmem:[%s1 + $0x1a8] sm:$0xff]
  %v3189 = vld [vmem:[%s1 + $0x1b0] sm:$0xff]
  %v3190 = vld [vmem:[%s1 + $0x1b8] sm:$0xff]
  %v3191 = vld [vmem:[%s1 + $0x1c0] sm:$0xff]
  %v3192 = vld [vmem:[%s1 + $0x1c8] sm:$0xff]
  %v3193 = vld [vmem:[%s1 + $0x1d0] sm:$0xff]
  %v3194 = vld [vmem:[%s1 + $0x1d8] sm:$0xff]
  %v3195 = vld [vmem:[%s1 + $0x1e0] sm:$0xff]
  %v3196 = vld [vmem:[%s1 + $0x1e8] sm:$0xff]
  %v3197 = vld [vmem:[%s1 + $0x1f0] sm:$0xff]
  %v3198 = vld [vmem:[%s1 + $0x1f8] sm:$0xff]
  %v3199 = vld [vmem:[%s1 + $0x200] sm:$0xff]
  %v3200 = vld [vmem:[%s1 + $0x208] sm:$0xff]
  %v3201 = vld [vmem:[%s1 + $0x210] sm:$0xff]
  %v3202 = vld [vmem:[%s1 + $0x218] sm:$0xff]
  %v3203 = vld [vmem:[%s1 + $0x220] sm:$0xff]
  %v3204 = vld [vmem:[%s1 + $0x228] sm:$0xff]
  %v3205 = vld [vmem:[%s1 + $0x230] sm:$0xff]
  %v3206 = vld [vmem:[%s1 + $0x238] sm:$0xff]
  %v3207 = vld [vmem:[%s1 + $0x240] sm:$0xff]
  %v3208 = vld [vmem:[%s1 + $0x248] sm:$0xff]
  %v3209 = vld [vmem:[%s1 + $0x250] sm:$0xff]
  %v3210 = vld [vmem:[%s1 + $0x258] sm:$0xff]
  %v3211 = vld [vmem:[%s1 + $0x260] sm:$0xff]
  %v3212 = vld [vmem:[%s1 + $0x268] sm:$0xff]
  %v3213 = vld [vmem:[%s1 + $0x270] sm:$0xff]
  %v3214 = vld [vmem:[%s1 + $0x278] sm:$0xff]
  %v3215 = vld [vmem:[%s1 + $0x280] sm:$0xff]
  %v3216 = vld [vmem:[%s1 + $0x288] sm:$0xff]
  %v3217 = vld [vmem:[%s1 + $0x290] sm:$0xff]
  %v3218 = vld [vmem:[%s1 + $0x298] sm:$0xff]
  %v3219 = vld [vmem:[%s1 + $0x2a0] sm:$0xff]
  %v3220 = vld [vmem:[%s1 + $0x2a8] sm:$0xff]
  %v3221 = vld [vmem:[%s1 + $0x2b0] sm:$0xff]
  %v3222 = vld [vmem:[%s1 + $0x2b8] sm:$0xff]
  %v3223 = vld [vmem:[%s1 + $0x2c0] sm:$0xff]
  %v3224 = vld [vmem:[%s1 + $0x2c8] sm:$0xff]
  %v3225 = vld [vmem:[%s1 + $0x2d0] sm:$0xff]
  %v3226 = vld [vmem:[%s1 + $0x2d8] sm:$0xff]
  %v3227 = vld [vmem:[%s1 + $0x2e0] sm:$0xff]
  %v3228 = vld [vmem:[%s1 + $0x2e8] sm:$0xff]
  %v3229 = vld [vmem:[%s1 + $0x2f0] sm:$0xff]
  %v3230 = vld [vmem:[%s1 + $0x2f8] sm:$0xff]
  %v3231 = vld [vmem:[%s1 + $0x300] sm:$0xff]
  %v3232 = vld [vmem:[%s1 + $0x308] sm:$0xff]
  %v3233 = vld [vmem:[%s1 + $0x310] sm:$0xff]
  %v3234 = vld [vmem:[%s1 + $0x318] sm:$0xff]
  %v3235 = vld [vmem:[%s1 + $0x320] sm:$0xff]
  %v3236 = vld [vmem:[%s1 + $0x328] sm:$0xff]
  %v3237 = vld [vmem:[%s1 + $0x330] sm:$0xff]
  %v3238 = vld [vmem:[%s1 + $0x338] sm:$0xff]
  %v3239 = vld [vmem:[%s1 + $0x340] sm:$0xff]
  %v3240 = vld [vmem:[%s1 + $0x348] sm:$0xff]
  %v3241 = vld [vmem:[%s1 + $0x350] sm:$0xff]
  %v3242 = vld [vmem:[%s1 + $0x358] sm:$0xff]
  %v3243 = vld [vmem:[%s1 + $0x360] sm:$0xff]
  %v3244 = vld [vmem:[%s1 + $0x368] sm:$0xff]
  %v3245 = vld [vmem:[%s1 + $0x370] sm:$0xff]
  %v3246 = vld [vmem:[%s1 + $0x378] sm:$0xff]
  %v3247 = vld [vmem:[%s1 + $0x380] sm:$0xff]
  %v3248 = vld [vmem:[%s1 + $0x388] sm:$0xff]
  %v3249 = vld [vmem:[%s1 + $0x390] sm:$0xff]
  %v3250 = vld [vmem:[%s1 + $0x398] sm:$0xff]
  %v3251 = vld [vmem:[%s1 + $0x3a0] sm:$0xff]
  %v3252 = vld [vmem:[%s1 + $0x3a8] sm:$0xff]
  %v3253 = vld [vmem:[%s1 + $0x3b0] sm:$0xff]
  %v3254 = vld [vmem:[%s1 + $0x3b8] sm:$0xff]
  %v3255 = vld [vmem:[%s1 + $0x3c0] sm:$0xff]
  %v3256 = vld [vmem:[%s1 + $0x3c8] sm:$0xff]
  %v3257 = vld [vmem:[%s1 + $0x3d0] sm:$0xff]
  %v3258 = vld [vmem:[%s1 + $0x3d8] sm:$0xff]
  %v3259 = vld [vmem:[%s1 + $0x3e0] sm:$0xff]
  %v3260 = vld [vmem:[%s1 + $0x3e8] sm:$0xff]
  %v3261 = vld [vmem:[%s1 + $0x3f0] sm:$0xff]
  %v3262 = vld [vmem:[%s1 + $0x3f8] sm:$0xff]
  %v3263 = vld [vmem:[%s1 + $0x400] sm:$0xff]
  %v3264 = vld [vmem:[%s1 + $0x408] sm:$0xff]
  %v3265 = vld [vmem:[%s1 + $0x410] sm:$0xff]
  %v3266 = vld [vmem:[%s1 + $0x418] sm:$0xff]
  %v3267 = vld [vmem:[%s1 + $0x420] sm:$0xff]
  %v3268 = vld [vmem:[%s1 + $0x428] sm:$0xff]
  %v3269 = vld [vmem:[%s1 + $0x430] sm:$0xff]
  %v3270 = vld [vmem:[%s1 + $0x438] sm:$0xff]
  %v3271 = vld [vmem:[%s1 + $0x440] sm:$0xff]
  %v3272 = vld [vmem:[%s1 + $0x448] sm:$0xff]
  %v3273 = vld [vmem:[%s1 + $0x450] sm:$0xff]
  %v3274 = vld [vmem:[%s1 + $0x458] sm:$0xff]
  %v3275 = vld [vmem:[%s1 + $0x460] sm:$0xff]
  %v3276 = vld [vmem:[%s1 + $0x468] sm:$0xff]
  %v3277 = vld [vmem:[%s1 + $0x470] sm:$0xff]
  %v3278 = vld [vmem:[%s1 + $0x478] sm:$0xff]
  %v3279 = vld [vmem:[%s1 + $0x480] sm:$0xff]
  %v3280 = vld [vmem:[%s1 + $0x488] sm:$0xff]
  %v3281 = vld [vmem:[%s1 + $0x490] sm:$0xff]
  %v3282 = vld [vmem:[%s1 + $0x498] sm:$0xff]
  %v3283 = vld [vmem:[%s1 + $0x4a0] sm:$0xff]
  %v3284 = vld [vmem:[%s1 + $0x4a8] sm:$0xff]
  %v3285 = vld [vmem:[%s1 + $0x4b0] sm:$0xff]
  %v3286 = vld [vmem:[%s1 + $0x4b8] sm:$0xff]
  %v3287 = vld [vmem:[%s1 + $0x4c0] sm:$0xff]
  %v3288 = vld [vmem:[%s1 + $0x4c8] sm:$0xff]
  %v3289 = vld [vmem:[%s1 + $0x4d0] sm:$0xff]
  %v3290 = vld [vmem:[%s1 + $0x4d8] sm:$0xff]
  %v3291 = vld [vmem:[%s1 + $0x4e0] sm:$0xff]
  %v3292 = vld [vmem:[%s1 + $0x4e8] sm:$0xff]
  %v3293 = vld [vmem:[%s1 + $0x4f0] sm:$0xff]
  %v3294 = vld [vmem:[%s1 + $0x4f8] sm:$0xff]
  %v3295 = vld [vmem:[%s1 + $0x500] sm:$0xff]
  %v3296 = vld [vmem:[%s1 + $0x508] sm:$0xff]
  %v3297 = vld [vmem:[%s1 + $0x510] sm:$0xff]
  %v3298 = vld [vmem:[%s1 + $0x518] sm:$0xff]
  %v3299 = vmul.f32 %v3135, %v2971
  %v3300 = vmul.f32 %v3136, %v2972
  %v3301 = vmul.f32 %v3137, %v2973
  %v3302 = vmul.f32 %v3138, %v2974
  %v3303 = vmul.f32 %v3139, %v2975
  %v3304 = vmul.f32 %v3140, %v2976
  %v3305 = vmul.f32 %v3141, %v2977
  %v3306 = vmul.f32 %v3142, %v2978
  %v3307 = vmul.f32 %v3143, %v2979
  %v3308 = vmul.f32 %v3144, %v2980
  %v3309 = vmul.f32 %v3145, %v2981
  %v3310 = vmul.f32 %v3146, %v2982
  %v3311 = vmul.f32 %v3147, %v2983
  %v3312 = vmul.f32 %v3148, %v2984
  %v3313 = vmul.f32 %v3149, %v2985
  %v3314 = vmul.f32 %v3150, %v2986
  %v3315 = vmul.f32 %v3151, %v2987
  %v3316 = vmul.f32 %v3152, %v2988
  %v3317 = vmul.f32 %v3153, %v2989
  %v3318 = vmul.f32 %v3154, %v2990
  %v3319 = vmul.f32 %v3155, %v2991
  %v3320 = vmul.f32 %v3156, %v2992
  %v3321 = vmul.f32 %v3157, %v2993
  %v3322 = vmul.f32 %v3158, %v2994
  %v3323 = vmul.f32 %v3159, %v2995
  %v3324 = vmul.f32 %v3160, %v2996
  %v3325 = vmul.f32 %v3161, %v2997
  %v3326 = vmul.f32 %v3162, %v2998
  %v3327 = vmul.f32 %v3163, %v2999
  %v3328 = vmul.f32 %v3164, %v3000
  %v3329 = vmul.f32 %v3165, %v3001
  %v3330 = vmul.f32 %v3166, %v3002
  %v3331 = vmul.f32 %v3167, %v3003
  %v3332 = vmul.f32 %v3168, %v3004
  %v3333 = vmul.f32 %v3169, %v3005
  %v3334 = vmul.f32 %v3170, %v3006
  %v3335 = vmul.f32 %v3171, %v3007
  %v3336 = vmul.f32 %v3172, %v3008
  %v3337 = vmul.f32 %v3173, %v3009
  %v3338 = vmul.f32 %v3174, %v3010
  %v3339 = vmul.f32 %v3175, %v3011
  %v3340 = vmul.f32 %v3176, %v3012
  %v3341 = vmul.f32 %v3177, %v3013
  %v3342 = vmul.f32 %v3178, %v3014
  %v3343 = vmul.f32 %v3179, %v3015
  %v3344 = vmul.f32 %v3180, %v3016
  %v3345 = vmul.f32 %v3181, %v3017
  %v3346 = vmul.f32 %v3182, %v3018
  %v3347 = vmul.f32 %v3183, %v3019
  %v3348 = vmul.f32 %v3184, %v3020
  %v3349 = vmul.f32 %v3185, %v3021
  %v3350 = vmul.f32 %v3186, %v3022
  %v3351 = vmul.f32 %v3187, %v3023
  %v3352 = vmul.f32 %v3188, %v3024
  %v3353 = vmul.f32 %v3189, %v3025
  %v3354 = vmul.f32 %v3190, %v3026
  %v3355 = vmul.f32 %v3191, %v3027
  %v3356 = vmul.f32 %v3192, %v3028
  %v3357 = vmul.f32 %v3193, %v3029
  %v3358 = vmul.f32 %v3194, %v3030
  %v3359 = vmul.f32 %v3195, %v3031
  %v3360 = vmul.f32 %v3196, %v3032
  %v3361 = vmul.f32 %v3197, %v3033
  %v3362 = vmul.f32 %v3198, %v3034
  %v3363 = vmul.f32 %v3199, %v3035
  %v3364 = vmul.f32 %v3200, %v3036
  %v3365 = vmul.f32 %v3201, %v3037
  %v3366 = vmul.f32 %v3202, %v3038
  %v3367 = vmul.f32 %v3203, %v3039
  %v3368 = vmul.f32 %v3204, %v3040
  %v3369 = vmul.f32 %v3205, %v3041
  %v3370 = vmul.f32 %v3206, %v3042
  %v3371 = vmul.f32 %v3207, %v3043
  %v3372 = vmul.f32 %v3208, %v3044
  %v3373 = vmul.f32 %v3209, %v3045
  %v3374 = vmul.f32 %v3210, %v3046
  %v3375 = vmul.f32 %v3211, %v3047
  %v3376 = vmul.f32 %v3212, %v3048
  %v3377 = vmul.f32 %v3213, %v3049
  %v3378 = vmul.f32 %v3214, %v3050
  %v3379 = vmul.f32 %v3215, %v3051
  %v3380 = vmul.f32 %v3216, %v3052
  %v3381 = vmul.f32 %v3217, %v3053
  %v3382 = vmul.f32 %v3218, %v3054
  %v3383 = vmul.f32 %v3219, %v3055
  %v3384 = vmul.f32 %v3220, %v3056
  %v3385 = vmul.f32 %v3221, %v3057
  %v3386 = vmul.f32 %v3222, %v3058
  %v3387 = vmul.f32 %v3223, %v3059
  %v3388 = vmul.f32 %v3224, %v3060
  %v3389 = vmul.f32 %v3225, %v3061
  %v3390 = vmul.f32 %v3226, %v3062
  %v3391 = vmul.f32 %v3227, %v3063
  %v3392 = vmul.f32 %v3228, %v3064
  %v3393 = vmul.f32 %v3229, %v3065
  %v3394 = vmul.f32 %v3230, %v3066
  %v3395 = vmul.f32 %v3231, %v3067
  %v3396 = vmul.f32 %v3232, %v3068
  %v3397 = vmul.f32 %v3233, %v3069
  %v3398 = vmul.f32 %v3234, %v3070
  %v3399 = vmul.f32 %v3235, %v3071
  %v3400 = vmul.f32 %v3236, %v3072
  %v3401 = vmul.f32 %v3237, %v3073
  %v3402 = vmul.f32 %v3238, %v3074
  %v3403 = vmul.f32 %v3239, %v3075
  %v3404 = vmul.f32 %v3240, %v3076
  %v3405 = vmul.f32 %v3241, %v3077
  %v3406 = vmul.f32 %v3242, %v3078
  %v3407 = vmul.f32 %v3243, %v3079
  %v3408 = vmul.f32 %v3244, %v3080
  %v3409 = vmul.f32 %v3245, %v3081
  %v3410 = vmul.f32 %v3246, %v3082
  %v3411 = vmul.f32 %v3247, %v3083
  %v3412 = vmul.f32 %v3248, %v3084
  %v3413 = vmul.f32 %v3249, %v3085
  %v3414 = vmul.f32 %v3250, %v3086
  %v3415 = vmul.f32 %v3251, %v3087
  %v3416 = vmul.f32 %v3252, %v3088
  %v3417 = vmul.f32 %v3253, %v3089
  %v3418 = vmul.f32 %v3254, %v3090
  %v3419 = vmul.f32 %v3255, %v3091
  %v3420 = vmul.f32 %v3256, %v3092
  %v3421 = vmul.f32 %v3257, %v3093
  %v3422 = vmul.f32 %v3258, %v3094
  %v3423 = vmul.f32 %v3259, %v3095
  %v3424 = vmul.f32 %v3260, %v3096
  %v3425 = vmul.f32 %v3261, %v3097
  %v3426 = vmul.f32 %v3262, %v3098
  %v3427 = vmul.f32 %v3263, %v3099
  %v3428 = vmul.f32 %v3264, %v3100
  %v3429 = vmul.f32 %v3265, %v3101
  %v3430 = vmul.f32 %v3266, %v3102
  %v3431 = vmul.f32 %v3267, %v3103
  %v3432 = vmul.f32 %v3268, %v3104
  %v3433 = vmul.f32 %v3269, %v3105
  %v3434 = vmul.f32 %v3270, %v3106
  %v3435 = vmul.f32 %v3271, %v3107
  %v3436 = vmul.f32 %v3272, %v3108
  %v3437 = vmul.f32 %v3273, %v3109
  %v3438 = vmul.f32 %v3274, %v3110
  %v3439 = vmul.f32 %v3275, %v3111
  %v3440 = vmul.f32 %v3276, %v3112
  %v3441 = vmul.f32 %v3277, %v3113
  %v3442 = vmul.f32 %v3278, %v3114
  %v3443 = vmul.f32 %v3279, %v3115
  %v3444 = vmul.f32 %v3280, %v3116
  %v3445 = vmul.f32 %v3281, %v3117
  %v3446 = vmul.f32 %v3282, %v3118
  %v3447 = vmul.f32 %v3283, %v3119
  %v3448 = vmul.f32 %v3284, %v3120
  %v3449 = vmul.f32 %v3285, %v3121
  %v3450 = vmul.f32 %v3286, %v3122
  %v3451 = vmul.f32 %v3287, %v3123
  %v3452 = vmul.f32 %v3288, %v3124
  %v3453 = vmul.f32 %v3289, %v3125
  %v3454 = vmul.f32 %v3290, %v3126
  %v3455 = vmul.f32 %v3291, %v3127
  %v3456 = vmul.f32 %v3292, %v3128
  %v3457 = vmul.f32 %v3293, %v3129
  %v3458 = vmul.f32 %v3294, %v3130
  %v3459 = vmul.f32 %v3295, %v3131
  %v3460 = vmul.f32 %v3296, %v3132
  %v3461 = vmul.f32 %v3297, %v3133
  %v3462 = vmul.f32 %v3298, %v3134
  %v3463 = vld [vmem:[%s2] sm:$0xff]
  %v3464 = vld [vmem:[%s2 + $0x8] sm:$0xff]
  %v3465 = vld [vmem:[%s2 + $0x10] sm:$0xff]
  %v3466 = vld [vmem:[%s2 + $0x18] sm:$0xff]
  %v3467 = vld [vmem:[%s2 + $0x20] sm:$0xff]
  %v3468 = vld [vmem:[%s2 + $0x28] sm:$0xff]
  %v3469 = vld [vmem:[%s2 + $0x30] sm:$0xff]
  %v3470 = vld [vmem:[%s2 + $0x38] sm:$0xff]
  %v3471 = vld [vmem:[%s2 + $0x40] sm:$0xff]
  %v3472 = vld [vmem:[%s2 + $0x48] sm:$0xff]
  %v3473 = vld [vmem:[%s2 + $0x50] sm:$0xff]
  %v3474 = vld [vmem:[%s2 + $0x58] sm:$0xff]
  %v3475 = vld [vmem:[%s2 + $0x60] sm:$0xff]
  %v3476 = vld [vmem:[%s2 + $0x68] sm:$0xff]
  %v3477 = vld [vmem:[%s2 + $0x70] sm:$0xff]
  %v3478 = vld [vmem:[%s2 + $0x78] sm:$0xff]
  %v3479 = vld [vmem:[%s2 + $0x80] sm:$0xff]
  %v3480 = vld [vmem:[%s2 + $0x88] sm:$0xff]
  %v3481 = vld [vmem:[%s2 + $0x90] sm:$0xff]
  %v3482 = vld [vmem:[%s2 + $0x98] sm:$0xff]
  %v3483 = vld [vmem:[%s2 + $0xa0] sm:$0xff]
  %v3484 = vld [vmem:[%s2 + $0xa8] sm:$0xff]
  %v3485 = vld [vmem:[%s2 + $0xb0] sm:$0xff]
  %v3486 = vld [vmem:[%s2 + $0xb8] sm:$0xff]
  %v3487 = vld [vmem:[%s2 + $0xc0] sm:$0xff]
  %v3488 = vld [vmem:[%s2 + $0xc8] sm:$0xff]
  %v3489 = vld [vmem:[%s2 + $0xd0] sm:$0xff]
  %v3490 = vld [vmem:[%s2 + $0xd8] sm:$0xff]
  %v3491 = vld [vmem:[%s2 + $0xe0] sm:$0xff]
  %v3492 = vld [vmem:[%s2 + $0xe8] sm:$0xff]
  %v3493 = vld [vmem:[%s2 + $0xf0] sm:$0xff]
  %v3494 = vld [vmem:[%s2 + $0xf8] sm:$0xff]
  %v3495 = vld [vmem:[%s2 + $0x100] sm:$0xff]
  %v3496 = vld [vmem:[%s2 + $0x108] sm:$0xff]
  %v3497 = vld [vmem:[%s2 + $0x110] sm:$0xff]
  %v3498 = vld [vmem:[%s2 + $0x118] sm:$0xff]
  %v3499 = vld [vmem:[%s2 + $0x120] sm:$0xff]
  %v3500 = vld [vmem:[%s2 + $0x128] sm:$0xff]
  %v3501 = vld [vmem:[%s2 + $0x130] sm:$0xff]
  %v3502 = vld [vmem:[%s2 + $0x138] sm:$0xff]
  %v3503 = vld [vmem:[%s2 + $0x140] sm:$0xff]
  %v3504 = vld [vmem:[%s2 + $0x148] sm:$0xff]
  %v3505 = vld [vmem:[%s2 + $0x150] sm:$0xff]
  %v3506 = vld [vmem:[%s2 + $0x158] sm:$0xff]
  %v3507 = vld [vmem:[%s2 + $0x160] sm:$0xff]
  %v3508 = vld [vmem:[%s2 + $0x168] sm:$0xff]
  %v3509 = vld [vmem:[%s2 + $0x170] sm:$0xff]
  %v3510 = vld [vmem:[%s2 + $0x178] sm:$0xff]
  %v3511 = vld [vmem:[%s2 + $0x180] sm:$0xff]
  %v3512 = vld [vmem:[%s2 + $0x188] sm:$0xff]
  %v3513 = vld [vmem:[%s2 + $0x190] sm:$0xff]
  %v3514 = vld [vmem:[%s2 + $0x198] sm:$0xff]
  %v3515 = vld [vmem:[%s2 + $0x1a0] sm:$0xff]
  %v3516 = vld [vmem:[%s2 + $0x1a8] sm:$0xff]
  %v3517 = vld [vmem:[%s2 + $0x1b0] sm:$0xff]
  %v3518 = vld [vmem:[%s2 + $0x1b8] sm:$0xff]
  %v3519 = vld [vmem:[%s2 + $0x1c0] sm:$0xff]
  %v3520 = vld [vmem:[%s2 + $0x1c8] sm:$0xff]
  %v3521 = vld [vmem:[%s2 + $0x1d0] sm:$0xff]
  %v3522 = vld [vmem:[%s2 + $0x1d8] sm:$0xff]
  %v3523 = vld [vmem:[%s2 + $0x1e0] sm:$0xff]
  %v3524 = vld [vmem:[%s2 + $0x1e8] sm:$0xff]
  %v3525 = vld [vmem:[%s2 + $0x1f0] sm:$0xff]
  %v3526 = vld [vmem:[%s2 + $0x1f8] sm:$0xff]
  %v3527 = vld [vmem:[%s2 + $0x200] sm:$0xff]
  %v3528 = vld [vmem:[%s2 + $0x208] sm:$0xff]
  %v3529 = vld [vmem:[%s2 + $0x210] sm:$0xff]
  %v3530 = vld [vmem:[%s2 + $0x218] sm:$0xff]
  %v3531 = vld [vmem:[%s2 + $0x220] sm:$0xff]
  %v3532 = vld [vmem:[%s2 + $0x228] sm:$0xff]
  %v3533 = vld [vmem:[%s2 + $0x230] sm:$0xff]
  %v3534 = vld [vmem:[%s2 + $0x238] sm:$0xff]
  %v3535 = vld [vmem:[%s2 + $0x240] sm:$0xff]
  %v3536 = vld [vmem:[%s2 + $0x248] sm:$0xff]
  %v3537 = vld [vmem:[%s2 + $0x250] sm:$0xff]
  %v3538 = vld [vmem:[%s2 + $0x258] sm:$0xff]
  %v3539 = vld [vmem:[%s2 + $0x260] sm:$0xff]
  %v3540 = vld [vmem:[%s2 + $0x268] sm:$0xff]
  %v3541 = vld [vmem:[%s2 + $0x270] sm:$0xff]
  %v3542 = vld [vmem:[%s2 + $0x278] sm:$0xff]
  %v3543 = vld [vmem:[%s2 + $0x280] sm:$0xff]
  %v3544 = vld [vmem:[%s2 + $0x288] sm:$0xff]
  %v3545 = vld [vmem:[%s2 + $0x290] sm:$0xff]
  %v3546 = vld [vmem:[%s2 + $0x298] sm:$0xff]
  %v3547 = vld [vmem:[%s2 + $0x2a0] sm:$0xff]
  %v3548 = vld [vmem:[%s2 + $0x2a8] sm:$0xff]
  %v3549 = vld [vmem:[%s2 + $0x2b0] sm:$0xff]
  %v3550 = vld [vmem:[%s2 + $0x2b8] sm:$0xff]
  %v3551 = vld [vmem:[%s2 + $0x2c0] sm:$0xff]
  %v3552 = vld [vmem:[%s2 + $0x2c8] sm:$0xff]
  %v3553 = vld [vmem:[%s2 + $0x2d0] sm:$0xff]
  %v3554 = vld [vmem:[%s2 + $0x2d8] sm:$0xff]
  %v3555 = vld [vmem:[%s2 + $0x2e0] sm:$0xff]
  %v3556 = vld [vmem:[%s2 + $0x2e8] sm:$0xff]
  %v3557 = vld [vmem:[%s2 + $0x2f0] sm:$0xff]
  %v3558 = vld [vmem:[%s2 + $0x2f8] sm:$0xff]
  %v3559 = vld [vmem:[%s2 + $0x300] sm:$0xff]
  %v3560 = vld [vmem:[%s2 + $0x308] sm:$0xff]
  %v3561 = vld [vmem:[%s2 + $0x310] sm:$0xff]
  %v3562 = vld [vmem:[%s2 + $0x318] sm:$0xff]
  %v3563 = vld [vmem:[%s2 + $0x320] sm:$0xff]
  %v3564 = vld [vmem:[%s2 + $0x328] sm:$0xff]
  %v3565 = vld [vmem:[%s2 + $0x330] sm:$0xff]
  %v3566 = vld [vmem:[%s2 + $0x338] sm:$0xff]
  %v3567 = vld [vmem:[%s2 + $0x340] sm:$0xff]
  %v3568 = vld [vmem:[%s2 + $0x348] sm:$0xff]
  %v3569 = vld [vmem:[%s2 + $0x350] sm:$0xff]
  %v3570 = vld [vmem:[%s2 + $0x358] sm:$0xff]
  %v3571 = vld [vmem:[%s2 + $0x360] sm:$0xff]
  %v3572 = vld [vmem:[%s2 + $0x368] sm:$0xff]
  %v3573 = vld [vmem:[%s2 + $0x370] sm:$0xff]
  %v3574 = vld [vmem:[%s2 + $0x378] sm:$0xff]
  %v3575 = vld [vmem:[%s2 + $0x380] sm:$0xff]
  %v3576 = vld [vmem:[%s2 + $0x388] sm:$0xff]
  %v3577 = vld [vmem:[%s2 + $0x390] sm:$0xff]
  %v3578 = vld [vmem:[%s2 + $0x398] sm:$0xff]
  %v3579 = vld [vmem:[%s2 + $0x3a0] sm:$0xff]
  %v3580 = vld [vmem:[%s2 + $0x3a8] sm:$0xff]
  %v3581 = vld [vmem:[%s2 + $0x3b0] sm:$0xff]
  %v3582 = vld [vmem:[%s2 + $0x3b8] sm:$0xff]
  %v3583 = vld [vmem:[%s2 + $0x3c0] sm:$0xff]
  %v3584 = vld [vmem:[%s2 + $0x3c8] sm:$0xff]
  %v3585 = vld [vmem:[%s2 + $0x3d0] sm:$0xff]
  %v3586 = vld [vmem:[%s2 + $0x3d8] sm:$0xff]
  %v3587 = vld [vmem:[%s2 + $0x3e0] sm:$0xff]
  %v3588 = vld [vmem:[%s2 + $0x3e8] sm:$0xff]
  %v3589 = vld [vmem:[%s2 + $0x3f0] sm:$0xff]
  %v3590 = vld [vmem:[%s2 + $0x3f8] sm:$0xff]
  %v3591 = vld [vmem:[%s2 + $0x400] sm:$0xff]
  %v3592 = vld [vmem:[%s2 + $0x408] sm:$0xff]
  %v3593 = vld [vmem:[%s2 + $0x410] sm:$0xff]
  %v3594 = vld [vmem:[%s2 + $0x418] sm:$0xff]
  %v3595 = vld [vmem:[%s2 + $0x420] sm:$0xff]
  %v3596 = vld [vmem:[%s2 + $0x428] sm:$0xff]
  %v3597 = vld [vmem:[%s2 + $0x430] sm:$0xff]
  %v3598 = vld [vmem:[%s2 + $0x438] sm:$0xff]
  %v3599 = vld [vmem:[%s2 + $0x440] sm:$0xff]
  %v3600 = vld [vmem:[%s2 + $0x448] sm:$0xff]
  %v3601 = vld [vmem:[%s2 + $0x450] sm:$0xff]
  %v3602 = vld [vmem:[%s2 + $0x458] sm:$0xff]
  %v3603 = vld [vmem:[%s2 + $0x460] sm:$0xff]
  %v3604 = vld [vmem:[%s2 + $0x468] sm:$0xff]
  %v3605 = vld [vmem:[%s2 + $0x470] sm:$0xff]
  %v3606 = vld [vmem:[%s2 + $0x478] sm:$0xff]
  %v3607 = vld [vmem:[%s2 + $0x480] sm:$0xff]
  %v3608 = vld [vmem:[%s2 + $0x488] sm:$0xff]
  %v3609 = vld [vmem:[%s2 + $0x490] sm:$0xff]
  %v3610 = vld [vmem:[%s2 + $0x498] sm:$0xff]
  %v3611 = vld [vmem:[%s2 + $0x4a0] sm:$0xff]
  %v3612 = vld [vmem:[%s2 + $0x4a8] sm:$0xff]
  %v3613 = vld [vmem:[%s2 + $0x4b0] sm:$0xff]
  %v3614 = vld [vmem:[%s2 + $0x4b8] sm:$0xff]
  %v3615 = vld [vmem:[%s2 + $0x4c0] sm:$0xff]
  %v3616 = vld [vmem:[%s2 + $0x4c8] sm:$0xff]
  %v3617 = vld [vmem:[%s2 + $0x4d0] sm:$0xff]
  %v3618 = vld [vmem:[%s2 + $0x4d8] sm:$0xff]
  %v3619 = vld [vmem:[%s2 + $0x4e0] sm:$0xff]
  %v3620 = vld [vmem:[%s2 + $0x4e8] sm:$0xff]
  %v3621 = vld [vmem:[%s2 + $0x4f0] sm:$0xff]
  %v3622 = vld [vmem:[%s2 + $0x4f8] sm:$0xff]
  %v3623 = vld [vmem:[%s2 + $0x500] sm:$0xff]
  %v3624 = vld [vmem:[%s2 + $0x508] sm:$0xff]
  %v3625 = vld [vmem:[%s2 + $0x510] sm:$0xff]
  %v3626 = vld [vmem:[%s2 + $0x518] sm:$0xff]
  %v3627 = vmul.f32 %v1823, %v3299
  %v3628 = vmul.f32 %v1824, %v3300
  %v3629 = vmul.f32 %v1825, %v3301
  %v3630 = vmul.f32 %v1826, %v3302
  %v3631 = vmul.f32 %v1827, %v3303
  %v3632 = vmul.f32 %v1828, %v3304
  %v3633 = vmul.f32 %v1829, %v3305
  %v3634 = vmul.f32 %v1830, %v3306
  %v3635 = vmul.f32 %v1831, %v3307
  %v3636 = vmul.f32 %v1832, %v3308
  %v3637 = vmul.f32 %v1833, %v3309
  %v3638 = vmul.f32 %v1834, %v3310
  %v3639 = vmul.f32 %v1835, %v3311
  %v3640 = vmul.f32 %v1836, %v3312
  %v3641 = vmul.f32 %v1837, %v3313
  %v3642 = vmul.f32 %v1838, %v3314
  %v3643 = vmul.f32 %v1839, %v3315
  %v3644 = vmul.f32 %v1840, %v3316
  %v3645 = vmul.f32 %v1841, %v3317
  %v3646 = vmul.f32 %v1842, %v3318
  %v3647 = vmul.f32 %v1843, %v3319
  %v3648 = vmul.f32 %v1844, %v3320
  %v3649 = vmul.f32 %v1845, %v3321
  %v3650 = vmul.f32 %v1846, %v3322
  %v3651 = vmul.f32 %v1847, %v3323
  %v3652 = vmul.f32 %v1848, %v3324
  %v3653 = vmul.f32 %v1849, %v3325
  %v3654 = vmul.f32 %v1850, %v3326
  %v3655 = vmul.f32 %v1851, %v3327
  %v3656 = vmul.f32 %v1852, %v3328
  %v3657 = vmul.f32 %v1853, %v3329
  %v3658 = vmul.f32 %v1854, %v3330
  %v3659 = vmul.f32 %v1855, %v3331
  %v3660 = vmul.f32 %v1856, %v3332
  %v3661 = vmul.f32 %v1857, %v3333
  %v3662 = vmul.f32 %v1858, %v3334
  %v3663 = vmul.f32 %v1859, %v3335
  %v3664 = vmul.f32 %v1860, %v3336
  %v3665 = vmul.f32 %v1861, %v3337
  %v3666 = vmul.f32 %v1862, %v3338
  %v3667 = vmul.f32 %v1863, %v3339
  %v3668 = vmul.f32 %v1864, %v3340
  %v3669 = vmul.f32 %v1865, %v3341
  %v3670 = vmul.f32 %v1866, %v3342
  %v3671 = vmul.f32 %v1867, %v3343
  %v3672 = vmul.f32 %v1868, %v3344
  %v3673 = vmul.f32 %v1869, %v3345
  %v3674 = vmul.f32 %v1870, %v3346
  %v3675 = vmul.f32 %v1871, %v3347
  %v3676 = vmul.f32 %v1872, %v3348
  %v3677 = vmul.f32 %v1873, %v3349
  %v3678 = vmul.f32 %v1874, %v3350
  %v3679 = vmul.f32 %v1875, %v3351
  %v3680 = vmul.f32 %v1876, %v3352
  %v3681 = vmul.f32 %v1877, %v3353
  %v3682 = vmul.f32 %v1878, %v3354
  %v3683 = vmul.f32 %v1879, %v3355
  %v3684 = vmul.f32 %v1880, %v3356
  %v3685 = vmul.f32 %v1881, %v3357
  %v3686 = vmul.f32 %v1882, %v3358
  %v3687 = vmul.f32 %v1883, %v3359
  %v3688 = vmul.f32 %v1884, %v3360
  %v3689 = vmul.f32 %v1885, %v3361
  %v3690 = vmul.f32 %v1886, %v3362
  %v3691 = vmul.f32 %v1887, %v3363
  %v3692 = vmul.f32 %v1888, %v3364
  %v3693 = vmul.f32 %v1889, %v3365
  %v3694 = vmul.f32 %v1890, %v3366
  %v3695 = vmul.f32 %v1891, %v3367
  %v3696 = vmul.f32 %v1892, %v3368
  %v3697 = vmul.f32 %v1893, %v3369
  %v3698 = vmul.f32 %v1894, %v3370
  %v3699 = vmul.f32 %v1895, %v3371
  %v3700 = vmul.f32 %v1896, %v3372
  %v3701 = vmul.f32 %v1897, %v3373
  %v3702 = vmul.f32 %v1898, %v3374
  %v3703 = vmul.f32 %v1899, %v3375
  %v3704 = vmul.f32 %v1900, %v3376
  %v3705 = vmul.f32 %v1901, %v3377
  %v3706 = vmul.f32 %v1902, %v3378
  %v3707 = vmul.f32 %v1903, %v3379
  %v3708 = vmul.f32 %v1904, %v3380
  %v3709 = vmul.f32 %v1905, %v3381
  %v3710 = vmul.f32 %v1906, %v3382
  %v3711 = vmul.f32 %v1907, %v3383
  %v3712 = vmul.f32 %v1908, %v3384
  %v3713 = vmul.f32 %v1909, %v3385
  %v3714 = vmul.f32 %v1910, %v3386
  %v3715 = vmul.f32 %v1911, %v3387
  %v3716 = vmul.f32 %v1912, %v3388
  %v3717 = vmul.f32 %v1913, %v3389
  %v3718 = vmul.f32 %v1914, %v3390
  %v3719 = vmul.f32 %v1915, %v3391
  %v3720 = vmul.f32 %v1916, %v3392
  %v3721 = vmul.f32 %v1917, %v3393
  %v3722 = vmul.f32 %v1918, %v3394
  %v3723 = vmul.f32 %v1919, %v3395
  %v3724 = vmul.f32 %v1920, %v3396
  %v3725 = vmul.f32 %v1921, %v3397
  %v3726 = vmul.f32 %v1922, %v3398
  %v3727 = vmul.f32 %v1923, %v3399
  %v3728 = vmul.f32 %v1924, %v3400
  %v3729 = vmul.f32 %v1925, %v3401
  %v3730 = vmul.f32 %v1926, %v3402
  %v3731 = vmul.f32 %v1927, %v3403
  %v3732 = vmul.f32 %v1928, %v3404
  %v3733 = vmul.f32 %v1929, %v3405
  %v3734 = vmul.f32 %v1930, %v3406
  %v3735 = vmul.f32 %v1931, %v3407
  %v3736 = vmul.f32 %v1932, %v3408
  %v3737 = vmul.f32 %v1933, %v3409
  %v3738 = vmul.f32 %v1934, %v3410
  %v3739 = vmul.f32 %v1935, %v3411
  %v3740 = vmul.f32 %v1936, %v3412
  %v3741 = vmul.f32 %v1937, %v3413
  %v3742 = vmul.f32 %v1938, %v3414
  %v3743 = vmul.f32 %v1939, %v3415
  %v3744 = vmul.f32 %v1940, %v3416
  %v3745 = vmul.f32 %v1941, %v3417
  %v3746 = vmul.f32 %v1942, %v3418
  %v3747 = vmul.f32 %v1943, %v3419
  %v3748 = vmul.f32 %v1944, %v3420
  %v3749 = vmul.f32 %v1945, %v3421
  %v3750 = vmul.f32 %v1946, %v3422
  %v3751 = vmul.f32 %v1947, %v3423
  %v3752 = vmul.f32 %v1948, %v3424
  %v3753 = vmul.f32 %v1949, %v3425
  %v3754 = vmul.f32 %v1950, %v3426
  %v3755 = vmul.f32 %v1951, %v3427
  %v3756 = vmul.f32 %v1952, %v3428
  %v3757 = vmul.f32 %v1953, %v3429
  %v3758 = vmul.f32 %v1954, %v3430
  %v3759 = vmul.f32 %v1955, %v3431
  %v3760 = vmul.f32 %v1956, %v3432
  %v3761 = vmul.f32 %v1957, %v3433
  %v3762 = vmul.f32 %v1958, %v3434
  %v3763 = vmul.f32 %v1959, %v3435
  %v3764 = vmul.f32 %v1960, %v3436
  %v3765 = vmul.f32 %v1961, %v3437
  %v3766 = vmul.f32 %v1962, %v3438
  %v3767 = vmul.f32 %v1963, %v3439
  %v3768 = vmul.f32 %v1964, %v3440
  %v3769 = vmul.f32 %v1965, %v3441
  %v3770 = vmul.f32 %v1966, %v3442
  %v3771 = vmul.f32 %v1967, %v3443
  %v3772 = vmul.f32 %v1968, %v3444
  %v3773 = vmul.f32 %v1969, %v3445
  %v3774 = vmul.f32 %v1970, %v3446
  %v3775 = vmul.f32 %v1971, %v3447
  %v3776 = vmul.f32 %v1972, %v3448
  %v3777 = vmul.f32 %v1973, %v3449
  %v3778 = vmul.f32 %v1974, %v3450
  %v3779 = vmul.f32 %v1975, %v3451
  %v3780 = vmul.f32 %v1976, %v3452
  %v3781 = vmul.f32 %v1977, %v3453
  %v3782 = vmul.f32 %v1978, %v3454
  %v3783 = vmul.f32 %v1979, %v3455
  %v3784 = vmul.f32 %v1980, %v3456
  %v3785 = vmul.f32 %v1981, %v3457
  %v3786 = vmul.f32 %v1982, %v3458
  %v3787 = vmul.f32 %v1983, %v3459
  %v3788 = vmul.f32 %v1984, %v3460
  %v3789 = vmul.f32 %v1985, %v3461
  %v3790 = vmul.f32 %v1986, %v3462
  %v3791 = vsub.f32 %v3463, %v3627
  %v3792 = vsub.f32 %v3464, %v3628
  %v3793 = vsub.f32 %v3465, %v3629
  %v3794 = vsub.f32 %v3466, %v3630
  %v3795 = vsub.f32 %v3467, %v3631
  %v3796 = vsub.f32 %v3468, %v3632
  %v3797 = vsub.f32 %v3469, %v3633
  %v3798 = vsub.f32 %v3470, %v3634
  %v3799 = vsub.f32 %v3471, %v3635
  %v3800 = vsub.f32 %v3472, %v3636
  %v3801 = vsub.f32 %v3473, %v3637
  %v3802 = vsub.f32 %v3474, %v3638
  %v3803 = vsub.f32 %v3475, %v3639
  %v3804 = vsub.f32 %v3476, %v3640
  %v3805 = vsub.f32 %v3477, %v3641
  %v3806 = vsub.f32 %v3478, %v3642
  %v3807 = vsub.f32 %v3479, %v3643
  %v3808 = vsub.f32 %v3480, %v3644
  %v3809 = vsub.f32 %v3481, %v3645
  %v3810 = vsub.f32 %v3482, %v3646
  %v3811 = vsub.f32 %v3483, %v3647
  %v3812 = vsub.f32 %v3484, %v3648
  %v3813 = vsub.f32 %v3485, %v3649
  %v3814 = vsub.f32 %v3486, %v3650
  %v3815 = vsub.f32 %v3487, %v3651
  %v3816 = vsub.f32 %v3488, %v3652
  %v3817 = vsub.f32 %v3489, %v3653
  %v3818 = vsub.f32 %v3490, %v3654
  %v3819 = vsub.f32 %v3491, %v3655
  %v3820 = vsub.f32 %v3492, %v3656
  %v3821 = vsub.f32 %v3493, %v3657
  %v3822 = vsub.f32 %v3494, %v3658
  %v3823 = vsub.f32 %v3495, %v3659
  %v3824 = vsub.f32 %v3496, %v3660
  %v3825 = vsub.f32 %v3497, %v3661
  %v3826 = vsub.f32 %v3498, %v3662
  %v3827 = vsub.f32 %v3499, %v3663
  %v3828 = vsub.f32 %v3500, %v3664
  %v3829 = vsub.f32 %v3501, %v3665
  %v3830 = vsub.f32 %v3502, %v3666
  %v3831 = vsub.f32 %v3503, %v3667
  %v3832 = vsub.f32 %v3504, %v3668
  %v3833 = vsub.f32 %v3505, %v3669
  %v3834 = vsub.f32 %v3506, %v3670
  %v3835 = vsub.f32 %v3507, %v3671
  %v3836 = vsub.f32 %v3508, %v3672
  %v3837 = vsub.f32 %v3509, %v3673
  %v3838 = vsub.f32 %v3510, %v3674
  %v3839 = vsub.f32 %v3511, %v3675
  %v3840 = vsub.f32 %v3512, %v3676
  %v3841 = vsub.f32 %v3513, %v3677
  %v3842 = vsub.f32 %v3514, %v3678
  %v3843 = vsub.f32 %v3515, %v3679
  %v3844 = vsub.f32 %v3516, %v3680
  %v3845 = vsub.f32 %v3517, %v3681
  %v3846 = vsub.f32 %v3518, %v3682
  %v3847 = vsub.f32 %v3519, %v3683
  %v3848 = vsub.f32 %v3520, %v3684
  %v3849 = vsub.f32 %v3521, %v3685
  %v3850 = vsub.f32 %v3522, %v3686
  %v3851 = vsub.f32 %v3523, %v3687
  %v3852 = vsub.f32 %v3524, %v3688
  %v3853 = vsub.f32 %v3525, %v3689
  %v3854 = vsub.f32 %v3526, %v3690
  %v3855 = vsub.f32 %v3527, %v3691
  %v3856 = vsub.f32 %v3528, %v3692
  %v3857 = vsub.f32 %v3529, %v3693
  %v3858 = vsub.f32 %v3530, %v3694
  %v3859 = vsub.f32 %v3531, %v3695
  %v3860 = vsub.f32 %v3532, %v3696
  %v3861 = vsub.f32 %v3533, %v3697
  %v3862 = vsub.f32 %v3534, %v3698
  %v3863 = vsub.f32 %v3535, %v3699
  %v3864 = vsub.f32 %v3536, %v3700
  %v3865 = vsub.f32 %v3537, %v3701
  %v3866 = vsub.f32 %v3538, %v3702
  %v3867 = vsub.f32 %v3539, %v3703
  %v3868 = vsub.f32 %v3540, %v3704
  %v3869 = vsub.f32 %v3541, %v3705
  %v3870 = vsub.f32 %v3542, %v3706
  %v3871 = vsub.f32 %v3543, %v3707
  %v3872 = vsub.f32 %v3544, %v3708
  %v3873 = vsub.f32 %v3545, %v3709
  %v3874 = vsub.f32 %v3546, %v3710
  %v3875 = vsub.f32 %v3547, %v3711
  %v3876 = vsub.f32 %v3548, %v3712
  %v3877 = vsub.f32 %v3549, %v3713
  %v3878 = vsub.f32 %v3550, %v3714
  %v3879 = vsub.f32 %v3551, %v3715
  %v3880 = vsub.f32 %v3552, %v3716
  %v3881 = vsub.f32 %v3553, %v3717
  %v3882 = vsub.f32 %v3554, %v3718
  %v3883 = vsub.f32 %v3555, %v3719
  %v3884 = vsub.f32 %v3556, %v3720
  %v3885 = vsub.f32 %v3557, %v3721
  %v3886 = vsub.f32 %v3558, %v3722
  %v3887 = vsub.f32 %v3559, %v3723
  %v3888 = vsub.f32 %v3560, %v3724
  %v3889 = vsub.f32 %v3561, %v3725
  %v3890 = vsub.f32 %v3562, %v3726
  %v3891 = vsub.f32 %v3563, %v3727
  %v3892 = vsub.f32 %v3564, %v3728
  %v3893 = vsub.f32 %v3565, %v3729
  %v3894 = vsub.f32 %v3566, %v3730
  %v3895 = vsub.f32 %v3567, %v3731
  %v3896 = vsub.f32 %v3568, %v3732
  %v3897 = vsub.f32 %v3569, %v3733
  %v3898 = vsub.f32 %v3570, %v3734
  %v3899 = vsub.f32 %v3571, %v3735
  %v3900 = vsub.f32 %v3572, %v3736
  %v3901 = vsub.f32 %v3573, %v3737
  %v3902 = vsub.f32 %v3574, %v3738
  %v3903 = vsub.f32 %v3575, %v3739
  %v3904 = vsub.f32 %v3576, %v3740
  %v3905 = vsub.f32 %v3577, %v3741
  %v3906 = vsub.f32 %v3578, %v3742
  %v3907 = vsub.f32 %v3579, %v3743
  %v3908 = vsub.f32 %v3580, %v3744
  %v3909 = vsub.f32 %v3581, %v3745
  %v3910 = vsub.f32 %v3582, %v3746
  %v3911 = vsub.f32 %v3583, %v3747
  %v3912 = vsub.f32 %v3584, %v3748
  %v3913 = vsub.f32 %v3585, %v3749
  %v3914 = vsub.f32 %v3586, %v3750
  %v3915 = vsub.f32 %v3587, %v3751
  %v3916 = vsub.f32 %v3588, %v3752
  %v3917 = vsub.f32 %v3589, %v3753
  %v3918 = vsub.f32 %v3590, %v3754
  %v3919 = vsub.f32 %v3591, %v3755
  %v3920 = vsub.f32 %v3592, %v3756
  %v3921 = vsub.f32 %v3593, %v3757
  %v3922 = vsub.f32 %v3594, %v3758
  %v3923 = vsub.f32 %v3595, %v3759
  %v3924 = vsub.f32 %v3596, %v3760
  %v3925 = vsub.f32 %v3597, %v3761
  %v3926 = vsub.f32 %v3598, %v3762
  %v3927 = vsub.f32 %v3599, %v3763
  %v3928 = vsub.f32 %v3600, %v3764
  %v3929 = vsub.f32 %v3601, %v3765
  %v3930 = vsub.f32 %v3602, %v3766
  %v3931 = vsub.f32 %v3603, %v3767
  %v3932 = vsub.f32 %v3604, %v3768
  %v3933 = vsub.f32 %v3605, %v3769
  %v3934 = vsub.f32 %v3606, %v3770
  %v3935 = vsub.f32 %v3607, %v3771
  %v3936 = vsub.f32 %v3608, %v3772
  %v3937 = vsub.f32 %v3609, %v3773
  %v3938 = vsub.f32 %v3610, %v3774
  %v3939 = vsub.f32 %v3611, %v3775
  %v3940 = vsub.f32 %v3612, %v3776
  %v3941 = vsub.f32 %v3613, %v3777
  %v3942 = vsub.f32 %v3614, %v3778
  %v3943 = vsub.f32 %v3615, %v3779
  %v3944 = vsub.f32 %v3616, %v3780
  %v3945 = vsub.f32 %v3617, %v3781
  %v3946 = vsub.f32 %v3618, %v3782
  %v3947 = vsub.f32 %v3619, %v3783
  %v3948 = vsub.f32 %v3620, %v3784
  %v3949 = vsub.f32 %v3621, %v3785
  %v3950 = vsub.f32 %v3622, %v3786
  %v3951 = vsub.f32 %v3623, %v3787
  %v3952 = vsub.f32 %v3624, %v3788
  %v3953 = vsub.f32 %v3625, %v3789
  %v3954 = vsub.f32 %v3626, %v3790
  %v3955 = vld [vmem:[%s0] sm:$0xff]
  %v3956 = vld [vmem:[%s0 + $0x8] sm:$0xff]
  %v3957 = vld [vmem:[%s0 + $0x10] sm:$0xff]
  %v3958 = vld [vmem:[%s0 + $0x18] sm:$0xff]
  %v3959 = vld [vmem:[%s0 + $0x20] sm:$0xff]
  %v3960 = vld [vmem:[%s0 + $0x28] sm:$0xff]
  %v3961 = vld [vmem:[%s0 + $0x30] sm:$0xff]
  %v3962 = vld [vmem:[%s0 + $0x38] sm:$0xff]
  %v3963 = vld [vmem:[%s0 + $0x40] sm:$0xff]
  %v3964 = vld [vmem:[%s0 + $0x48] sm:$0xff]
  %v3965 = vld [vmem:[%s0 + $0x50] sm:$0xff]
  %v3966 = vld [vmem:[%s0 + $0x58] sm:$0xff]
  %v3967 = vld [vmem:[%s0 + $0x60] sm:$0xff]
  %v3968 = vld [vmem:[%s0 + $0x68] sm:$0xff]
  %v3969 = vld [vmem:[%s0 + $0x70] sm:$0xff]
  %v3970 = vld [vmem:[%s0 + $0x78] sm:$0xff]
  %v3971 = vld [vmem:[%s0 + $0x80] sm:$0xff]
  %v3972 = vld [vmem:[%s0 + $0x88] sm:$0xff]
  %v3973 = vld [vmem:[%s0 + $0x90] sm:$0xff]
  %v3974 = vld [vmem:[%s0 + $0x98] sm:$0xff]
  %v3975 = vld [vmem:[%s0 + $0xa0] sm:$0xff]
  %v3976 = vld [vmem:[%s0 + $0xa8] sm:$0xff]
  %v3977 = vld [vmem:[%s0 + $0xb0] sm:$0xff]
  %v3978 = vld [vmem:[%s0 + $0xb8] sm:$0xff]
  %v3979 = vld [vmem:[%s0 + $0xc0] sm:$0xff]
  %v3980 = vld [vmem:[%s0 + $0xc8] sm:$0xff]
  %v3981 = vld [vmem:[%s0 + $0xd0] sm:$0xff]
  %v3982 = vld [vmem:[%s0 + $0xd8] sm:$0xff]
  %v3983 = vld [vmem:[%s0 + $0xe0] sm:$0xff]
  %v3984 = vld [vmem:[%s0 + $0xe8] sm:$0xff]
  %v3985 = vld [vmem:[%s0 + $0xf0] sm:$0xff]
  %v3986 = vld [vmem:[%s0 + $0xf8] sm:$0xff]
  %v3987 = vld [vmem:[%s0 + $0x100] sm:$0xff]
  %v3988 = vld [vmem:[%s0 + $0x108] sm:$0xff]
  %v3989 = vld [vmem:[%s0 + $0x110] sm:$0xff]
  %v3990 = vld [vmem:[%s0 + $0x118] sm:$0xff]
  %v3991 = vld [vmem:[%s0 + $0x120] sm:$0xff]
  %v3992 = vld [vmem:[%s0 + $0x128] sm:$0xff]
  %v3993 = vld [vmem:[%s0 + $0x130] sm:$0xff]
  %v3994 = vld [vmem:[%s0 + $0x138] sm:$0xff]
  %v3995 = vld [vmem:[%s0 + $0x140] sm:$0xff]
  %v3996 = vld [vmem:[%s0 + $0x148] sm:$0xff]
  %v3997 = vld [vmem:[%s0 + $0x150] sm:$0xff]
  %v3998 = vld [vmem:[%s0 + $0x158] sm:$0xff]
  %v3999 = vld [vmem:[%s0 + $0x160] sm:$0xff]
  %v4000 = vld [vmem:[%s0 + $0x168] sm:$0xff]
  %v4001 = vld [vmem:[%s0 + $0x170] sm:$0xff]
  %v4002 = vld [vmem:[%s0 + $0x178] sm:$0xff]
  %v4003 = vld [vmem:[%s0 + $0x180] sm:$0xff]
  %v4004 = vld [vmem:[%s0 + $0x188] sm:$0xff]
  %v4005 = vld [vmem:[%s0 + $0x190] sm:$0xff]
  %v4006 = vld [vmem:[%s0 + $0x198] sm:$0xff]
  %v4007 = vld [vmem:[%s0 + $0x1a0] sm:$0xff]
  %v4008 = vld [vmem:[%s0 + $0x1a8] sm:$0xff]
  %v4009 = vld [vmem:[%s0 + $0x1b0] sm:$0xff]
  %v4010 = vld [vmem:[%s0 + $0x1b8] sm:$0xff]
  %v4011 = vld [vmem:[%s0 + $0x1c0] sm:$0xff]
  %v4012 = vld [vmem:[%s0 + $0x1c8] sm:$0xff]
  %v4013 = vld [vmem:[%s0 + $0x1d0] sm:$0xff]
  %v4014 = vld [vmem:[%s0 + $0x1d8] sm:$0xff]
  %v4015 = vld [vmem:[%s0 + $0x1e0] sm:$0xff]
  %v4016 = vld [vmem:[%s0 + $0x1e8] sm:$0xff]
  %v4017 = vld [vmem:[%s0 + $0x1f0] sm:$0xff]
  %v4018 = vld [vmem:[%s0 + $0x1f8] sm:$0xff]
  %v4019 = vld [vmem:[%s0 + $0x200] sm:$0xff]
  %v4020 = vld [vmem:[%s0 + $0x208] sm:$0xff]
  %v4021 = vld [vmem:[%s0 + $0x210] sm:$0xff]
  %v4022 = vld [vmem:[%s0 + $0x218] sm:$0xff]
  %v4023 = vld [vmem:[%s0 + $0x220] sm:$0xff]
  %v4024 = vld [vmem:[%s0 + $0x228] sm:$0xff]
  %v4025 = vld [vmem:[%s0 + $0x230] sm:$0xff]
  %v4026 = vld [vmem:[%s0 + $0x238] sm:$0xff]
  %v4027 = vld [vmem:[%s0 + $0x240] sm:$0xff]
  %v4028 = vld [vmem:[%s0 + $0x248] sm:$0xff]
  %v4029 = vld [vmem:[%s0 + $0x250] sm:$0xff]
  %v4030 = vld [vmem:[%s0 + $0x258] sm:$0xff]
  %v4031 = vld [vmem:[%s0 + $0x260] sm:$0xff]
  %v4032 = vld [vmem:[%s0 + $0x268] sm:$0xff]
  %v4033 = vld [vmem:[%s0 + $0x270] sm:$0xff]
  %v4034 = vld [vmem:[%s0 + $0x278] sm:$0xff]
  %v4035 = vld [vmem:[%s0 + $0x280] sm:$0xff]
  %v4036 = vld [vmem:[%s0 + $0x288] sm:$0xff]
  %v4037 = vld [vmem:[%s0 + $0x290] sm:$0xff]
  %v4038 = vld [vmem:[%s0 + $0x298] sm:$0xff]
  %v4039 = vld [vmem:[%s0 + $0x2a0] sm:$0xff]
  %v4040 = vld [vmem:[%s0 + $0x2a8] sm:$0xff]
  %v4041 = vld [vmem:[%s0 + $0x2b0] sm:$0xff]
  %v4042 = vld [vmem:[%s0 + $0x2b8] sm:$0xff]
  %v4043 = vld [vmem:[%s0 + $0x2c0] sm:$0xff]
  %v4044 = vld [vmem:[%s0 + $0x2c8] sm:$0xff]
  %v4045 = vld [vmem:[%s0 + $0x2d0] sm:$0xff]
  %v4046 = vld [vmem:[%s0 + $0x2d8] sm:$0xff]
  %v4047 = vld [vmem:[%s0 + $0x2e0] sm:$0xff]
  %v4048 = vld [vmem:[%s0 + $0x2e8] sm:$0xff]
  %v4049 = vld [vmem:[%s0 + $0x2f0] sm:$0xff]
  %v4050 = vld [vmem:[%s0 + $0x2f8] sm:$0xff]
  %v4051 = vld [vmem:[%s0 + $0x300] sm:$0xff]
  %v4052 = vld [vmem:[%s0 + $0x308] sm:$0xff]
  %v4053 = vld [vmem:[%s0 + $0x310] sm:$0xff]
  %v4054 = vld [vmem:[%s0 + $0x318] sm:$0xff]
  %v4055 = vld [vmem:[%s0 + $0x320] sm:$0xff]
  %v4056 = vld [vmem:[%s0 + $0x328] sm:$0xff]
  %v4057 = vld [vmem:[%s0 + $0x330] sm:$0xff]
  %v4058 = vld [vmem:[%s0 + $0x338] sm:$0xff]
  %v4059 = vld [vmem:[%s0 + $0x340] sm:$0xff]
  %v4060 = vld [vmem:[%s0 + $0x348] sm:$0xff]
  %v4061 = vld [vmem:[%s0 + $0x350] sm:$0xff]
  %v4062 = vld [vmem:[%s0 + $0x358] sm:$0xff]
  %v4063 = vld [vmem:[%s0 + $0x360] sm:$0xff]
  %v4064 = vld [vmem:[%s0 + $0x368] sm:$0xff]
  %v4065 = vld [vmem:[%s0 + $0x370] sm:$0xff]
  %v4066 = vld [vmem:[%s0 + $0x378] sm:$0xff]
  %v4067 = vld [vmem:[%s0 + $0x380] sm:$0xff]
  %v4068 = vld [vmem:[%s0 + $0x388] sm:$0xff]
  %v4069 = vld [vmem:[%s0 + $0x390] sm:$0xff]
  %v4070 = vld [vmem:[%s0 + $0x398] sm:$0xff]
  %v4071 = vld [vmem:[%s0 + $0x3a0] sm:$0xff]
  %v4072 = vld [vmem:[%s0 + $0x3a8] sm:$0xff]
  %v4073 = vld [vmem:[%s0 + $0x3b0] sm:$0xff]
  %v4074 = vld [vmem:[%s0 + $0x3b8] sm:$0xff]
  %v4075 = vld [vmem:[%s0 + $0x3c0] sm:$0xff]
  %v4076 = vld [vmem:[%s0 + $0x3c8] sm:$0xff]
  %v4077 = vld [vmem:[%s0 + $0x3d0] sm:$0xff]
  %v4078 = vld [vmem:[%s0 + $0x3d8] sm:$0xff]
  %v4079 = vld [vmem:[%s0 + $0x3e0] sm:$0xff]
  %v4080 = vld [vmem:[%s0 + $0x3e8] sm:$0xff]
  %v4081 = vld [vmem:[%s0 + $0x3f0] sm:$0xff]
  %v4082 = vld [vmem:[%s0 + $0x3f8] sm:$0xff]
  %v4083 = vld [vmem:[%s0 + $0x400] sm:$0xff]
  %v4084 = vld [vmem:[%s0 + $0x408] sm:$0xff]
  %v4085 = vld [vmem:[%s0 + $0x410] sm:$0xff]
  %v4086 = vld [vmem:[%s0 + $0x418] sm:$0xff]
  %v4087 = vld [vmem:[%s0 + $0x420] sm:$0xff]
  %v4088 = vld [vmem:[%s0 + $0x428] sm:$0xff]
  %v4089 = vld [vmem:[%s0 + $0x430] sm:$0xff]
  %v4090 = vld [vmem:[%s0 + $0x438] sm:$0xff]
  %v4091 = vld [vmem:[%s0 + $0x440] sm:$0xff]
  %v4092 = vld [vmem:[%s0 + $0x448] sm:$0xff]
  %v4093 = vld [vmem:[%s0 + $0x450] sm:$0xff]
  %v4094 = vld [vmem:[%s0 + $0x458] sm:$0xff]
  %v4095 = vld [vmem:[%s0 + $0x460] sm:$0xff]
  %v4096 = vld [vmem:[%s0 + $0x468] sm:$0xff]
  %v4097 = vld [vmem:[%s0 + $0x470] sm:$0xff]
  %v4098 = vld [vmem:[%s0 + $0x478] sm:$0xff]
  %v4099 = vld [vmem:[%s0 + $0x480] sm:$0xff]
  %v4100 = vld [vmem:[%s0 + $0x488] sm:$0xff]
  %v4101 = vld [vmem:[%s0 + $0x490] sm:$0xff]
  %v4102 = vld [vmem:[%s0 + $0x498] sm:$0xff]
  %v4103 = vld [vmem:[%s0 + $0x4a0] sm:$0xff]
  %v4104 = vld [vmem:[%s0 + $0x4a8] sm:$0xff]
  %v4105 = vld [vmem:[%s0 + $0x4b0] sm:$0xff]
  %v4106 = vld [vmem:[%s0 + $0x4b8] sm:$0xff]
  %v4107 = vld [vmem:[%s0 + $0x4c0] sm:$0xff]
  %v4108 = vld [vmem:[%s0 + $0x4c8] sm:$0xff]
  %v4109 = vld [vmem:[%s0 + $0x4d0] sm:$0xff]
  %v4110 = vld [vmem:[%s0 + $0x4d8] sm:$0xff]
  %v4111 = vld [vmem:[%s0 + $0x4e0] sm:$0xff]
  %v4112 = vld [vmem:[%s0 + $0x4e8] sm:$0xff]
  %v4113 = vld [vmem:[%s0 + $0x4f0] sm:$0xff]
  %v4114 = vld [vmem:[%s0 + $0x4f8] sm:$0xff]
  %v4115 = vld [vmem:[%s0 + $0x500] sm:$0xff]
  %v4116 = vld [vmem:[%s0 + $0x508] sm:$0xff]
  %v4117 = vld [vmem:[%s0 + $0x510] sm:$0xff]
  %v4118 = vld [vmem:[%s0 + $0x518] sm:$0xff]
  %4120 = vset.pattern.permute.xlu0 0
  %4121 = vperm.xlu0 %4120, %v3299
  %v4122 = vpop.permute.xlu0 %4121
  %4125 = vset.pattern.permute.xlu0 0
  %4126 = vperm.xlu0 %4125, %v3300
  %v4127 = vpop.permute.xlu0 %4126
  %4130 = vset.pattern.permute.xlu0 0
  %4131 = vperm.xlu0 %4130, %v3301
  %v4132 = vpop.permute.xlu0 %4131
  %4135 = vset.pattern.permute.xlu0 0
  %4136 = vperm.xlu0 %4135, %v3302
  %v4137 = vpop.permute.xlu0 %4136
  %4140 = vset.pattern.permute.xlu0 0
  %4141 = vperm.xlu0 %4140, %v3303
  %v4142 = vpop.permute.xlu0 %4141
  %4145 = vset.pattern.permute.xlu0 0
  %4146 = vperm.xlu0 %4145, %v3304
  %v4147 = vpop.permute.xlu0 %4146
  %4150 = vset.pattern.permute.xlu0 0
  %4151 = vperm.xlu0 %4150, %v3305
  %v4152 = vpop.permute.xlu0 %4151
  %4155 = vset.pattern.permute.xlu0 0
  %4156 = vperm.xlu0 %4155, %v3306
  %v4157 = vpop.permute.xlu0 %4156
  %4160 = vset.pattern.permute.xlu0 0
  %4161 = vperm.xlu0 %4160, %v3307
  %v4162 = vpop.permute.xlu0 %4161
  %4165 = vset.pattern.permute.xlu0 0
  %4166 = vperm.xlu0 %4165, %v3308
  %v4167 = vpop.permute.xlu0 %4166
  %4170 = vset.pattern.permute.xlu0 0
  %4171 = vperm.xlu0 %4170, %v3309
  %v4172 = vpop.permute.xlu0 %4171
  %4175 = vset.pattern.permute.xlu0 0
  %4176 = vperm.xlu0 %4175, %v3310
  %v4177 = vpop.permute.xlu0 %4176
  %4180 = vset.pattern.permute.xlu0 0
  %4181 = vperm.xlu0 %4180, %v3311
  %v4182 = vpop.permute.xlu0 %4181
  %4185 = vset.pattern.permute.xlu0 0
  %4186 = vperm.xlu0 %4185, %v3312
  %v4187 = vpop.permute.xlu0 %4186
  %4190 = vset.pattern.permute.xlu0 0
  %4191 = vperm.xlu0 %4190, %v3313
  %v4192 = vpop.permute.xlu0 %4191
  %4195 = vset.pattern.permute.xlu0 0
  %4196 = vperm.xlu0 %4195, %v3314
  %v4197 = vpop.permute.xlu0 %4196
  %4200 = vset.pattern.permute.xlu0 0
  %4201 = vperm.xlu0 %4200, %v3315
  %v4202 = vpop.permute.xlu0 %4201
  %4205 = vset.pattern.permute.xlu0 0
  %4206 = vperm.xlu0 %4205, %v3316
  %v4207 = vpop.permute.xlu0 %4206
  %4210 = vset.pattern.permute.xlu0 0
  %4211 = vperm.xlu0 %4210, %v3317
  %v4212 = vpop.permute.xlu0 %4211
  %4215 = vset.pattern.permute.xlu0 0
  %4216 = vperm.xlu0 %4215, %v3318
  %v4217 = vpop.permute.xlu0 %4216
  %4220 = vset.pattern.permute.xlu0 0
  %4221 = vperm.xlu0 %4220, %v3319
  %v4222 = vpop.permute.xlu0 %4221
  %4225 = vset.pattern.permute.xlu0 0
  %4226 = vperm.xlu0 %4225, %v3320
  %v4227 = vpop.permute.xlu0 %4226
  %4230 = vset.pattern.permute.xlu0 0
  %4231 = vperm.xlu0 %4230, %v3321
  %v4232 = vpop.permute.xlu0 %4231
  %4235 = vset.pattern.permute.xlu0 0
  %4236 = vperm.xlu0 %4235, %v3322
  %v4237 = vpop.permute.xlu0 %4236
  %4240 = vset.pattern.permute.xlu0 0
  %4241 = vperm.xlu0 %4240, %v3323
  %v4242 = vpop.permute.xlu0 %4241
  %4245 = vset.pattern.permute.xlu0 0
  %4246 = vperm.xlu0 %4245, %v3324
  %v4247 = vpop.permute.xlu0 %4246
  %4250 = vset.pattern.permute.xlu0 0
  %4251 = vperm.xlu0 %4250, %v3325
  %v4252 = vpop.permute.xlu0 %4251
  %4255 = vset.pattern.permute.xlu0 0
  %4256 = vperm.xlu0 %4255, %v3326
  %v4257 = vpop.permute.xlu0 %4256
  %4260 = vset.pattern.permute.xlu0 0
  %4261 = vperm.xlu0 %4260, %v3327
  %v4262 = vpop.permute.xlu0 %4261
  %4265 = vset.pattern.permute.xlu0 0
  %4266 = vperm.xlu0 %4265, %v3328
  %v4267 = vpop.permute.xlu0 %4266
  %4270 = vset.pattern.permute.xlu0 0
  %4271 = vperm.xlu0 %4270, %v3329
  %v4272 = vpop.permute.xlu0 %4271
  %4275 = vset.pattern.permute.xlu0 0
  %4276 = vperm.xlu0 %4275, %v3330
  %v4277 = vpop.permute.xlu0 %4276
  %4280 = vset.pattern.permute.xlu0 0
  %4281 = vperm.xlu0 %4280, %v3331
  %v4282 = vpop.permute.xlu0 %4281
  %4285 = vset.pattern.permute.xlu0 0
  %4286 = vperm.xlu0 %4285, %v3332
  %v4287 = vpop.permute.xlu0 %4286
  %4290 = vset.pattern.permute.xlu0 0
  %4291 = vperm.xlu0 %4290, %v3333
  %v4292 = vpop.permute.xlu0 %4291
  %4295 = vset.pattern.permute.xlu0 0
  %4296 = vperm.xlu0 %4295, %v3334
  %v4297 = vpop.permute.xlu0 %4296
  %4300 = vset.pattern.permute.xlu0 0
  %4301 = vperm.xlu0 %4300, %v3335
  %v4302 = vpop.permute.xlu0 %4301
  %4305 = vset.pattern.permute.xlu0 0
  %4306 = vperm.xlu0 %4305, %v3336
  %v4307 = vpop.permute.xlu0 %4306
  %4310 = vset.pattern.permute.xlu0 0
  %4311 = vperm.xlu0 %4310, %v3337
  %v4312 = vpop.permute.xlu0 %4311
  %4315 = vset.pattern.permute.xlu0 0
  %4316 = vperm.xlu0 %4315, %v3338
  %v4317 = vpop.permute.xlu0 %4316
  %4320 = vset.pattern.permute.xlu0 0
  %4321 = vperm.xlu0 %4320, %v3339
  %v4322 = vpop.permute.xlu0 %4321
  %4325 = vset.pattern.permute.xlu0 0
  %4326 = vperm.xlu0 %4325, %v3340
  %v4327 = vpop.permute.xlu0 %4326
  %4330 = vset.pattern.permute.xlu0 0
  %4331 = vperm.xlu0 %4330, %v3341
  %v4332 = vpop.permute.xlu0 %4331
  %4335 = vset.pattern.permute.xlu0 0
  %4336 = vperm.xlu0 %4335, %v3342
  %v4337 = vpop.permute.xlu0 %4336
  %4340 = vset.pattern.permute.xlu0 0
  %4341 = vperm.xlu0 %4340, %v3343
  %v4342 = vpop.permute.xlu0 %4341
  %4345 = vset.pattern.permute.xlu0 0
  %4346 = vperm.xlu0 %4345, %v3344
  %v4347 = vpop.permute.xlu0 %4346
  %4350 = vset.pattern.permute.xlu0 0
  %4351 = vperm.xlu0 %4350, %v3345
  %v4352 = vpop.permute.xlu0 %4351
  %4355 = vset.pattern.permute.xlu0 0
  %4356 = vperm.xlu0 %4355, %v3346
  %v4357 = vpop.permute.xlu0 %4356
  %4360 = vset.pattern.permute.xlu0 0
  %4361 = vperm.xlu0 %4360, %v3347
  %v4362 = vpop.permute.xlu0 %4361
  %4365 = vset.pattern.permute.xlu0 0
  %4366 = vperm.xlu0 %4365, %v3348
  %v4367 = vpop.permute.xlu0 %4366
  %4370 = vset.pattern.permute.xlu0 0
  %4371 = vperm.xlu0 %4370, %v3349
  %v4372 = vpop.permute.xlu0 %4371
  %4375 = vset.pattern.permute.xlu0 0
  %4376 = vperm.xlu0 %4375, %v3350
  %v4377 = vpop.permute.xlu0 %4376
  %4380 = vset.pattern.permute.xlu0 0
  %4381 = vperm.xlu0 %4380, %v3351
  %v4382 = vpop.permute.xlu0 %4381
  %4385 = vset.pattern.permute.xlu0 0
  %4386 = vperm.xlu0 %4385, %v3352
  %v4387 = vpop.permute.xlu0 %4386
  %4390 = vset.pattern.permute.xlu0 0
  %4391 = vperm.xlu0 %4390, %v3353
  %v4392 = vpop.permute.xlu0 %4391
  %4395 = vset.pattern.permute.xlu0 0
  %4396 = vperm.xlu0 %4395, %v3354
  %v4397 = vpop.permute.xlu0 %4396
  %4400 = vset.pattern.permute.xlu0 0
  %4401 = vperm.xlu0 %4400, %v3355
  %v4402 = vpop.permute.xlu0 %4401
  %4405 = vset.pattern.permute.xlu0 0
  %4406 = vperm.xlu0 %4405, %v3356
  %v4407 = vpop.permute.xlu0 %4406
  %4410 = vset.pattern.permute.xlu0 0
  %4411 = vperm.xlu0 %4410, %v3357
  %v4412 = vpop.permute.xlu0 %4411
  %4415 = vset.pattern.permute.xlu0 0
  %4416 = vperm.xlu0 %4415, %v3358
  %v4417 = vpop.permute.xlu0 %4416
  %4420 = vset.pattern.permute.xlu0 0
  %4421 = vperm.xlu0 %4420, %v3359
  %v4422 = vpop.permute.xlu0 %4421
  %4425 = vset.pattern.permute.xlu0 0
  %4426 = vperm.xlu0 %4425, %v3360
  %v4427 = vpop.permute.xlu0 %4426
  %4430 = vset.pattern.permute.xlu0 0
  %4431 = vperm.xlu0 %4430, %v3361
  %v4432 = vpop.permute.xlu0 %4431
  %4435 = vset.pattern.permute.xlu0 0
  %4436 = vperm.xlu0 %4435, %v3362
  %v4437 = vpop.permute.xlu0 %4436
  %4440 = vset.pattern.permute.xlu0 0
  %4441 = vperm.xlu0 %4440, %v3363
  %v4442 = vpop.permute.xlu0 %4441
  %4445 = vset.pattern.permute.xlu0 0
  %4446 = vperm.xlu0 %4445, %v3364
  %v4447 = vpop.permute.xlu0 %4446
  %4450 = vset.pattern.permute.xlu0 0
  %4451 = vperm.xlu0 %4450, %v3365
  %v4452 = vpop.permute.xlu0 %4451
  %4455 = vset.pattern.permute.xlu0 0
  %4456 = vperm.xlu0 %4455, %v3366
  %v4457 = vpop.permute.xlu0 %4456
  %4460 = vset.pattern.permute.xlu0 0
  %4461 = vperm.xlu0 %4460, %v3367
  %v4462 = vpop.permute.xlu0 %4461
  %4465 = vset.pattern.permute.xlu0 0
  %4466 = vperm.xlu0 %4465, %v3368
  %v4467 = vpop.permute.xlu0 %4466
  %4470 = vset.pattern.permute.xlu0 0
  %4471 = vperm.xlu0 %4470, %v3369
  %v4472 = vpop.permute.xlu0 %4471
  %4475 = vset.pattern.permute.xlu0 0
  %4476 = vperm.xlu0 %4475, %v3370
  %v4477 = vpop.permute.xlu0 %4476
  %4480 = vset.pattern.permute.xlu0 0
  %4481 = vperm.xlu0 %4480, %v3371
  %v4482 = vpop.permute.xlu0 %4481
  %4485 = vset.pattern.permute.xlu0 0
  %4486 = vperm.xlu0 %4485, %v3372
  %v4487 = vpop.permute.xlu0 %4486
  %4490 = vset.pattern.permute.xlu0 0
  %4491 = vperm.xlu0 %4490, %v3373
  %v4492 = vpop.permute.xlu0 %4491
  %4495 = vset.pattern.permute.xlu0 0
  %4496 = vperm.xlu0 %4495, %v3374
  %v4497 = vpop.permute.xlu0 %4496
  %4500 = vset.pattern.permute.xlu0 0
  %4501 = vperm.xlu0 %4500, %v3375
  %v4502 = vpop.permute.xlu0 %4501
  %4505 = vset.pattern.permute.xlu0 0
  %4506 = vperm.xlu0 %4505, %v3376
  %v4507 = vpop.permute.xlu0 %4506
  %4510 = vset.pattern.permute.xlu0 0
  %4511 = vperm.xlu0 %4510, %v3377
  %v4512 = vpop.permute.xlu0 %4511
  %4515 = vset.pattern.permute.xlu0 0
  %4516 = vperm.xlu0 %4515, %v3378
  %v4517 = vpop.permute.xlu0 %4516
  %4520 = vset.pattern.permute.xlu0 0
  %4521 = vperm.xlu0 %4520, %v3379
  %v4522 = vpop.permute.xlu0 %4521
  %4525 = vset.pattern.permute.xlu0 0
  %4526 = vperm.xlu0 %4525, %v3380
  %v4527 = vpop.permute.xlu0 %4526
  %4530 = vset.pattern.permute.xlu0 0
  %4531 = vperm.xlu0 %4530, %v3381
  %v4532 = vpop.permute.xlu0 %4531
  %4535 = vset.pattern.permute.xlu0 0
  %4536 = vperm.xlu0 %4535, %v3382
  %v4537 = vpop.permute.xlu0 %4536
  %4540 = vset.pattern.permute.xlu0 0
  %4541 = vperm.xlu0 %4540, %v3383
  %v4542 = vpop.permute.xlu0 %4541
  %4545 = vset.pattern.permute.xlu0 0
  %4546 = vperm.xlu0 %4545, %v3384
  %v4547 = vpop.permute.xlu0 %4546
  %4550 = vset.pattern.permute.xlu0 0
  %4551 = vperm.xlu0 %4550, %v3385
  %v4552 = vpop.permute.xlu0 %4551
  %4555 = vset.pattern.permute.xlu0 0
  %4556 = vperm.xlu0 %4555, %v3386
  %v4557 = vpop.permute.xlu0 %4556
  %4560 = vset.pattern.permute.xlu0 0
  %4561 = vperm.xlu0 %4560, %v3387
  %v4562 = vpop.permute.xlu0 %4561
  %4565 = vset.pattern.permute.xlu0 0
  %4566 = vperm.xlu0 %4565, %v3388
  %v4567 = vpop.permute.xlu0 %4566
  %4570 = vset.pattern.permute.xlu0 0
  %4571 = vperm.xlu0 %4570, %v3389
  %v4572 = vpop.permute.xlu0 %4571
  %4575 = vset.pattern.permute.xlu0 0
  %4576 = vperm.xlu0 %4575, %v3390
  %v4577 = vpop.permute.xlu0 %4576
  %4580 = vset.pattern.permute.xlu0 0
  %4581 = vperm.xlu0 %4580, %v3391
  %v4582 = vpop.permute.xlu0 %4581
  %4585 = vset.pattern.permute.xlu0 0
  %4586 = vperm.xlu0 %4585, %v3392
  %v4587 = vpop.permute.xlu0 %4586
  %4590 = vset.pattern.permute.xlu0 0
  %4591 = vperm.xlu0 %4590, %v3393
  %v4592 = vpop.permute.xlu0 %4591
  %4595 = vset.pattern.permute.xlu0 0
  %4596 = vperm.xlu0 %4595, %v3394
  %v4597 = vpop.permute.xlu0 %4596
  %4600 = vset.pattern.permute.xlu0 0
  %4601 = vperm.xlu0 %4600, %v3395
  %v4602 = vpop.permute.xlu0 %4601
  %4605 = vset.pattern.permute.xlu0 0
  %4606 = vperm.xlu0 %4605, %v3396
  %v4607 = vpop.permute.xlu0 %4606
  %4610 = vset.pattern.permute.xlu0 0
  %4611 = vperm.xlu0 %4610, %v3397
  %v4612 = vpop.permute.xlu0 %4611
  %4615 = vset.pattern.permute.xlu0 0
  %4616 = vperm.xlu0 %4615, %v3398
  %v4617 = vpop.permute.xlu0 %4616
  %4620 = vset.pattern.permute.xlu0 0
  %4621 = vperm.xlu0 %4620, %v3399
  %v4622 = vpop.permute.xlu0 %4621
  %4625 = vset.pattern.permute.xlu0 0
  %4626 = vperm.xlu0 %4625, %v3400
  %v4627 = vpop.permute.xlu0 %4626
  %4630 = vset.pattern.permute.xlu0 0
  %4631 = vperm.xlu0 %4630, %v3401
  %v4632 = vpop.permute.xlu0 %4631
  %4635 = vset.pattern.permute.xlu0 0
  %4636 = vperm.xlu0 %4635, %v3402
  %v4637 = vpop.permute.xlu0 %4636
  %4640 = vset.pattern.permute.xlu0 0
  %4641 = vperm.xlu0 %4640, %v3403
  %v4642 = vpop.permute.xlu0 %4641
  %4645 = vset.pattern.permute.xlu0 0
  %4646 = vperm.xlu0 %4645, %v3404
  %v4647 = vpop.permute.xlu0 %4646
  %4650 = vset.pattern.permute.xlu0 0
  %4651 = vperm.xlu0 %4650, %v3405
  %v4652 = vpop.permute.xlu0 %4651
  %4655 = vset.pattern.permute.xlu0 0
  %4656 = vperm.xlu0 %4655, %v3406
  %v4657 = vpop.permute.xlu0 %4656
  %4660 = vset.pattern.permute.xlu0 0
  %4661 = vperm.xlu0 %4660, %v3407
  %v4662 = vpop.permute.xlu0 %4661
  %4665 = vset.pattern.permute.xlu0 0
  %4666 = vperm.xlu0 %4665, %v3408
  %v4667 = vpop.permute.xlu0 %4666
  %4670 = vset.pattern.permute.xlu0 0
  %4671 = vperm.xlu0 %4670, %v3409
  %v4672 = vpop.permute.xlu0 %4671
  %4675 = vset.pattern.permute.xlu0 0
  %4676 = vperm.xlu0 %4675, %v3410
  %v4677 = vpop.permute.xlu0 %4676
  %4680 = vset.pattern.permute.xlu0 0
  %4681 = vperm.xlu0 %4680, %v3411
  %v4682 = vpop.permute.xlu0 %4681
  %4685 = vset.pattern.permute.xlu0 0
  %4686 = vperm.xlu0 %4685, %v3412
  %v4687 = vpop.permute.xlu0 %4686
  %4690 = vset.pattern.permute.xlu0 0
  %4691 = vperm.xlu0 %4690, %v3413
  %v4692 = vpop.permute.xlu0 %4691
  %4695 = vset.pattern.permute.xlu0 0
  %4696 = vperm.xlu0 %4695, %v3414
  %v4697 = vpop.permute.xlu0 %4696
  %4700 = vset.pattern.permute.xlu0 0
  %4701 = vperm.xlu0 %4700, %v3415
  %v4702 = vpop.permute.xlu0 %4701
  %4705 = vset.pattern.permute.xlu0 0
  %4706 = vperm.xlu0 %4705, %v3416
  %v4707 = vpop.permute.xlu0 %4706
  %4710 = vset.pattern.permute.xlu0 0
  %4711 = vperm.xlu0 %4710, %v3417
  %v4712 = vpop.permute.xlu0 %4711
  %4715 = vset.pattern.permute.xlu0 0
  %4716 = vperm.xlu0 %4715, %v3418
  %v4717 = vpop.permute.xlu0 %4716
  %4720 = vset.pattern.permute.xlu0 0
  %4721 = vperm.xlu0 %4720, %v3419
  %v4722 = vpop.permute.xlu0 %4721
  %4725 = vset.pattern.permute.xlu0 0
  %4726 = vperm.xlu0 %4725, %v3420
  %v4727 = vpop.permute.xlu0 %4726
  %4730 = vset.pattern.permute.xlu0 0
  %4731 = vperm.xlu0 %4730, %v3421
  %v4732 = vpop.permute.xlu0 %4731
  %4735 = vset.pattern.permute.xlu0 0
  %4736 = vperm.xlu0 %4735, %v3422
  %v4737 = vpop.permute.xlu0 %4736
  %4740 = vset.pattern.permute.xlu0 0
  %4741 = vperm.xlu0 %4740, %v3423
  %v4742 = vpop.permute.xlu0 %4741
  %4745 = vset.pattern.permute.xlu0 0
  %4746 = vperm.xlu0 %4745, %v3424
  %v4747 = vpop.permute.xlu0 %4746
  %4750 = vset.pattern.permute.xlu0 0
  %4751 = vperm.xlu0 %4750, %v3425
  %v4752 = vpop.permute.xlu0 %4751
  %4755 = vset.pattern.permute.xlu0 0
  %4756 = vperm.xlu0 %4755, %v3426
  %v4757 = vpop.permute.xlu0 %4756
  %4760 = vset.pattern.permute.xlu0 0
  %4761 = vperm.xlu0 %4760, %v3427
  %v4762 = vpop.permute.xlu0 %4761
  %4765 = vset.pattern.permute.xlu0 0
  %4766 = vperm.xlu0 %4765, %v3428
  %v4767 = vpop.permute.xlu0 %4766
  %4770 = vset.pattern.permute.xlu0 0
  %4771 = vperm.xlu0 %4770, %v3429
  %v4772 = vpop.permute.xlu0 %4771
  %4775 = vset.pattern.permute.xlu0 0
  %4776 = vperm.xlu0 %4775, %v3430
  %v4777 = vpop.permute.xlu0 %4776
  %4780 = vset.pattern.permute.xlu0 0
  %4781 = vperm.xlu0 %4780, %v3431
  %v4782 = vpop.permute.xlu0 %4781
  %4785 = vset.pattern.permute.xlu0 0
  %4786 = vperm.xlu0 %4785, %v3432
  %v4787 = vpop.permute.xlu0 %4786
  %4790 = vset.pattern.permute.xlu0 0
  %4791 = vperm.xlu0 %4790, %v3433
  %v4792 = vpop.permute.xlu0 %4791
  %4795 = vset.pattern.permute.xlu0 0
  %4796 = vperm.xlu0 %4795, %v3434
  %v4797 = vpop.permute.xlu0 %4796
  %4800 = vset.pattern.permute.xlu0 0
  %4801 = vperm.xlu0 %4800, %v3435
  %v4802 = vpop.permute.xlu0 %4801
  %4805 = vset.pattern.permute.xlu0 0
  %4806 = vperm.xlu0 %4805, %v3436
  %v4807 = vpop.permute.xlu0 %4806
  %4810 = vset.pattern.permute.xlu0 0
  %4811 = vperm.xlu0 %4810, %v3437
  %v4812 = vpop.permute.xlu0 %4811
  %4815 = vset.pattern.permute.xlu0 0
  %4816 = vperm.xlu0 %4815, %v3438
  %v4817 = vpop.permute.xlu0 %4816
  %4820 = vset.pattern.permute.xlu0 0
  %4821 = vperm.xlu0 %4820, %v3439
  %v4822 = vpop.permute.xlu0 %4821
  %4825 = vset.pattern.permute.xlu0 0
  %4826 = vperm.xlu0 %4825, %v3440
  %v4827 = vpop.permute.xlu0 %4826
  %4830 = vset.pattern.permute.xlu0 0
  %4831 = vperm.xlu0 %4830, %v3441
  %v4832 = vpop.permute.xlu0 %4831
  %4835 = vset.pattern.permute.xlu0 0
  %4836 = vperm.xlu0 %4835, %v3442
  %v4837 = vpop.permute.xlu0 %4836
  %4840 = vset.pattern.permute.xlu0 0
  %4841 = vperm.xlu0 %4840, %v3443
  %v4842 = vpop.permute.xlu0 %4841
  %4845 = vset.pattern.permute.xlu0 0
  %4846 = vperm.xlu0 %4845, %v3444
  %v4847 = vpop.permute.xlu0 %4846
  %4850 = vset.pattern.permute.xlu0 0
  %4851 = vperm.xlu0 %4850, %v3445
  %v4852 = vpop.permute.xlu0 %4851
  %4855 = vset.pattern.permute.xlu0 0
  %4856 = vperm.xlu0 %4855, %v3446
  %v4857 = vpop.permute.xlu0 %4856
  %4860 = vset.pattern.permute.xlu0 0
  %4861 = vperm.xlu0 %4860, %v3447
  %v4862 = vpop.permute.xlu0 %4861
  %4865 = vset.pattern.permute.xlu0 0
  %4866 = vperm.xlu0 %4865, %v3448
  %v4867 = vpop.permute.xlu0 %4866
  %4870 = vset.pattern.permute.xlu0 0
  %4871 = vperm.xlu0 %4870, %v3449
  %v4872 = vpop.permute.xlu0 %4871
  %4875 = vset.pattern.permute.xlu0 0
  %4876 = vperm.xlu0 %4875, %v3450
  %v4877 = vpop.permute.xlu0 %4876
  %4880 = vset.pattern.permute.xlu0 0
  %4881 = vperm.xlu0 %4880, %v3451
  %v4882 = vpop.permute.xlu0 %4881
  %4885 = vset.pattern.permute.xlu0 0
  %4886 = vperm.xlu0 %4885, %v3452
  %v4887 = vpop.permute.xlu0 %4886
  %4890 = vset.pattern.permute.xlu0 0
  %4891 = vperm.xlu0 %4890, %v3453
  %v4892 = vpop.permute.xlu0 %4891
  %4895 = vset.pattern.permute.xlu0 0
  %4896 = vperm.xlu0 %4895, %v3454
  %v4897 = vpop.permute.xlu0 %4896
  %4900 = vset.pattern.permute.xlu0 0
  %4901 = vperm.xlu0 %4900, %v3455
  %v4902 = vpop.permute.xlu0 %4901
  %4905 = vset.pattern.permute.xlu0 0
  %4906 = vperm.xlu0 %4905, %v3456
  %v4907 = vpop.permute.xlu0 %4906
  %4910 = vset.pattern.permute.xlu0 0
  %4911 = vperm.xlu0 %4910, %v3457
  %v4912 = vpop.permute.xlu0 %4911
  %4915 = vset.pattern.permute.xlu0 0
  %4916 = vperm.xlu0 %4915, %v3458
  %v4917 = vpop.permute.xlu0 %4916
  %4920 = vset.pattern.permute.xlu0 0
  %4921 = vperm.xlu0 %4920, %v3459
  %v4922 = vpop.permute.xlu0 %4921
  %4925 = vset.pattern.permute.xlu0 0
  %4926 = vperm.xlu0 %4925, %v3460
  %v4927 = vpop.permute.xlu0 %4926
  %4930 = vset.pattern.permute.xlu0 0
  %4931 = vperm.xlu0 %4930, %v3461
  %v4932 = vpop.permute.xlu0 %4931
  %4935 = vset.pattern.permute.xlu0 0
  %4936 = vperm.xlu0 %4935, %v3462
  %v4937 = vpop.permute.xlu0 %4936
  %v4939 = vmul.f32 %v3955, %v4122
  %v4940 = vmul.f32 %v3956, %v4127
  %v4941 = vmul.f32 %v3957, %v4132
  %v4942 = vmul.f32 %v3958, %v4137
  %v4943 = vmul.f32 %v3959, %v4142
  %v4944 = vmul.f32 %v3960, %v4147
  %v4945 = vmul.f32 %v3961, %v4152
  %v4946 = vmul.f32 %v3962, %v4157
  %v4947 = vmul.f32 %v3963, %v4162
  %v4948 = vmul.f32 %v3964, %v4167
  %v4949 = vmul.f32 %v3965, %v4172
  %v4950 = vmul.f32 %v3966, %v4177
  %v4951 = vmul.f32 %v3967, %v4182
  %v4952 = vmul.f32 %v3968, %v4187
  %v4953 = vmul.f32 %v3969, %v4192
  %v4954 = vmul.f32 %v3970, %v4197
  %v4955 = vmul.f32 %v3971, %v4202
  %v4956 = vmul.f32 %v3972, %v4207
  %v4957 = vmul.f32 %v3973, %v4212
  %v4958 = vmul.f32 %v3974, %v4217
  %v4959 = vmul.f32 %v3975, %v4222
  %v4960 = vmul.f32 %v3976, %v4227
  %v4961 = vmul.f32 %v3977, %v4232
  %v4962 = vmul.f32 %v3978, %v4237
  %v4963 = vmul.f32 %v3979, %v4242
  %v4964 = vmul.f32 %v3980, %v4247
  %v4965 = vmul.f32 %v3981, %v4252
  %v4966 = vmul.f32 %v3982, %v4257
  %v4967 = vmul.f32 %v3983, %v4262
  %v4968 = vmul.f32 %v3984, %v4267
  %v4969 = vmul.f32 %v3985, %v4272
  %v4970 = vmul.f32 %v3986, %v4277
  %v4971 = vmul.f32 %v3987, %v4282
  %v4972 = vmul.f32 %v3988, %v4287
  %v4973 = vmul.f32 %v3989, %v4292
  %v4974 = vmul.f32 %v3990, %v4297
  %v4975 = vmul.f32 %v3991, %v4302
  %v4976 = vmul.f32 %v3992, %v4307
  %v4977 = vmul.f32 %v3993, %v4312
  %v4978 = vmul.f32 %v3994, %v4317
  %v4979 = vmul.f32 %v3995, %v4322
  %v4980 = vmul.f32 %v3996, %v4327
  %v4981 = vmul.f32 %v3997, %v4332
  %v4982 = vmul.f32 %v3998, %v4337
  %v4983 = vmul.f32 %v3999, %v4342
  %v4984 = vmul.f32 %v4000, %v4347
  %v4985 = vmul.f32 %v4001, %v4352
  %v4986 = vmul.f32 %v4002, %v4357
  %v4987 = vmul.f32 %v4003, %v4362
  %v4988 = vmul.f32 %v4004, %v4367
  %v4989 = vmul.f32 %v4005, %v4372
  %v4990 = vmul.f32 %v4006, %v4377
  %v4991 = vmul.f32 %v4007, %v4382
  %v4992 = vmul.f32 %v4008, %v4387
  %v4993 = vmul.f32 %v4009, %v4392
  %v4994 = vmul.f32 %v4010, %v4397
  %v4995 = vmul.f32 %v4011, %v4402
  %v4996 = vmul.f32 %v4012, %v4407
  %v4997 = vmul.f32 %v4013, %v4412
  %v4998 = vmul.f32 %v4014, %v4417
  %v4999 = vmul.f32 %v4015, %v4422
  %v5000 = vmul.f32 %v4016, %v4427
  %v5001 = vmul.f32 %v4017, %v4432
  %v5002 = vmul.f32 %v4018, %v4437
  %v5003 = vmul.f32 %v4019, %v4442
  %v5004 = vmul.f32 %v4020, %v4447
  %v5005 = vmul.f32 %v4021, %v4452
  %v5006 = vmul.f32 %v4022, %v4457
  %v5007 = vmul.f32 %v4023, %v4462
  %v5008 = vmul.f32 %v4024, %v4467
  %v5009 = vmul.f32 %v4025, %v4472
  %v5010 = vmul.f32 %v4026, %v4477
  %v5011 = vmul.f32 %v4027, %v4482
  %v5012 = vmul.f32 %v4028, %v4487
  %v5013 = vmul.f32 %v4029, %v4492
  %v5014 = vmul.f32 %v4030, %v4497
  %v5015 = vmul.f32 %v4031, %v4502
  %v5016 = vmul.f32 %v4032, %v4507
  %v5017 = vmul.f32 %v4033, %v4512
  %v5018 = vmul.f32 %v4034, %v4517
  %v5019 = vmul.f32 %v4035, %v4522
  %v5020 = vmul.f32 %v4036, %v4527
  %v5021 = vmul.f32 %v4037, %v4532
  %v5022 = vmul.f32 %v4038, %v4537
  %v5023 = vmul.f32 %v4039, %v4542
  %v5024 = vmul.f32 %v4040, %v4547
  %v5025 = vmul.f32 %v4041, %v4552
  %v5026 = vmul.f32 %v4042, %v4557
  %v5027 = vmul.f32 %v4043, %v4562
  %v5028 = vmul.f32 %v4044, %v4567
  %v5029 = vmul.f32 %v4045, %v4572
  %v5030 = vmul.f32 %v4046, %v4577
  %v5031 = vmul.f32 %v4047, %v4582
  %v5032 = vmul.f32 %v4048, %v4587
  %v5033 = vmul.f32 %v4049, %v4592
  %v5034 = vmul.f32 %v4050, %v4597
  %v5035 = vmul.f32 %v4051, %v4602
  %v5036 = vmul.f32 %v4052, %v4607
  %v5037 = vmul.f32 %v4053, %v4612
  %v5038 = vmul.f32 %v4054, %v4617
  %v5039 = vmul.f32 %v4055, %v4622
  %v5040 = vmul.f32 %v4056, %v4627
  %v5041 = vmul.f32 %v4057, %v4632
  %v5042 = vmul.f32 %v4058, %v4637
  %v5043 = vmul.f32 %v4059, %v4642
  %v5044 = vmul.f32 %v4060, %v4647
  %v5045 = vmul.f32 %v4061, %v4652
  %v5046 = vmul.f32 %v4062, %v4657
  %v5047 = vmul.f32 %v4063, %v4662
  %v5048 = vmul.f32 %v4064, %v4667
  %v5049 = vmul.f32 %v4065, %v4672
  %v5050 = vmul.f32 %v4066, %v4677
  %v5051 = vmul.f32 %v4067, %v4682
  %v5052 = vmul.f32 %v4068, %v4687
  %v5053 = vmul.f32 %v4069, %v4692
  %v5054 = vmul.f32 %v4070, %v4697
  %v5055 = vmul.f32 %v4071, %v4702
  %v5056 = vmul.f32 %v4072, %v4707
  %v5057 = vmul.f32 %v4073, %v4712
  %v5058 = vmul.f32 %v4074, %v4717
  %v5059 = vmul.f32 %v4075, %v4722
  %v5060 = vmul.f32 %v4076, %v4727
  %v5061 = vmul.f32 %v4077, %v4732
  %v5062 = vmul.f32 %v4078, %v4737
  %v5063 = vmul.f32 %v4079, %v4742
  %v5064 = vmul.f32 %v4080, %v4747
  %v5065 = vmul.f32 %v4081, %v4752
  %v5066 = vmul.f32 %v4082, %v4757
  %v5067 = vmul.f32 %v4083, %v4762
  %v5068 = vmul.f32 %v4084, %v4767
  %v5069 = vmul.f32 %v4085, %v4772
  %v5070 = vmul.f32 %v4086, %v4777
  %v5071 = vmul.f32 %v4087, %v4782
  %v5072 = vmul.f32 %v4088, %v4787
  %v5073 = vmul.f32 %v4089, %v4792
  %v5074 = vmul.f32 %v4090, %v4797
  %v5075 = vmul.f32 %v4091, %v4802
  %v5076 = vmul.f32 %v4092, %v4807
  %v5077 = vmul.f32 %v4093, %v4812
  %v5078 = vmul.f32 %v4094, %v4817
  %v5079 = vmul.f32 %v4095, %v4822
  %v5080 = vmul.f32 %v4096, %v4827
  %v5081 = vmul.f32 %v4097, %v4832
  %v5082 = vmul.f32 %v4098, %v4837
  %v5083 = vmul.f32 %v4099, %v4842
  %v5084 = vmul.f32 %v4100, %v4847
  %v5085 = vmul.f32 %v4101, %v4852
  %v5086 = vmul.f32 %v4102, %v4857
  %v5087 = vmul.f32 %v4103, %v4862
  %v5088 = vmul.f32 %v4104, %v4867
  %v5089 = vmul.f32 %v4105, %v4872
  %v5090 = vmul.f32 %v4106, %v4877
  %v5091 = vmul.f32 %v4107, %v4882
  %v5092 = vmul.f32 %v4108, %v4887
  %v5093 = vmul.f32 %v4109, %v4892
  %v5094 = vmul.f32 %v4110, %v4897
  %v5095 = vmul.f32 %v4111, %v4902
  %v5096 = vmul.f32 %v4112, %v4907
  %v5097 = vmul.f32 %v4113, %v4912
  %v5098 = vmul.f32 %v4114, %v4917
  %v5099 = vmul.f32 %v4115, %v4922
  %v5100 = vmul.f32 %v4116, %v4927
  %v5101 = vmul.f32 %v4117, %v4932
  %v5102 = vmul.f32 %v4118, %v4937
  %5104 = vset.pattern.permute.xlu0 0
  %5105 = vperm.xlu0 %5104, %v3791
  %v5106 = vpop.permute.xlu0 %5105
  %5109 = vset.pattern.permute.xlu0 0
  %5110 = vperm.xlu0 %5109, %v3792
  %v5111 = vpop.permute.xlu0 %5110
  %5114 = vset.pattern.permute.xlu0 0
  %5115 = vperm.xlu0 %5114, %v3793
  %v5116 = vpop.permute.xlu0 %5115
  %5119 = vset.pattern.permute.xlu0 0
  %5120 = vperm.xlu0 %5119, %v3794
  %v5121 = vpop.permute.xlu0 %5120
  %5124 = vset.pattern.permute.xlu0 0
  %5125 = vperm.xlu0 %5124, %v3795
  %v5126 = vpop.permute.xlu0 %5125
  %5129 = vset.pattern.permute.xlu0 0
  %5130 = vperm.xlu0 %5129, %v3796
  %v5131 = vpop.permute.xlu0 %5130
  %5134 = vset.pattern.permute.xlu0 0
  %5135 = vperm.xlu0 %5134, %v3797
  %v5136 = vpop.permute.xlu0 %5135
  %5139 = vset.pattern.permute.xlu0 0
  %5140 = vperm.xlu0 %5139, %v3798
  %v5141 = vpop.permute.xlu0 %5140
  %5144 = vset.pattern.permute.xlu0 0
  %5145 = vperm.xlu0 %5144, %v3799
  %v5146 = vpop.permute.xlu0 %5145
  %5149 = vset.pattern.permute.xlu0 0
  %5150 = vperm.xlu0 %5149, %v3800
  %v5151 = vpop.permute.xlu0 %5150
  %5154 = vset.pattern.permute.xlu0 0
  %5155 = vperm.xlu0 %5154, %v3801
  %v5156 = vpop.permute.xlu0 %5155
  %5159 = vset.pattern.permute.xlu0 0
  %5160 = vperm.xlu0 %5159, %v3802
  %v5161 = vpop.permute.xlu0 %5160
  %5164 = vset.pattern.permute.xlu0 0
  %5165 = vperm.xlu0 %5164, %v3803
  %v5166 = vpop.permute.xlu0 %5165
  %5169 = vset.pattern.permute.xlu0 0
  %5170 = vperm.xlu0 %5169, %v3804
  %v5171 = vpop.permute.xlu0 %5170
  %5174 = vset.pattern.permute.xlu0 0
  %5175 = vperm.xlu0 %5174, %v3805
  %v5176 = vpop.permute.xlu0 %5175
  %5179 = vset.pattern.permute.xlu0 0
  %5180 = vperm.xlu0 %5179, %v3806
  %v5181 = vpop.permute.xlu0 %5180
  %5184 = vset.pattern.permute.xlu0 0
  %5185 = vperm.xlu0 %5184, %v3807
  %v5186 = vpop.permute.xlu0 %5185
  %5189 = vset.pattern.permute.xlu0 0
  %5190 = vperm.xlu0 %5189, %v3808
  %v5191 = vpop.permute.xlu0 %5190
  %5194 = vset.pattern.permute.xlu0 0
  %5195 = vperm.xlu0 %5194, %v3809
  %v5196 = vpop.permute.xlu0 %5195
  %5199 = vset.pattern.permute.xlu0 0
  %5200 = vperm.xlu0 %5199, %v3810
  %v5201 = vpop.permute.xlu0 %5200
  %5204 = vset.pattern.permute.xlu0 0
  %5205 = vperm.xlu0 %5204, %v3811
  %v5206 = vpop.permute.xlu0 %5205
  %5209 = vset.pattern.permute.xlu0 0
  %5210 = vperm.xlu0 %5209, %v3812
  %v5211 = vpop.permute.xlu0 %5210
  %5214 = vset.pattern.permute.xlu0 0
  %5215 = vperm.xlu0 %5214, %v3813
  %v5216 = vpop.permute.xlu0 %5215
  %5219 = vset.pattern.permute.xlu0 0
  %5220 = vperm.xlu0 %5219, %v3814
  %v5221 = vpop.permute.xlu0 %5220
  %5224 = vset.pattern.permute.xlu0 0
  %5225 = vperm.xlu0 %5224, %v3815
  %v5226 = vpop.permute.xlu0 %5225
  %5229 = vset.pattern.permute.xlu0 0
  %5230 = vperm.xlu0 %5229, %v3816
  %v5231 = vpop.permute.xlu0 %5230
  %5234 = vset.pattern.permute.xlu0 0
  %5235 = vperm.xlu0 %5234, %v3817
  %v5236 = vpop.permute.xlu0 %5235
  %5239 = vset.pattern.permute.xlu0 0
  %5240 = vperm.xlu0 %5239, %v3818
  %v5241 = vpop.permute.xlu0 %5240
  %5244 = vset.pattern.permute.xlu0 0
  %5245 = vperm.xlu0 %5244, %v3819
  %v5246 = vpop.permute.xlu0 %5245
  %5249 = vset.pattern.permute.xlu0 0
  %5250 = vperm.xlu0 %5249, %v3820
  %v5251 = vpop.permute.xlu0 %5250
  %5254 = vset.pattern.permute.xlu0 0
  %5255 = vperm.xlu0 %5254, %v3821
  %v5256 = vpop.permute.xlu0 %5255
  %5259 = vset.pattern.permute.xlu0 0
  %5260 = vperm.xlu0 %5259, %v3822
  %v5261 = vpop.permute.xlu0 %5260
  %5264 = vset.pattern.permute.xlu0 0
  %5265 = vperm.xlu0 %5264, %v3823
  %v5266 = vpop.permute.xlu0 %5265
  %5269 = vset.pattern.permute.xlu0 0
  %5270 = vperm.xlu0 %5269, %v3824
  %v5271 = vpop.permute.xlu0 %5270
  %5274 = vset.pattern.permute.xlu0 0
  %5275 = vperm.xlu0 %5274, %v3825
  %v5276 = vpop.permute.xlu0 %5275
  %5279 = vset.pattern.permute.xlu0 0
  %5280 = vperm.xlu0 %5279, %v3826
  %v5281 = vpop.permute.xlu0 %5280
  %5284 = vset.pattern.permute.xlu0 0
  %5285 = vperm.xlu0 %5284, %v3827
  %v5286 = vpop.permute.xlu0 %5285
  %5289 = vset.pattern.permute.xlu0 0
  %5290 = vperm.xlu0 %5289, %v3828
  %v5291 = vpop.permute.xlu0 %5290
  %5294 = vset.pattern.permute.xlu0 0
  %5295 = vperm.xlu0 %5294, %v3829
  %v5296 = vpop.permute.xlu0 %5295
  %5299 = vset.pattern.permute.xlu0 0
  %5300 = vperm.xlu0 %5299, %v3830
  %v5301 = vpop.permute.xlu0 %5300
  %5304 = vset.pattern.permute.xlu0 0
  %5305 = vperm.xlu0 %5304, %v3831
  %v5306 = vpop.permute.xlu0 %5305
  %5309 = vset.pattern.permute.xlu0 0
  %5310 = vperm.xlu0 %5309, %v3832
  %v5311 = vpop.permute.xlu0 %5310
  %5314 = vset.pattern.permute.xlu0 0
  %5315 = vperm.xlu0 %5314, %v3833
  %v5316 = vpop.permute.xlu0 %5315
  %5319 = vset.pattern.permute.xlu0 0
  %5320 = vperm.xlu0 %5319, %v3834
  %v5321 = vpop.permute.xlu0 %5320
  %5324 = vset.pattern.permute.xlu0 0
  %5325 = vperm.xlu0 %5324, %v3835
  %v5326 = vpop.permute.xlu0 %5325
  %5329 = vset.pattern.permute.xlu0 0
  %5330 = vperm.xlu0 %5329, %v3836
  %v5331 = vpop.permute.xlu0 %5330
  %5334 = vset.pattern.permute.xlu0 0
  %5335 = vperm.xlu0 %5334, %v3837
  %v5336 = vpop.permute.xlu0 %5335
  %5339 = vset.pattern.permute.xlu0 0
  %5340 = vperm.xlu0 %5339, %v3838
  %v5341 = vpop.permute.xlu0 %5340
  %5344 = vset.pattern.permute.xlu0 0
  %5345 = vperm.xlu0 %5344, %v3839
  %v5346 = vpop.permute.xlu0 %5345
  %5349 = vset.pattern.permute.xlu0 0
  %5350 = vperm.xlu0 %5349, %v3840
  %v5351 = vpop.permute.xlu0 %5350
  %5354 = vset.pattern.permute.xlu0 0
  %5355 = vperm.xlu0 %5354, %v3841
  %v5356 = vpop.permute.xlu0 %5355
  %5359 = vset.pattern.permute.xlu0 0
  %5360 = vperm.xlu0 %5359, %v3842
  %v5361 = vpop.permute.xlu0 %5360
  %5364 = vset.pattern.permute.xlu0 0
  %5365 = vperm.xlu0 %5364, %v3843
  %v5366 = vpop.permute.xlu0 %5365
  %5369 = vset.pattern.permute.xlu0 0
  %5370 = vperm.xlu0 %5369, %v3844
  %v5371 = vpop.permute.xlu0 %5370
  %5374 = vset.pattern.permute.xlu0 0
  %5375 = vperm.xlu0 %5374, %v3845
  %v5376 = vpop.permute.xlu0 %5375
  %5379 = vset.pattern.permute.xlu0 0
  %5380 = vperm.xlu0 %5379, %v3846
  %v5381 = vpop.permute.xlu0 %5380
  %5384 = vset.pattern.permute.xlu0 0
  %5385 = vperm.xlu0 %5384, %v3847
  %v5386 = vpop.permute.xlu0 %5385
  %5389 = vset.pattern.permute.xlu0 0
  %5390 = vperm.xlu0 %5389, %v3848
  %v5391 = vpop.permute.xlu0 %5390
  %5394 = vset.pattern.permute.xlu0 0
  %5395 = vperm.xlu0 %5394, %v3849
  %v5396 = vpop.permute.xlu0 %5395
  %5399 = vset.pattern.permute.xlu0 0
  %5400 = vperm.xlu0 %5399, %v3850
  %v5401 = vpop.permute.xlu0 %5400
  %5404 = vset.pattern.permute.xlu0 0
  %5405 = vperm.xlu0 %5404, %v3851
  %v5406 = vpop.permute.xlu0 %5405
  %5409 = vset.pattern.permute.xlu0 0
  %5410 = vperm.xlu0 %5409, %v3852
  %v5411 = vpop.permute.xlu0 %5410
  %5414 = vset.pattern.permute.xlu0 0
  %5415 = vperm.xlu0 %5414, %v3853
  %v5416 = vpop.permute.xlu0 %5415
  %5419 = vset.pattern.permute.xlu0 0
  %5420 = vperm.xlu0 %5419, %v3854
  %v5421 = vpop.permute.xlu0 %5420
  %5424 = vset.pattern.permute.xlu0 0
  %5425 = vperm.xlu0 %5424, %v3855
  %v5426 = vpop.permute.xlu0 %5425
  %5429 = vset.pattern.permute.xlu0 0
  %5430 = vperm.xlu0 %5429, %v3856
  %v5431 = vpop.permute.xlu0 %5430
  %5434 = vset.pattern.permute.xlu0 0
  %5435 = vperm.xlu0 %5434, %v3857
  %v5436 = vpop.permute.xlu0 %5435
  %5439 = vset.pattern.permute.xlu0 0
  %5440 = vperm.xlu0 %5439, %v3858
  %v5441 = vpop.permute.xlu0 %5440
  %5444 = vset.pattern.permute.xlu0 0
  %5445 = vperm.xlu0 %5444, %v3859
  %v5446 = vpop.permute.xlu0 %5445
  %5449 = vset.pattern.permute.xlu0 0
  %5450 = vperm.xlu0 %5449, %v3860
  %v5451 = vpop.permute.xlu0 %5450
  %5454 = vset.pattern.permute.xlu0 0
  %5455 = vperm.xlu0 %5454, %v3861
  %v5456 = vpop.permute.xlu0 %5455
  %5459 = vset.pattern.permute.xlu0 0
  %5460 = vperm.xlu0 %5459, %v3862
  %v5461 = vpop.permute.xlu0 %5460
  %5464 = vset.pattern.permute.xlu0 0
  %5465 = vperm.xlu0 %5464, %v3863
  %v5466 = vpop.permute.xlu0 %5465
  %5469 = vset.pattern.permute.xlu0 0
  %5470 = vperm.xlu0 %5469, %v3864
  %v5471 = vpop.permute.xlu0 %5470
  %5474 = vset.pattern.permute.xlu0 0
  %5475 = vperm.xlu0 %5474, %v3865
  %v5476 = vpop.permute.xlu0 %5475
  %5479 = vset.pattern.permute.xlu0 0
  %5480 = vperm.xlu0 %5479, %v3866
  %v5481 = vpop.permute.xlu0 %5480
  %5484 = vset.pattern.permute.xlu0 0
  %5485 = vperm.xlu0 %5484, %v3867
  %v5486 = vpop.permute.xlu0 %5485
  %5489 = vset.pattern.permute.xlu0 0
  %5490 = vperm.xlu0 %5489, %v3868
  %v5491 = vpop.permute.xlu0 %5490
  %5494 = vset.pattern.permute.xlu0 0
  %5495 = vperm.xlu0 %5494, %v3869
  %v5496 = vpop.permute.xlu0 %5495
  %5499 = vset.pattern.permute.xlu0 0
  %5500 = vperm.xlu0 %5499, %v3870
  %v5501 = vpop.permute.xlu0 %5500
  %5504 = vset.pattern.permute.xlu0 0
  %5505 = vperm.xlu0 %5504, %v3871
  %v5506 = vpop.permute.xlu0 %5505
  %5509 = vset.pattern.permute.xlu0 0
  %5510 = vperm.xlu0 %5509, %v3872
  %v5511 = vpop.permute.xlu0 %5510
  %5514 = vset.pattern.permute.xlu0 0
  %5515 = vperm.xlu0 %5514, %v3873
  %v5516 = vpop.permute.xlu0 %5515
  %5519 = vset.pattern.permute.xlu0 0
  %5520 = vperm.xlu0 %5519, %v3874
  %v5521 = vpop.permute.xlu0 %5520
  %5524 = vset.pattern.permute.xlu0 0
  %5525 = vperm.xlu0 %5524, %v3875
  %v5526 = vpop.permute.xlu0 %5525
  %5529 = vset.pattern.permute.xlu0 0
  %5530 = vperm.xlu0 %5529, %v3876
  %v5531 = vpop.permute.xlu0 %5530
  %5534 = vset.pattern.permute.xlu0 0
  %5535 = vperm.xlu0 %5534, %v3877
  %v5536 = vpop.permute.xlu0 %5535
  %5539 = vset.pattern.permute.xlu0 0
  %5540 = vperm.xlu0 %5539, %v3878
  %v5541 = vpop.permute.xlu0 %5540
  %5544 = vset.pattern.permute.xlu0 0
  %5545 = vperm.xlu0 %5544, %v3879
  %v5546 = vpop.permute.xlu0 %5545
  %5549 = vset.pattern.permute.xlu0 0
  %5550 = vperm.xlu0 %5549, %v3880
  %v5551 = vpop.permute.xlu0 %5550
  %5554 = vset.pattern.permute.xlu0 0
  %5555 = vperm.xlu0 %5554, %v3881
  %v5556 = vpop.permute.xlu0 %5555
  %5559 = vset.pattern.permute.xlu0 0
  %5560 = vperm.xlu0 %5559, %v3882
  %v5561 = vpop.permute.xlu0 %5560
  %5564 = vset.pattern.permute.xlu0 0
  %5565 = vperm.xlu0 %5564, %v3883
  %v5566 = vpop.permute.xlu0 %5565
  %5569 = vset.pattern.permute.xlu0 0
  %5570 = vperm.xlu0 %5569, %v3884
  %v5571 = vpop.permute.xlu0 %5570
  %5574 = vset.pattern.permute.xlu0 0
  %5575 = vperm.xlu0 %5574, %v3885
  %v5576 = vpop.permute.xlu0 %5575
  %5579 = vset.pattern.permute.xlu0 0
  %5580 = vperm.xlu0 %5579, %v3886
  %v5581 = vpop.permute.xlu0 %5580
  %5584 = vset.pattern.permute.xlu0 0
  %5585 = vperm.xlu0 %5584, %v3887
  %v5586 = vpop.permute.xlu0 %5585
  %5589 = vset.pattern.permute.xlu0 0
  %5590 = vperm.xlu0 %5589, %v3888
  %v5591 = vpop.permute.xlu0 %5590
  %5594 = vset.pattern.permute.xlu0 0
  %5595 = vperm.xlu0 %5594, %v3889
  %v5596 = vpop.permute.xlu0 %5595
  %5599 = vset.pattern.permute.xlu0 0
  %5600 = vperm.xlu0 %5599, %v3890
  %v5601 = vpop.permute.xlu0 %5600
  %5604 = vset.pattern.permute.xlu0 0
  %5605 = vperm.xlu0 %5604, %v3891
  %v5606 = vpop.permute.xlu0 %5605
  %5609 = vset.pattern.permute.xlu0 0
  %5610 = vperm.xlu0 %5609, %v3892
  %v5611 = vpop.permute.xlu0 %5610
  %5614 = vset.pattern.permute.xlu0 0
  %5615 = vperm.xlu0 %5614, %v3893
  %v5616 = vpop.permute.xlu0 %5615
  %5619 = vset.pattern.permute.xlu0 0
  %5620 = vperm.xlu0 %5619, %v3894
  %v5621 = vpop.permute.xlu0 %5620
  %5624 = vset.pattern.permute.xlu0 0
  %5625 = vperm.xlu0 %5624, %v3895
  %v5626 = vpop.permute.xlu0 %5625
  %5629 = vset.pattern.permute.xlu0 0
  %5630 = vperm.xlu0 %5629, %v3896
  %v5631 = vpop.permute.xlu0 %5630
  %5634 = vset.pattern.permute.xlu0 0
  %5635 = vperm.xlu0 %5634, %v3897
  %v5636 = vpop.permute.xlu0 %5635
  %5639 = vset.pattern.permute.xlu0 0
  %5640 = vperm.xlu0 %5639, %v3898
  %v5641 = vpop.permute.xlu0 %5640
  %5644 = vset.pattern.permute.xlu0 0
  %5645 = vperm.xlu0 %5644, %v3899
  %v5646 = vpop.permute.xlu0 %5645
  %5649 = vset.pattern.permute.xlu0 0
  %5650 = vperm.xlu0 %5649, %v3900
  %v5651 = vpop.permute.xlu0 %5650
  %5654 = vset.pattern.permute.xlu0 0
  %5655 = vperm.xlu0 %5654, %v3901
  %v5656 = vpop.permute.xlu0 %5655
  %5659 = vset.pattern.permute.xlu0 0
  %5660 = vperm.xlu0 %5659, %v3902
  %v5661 = vpop.permute.xlu0 %5660
  %5664 = vset.pattern.permute.xlu0 0
  %5665 = vperm.xlu0 %5664, %v3903
  %v5666 = vpop.permute.xlu0 %5665
  %5669 = vset.pattern.permute.xlu0 0
  %5670 = vperm.xlu0 %5669, %v3904
  %v5671 = vpop.permute.xlu0 %5670
  %5674 = vset.pattern.permute.xlu0 0
  %5675 = vperm.xlu0 %5674, %v3905
  %v5676 = vpop.permute.xlu0 %5675
  %5679 = vset.pattern.permute.xlu0 0
  %5680 = vperm.xlu0 %5679, %v3906
  %v5681 = vpop.permute.xlu0 %5680
  %5684 = vset.pattern.permute.xlu0 0
  %5685 = vperm.xlu0 %5684, %v3907
  %v5686 = vpop.permute.xlu0 %5685
  %5689 = vset.pattern.permute.xlu0 0
  %5690 = vperm.xlu0 %5689, %v3908
  %v5691 = vpop.permute.xlu0 %5690
  %5694 = vset.pattern.permute.xlu0 0
  %5695 = vperm.xlu0 %5694, %v3909
  %v5696 = vpop.permute.xlu0 %5695
  %5699 = vset.pattern.permute.xlu0 0
  %5700 = vperm.xlu0 %5699, %v3910
  %v5701 = vpop.permute.xlu0 %5700
  %5704 = vset.pattern.permute.xlu0 0
  %5705 = vperm.xlu0 %5704, %v3911
  %v5706 = vpop.permute.xlu0 %5705
  %5709 = vset.pattern.permute.xlu0 0
  %5710 = vperm.xlu0 %5709, %v3912
  %v5711 = vpop.permute.xlu0 %5710
  %5714 = vset.pattern.permute.xlu0 0
  %5715 = vperm.xlu0 %5714, %v3913
  %v5716 = vpop.permute.xlu0 %5715
  %5719 = vset.pattern.permute.xlu0 0
  %5720 = vperm.xlu0 %5719, %v3914
  %v5721 = vpop.permute.xlu0 %5720
  %5724 = vset.pattern.permute.xlu0 0
  %5725 = vperm.xlu0 %5724, %v3915
  %v5726 = vpop.permute.xlu0 %5725
  %5729 = vset.pattern.permute.xlu0 0
  %5730 = vperm.xlu0 %5729, %v3916
  %v5731 = vpop.permute.xlu0 %5730
  %5734 = vset.pattern.permute.xlu0 0
  %5735 = vperm.xlu0 %5734, %v3917
  %v5736 = vpop.permute.xlu0 %5735
  %5739 = vset.pattern.permute.xlu0 0
  %5740 = vperm.xlu0 %5739, %v3918
  %v5741 = vpop.permute.xlu0 %5740
  %5744 = vset.pattern.permute.xlu0 0
  %5745 = vperm.xlu0 %5744, %v3919
  %v5746 = vpop.permute.xlu0 %5745
  %5749 = vset.pattern.permute.xlu0 0
  %5750 = vperm.xlu0 %5749, %v3920
  %v5751 = vpop.permute.xlu0 %5750
  %5754 = vset.pattern.permute.xlu0 0
  %5755 = vperm.xlu0 %5754, %v3921
  %v5756 = vpop.permute.xlu0 %5755
  %5759 = vset.pattern.permute.xlu0 0
  %5760 = vperm.xlu0 %5759, %v3922
  %v5761 = vpop.permute.xlu0 %5760
  %5764 = vset.pattern.permute.xlu0 0
  %5765 = vperm.xlu0 %5764, %v3923
  %v5766 = vpop.permute.xlu0 %5765
  %5769 = vset.pattern.permute.xlu0 0
  %5770 = vperm.xlu0 %5769, %v3924
  %v5771 = vpop.permute.xlu0 %5770
  %5774 = vset.pattern.permute.xlu0 0
  %5775 = vperm.xlu0 %5774, %v3925
  %v5776 = vpop.permute.xlu0 %5775
  %5779 = vset.pattern.permute.xlu0 0
  %5780 = vperm.xlu0 %5779, %v3926
  %v5781 = vpop.permute.xlu0 %5780
  %5784 = vset.pattern.permute.xlu0 0
  %5785 = vperm.xlu0 %5784, %v3927
  %v5786 = vpop.permute.xlu0 %5785
  %5789 = vset.pattern.permute.xlu0 0
  %5790 = vperm.xlu0 %5789, %v3928
  %v5791 = vpop.permute.xlu0 %5790
  %5794 = vset.pattern.permute.xlu0 0
  %5795 = vperm.xlu0 %5794, %v3929
  %v5796 = vpop.permute.xlu0 %5795
  %5799 = vset.pattern.permute.xlu0 0
  %5800 = vperm.xlu0 %5799, %v3930
  %v5801 = vpop.permute.xlu0 %5800
  %5804 = vset.pattern.permute.xlu0 0
  %5805 = vperm.xlu0 %5804, %v3931
  %v5806 = vpop.permute.xlu0 %5805
  %5809 = vset.pattern.permute.xlu0 0
  %5810 = vperm.xlu0 %5809, %v3932
  %v5811 = vpop.permute.xlu0 %5810
  %5814 = vset.pattern.permute.xlu0 0
  %5815 = vperm.xlu0 %5814, %v3933
  %v5816 = vpop.permute.xlu0 %5815
  %5819 = vset.pattern.permute.xlu0 0
  %5820 = vperm.xlu0 %5819, %v3934
  %v5821 = vpop.permute.xlu0 %5820
  %5824 = vset.pattern.permute.xlu0 0
  %5825 = vperm.xlu0 %5824, %v3935
  %v5826 = vpop.permute.xlu0 %5825
  %5829 = vset.pattern.permute.xlu0 0
  %5830 = vperm.xlu0 %5829, %v3936
  %v5831 = vpop.permute.xlu0 %5830
  %5834 = vset.pattern.permute.xlu0 0
  %5835 = vperm.xlu0 %5834, %v3937
  %v5836 = vpop.permute.xlu0 %5835
  %5839 = vset.pattern.permute.xlu0 0
  %5840 = vperm.xlu0 %5839, %v3938
  %v5841 = vpop.permute.xlu0 %5840
  %5844 = vset.pattern.permute.xlu0 0
  %5845 = vperm.xlu0 %5844, %v3939
  %v5846 = vpop.permute.xlu0 %5845
  %5849 = vset.pattern.permute.xlu0 0
  %5850 = vperm.xlu0 %5849, %v3940
  %v5851 = vpop.permute.xlu0 %5850
  %5854 = vset.pattern.permute.xlu0 0
  %5855 = vperm.xlu0 %5854, %v3941
  %v5856 = vpop.permute.xlu0 %5855
  %5859 = vset.pattern.permute.xlu0 0
  %5860 = vperm.xlu0 %5859, %v3942
  %v5861 = vpop.permute.xlu0 %5860
  %5864 = vset.pattern.permute.xlu0 0
  %5865 = vperm.xlu0 %5864, %v3943
  %v5866 = vpop.permute.xlu0 %5865
  %5869 = vset.pattern.permute.xlu0 0
  %5870 = vperm.xlu0 %5869, %v3944
  %v5871 = vpop.permute.xlu0 %5870
  %5874 = vset.pattern.permute.xlu0 0
  %5875 = vperm.xlu0 %5874, %v3945
  %v5876 = vpop.permute.xlu0 %5875
  %5879 = vset.pattern.permute.xlu0 0
  %5880 = vperm.xlu0 %5879, %v3946
  %v5881 = vpop.permute.xlu0 %5880
  %5884 = vset.pattern.permute.xlu0 0
  %5885 = vperm.xlu0 %5884, %v3947
  %v5886 = vpop.permute.xlu0 %5885
  %5889 = vset.pattern.permute.xlu0 0
  %5890 = vperm.xlu0 %5889, %v3948
  %v5891 = vpop.permute.xlu0 %5890
  %5894 = vset.pattern.permute.xlu0 0
  %5895 = vperm.xlu0 %5894, %v3949
  %v5896 = vpop.permute.xlu0 %5895
  %5899 = vset.pattern.permute.xlu0 0
  %5900 = vperm.xlu0 %5899, %v3950
  %v5901 = vpop.permute.xlu0 %5900
  %5904 = vset.pattern.permute.xlu0 0
  %5905 = vperm.xlu0 %5904, %v3951
  %v5906 = vpop.permute.xlu0 %5905
  %5909 = vset.pattern.permute.xlu0 0
  %5910 = vperm.xlu0 %5909, %v3952
  %v5911 = vpop.permute.xlu0 %5910
  %5914 = vset.pattern.permute.xlu0 0
  %5915 = vperm.xlu0 %5914, %v3953
  %v5916 = vpop.permute.xlu0 %5915
  %5919 = vset.pattern.permute.xlu0 0
  %5920 = vperm.xlu0 %5919, %v3954
  %v5921 = vpop.permute.xlu0 %5920
  %v5923 = vadd.f32 %v4939, %v5106
  %v5924 = vadd.f32 %v4940, %v5111
  %v5925 = vadd.f32 %v4941, %v5116
  %v5926 = vadd.f32 %v4942, %v5121
  %v5927 = vadd.f32 %v4943, %v5126
  %v5928 = vadd.f32 %v4944, %v5131
  %v5929 = vadd.f32 %v4945, %v5136
  %v5930 = vadd.f32 %v4946, %v5141
  %v5931 = vadd.f32 %v4947, %v5146
  %v5932 = vadd.f32 %v4948, %v5151
  %v5933 = vadd.f32 %v4949, %v5156
  %v5934 = vadd.f32 %v4950, %v5161
  %v5935 = vadd.f32 %v4951, %v5166
  %v5936 = vadd.f32 %v4952, %v5171
  %v5937 = vadd.f32 %v4953, %v5176
  %v5938 = vadd.f32 %v4954, %v5181
  %v5939 = vadd.f32 %v4955, %v5186
  %v5940 = vadd.f32 %v4956, %v5191
  %v5941 = vadd.f32 %v4957, %v5196
  %v5942 = vadd.f32 %v4958, %v5201
  %v5943 = vadd.f32 %v4959, %v5206
  %v5944 = vadd.f32 %v4960, %v5211
  %v5945 = vadd.f32 %v4961, %v5216
  %v5946 = vadd.f32 %v4962, %v5221
  %v5947 = vadd.f32 %v4963, %v5226
  %v5948 = vadd.f32 %v4964, %v5231
  %v5949 = vadd.f32 %v4965, %v5236
  %v5950 = vadd.f32 %v4966, %v5241
  %v5951 = vadd.f32 %v4967, %v5246
  %v5952 = vadd.f32 %v4968, %v5251
  %v5953 = vadd.f32 %v4969, %v5256
  %v5954 = vadd.f32 %v4970, %v5261
  %v5955 = vadd.f32 %v4971, %v5266
  %v5956 = vadd.f32 %v4972, %v5271
  %v5957 = vadd.f32 %v4973, %v5276
  %v5958 = vadd.f32 %v4974, %v5281
  %v5959 = vadd.f32 %v4975, %v5286
  %v5960 = vadd.f32 %v4976, %v5291
  %v5961 = vadd.f32 %v4977, %v5296
  %v5962 = vadd.f32 %v4978, %v5301
  %v5963 = vadd.f32 %v4979, %v5306
  %v5964 = vadd.f32 %v4980, %v5311
  %v5965 = vadd.f32 %v4981, %v5316
  %v5966 = vadd.f32 %v4982, %v5321
  %v5967 = vadd.f32 %v4983, %v5326
  %v5968 = vadd.f32 %v4984, %v5331
  %v5969 = vadd.f32 %v4985, %v5336
  %v5970 = vadd.f32 %v4986, %v5341
  %v5971 = vadd.f32 %v4987, %v5346
  %v5972 = vadd.f32 %v4988, %v5351
  %v5973 = vadd.f32 %v4989, %v5356
  %v5974 = vadd.f32 %v4990, %v5361
  %v5975 = vadd.f32 %v4991, %v5366
  %v5976 = vadd.f32 %v4992, %v5371
  %v5977 = vadd.f32 %v4993, %v5376
  %v5978 = vadd.f32 %v4994, %v5381
  %v5979 = vadd.f32 %v4995, %v5386
  %v5980 = vadd.f32 %v4996, %v5391
  %v5981 = vadd.f32 %v4997, %v5396
  %v5982 = vadd.f32 %v4998, %v5401
  %v5983 = vadd.f32 %v4999, %v5406
  %v5984 = vadd.f32 %v5000, %v5411
  %v5985 = vadd.f32 %v5001, %v5416
  %v5986 = vadd.f32 %v5002, %v5421
  %v5987 = vadd.f32 %v5003, %v5426
  %v5988 = vadd.f32 %v5004, %v5431
  %v5989 = vadd.f32 %v5005, %v5436
  %v5990 = vadd.f32 %v5006, %v5441
  %v5991 = vadd.f32 %v5007, %v5446
  %v5992 = vadd.f32 %v5008, %v5451
  %v5993 = vadd.f32 %v5009, %v5456
  %v5994 = vadd.f32 %v5010, %v5461
  %v5995 = vadd.f32 %v5011, %v5466
  %v5996 = vadd.f32 %v5012, %v5471
  %v5997 = vadd.f32 %v5013, %v5476
  %v5998 = vadd.f32 %v5014, %v5481
  %v5999 = vadd.f32 %v5015, %v5486
  %v6000 = vadd.f32 %v5016, %v5491
  %v6001 = vadd.f32 %v5017, %v5496
  %v6002 = vadd.f32 %v5018, %v5501
  %v6003 = vadd.f32 %v5019, %v5506
  %v6004 = vadd.f32 %v5020, %v5511
  %v6005 = vadd.f32 %v5021, %v5516
  %v6006 = vadd.f32 %v5022, %v5521
  %v6007 = vadd.f32 %v5023, %v5526
  %v6008 = vadd.f32 %v5024, %v5531
  %v6009 = vadd.f32 %v5025, %v5536
  %v6010 = vadd.f32 %v5026, %v5541
  %v6011 = vadd.f32 %v5027, %v5546
  %v6012 = vadd.f32 %v5028, %v5551
  %v6013 = vadd.f32 %v5029, %v5556
  %v6014 = vadd.f32 %v5030, %v5561
  %v6015 = vadd.f32 %v5031, %v5566
  %v6016 = vadd.f32 %v5032, %v5571
  %v6017 = vadd.f32 %v5033, %v5576
  %v6018 = vadd.f32 %v5034, %v5581
  %v6019 = vadd.f32 %v5035, %v5586
  %v6020 = vadd.f32 %v5036, %v5591
  %v6021 = vadd.f32 %v5037, %v5596
  %v6022 = vadd.f32 %v5038, %v5601
  %v6023 = vadd.f32 %v5039, %v5606
  %v6024 = vadd.f32 %v5040, %v5611
  %v6025 = vadd.f32 %v5041, %v5616
  %v6026 = vadd.f32 %v5042, %v5621
  %v6027 = vadd.f32 %v5043, %v5626
  %v6028 = vadd.f32 %v5044, %v5631
  %v6029 = vadd.f32 %v5045, %v5636
  %v6030 = vadd.f32 %v5046, %v5641
  %v6031 = vadd.f32 %v5047, %v5646
  %v6032 = vadd.f32 %v5048, %v5651
  %v6033 = vadd.f32 %v5049, %v5656
  %v6034 = vadd.f32 %v5050, %v5661
  %v6035 = vadd.f32 %v5051, %v5666
  %v6036 = vadd.f32 %v5052, %v5671
  %v6037 = vadd.f32 %v5053, %v5676
  %v6038 = vadd.f32 %v5054, %v5681
  %v6039 = vadd.f32 %v5055, %v5686
  %v6040 = vadd.f32 %v5056, %v5691
  %v6041 = vadd.f32 %v5057, %v5696
  %v6042 = vadd.f32 %v5058, %v5701
  %v6043 = vadd.f32 %v5059, %v5706
  %v6044 = vadd.f32 %v5060, %v5711
  %v6045 = vadd.f32 %v5061, %v5716
  %v6046 = vadd.f32 %v5062, %v5721
  %v6047 = vadd.f32 %v5063, %v5726
  %v6048 = vadd.f32 %v5064, %v5731
  %v6049 = vadd.f32 %v5065, %v5736
  %v6050 = vadd.f32 %v5066, %v5741
  %v6051 = vadd.f32 %v5067, %v5746
  %v6052 = vadd.f32 %v5068, %v5751
  %v6053 = vadd.f32 %v5069, %v5756
  %v6054 = vadd.f32 %v5070, %v5761
  %v6055 = vadd.f32 %v5071, %v5766
  %v6056 = vadd.f32 %v5072, %v5771
  %v6057 = vadd.f32 %v5073, %v5776
  %v6058 = vadd.f32 %v5074, %v5781
  %v6059 = vadd.f32 %v5075, %v5786
  %v6060 = vadd.f32 %v5076, %v5791
  %v6061 = vadd.f32 %v5077, %v5796
  %v6062 = vadd.f32 %v5078, %v5801
  %v6063 = vadd.f32 %v5079, %v5806
  %v6064 = vadd.f32 %v5080, %v5811
  %v6065 = vadd.f32 %v5081, %v5816
  %v6066 = vadd.f32 %v5082, %v5821
  %v6067 = vadd.f32 %v5083, %v5826
  %v6068 = vadd.f32 %v5084, %v5831
  %v6069 = vadd.f32 %v5085, %v5836
  %v6070 = vadd.f32 %v5086, %v5841
  %v6071 = vadd.f32 %v5087, %v5846
  %v6072 = vadd.f32 %v5088, %v5851
  %v6073 = vadd.f32 %v5089, %v5856
  %v6074 = vadd.f32 %v5090, %v5861
  %v6075 = vadd.f32 %v5091, %v5866
  %v6076 = vadd.f32 %v5092, %v5871
  %v6077 = vadd.f32 %v5093, %v5876
  %v6078 = vadd.f32 %v5094, %v5881
  %v6079 = vadd.f32 %v5095, %v5886
  %v6080 = vadd.f32 %v5096, %v5891
  %v6081 = vadd.f32 %v5097, %v5896
  %v6082 = vadd.f32 %v5098, %v5901
  %v6083 = vadd.f32 %v5099, %v5906
  %v6084 = vadd.f32 %v5100, %v5911
  %v6085 = vadd.f32 %v5101, %v5916
  %v6086 = vadd.f32 %v5102, %v5921
  %v6087 = vmax.f32 %v5923, 0.0
  %v6088 = vmax.f32 %v5924, 0.0
  %v6089 = vmax.f32 %v5925, 0.0
  %v6090 = vmax.f32 %v5926, 0.0
  %v6091 = vmax.f32 %v5927, 0.0
  %v6092 = vmax.f32 %v5928, 0.0
  %v6093 = vmax.f32 %v5929, 0.0
  %v6094 = vmax.f32 %v5930, 0.0
  %v6095 = vmax.f32 %v5931, 0.0
  %v6096 = vmax.f32 %v5932, 0.0
  %v6097 = vmax.f32 %v5933, 0.0
  %v6098 = vmax.f32 %v5934, 0.0
  %v6099 = vmax.f32 %v5935, 0.0
  %v6100 = vmax.f32 %v5936, 0.0
  %v6101 = vmax.f32 %v5937, 0.0
  %v6102 = vmax.f32 %v5938, 0.0
  %v6103 = vmax.f32 %v5939, 0.0
  %v6104 = vmax.f32 %v5940, 0.0
  %v6105 = vmax.f32 %v5941, 0.0
  %v6106 = vmax.f32 %v5942, 0.0
  %v6107 = vmax.f32 %v5943, 0.0
  %v6108 = vmax.f32 %v5944, 0.0
  %v6109 = vmax.f32 %v5945, 0.0
  %v6110 = vmax.f32 %v5946, 0.0
  %v6111 = vmax.f32 %v5947, 0.0
  %v6112 = vmax.f32 %v5948, 0.0
  %v6113 = vmax.f32 %v5949, 0.0
  %v6114 = vmax.f32 %v5950, 0.0
  %v6115 = vmax.f32 %v5951, 0.0
  %v6116 = vmax.f32 %v5952, 0.0
  %v6117 = vmax.f32 %v5953, 0.0
  %v6118 = vmax.f32 %v5954, 0.0
  %v6119 = vmax.f32 %v5955, 0.0
  %v6120 = vmax.f32 %v5956, 0.0
  %v6121 = vmax.f32 %v5957, 0.0
  %v6122 = vmax.f32 %v5958, 0.0
  %v6123 = vmax.f32 %v5959, 0.0
  %v6124 = vmax.f32 %v5960, 0.0
  %v6125 = vmax.f32 %v5961, 0.0
  %v6126 = vmax.f32 %v5962, 0.0
  %v6127 = vmax.f32 %v5963, 0.0
  %v6128 = vmax.f32 %v5964, 0.0
  %v6129 = vmax.f32 %v5965, 0.0
  %v6130 = vmax.f32 %v5966, 0.0
  %v6131 = vmax.f32 %v5967, 0.0
  %v6132 = vmax.f32 %v5968, 0.0
  %v6133 = vmax.f32 %v5969, 0.0
  %v6134 = vmax.f32 %v5970, 0.0
  %v6135 = vmax.f32 %v5971, 0.0
  %v6136 = vmax.f32 %v5972, 0.0
  %v6137 = vmax.f32 %v5973, 0.0
  %v6138 = vmax.f32 %v5974, 0.0
  %v6139 = vmax.f32 %v5975, 0.0
  %v6140 = vmax.f32 %v5976, 0.0
  %v6141 = vmax.f32 %v5977, 0.0
  %v6142 = vmax.f32 %v5978, 0.0
  %v6143 = vmax.f32 %v5979, 0.0
  %v6144 = vmax.f32 %v5980, 0.0
  %v6145 = vmax.f32 %v5981, 0.0
  %v6146 = vmax.f32 %v5982, 0.0
  %v6147 = vmax.f32 %v5983, 0.0
  %v6148 = vmax.f32 %v5984, 0.0
  %v6149 = vmax.f32 %v5985, 0.0
  %v6150 = vmax.f32 %v5986, 0.0
  %v6151 = vmax.f32 %v5987, 0.0
  %v6152 = vmax.f32 %v5988, 0.0
  %v6153 = vmax.f32 %v5989, 0.0
  %v6154 = vmax.f32 %v5990, 0.0
  %v6155 = vmax.f32 %v5991, 0.0
  %v6156 = vmax.f32 %v5992, 0.0
  %v6157 = vmax.f32 %v5993, 0.0
  %v6158 = vmax.f32 %v5994, 0.0
  %v6159 = vmax.f32 %v5995, 0.0
  %v6160 = vmax.f32 %v5996, 0.0
  %v6161 = vmax.f32 %v5997, 0.0
  %v6162 = vmax.f32 %v5998, 0.0
  %v6163 = vmax.f32 %v5999, 0.0
  %v6164 = vmax.f32 %v6000, 0.0
  %v6165 = vmax.f32 %v6001, 0.0
  %v6166 = vmax.f32 %v6002, 0.0
  %v6167 = vmax.f32 %v6003, 0.0
  %v6168 = vmax.f32 %v6004, 0.0
  %v6169 = vmax.f32 %v6005, 0.0
  %v6170 = vmax.f32 %v6006, 0.0
  %v6171 = vmax.f32 %v6007, 0.0
  %v6172 = vmax.f32 %v6008, 0.0
  %v6173 = vmax.f32 %v6009, 0.0
  %v6174 = vmax.f32 %v6010, 0.0
  %v6175 = vmax.f32 %v6011, 0.0
  %v6176 = vmax.f32 %v6012, 0.0
  %v6177 = vmax.f32 %v6013, 0.0
  %v6178 = vmax.f32 %v6014, 0.0
  %v6179 = vmax.f32 %v6015, 0.0
  %v6180 = vmax.f32 %v6016, 0.0
  %v6181 = vmax.f32 %v6017, 0.0
  %v6182 = vmax.f32 %v6018, 0.0
  %v6183 = vmax.f32 %v6019, 0.0
  %v6184 = vmax.f32 %v6020, 0.0
  %v6185 = vmax.f32 %v6021, 0.0
  %v6186 = vmax.f32 %v6022, 0.0
  %v6187 = vmax.f32 %v6023, 0.0
  %v6188 = vmax.f32 %v6024, 0.0
  %v6189 = vmax.f32 %v6025, 0.0
  %v6190 = vmax.f32 %v6026, 0.0
  %v6191 = vmax.f32 %v6027, 0.0
  %v6192 = vmax.f32 %v6028, 0.0
  %v6193 = vmax.f32 %v6029, 0.0
  %v6194 = vmax.f32 %v6030, 0.0
  %v6195 = vmax.f32 %v6031, 0.0
  %v6196 = vmax.f32 %v6032, 0.0
  %v6197 = vmax.f32 %v6033, 0.0
  %v6198 = vmax.f32 %v6034, 0.0
  %v6199 = vmax.f32 %v6035, 0.0
  %v6200 = vmax.f32 %v6036, 0.0
  %v6201 = vmax.f32 %v6037, 0.0
  %v6202 = vmax.f32 %v6038, 0.0
  %v6203 = vmax.f32 %v6039, 0.0
  %v6204 = vmax.f32 %v6040, 0.0
  %v6205 = vmax.f32 %v6041, 0.0
  %v6206 = vmax.f32 %v6042, 0.0
  %v6207 = vmax.f32 %v6043, 0.0
  %v6208 = vmax.f32 %v6044, 0.0
  %v6209 = vmax.f32 %v6045, 0.0
  %v6210 = vmax.f32 %v6046, 0.0
  %v6211 = vmax.f32 %v6047, 0.0
  %v6212 = vmax.f32 %v6048, 0.0
  %v6213 = vmax.f32 %v6049, 0.0
  %v6214 = vmax.f32 %v6050, 0.0
  %v6215 = vmax.f32 %v6051, 0.0
  %v6216 = vmax.f32 %v6052, 0.0
  %v6217 = vmax.f32 %v6053, 0.0
  %v6218 = vmax.f32 %v6054, 0.0
  %v6219 = vmax.f32 %v6055, 0.0
  %v6220 = vmax.f32 %v6056, 0.0
  %v6221 = vmax.f32 %v6057, 0.0
  %v6222 = vmax.f32 %v6058, 0.0
  %v6223 = vmax.f32 %v6059, 0.0
  %v6224 = vmax.f32 %v6060, 0.0
  %v6225 = vmax.f32 %v6061, 0.0
  %v6226 = vmax.f32 %v6062, 0.0
  %v6227 = vmax.f32 %v6063, 0.0
  %v6228 = vmax.f32 %v6064, 0.0
  %v6229 = vmax.f32 %v6065, 0.0
  %v6230 = vmax.f32 %v6066, 0.0
  %v6231 = vmax.f32 %v6067, 0.0
  %v6232 = vmax.f32 %v6068, 0.0
  %v6233 = vmax.f32 %v6069, 0.0
  %v6234 = vmax.f32 %v6070, 0.0
  %v6235 = vmax.f32 %v6071, 0.0
  %v6236 = vmax.f32 %v6072, 0.0
  %v6237 = vmax.f32 %v6073, 0.0
  %v6238 = vmax.f32 %v6074, 0.0
  %v6239 = vmax.f32 %v6075, 0.0
  %v6240 = vmax.f32 %v6076, 0.0
  %v6241 = vmax.f32 %v6077, 0.0
  %v6242 = vmax.f32 %v6078, 0.0
  %v6243 = vmax.f32 %v6079, 0.0
  %v6244 = vmax.f32 %v6080, 0.0
  %v6245 = vmax.f32 %v6081, 0.0
  %v6246 = vmax.f32 %v6082, 0.0
  %v6247 = vmax.f32 %v6083, 0.0
  %v6248 = vmax.f32 %v6084, 0.0
  %v6249 = vmax.f32 %v6085, 0.0
  %v6250 = vmax.f32 %v6086, 0.0
  %v6251 = vld [vmem:[%s3] sm:$0xff]
  %v6252 = vld [vmem:[%s3 + $0x8] sm:$0xff]
  %v6253 = vld [vmem:[%s3 + $0x10] sm:$0xff]
  %v6254 = vld [vmem:[%s3 + $0x18] sm:$0xff]
  %v6255 = vld [vmem:[%s3 + $0x20] sm:$0xff]
  %v6256 = vld [vmem:[%s3 + $0x28] sm:$0xff]
  %v6257 = vld [vmem:[%s3 + $0x30] sm:$0xff]
  %v6258 = vld [vmem:[%s3 + $0x38] sm:$0xff]
  %v6259 = vld [vmem:[%s3 + $0x40] sm:$0xff]
  %v6260 = vld [vmem:[%s3 + $0x48] sm:$0xff]
  %v6261 = vld [vmem:[%s3 + $0x50] sm:$0xff]
  %v6262 = vld [vmem:[%s3 + $0x58] sm:$0xff]
  %v6263 = vld [vmem:[%s3 + $0x60] sm:$0xff]
  %v6264 = vld [vmem:[%s3 + $0x68] sm:$0xff]
  %v6265 = vld [vmem:[%s3 + $0x70] sm:$0xff]
  %v6266 = vld [vmem:[%s3 + $0x78] sm:$0xff]
  %v6267 = vld [vmem:[%s3 + $0x80] sm:$0xff]
  %v6268 = vld [vmem:[%s3 + $0x88] sm:$0xff]
  %v6269 = vld [vmem:[%s3 + $0x90] sm:$0xff]
  %v6270 = vld [vmem:[%s3 + $0x98] sm:$0xff]
  %v6271 = vld [vmem:[%s3 + $0xa0] sm:$0xff]
  %v6272 = vld [vmem:[%s3 + $0xa8] sm:$0xff]
  %v6273 = vld [vmem:[%s3 + $0xb0] sm:$0xff]
  %v6274 = vld [vmem:[%s3 + $0xb8] sm:$0xff]
  %v6275 = vld [vmem:[%s3 + $0xc0] sm:$0xff]
  %v6276 = vld [vmem:[%s3 + $0xc8] sm:$0xff]
  %v6277 = vld [vmem:[%s3 + $0xd0] sm:$0xff]
  %v6278 = vld [vmem:[%s3 + $0xd8] sm:$0xff]
  %v6279 = vld [vmem:[%s3 + $0xe0] sm:$0xff]
  %v6280 = vld [vmem:[%s3 + $0xe8] sm:$0xff]
  %v6281 = vld [vmem:[%s3 + $0xf0] sm:$0xff]
  %v6282 = vld [vmem:[%s3 + $0xf8] sm:$0xff]
  %v6283 = vld [vmem:[%s3 + $0x100] sm:$0xff]
  %v6284 = vld [vmem:[%s3 + $0x108] sm:$0xff]
  %v6285 = vld [vmem:[%s3 + $0x110] sm:$0xff]
  %v6286 = vld [vmem:[%s3 + $0x118] sm:$0xff]
  %v6287 = vld [vmem:[%s3 + $0x120] sm:$0xff]
  %v6288 = vld [vmem:[%s3 + $0x128] sm:$0xff]
  %v6289 = vld [vmem:[%s3 + $0x130] sm:$0xff]
  %v6290 = vld [vmem:[%s3 + $0x138] sm:$0xff]
  %v6291 = vld [vmem:[%s3 + $0x140] sm:$0xff]
  %v6292 = vld [vmem:[%s3 + $0x148] sm:$0xff]
  %v6293 = vld [vmem:[%s3 + $0x150] sm:$0xff]
  %v6294 = vld [vmem:[%s3 + $0x158] sm:$0xff]
  %v6295 = vld [vmem:[%s3 + $0x160] sm:$0xff]
  %v6296 = vld [vmem:[%s3 + $0x168] sm:$0xff]
  %v6297 = vld [vmem:[%s3 + $0x170] sm:$0xff]
  %v6298 = vld [vmem:[%s3 + $0x178] sm:$0xff]
  %v6299 = vld [vmem:[%s3 + $0x180] sm:$0xff]
  %v6300 = vld [vmem:[%s3 + $0x188] sm:$0xff]
  %v6301 = vld [vmem:[%s3 + $0x190] sm:$0xff]
  %v6302 = vld [vmem:[%s3 + $0x198] sm:$0xff]
  %v6303 = vld [vmem:[%s3 + $0x1a0] sm:$0xff]
  %v6304 = vld [vmem:[%s3 + $0x1a8] sm:$0xff]
  %v6305 = vld [vmem:[%s3 + $0x1b0] sm:$0xff]
  %v6306 = vld [vmem:[%s3 + $0x1b8] sm:$0xff]
  %v6307 = vld [vmem:[%s3 + $0x1c0] sm:$0xff]
  %v6308 = vld [vmem:[%s3 + $0x1c8] sm:$0xff]
  %v6309 = vld [vmem:[%s3 + $0x1d0] sm:$0xff]
  %v6310 = vld [vmem:[%s3 + $0x1d8] sm:$0xff]
  %v6311 = vld [vmem:[%s3 + $0x1e0] sm:$0xff]
  %v6312 = vld [vmem:[%s3 + $0x1e8] sm:$0xff]
  %v6313 = vld [vmem:[%s3 + $0x1f0] sm:$0xff]
  %v6314 = vld [vmem:[%s3 + $0x1f8] sm:$0xff]
  %v6315 = vld [vmem:[%s3 + $0x200] sm:$0xff]
  %v6316 = vld [vmem:[%s3 + $0x208] sm:$0xff]
  %v6317 = vld [vmem:[%s3 + $0x210] sm:$0xff]
  %v6318 = vld [vmem:[%s3 + $0x218] sm:$0xff]
  %v6319 = vld [vmem:[%s3 + $0x220] sm:$0xff]
  %v6320 = vld [vmem:[%s3 + $0x228] sm:$0xff]
  %v6321 = vld [vmem:[%s3 + $0x230] sm:$0xff]
  %v6322 = vld [vmem:[%s3 + $0x238] sm:$0xff]
  %v6323 = vld [vmem:[%s3 + $0x240] sm:$0xff]
  %v6324 = vld [vmem:[%s3 + $0x248] sm:$0xff]
  %v6325 = vld [vmem:[%s3 + $0x250] sm:$0xff]
  %v6326 = vld [vmem:[%s3 + $0x258] sm:$0xff]
  %v6327 = vld [vmem:[%s3 + $0x260] sm:$0xff]
  %v6328 = vld [vmem:[%s3 + $0x268] sm:$0xff]
  %v6329 = vld [vmem:[%s3 + $0x270] sm:$0xff]
  %v6330 = vld [vmem:[%s3 + $0x278] sm:$0xff]
  %v6331 = vld [vmem:[%s3 + $0x280] sm:$0xff]
  %v6332 = vld [vmem:[%s3 + $0x288] sm:$0xff]
  %v6333 = vld [vmem:[%s3 + $0x290] sm:$0xff]
  %v6334 = vld [vmem:[%s3 + $0x298] sm:$0xff]
  %v6335 = vld [vmem:[%s3 + $0x2a0] sm:$0xff]
  %v6336 = vld [vmem:[%s3 + $0x2a8] sm:$0xff]
  %v6337 = vld [vmem:[%s3 + $0x2b0] sm:$0xff]
  %v6338 = vld [vmem:[%s3 + $0x2b8] sm:$0xff]
  %v6339 = vld [vmem:[%s3 + $0x2c0] sm:$0xff]
  %v6340 = vld [vmem:[%s3 + $0x2c8] sm:$0xff]
  %v6341 = vld [vmem:[%s3 + $0x2d0] sm:$0xff]
  %v6342 = vld [vmem:[%s3 + $0x2d8] sm:$0xff]
  %v6343 = vld [vmem:[%s3 + $0x2e0] sm:$0xff]
  %v6344 = vld [vmem:[%s3 + $0x2e8] sm:$0xff]
  %v6345 = vld [vmem:[%s3 + $0x2f0] sm:$0xff]
  %v6346 = vld [vmem:[%s3 + $0x2f8] sm:$0xff]
  %v6347 = vld [vmem:[%s3 + $0x300] sm:$0xff]
  %v6348 = vld [vmem:[%s3 + $0x308] sm:$0xff]
  %v6349 = vld [vmem:[%s3 + $0x310] sm:$0xff]
  %v6350 = vld [vmem:[%s3 + $0x318] sm:$0xff]
  %v6351 = vld [vmem:[%s3 + $0x320] sm:$0xff]
  %v6352 = vld [vmem:[%s3 + $0x328] sm:$0xff]
  %v6353 = vld [vmem:[%s3 + $0x330] sm:$0xff]
  %v6354 = vld [vmem:[%s3 + $0x338] sm:$0xff]
  %v6355 = vld [vmem:[%s3 + $0x340] sm:$0xff]
  %v6356 = vld [vmem:[%s3 + $0x348] sm:$0xff]
  %v6357 = vld [vmem:[%s3 + $0x350] sm:$0xff]
  %v6358 = vld [vmem:[%s3 + $0x358] sm:$0xff]
  %v6359 = vld [vmem:[%s3 + $0x360] sm:$0xff]
  %v6360 = vld [vmem:[%s3 + $0x368] sm:$0xff]
  %v6361 = vld [vmem:[%s3 + $0x370] sm:$0xff]
  %v6362 = vld [vmem:[%s3 + $0x378] sm:$0xff]
  %v6363 = vld [vmem:[%s3 + $0x380] sm:$0xff]
  %v6364 = vld [vmem:[%s3 + $0x388] sm:$0xff]
  %v6365 = vld [vmem:[%s3 + $0x390] sm:$0xff]
  %v6366 = vld [vmem:[%s3 + $0x398] sm:$0xff]
  %v6367 = vld [vmem:[%s3 + $0x3a0] sm:$0xff]
  %v6368 = vld [vmem:[%s3 + $0x3a8] sm:$0xff]
  %v6369 = vld [vmem:[%s3 + $0x3b0] sm:$0xff]
  %v6370 = vld [vmem:[%s3 + $0x3b8] sm:$0xff]
  %v6371 = vld [vmem:[%s3 + $0x3c0] sm:$0xff]
  %v6372 = vld [vmem:[%s3 + $0x3c8] sm:$0xff]
  %v6373 = vld [vmem:[%s3 + $0x3d0] sm:$0xff]
  %v6374 = vld [vmem:[%s3 + $0x3d8] sm:$0xff]
  %v6375 = vld [vmem:[%s3 + $0x3e0] sm:$0xff]
  %v6376 = vld [vmem:[%s3 + $0x3e8] sm:$0xff]
  %v6377 = vld [vmem:[%s3 + $0x3f0] sm:$0xff]
  %v6378 = vld [vmem:[%s3 + $0x3f8] sm:$0xff]
  %v6379 = vld [vmem:[%s3 + $0x400] sm:$0xff]
  %v6380 = vld [vmem:[%s3 + $0x408] sm:$0xff]
  %v6381 = vld [vmem:[%s3 + $0x410] sm:$0xff]
  %v6382 = vld [vmem:[%s3 + $0x418] sm:$0xff]
  %v6383 = vld [vmem:[%s3 + $0x420] sm:$0xff]
  %v6384 = vld [vmem:[%s3 + $0x428] sm:$0xff]
  %v6385 = vld [vmem:[%s3 + $0x430] sm:$0xff]
  %v6386 = vld [vmem:[%s3 + $0x438] sm:$0xff]
  %v6387 = vld [vmem:[%s3 + $0x440] sm:$0xff]
  %v6388 = vld [vmem:[%s3 + $0x448] sm:$0xff]
  %v6389 = vld [vmem:[%s3 + $0x450] sm:$0xff]
  %v6390 = vld [vmem:[%s3 + $0x458] sm:$0xff]
  %v6391 = vld [vmem:[%s3 + $0x460] sm:$0xff]
  %v6392 = vld [vmem:[%s3 + $0x468] sm:$0xff]
  %v6393 = vld [vmem:[%s3 + $0x470] sm:$0xff]
  %v6394 = vld [vmem:[%s3 + $0x478] sm:$0xff]
  %v6395 = vld [vmem:[%s3 + $0x480] sm:$0xff]
  %v6396 = vld [vmem:[%s3 + $0x488] sm:$0xff]
  %v6397 = vld [vmem:[%s3 + $0x490] sm:$0xff]
  %v6398 = vld [vmem:[%s3 + $0x498] sm:$0xff]
  %v6399 = vld [vmem:[%s3 + $0x4a0] sm:$0xff]
  %v6400 = vld [vmem:[%s3 + $0x4a8] sm:$0xff]
  %v6401 = vld [vmem:[%s3 + $0x4b0] sm:$0xff]
  %v6402 = vld [vmem:[%s3 + $0x4b8] sm:$0xff]
  %v6403 = vld [vmem:[%s3 + $0x4c0] sm:$0xff]
  %v6404 = vld [vmem:[%s3 + $0x4c8] sm:$0xff]
  %v6405 = vld [vmem:[%s3 + $0x4d0] sm:$0xff]
  %v6406 = vld [vmem:[%s3 + $0x4d8] sm:$0xff]
  %v6407 = vld [vmem:[%s3 + $0x4e0] sm:$0xff]
  %v6408 = vld [vmem:[%s3 + $0x4e8] sm:$0xff]
  %v6409 = vld [vmem:[%s3 + $0x4f0] sm:$0xff]
  %v6410 = vld [vmem:[%s3 + $0x4f8] sm:$0xff]
  %v6411 = vld [vmem:[%s3 + $0x500] sm:$0xff]
  %v6412 = vld [vmem:[%s3 + $0x508] sm:$0xff]
  %v6413 = vld [vmem:[%s3 + $0x510] sm:$0xff]
  %v6414 = vld [vmem:[%s3 + $0x518] sm:$0xff]
  %v6415 = vld [vmem:[%s3 + $0x520] sm:$0xff]
  %v6416 = vld [vmem:[%s3 + $0x528] sm:$0xff]
  %v6417 = vld [vmem:[%s3 + $0x530] sm:$0xff]
  %v6418 = vld [vmem:[%s3 + $0x538] sm:$0xff]
  %v6419 = vld [vmem:[%s3 + $0x540] sm:$0xff]
  %v6420 = vld [vmem:[%s3 + $0x548] sm:$0xff]
  %v6421 = vld [vmem:[%s3 + $0x550] sm:$0xff]
  %v6422 = vld [vmem:[%s3 + $0x558] sm:$0xff]
  %v6423 = vld [vmem:[%s3 + $0x560] sm:$0xff]
  %v6424 = vld [vmem:[%s3 + $0x568] sm:$0xff]
  %v6425 = vld [vmem:[%s3 + $0x570] sm:$0xff]
  %v6426 = vld [vmem:[%s3 + $0x578] sm:$0xff]
  %vm6427 = vcmask 261120
  %v6429 = vsel %vm6427, %v6261, 0
  %v6432 = vsel %vm6427, %v6272, 0
  %v6435 = vsel %vm6427, %v6283, 0
  %v6438 = vsel %vm6427, %v6294, 0
  %v6441 = vsel %vm6427, %v6305, 0
  %v6444 = vsel %vm6427, %v6316, 0
  %v6447 = vsel %vm6427, %v6327, 0
  %v6450 = vsel %vm6427, %v6338, 0
  %v6453 = vsel %vm6427, %v6349, 0
  %v6456 = vsel %vm6427, %v6360, 0
  %v6459 = vsel %vm6427, %v6371, 0
  %v6462 = vsel %vm6427, %v6382, 0
  %v6465 = vsel %vm6427, %v6393, 0
  %v6468 = vsel %vm6427, %v6404, 0
  %v6471 = vsel %vm6427, %v6415, 0
  %v6474 = vsel %vm6427, %v6426, 0
  %6476 = vmatprep.subr.mxu0 0.0
  %6477 = vmatpush1.msra.mxu0 %v6087
  %6478 = vmatprep.subr.mxu0 0.0
  %6479 = vmatpush1.msra.mxu0 %v6088
  %6480 = vmatprep.subr.mxu0 0.0
  %6481 = vmatpush1.msra.mxu0 %v6089
  %6482 = vmatprep.subr.mxu0 0.0
  %6483 = vmatpush1.msra.mxu0 %v6090
  %6484 = vmatprep.subr.mxu0 0.0
  %6485 = vmatpush1.msra.mxu0 %v6091
  %6486 = vmatprep.subr.mxu0 0.0
  %6487 = vmatpush1.msra.mxu0 %v6092
  %6488 = vmatprep.subr.mxu0 0.0
  %6489 = vmatpush1.msra.mxu0 %v6093
  %6490 = vmatprep.subr.mxu0 0.0
  %6491 = vmatpush1.msra.mxu0 %v6094
  %6492 = vmatprep.subr.mxu0 0.0
  %6493 = vmatpush1.msra.mxu0 %v6095
  %6494 = vmatprep.subr.mxu0 0.0
  %6495 = vmatpush1.msra.mxu0 %v6096
  %6496 = vmatprep.subr.mxu0 0.0
  %6497 = vmatpush1.msra.mxu0 %v6097
  %6498 = vmatprep.subr.mxu0 0.0
  %6499 = vmatpush1.msra.mxu0 %v6098
  %6500 = vmatprep.subr.mxu0 0.0
  %6501 = vmatpush1.msra.mxu0 %v6099
  %6502 = vmatprep.subr.mxu0 0.0
  %6503 = vmatpush1.msra.mxu0 %v6100
  %6504 = vmatprep.subr.mxu0 0.0
  %6505 = vmatpush1.msra.mxu0 %v6101
  %6506 = vmatprep.subr.mxu0 0.0
  %6507 = vmatpush1.msra.mxu0 %v6102
  %6508 = vmatprep.subr.mxu0 0.0
  %6509 = vmatpush1.msra.mxu0 %v6103
  %6510 = vmatprep.subr.mxu0 0.0
  %6511 = vmatpush1.msra.mxu0 %v6104
  %6512 = vmatprep.subr.mxu0 0.0
  %6513 = vmatpush1.msra.mxu0 %v6105
  %6514 = vmatprep.subr.mxu0 0.0
  %6515 = vmatpush1.msra.mxu0 %v6106
  %6516 = vmatprep.subr.mxu0 0.0
  %6517 = vmatpush1.msra.mxu0 %v6107
  %6518 = vmatprep.subr.mxu0 0.0
  %6519 = vmatpush1.msra.mxu0 %v6108
  %6520 = vmatprep.subr.mxu0 0.0
  %6521 = vmatpush1.msra.mxu0 %v6109
  %6522 = vmatprep.subr.mxu0 0.0
  %6523 = vmatpush1.msra.mxu0 %v6110
  %6524 = vmatprep.subr.mxu0 0.0
  %6525 = vmatpush1.msra.mxu0 %v6111
  %6526 = vmatprep.subr.mxu0 0.0
  %6527 = vmatpush1.msra.mxu0 %v6112
  %6528 = vmatprep.subr.mxu0 0.0
  %6529 = vmatpush1.msra.mxu0 %v6113
  %6530 = vmatprep.subr.mxu0 0.0
  %6531 = vmatpush1.msra.mxu0 %v6114
  %6532 = vmatprep.subr.mxu0 0.0
  %6533 = vmatpush1.msra.mxu0 %v6115
  %6534 = vmatprep.subr.mxu0 0.0
  %6535 = vmatpush1.msra.mxu0 %v6116
  %6536 = vmatprep.subr.mxu0 0.0
  %6537 = vmatpush1.msra.mxu0 %v6117
  %6538 = vmatprep.subr.mxu0 0.0
  %6539 = vmatpush1.msra.mxu0 %v6118
  %6540 = vmatprep.mubr.f32.mxu0 %v6252
  %6541 = vmatmul.mubr.f32.gmra.mrb[0].mxu0 %v6251
  %v6542 = vpop.f32.mrb[0].mxu0
  %v6543 = vadd.f32 0.0, %v6542
  %v6544 = vpop.f32.mrb[0].mxu0
  %6545 = vmatprep.mubr.f32.mxu0 %v6263
  %6546 = vmatmul.mubr.f32.gmra.mrb[0].mxu0 %v6262
  %v6547 = vpop.f32.mrb[0].mxu0
  %v6548 = vadd.f32 0.0, %v6547
  %v6549 = vpop.f32.mrb[0].mxu0
  %6550 = vmatprep.mubr.f32.mxu0 %v6274
  %6551 = vmatmul.mubr.f32.gmra.mrb[0].mxu0 %v6273
  %v6552 = vpop.f32.mrb[0].mxu0
  %v6553 = vadd.f32 0.0, %v6552
  %v6554 = vpop.f32.mrb[0].mxu0
  %6555 = vmatprep.mubr.f32.mxu0 %v6285
  %6556 = vmatmul.mubr.f32.gmra.mrb[0].mxu0 %v6284
  %v6557 = vpop.f32.mrb[0].mxu0
  %v6558 = vadd.f32 0.0, %v6557
  %v6559 = vpop.f32.mrb[0].mxu0
  %6560 = vmatprep.mubr.f32.mxu0 %v6296
  %6561 = vmatmul.mubr.f32.gmra.mrb[0].mxu0 %v6295
  %v6562 = vpop.f32.mrb[0].mxu0
  %v6563 = vadd.f32 0.0, %v6562
  %v6564 = vpop.f32.mrb[0].mxu0
  %6565 = vmatprep.mubr.f32.mxu0 %v6307
  %6566 = vmatmul.mubr.f32.gmra.mrb[0].mxu0 %v6306
  %v6567 = vpop.f32.mrb[0].mxu0
  %v6568 = vadd.f32 0.0, %v6567
  %v6569 = vpop.f32.mrb[0].mxu0
  %6570 = vmatprep.mubr.f32.mxu0 %v6318
  %6571 = vmatmul.mubr.f32.gmra.mrb[0].mxu0 %v6317
  %v6572 = vpop.f32.mrb[0].mxu0
  %v6573 = vadd.f32 0.0, %v6572
  %v6574 = vpop.f32.mrb[0].mxu0
  %6575 = vmatprep.mubr.f32.mxu0 %v6329
  %6576 = vmatmul.mubr.f32.gmra.mrb[0].mxu0 %v6328
  %v6577 = vpop.f32.mrb[0].mxu0
  %v6578 = vadd.f32 0.0, %v6577
  %v6579 = vpop.f32.mrb[0].mxu0
  %6580 = vmatprep.mubr.f32.mxu0 %v6340
  %6581 = vmatmul.mubr.f32.gmra.mrb[0].mxu0 %v6339
  %v6582 = vpop.f32.mrb[0].mxu0
  %v6583 = vadd.f32 0.0, %v6582
  %v6584 = vpop.f32.mrb[0].mxu0
  %6585 = vmatprep.mubr.f32.mxu0 %v6351
  %6586 = vmatmul.mubr.f32.gmra.mrb[0].mxu0 %v6350
  %v6587 = vpop.f32.mrb[0].mxu0
  %v6588 = vadd.f32 0.0, %v6587
  %v6589 = vpop.f32.mrb[0].mxu0
  %6590 = vmatprep.mubr.f32.mxu0 %v6362
  %6591 = vmatmul.mubr.f32.gmra.mrb[0].mxu0 %v6361
  %v6592 = vpop.f32.mrb[0].mxu0
  %v6593 = vadd.f32 0.0, %v6592
  %v6594 = vpop.f32.mrb[0].mxu0
  %6595 = vmatprep.mubr.f32.mxu0 %v6373
  %6596 = vmatmul.mubr.f32.gmra.mrb[0].mxu0 %v6372
  %v6597 = vpop.f32.mrb[0].mxu0
  %v6598 = vadd.f32 0.0, %v6597
  %v6599 = vpop.f32.mrb[0].mxu0
  %6600 = vmatprep.mubr.f32.mxu0 %v6384
  %6601 = vmatmul.mubr.f32.gmra.mrb[0].mxu0 %v6383
  %v6602 = vpop.f32.mrb[0].mxu0
  %v6603 = vadd.f32 0.0, %v6602
  %v6604 = vpop.f32.mrb[0].mxu0
  %6605 = vmatprep.mubr.f32.mxu0 %v6395
  %6606 = vmatmul.mubr.f32.gmra.mrb[0].mxu0 %v6394
  %v6607 = vpop.f32.mrb[0].mxu0
  %v6608 = vadd.f32 0.0, %v6607
  %v6609 = vpop.f32.mrb[0].mxu0
  %6610 = vmatprep.mubr.f32.mxu0 %v6406
  %6611 = vmatmul.mubr.f32.gmra.mrb[0].mxu0 %v6405
  %v6612 = vpop.f32.mrb[0].mxu0
  %v6613 = vadd.f32 0.0, %v6612
  %v6614 = vpop.f32.mrb[0].mxu0
  %6615 = vmatprep.mubr.f32.mxu0 %v6417
  %6616 = vmatmul.mubr.f32.gmra.mrb[0].mxu0 %v6416
  %v6617 = vpop.f32.mrb[0].mxu0
  %v6618 = vadd.f32 0.0, %v6617
  %v6619 = vpop.f32.mrb[0].mxu0
  %6620 = vdwg.mxu0
  %6621 = vmatprep.subr.mxu0 0.0
  %6622 = vmatpush1.msra.mxu0 %v6119
  %6623 = vmatprep.subr.mxu0 0.0
  %6624 = vmatpush1.msra.mxu0 %v6120
  %6625 = vmatprep.subr.mxu0 0.0
  %6626 = vmatpush1.msra.mxu0 %v6121
  %6627 = vmatprep.subr.mxu0 0.0
  %6628 = vmatpush1.msra.mxu0 %v6122
  %6629 = vmatprep.subr.mxu0 0.0
  %6630 = vmatpush1.msra.mxu0 %v6123
  %6631 = vmatprep.subr.mxu0 0.0
  %6632 = vmatpush1.msra.mxu0 %v6124
  %6633 = vmatprep.subr.mxu0 0.0
  %6634 = vmatpush1.msra.mxu0 %v6125
  %6635 = vmatprep.subr.mxu0 0.0
  %6636 = vmatpush1.msra.mxu0 %v6126
  %6637 = vmatprep.subr.mxu0 0.0
  %6638 = vmatpush1.msra.mxu0 %v6127
  %6639 = vmatprep.subr.mxu0 0.0
  %6640 = vmatpush1.msra.mxu0 %v6128
  %6641 = vmatprep.subr.mxu0 0.0
  %6642 = vmatpush1.msra.mxu0 %v6129
  %6643 = vmatprep.subr.mxu0 0.0
  %6644 = vmatpush1.msra.mxu0 %v6130
  %6645 = vmatprep.subr.mxu0 0.0
  %6646 = vmatpush1.msra.mxu0 %v6131
  %6647 = vmatprep.subr.mxu0 0.0
  %6648 = vmatpush1.msra.mxu0 %v6132
  %6649 = vmatprep.subr.mxu0 0.0
  %6650 = vmatpush1.msra.mxu0 %v6133
  %6651 = vmatprep.subr.mxu0 0.0
  %6652 = vmatpush1.msra.mxu0 %v6134
  %6653 = vmatprep.subr.mxu0 0.0
  %6654 = vmatpush1.msra.mxu0 %v6135
  %6655 = vmatprep.subr.mxu0 0.0
  %6656 = vmatpush1.msra.mxu0 %v6136
  %6657 = vmatprep.subr.mxu0 0.0
  %6658 = vmatpush1.msra.mxu0 %v6137
  %6659 = vmatprep.subr.mxu0 0.0
  %6660 = vmatpush1.msra.mxu0 %v6138
  %6661 = vmatprep.subr.mxu0 0.0
  %6662 = vmatpush1.msra.mxu0 %v6139
  %6663 = vmatprep.subr.mxu0 0.0
  %6664 = vmatpush1.msra.mxu0 %v6140
  %6665 = vmatprep.subr.mxu0 0.0
  %6666 = vmatpush1.msra.mxu0 %v6141
  %6667 = vmatprep.subr.mxu0 0.0
  %6668 = vmatpush1.msra.mxu0 %v6142
  %6669 = vmatprep.subr.mxu0 0.0
  %6670 = vmatpush1.msra.mxu0 %v6143
  %6671 = vmatprep.subr.mxu0 0.0
  %6672 = vmatpush1.msra.mxu0 %v6144
  %6673 = vmatprep.subr.mxu0 0.0
  %6674 = vmatpush1.msra.mxu0 %v6145
  %6675 = vmatprep.subr.mxu0 0.0
  %6676 = vmatpush1.msra.mxu0 %v6146
  %6677 = vmatprep.subr.mxu0 0.0
  %6678 = vmatpush1.msra.mxu0 %v6147
  %6679 = vmatprep.subr.mxu0 0.0
  %6680 = vmatpush1.msra.mxu0 %v6148
  %6681 = vmatprep.subr.mxu0 0.0
  %6682 = vmatpush1.msra.mxu0 %v6149
  %6683 = vmatprep.subr.mxu0 0.0
  %6684 = vmatpush1.msra.mxu0 %v6150
  %6685 = vmatprep.mubr.f32.mxu0 %v6254
  %6686 = vmatmul.mubr.f32.gmra.mrb[0].mxu0 %v6253
  %v6687 = vpop.f32.mrb[0].mxu0
  %v6688 = vadd.f32 %v6543, %v6687
  %v6689 = vpop.f32.mrb[0].mxu0
  %6690 = vmatprep.mubr.f32.mxu0 %v6265
  %6691 = vmatmul.mubr.f32.gmra.mrb[0].mxu0 %v6264
  %v6692 = vpop.f32.mrb[0].mxu0
  %v6693 = vadd.f32 %v6548, %v6692
  %v6694 = vpop.f32.mrb[0].mxu0
  %6695 = vmatprep.mubr.f32.mxu0 %v6276
  %6696 = vmatmul.mubr.f32.gmra.mrb[0].mxu0 %v6275
  %v6697 = vpop.f32.mrb[0].mxu0
  %v6698 = vadd.f32 %v6553, %v6697
  %v6699 = vpop.f32.mrb[0].mxu0
  %6700 = vmatprep.mubr.f32.mxu0 %v6287
  %6701 = vmatmul.mubr.f32.gmra.mrb[0].mxu0 %v6286
  %v6702 = vpop.f32.mrb[0].mxu0
  %v6703 = vadd.f32 %v6558, %v6702
  %v6704 = vpop.f32.mrb[0].mxu0
  %6705 = vmatprep.mubr.f32.mxu0 %v6298
  %6706 = vmatmul.mubr.f32.gmra.mrb[0].mxu0 %v6297
  %v6707 = vpop.f32.mrb[0].mxu0
  %v6708 = vadd.f32 %v6563, %v6707
  %v6709 = vpop.f32.mrb[0].mxu0
  %6710 = vmatprep.mubr.f32.mxu0 %v6309
  %6711 = vmatmul.mubr.f32.gmra.mrb[0].mxu0 %v6308
  %v6712 = vpop.f32.mrb[0].mxu0
  %v6713 = vadd.f32 %v6568, %v6712
  %v6714 = vpop.f32.mrb[0].mxu0
  %6715 = vmatprep.mubr.f32.mxu0 %v6320
  %6716 = vmatmul.mubr.f32.gmra.mrb[0].mxu0 %v6319
  %v6717 = vpop.f32.mrb[0].mxu0
  %v6718 = vadd.f32 %v6573, %v6717
  %v6719 = vpop.f32.mrb[0].mxu0
  %6720 = vmatprep.mubr.f32.mxu0 %v6331
  %6721 = vmatmul.mubr.f32.gmra.mrb[0].mxu0 %v6330
  %v6722 = vpop.f32.mrb[0].mxu0
  %v6723 = vadd.f32 %v6578, %v6722
  %v6724 = vpop.f32.mrb[0].mxu0
  %6725 = vmatprep.mubr.f32.mxu0 %v6342
  %6726 = vmatmul.mubr.f32.gmra.mrb[0].mxu0 %v6341
  %v6727 = vpop.f32.mrb[0].mxu0
  %v6728 = vadd.f32 %v6583, %v6727
  %v6729 = vpop.f32.mrb[0].mxu0
  %6730 = vmatprep.mubr.f32.mxu0 %v6353
  %6731 = vmatmul.mubr.f32.gmra.mrb[0].mxu0 %v6352
  %v6732 = vpop.f32.mrb[0].mxu0
  %v6733 = vadd.f32 %v6588, %v6732
  %v6734 = vpop.f32.mrb[0].mxu0
  %6735 = vmatprep.mubr.f32.mxu0 %v6364
  %6736 = vmatmul.mubr.f32.gmra.mrb[0].mxu0 %v6363
  %v6737 = vpop.f32.mrb[0].mxu0
  %v6738 = vadd.f32 %v6593, %v6737
  %v6739 = vpop.f32.mrb[0].mxu0
  %6740 = vmatprep.mubr.f32.mxu0 %v6375
  %6741 = vmatmul.mubr.f32.gmra.mrb[0].mxu0 %v6374
  %v6742 = vpop.f32.mrb[0].mxu0
  %v6743 = vadd.f32 %v6598, %v6742
  %v6744 = vpop.f32.mrb[0].mxu0
  %6745 = vmatprep.mubr.f32.mxu0 %v6386
  %6746 = vmatmul.mubr.f32.gmra.mrb[0].mxu0 %v6385
  %v6747 = vpop.f32.mrb[0].mxu0
  %v6748 = vadd.f32 %v6603, %v6747
  %v6749 = vpop.f32.mrb[0].mxu0
  %6750 = vmatprep.mubr.f32.mxu0 %v6397
  %6751 = vmatmul.mubr.f32.gmra.mrb[0].mxu0 %v6396
  %v6752 = vpop.f32.mrb[0].mxu0
  %v6753 = vadd.f32 %v6608, %v6752
  %v6754 = vpop.f32.mrb[0].mxu0
  %6755 = vmatprep.mubr.f32.mxu0 %v6408
  %6756 = vmatmul.mubr.f32.gmra.mrb[0].mxu0 %v6407
  %v6757 = vpop.f32.mrb[0].mxu0
  %v6758 = vadd.f32 %v6613, %v6757
  %v6759 = vpop.f32.mrb[0].mxu0
  %6760 = vmatprep.mubr.f32.mxu0 %v6419
  %6761 = vmatmul.mubr.f32.gmra.mrb[0].mxu0 %v6418
  %v6762 = vpop.f32.mrb[0].mxu0
  %v6763 = vadd.f32 %v6618, %v6762
  %v6764 = vpop.f32.mrb[0].mxu0
  %6765 = vdwg.mxu0
  %6766 = vmatprep.subr.mxu0 0.0
  %6767 = vmatpush1.msra.mxu0 %v6151
  %6768 = vmatprep.subr.mxu0 0.0
  %6769 = vmatpush1.msra.mxu0 %v6152
  %6770 = vmatprep.subr.mxu0 0.0
  %6771 = vmatpush1.msra.mxu0 %v6153
  %6772 = vmatprep.subr.mxu0 0.0
  %6773 = vmatpush1.msra.mxu0 %v6154
  %6774 = vmatprep.subr.mxu0 0.0
  %6775 = vmatpush1.msra.mxu0 %v6155
  %6776 = vmatprep.subr.mxu0 0.0
  %6777 = vmatpush1.msra.mxu0 %v6156
  %6778 = vmatprep.subr.mxu0 0.0
  %6779 = vmatpush1.msra.mxu0 %v6157
  %6780 = vmatprep.subr.mxu0 0.0
  %6781 = vmatpush1.msra.mxu0 %v6158
  %6782 = vmatprep.subr.mxu0 0.0
  %6783 = vmatpush1.msra.mxu0 %v6159
  %6784 = vmatprep.subr.mxu0 0.0
  %6785 = vmatpush1.msra.mxu0 %v6160
  %6786 = vmatprep.subr.mxu0 0.0
  %6787 = vmatpush1.msra.mxu0 %v6161
  %6788 = vmatprep.subr.mxu0 0.0
  %6789 = vmatpush1.msra.mxu0 %v6162
  %6790 = vmatprep.subr.mxu0 0.0
  %6791 = vmatpush1.msra.mxu0 %v6163
  %6792 = vmatprep.subr.mxu0 0.0
  %6793 = vmatpush1.msra.mxu0 %v6164
  %6794 = vmatprep.subr.mxu0 0.0
  %6795 = vmatpush1.msra.mxu0 %v6165
  %6796 = vmatprep.subr.mxu0 0.0
  %6797 = vmatpush1.msra.mxu0 %v6166
  %6798 = vmatprep.subr.mxu0 0.0
  %6799 = vmatpush1.msra.mxu0 %v6167
  %6800 = vmatprep.subr.mxu0 0.0
  %6801 = vmatpush1.msra.mxu0 %v6168
  %6802 = vmatprep.subr.mxu0 0.0
  %6803 = vmatpush1.msra.mxu0 %v6169
  %6804 = vmatprep.subr.mxu0 0.0
  %6805 = vmatpush1.msra.mxu0 %v6170
  %6806 = vmatprep.subr.mxu0 0.0
  %6807 = vmatpush1.msra.mxu0 %v6171
  %6808 = vmatprep.subr.mxu0 0.0
  %6809 = vmatpush1.msra.mxu0 %v6172
  %6810 = vmatprep.subr.mxu0 0.0
  %6811 = vmatpush1.msra.mxu0 %v6173
  %6812 = vmatprep.subr.mxu0 0.0
  %6813 = vmatpush1.msra.mxu0 %v6174
  %6814 = vmatprep.subr.mxu0 0.0
  %6815 = vmatpush1.msra.mxu0 %v6175
  %6816 = vmatprep.subr.mxu0 0.0
  %6817 = vmatpush1.msra.mxu0 %v6176
  %6818 = vmatprep.subr.mxu0 0.0
  %6819 = vmatpush1.msra.mxu0 %v6177
  %6820 = vmatprep.subr.mxu0 0.0
  %6821 = vmatpush1.msra.mxu0 %v6178
  %6822 = vmatprep.subr.mxu0 0.0
  %6823 = vmatpush1.msra.mxu0 %v6179
  %6824 = vmatprep.subr.mxu0 0.0
  %6825 = vmatpush1.msra.mxu0 %v6180
  %6826 = vmatprep.subr.mxu0 0.0
  %6827 = vmatpush1.msra.mxu0 %v6181
  %6828 = vmatprep.subr.mxu0 0.0
  %6829 = vmatpush1.msra.mxu0 %v6182
  %6830 = vmatprep.mubr.f32.mxu0 %v6256
  %6831 = vmatmul.mubr.f32.gmra.mrb[0].mxu0 %v6255
  %v6832 = vpop.f32.mrb[0].mxu0
  %v6833 = vadd.f32 %v6688, %v6832
  %v6834 = vpop.f32.mrb[0].mxu0
  %6835 = vmatprep.mubr.f32.mxu0 %v6267
  %6836 = vmatmul.mubr.f32.gmra.mrb[0].mxu0 %v6266
  %v6837 = vpop.f32.mrb[0].mxu0
  %v6838 = vadd.f32 %v6693, %v6837
  %v6839 = vpop.f32.mrb[0].mxu0
  %6840 = vmatprep.mubr.f32.mxu0 %v6278
  %6841 = vmatmul.mubr.f32.gmra.mrb[0].mxu0 %v6277
  %v6842 = vpop.f32.mrb[0].mxu0
  %v6843 = vadd.f32 %v6698, %v6842
  %v6844 = vpop.f32.mrb[0].mxu0
  %6845 = vmatprep.mubr.f32.mxu0 %v6289
  %6846 = vmatmul.mubr.f32.gmra.mrb[0].mxu0 %v6288
  %v6847 = vpop.f32.mrb[0].mxu0
  %v6848 = vadd.f32 %v6703, %v6847
  %v6849 = vpop.f32.mrb[0].mxu0
  %6850 = vmatprep.mubr.f32.mxu0 %v6300
  %6851 = vmatmul.mubr.f32.gmra.mrb[0].mxu0 %v6299
  %v6852 = vpop.f32.mrb[0].mxu0
  %v6853 = vadd.f32 %v6708, %v6852
  %v6854 = vpop.f32.mrb[0].mxu0
  %6855 = vmatprep.mubr.f32.mxu0 %v6311
  %6856 = vmatmul.mubr.f32.gmra.mrb[0].mxu0 %v6310
  %v6857 = vpop.f32.mrb[0].mxu0
  %v6858 = vadd.f32 %v6713, %v6857
  %v6859 = vpop.f32.mrb[0].mxu0
  %6860 = vmatprep.mubr.f32.mxu0 %v6322
  %6861 = vmatmul.mubr.f32.gmra.mrb[0].mxu0 %v6321
  %v6862 = vpop.f32.mrb[0].mxu0
  %v6863 = vadd.f32 %v6718, %v6862
  %v6864 = vpop.f32.mrb[0].mxu0
  %6865 = vmatprep.mubr.f32.mxu0 %v6333
  %6866 = vmatmul.mubr.f32.gmra.mrb[0].mxu0 %v6332
  %v6867 = vpop.f32.mrb[0].mxu0
  %v6868 = vadd.f32 %v6723, %v6867
  %v6869 = vpop.f32.mrb[0].mxu0
  %6870 = vmatprep.mubr.f32.mxu0 %v6344
  %6871 = vmatmul.mubr.f32.gmra.mrb[0].mxu0 %v6343
  %v6872 = vpop.f32.mrb[0].mxu0
  %v6873 = vadd.f32 %v6728, %v6872
  %v6874 = vpop.f32.mrb[0].mxu0
  %6875 = vmatprep.mubr.f32.mxu0 %v6355
  %6876 = vmatmul.mubr.f32.gmra.mrb[0].mxu0 %v6354
  %v6877 = vpop.f32.mrb[0].mxu0
  %v6878 = vadd.f32 %v6733, %v6877
  %v6879 = vpop.f32.mrb[0].mxu0
  %6880 = vmatprep.mubr.f32.mxu0 %v6366
  %6881 = vmatmul.mubr.f32.gmra.mrb[0].mxu0 %v6365
  %v6882 = vpop.f32.mrb[0].mxu0
  %v6883 = vadd.f32 %v6738, %v6882
  %v6884 = vpop.f32.mrb[0].mxu0
  %6885 = vmatprep.mubr.f32.mxu0 %v6377
  %6886 = vmatmul.mubr.f32.gmra.mrb[0].mxu0 %v6376
  %v6887 = vpop.f32.mrb[0].mxu0
  %v6888 = vadd.f32 %v6743, %v6887
  %v6889 = vpop.f32.mrb[0].mxu0
  %6890 = vmatprep.mubr.f32.mxu0 %v6388
  %6891 = vmatmul.mubr.f32.gmra.mrb[0].mxu0 %v6387
  %v6892 = vpop.f32.mrb[0].mxu0
  %v6893 = vadd.f32 %v6748, %v6892
  %v6894 = vpop.f32.mrb[0].mxu0
  %6895 = vmatprep.mubr.f32.mxu0 %v6399
  %6896 = vmatmul.mubr.f32.gmra.mrb[0].mxu0 %v6398
  %v6897 = vpop.f32.mrb[0].mxu0
  %v6898 = vadd.f32 %v6753, %v6897
  %v6899 = vpop.f32.mrb[0].mxu0
  %6900 = vmatprep.mubr.f32.mxu0 %v6410
  %6901 = vmatmul.mubr.f32.gmra.mrb[0].mxu0 %v6409
  %v6902 = vpop.f32.mrb[0].mxu0
  %v6903 = vadd.f32 %v6758, %v6902
  %v6904 = vpop.f32.mrb[0].mxu0
  %6905 = vmatprep.mubr.f32.mxu0 %v6421
  %6906 = vmatmul.mubr.f32.gmra.mrb[0].mxu0 %v6420
  %v6907 = vpop.f32.mrb[0].mxu0
  %v6908 = vadd.f32 %v6763, %v6907
  %v6909 = vpop.f32.mrb[0].mxu0
  %6910 = vdwg.mxu0
  %6911 = vmatprep.subr.mxu0 0.0
  %6912 = vmatpush1.msra.mxu0 %v6183
  %6913 = vmatprep.subr.mxu0 0.0
  %6914 = vmatpush1.msra.mxu0 %v6184
  %6915 = vmatprep.subr.mxu0 0.0
  %6916 = vmatpush1.msra.mxu0 %v6185
  %6917 = vmatprep.subr.mxu0 0.0
  %6918 = vmatpush1.msra.mxu0 %v6186
  %6919 = vmatprep.subr.mxu0 0.0
  %6920 = vmatpush1.msra.mxu0 %v6187
  %6921 = vmatprep.subr.mxu0 0.0
  %6922 = vmatpush1.msra.mxu0 %v6188
  %6923 = vmatprep.subr.mxu0 0.0
  %6924 = vmatpush1.msra.mxu0 %v6189
  %6925 = vmatprep.subr.mxu0 0.0
  %6926 = vmatpush1.msra.mxu0 %v6190
  %6927 = vmatprep.subr.mxu0 0.0
  %6928 = vmatpush1.msra.mxu0 %v6191
  %6929 = vmatprep.subr.mxu0 0.0
  %6930 = vmatpush1.msra.mxu0 %v6192
  %6931 = vmatprep.subr.mxu0 0.0
  %6932 = vmatpush1.msra.mxu0 %v6193
  %6933 = vmatprep.subr.mxu0 0.0
  %6934 = vmatpush1.msra.mxu0 %v6194
  %6935 = vmatprep.subr.mxu0 0.0
  %6936 = vmatpush1.msra.mxu0 %v6195
  %6937 = vmatprep.subr.mxu0 0.0
  %6938 = vmatpush1.msra.mxu0 %v6196
  %6939 = vmatprep.subr.mxu0 0.0
  %6940 = vmatpush1.msra.mxu0 %v6197
  %6941 = vmatprep.subr.mxu0 0.0
  %6942 = vmatpush1.msra.mxu0 %v6198
  %6943 = vmatprep.subr.mxu0 0.0
  %6944 = vmatpush1.msra.mxu0 %v6199
  %6945 = vmatprep.subr.mxu0 0.0
  %6946 = vmatpush1.msra.mxu0 %v6200
  %6947 = vmatprep.subr.mxu0 0.0
  %6948 = vmatpush1.msra.mxu0 %v6201
  %6949 = vmatprep.subr.mxu0 0.0
  %6950 = vmatpush1.msra.mxu0 %v6202
  %6951 = vmatprep.subr.mxu0 0.0
  %6952 = vmatpush1.msra.mxu0 %v6203
  %6953 = vmatprep.subr.mxu0 0.0
  %6954 = vmatpush1.msra.mxu0 %v6204
  %6955 = vmatprep.subr.mxu0 0.0
  %6956 = vmatpush1.msra.mxu0 %v6205
  %6957 = vmatprep.subr.mxu0 0.0
  %6958 = vmatpush1.msra.mxu0 %v6206
  %6959 = vmatprep.subr.mxu0 0.0
  %6960 = vmatpush1.msra.mxu0 %v6207
  %6961 = vmatprep.subr.mxu0 0.0
  %6962 = vmatpush1.msra.mxu0 %v6208
  %6963 = vmatprep.subr.mxu0 0.0
  %6964 = vmatpush1.msra.mxu0 %v6209
  %6965 = vmatprep.subr.mxu0 0.0
  %6966 = vmatpush1.msra.mxu0 %v6210
  %6967 = vmatprep.subr.mxu0 0.0
  %6968 = vmatpush1.msra.mxu0 %v6211
  %6969 = vmatprep.subr.mxu0 0.0
  %6970 = vmatpush1.msra.mxu0 %v6212
  %6971 = vmatprep.subr.mxu0 0.0
  %6972 = vmatpush1.msra.mxu0 %v6213
  %6973 = vmatprep.subr.mxu0 0.0
  %6974 = vmatpush1.msra.mxu0 %v6214
  %6975 = vmatprep.mubr.f32.mxu0 %v6258
  %6976 = vmatmul.mubr.f32.gmra.mrb[0].mxu0 %v6257
  %v6977 = vpop.f32.mrb[0].mxu0
  %v6978 = vadd.f32 %v6833, %v6977
  %v6979 = vpop.f32.mrb[0].mxu0
  %6980 = vmatprep.mubr.f32.mxu0 %v6269
  %6981 = vmatmul.mubr.f32.gmra.mrb[0].mxu0 %v6268
  %v6982 = vpop.f32.mrb[0].mxu0
  %v6983 = vadd.f32 %v6838, %v6982
  %v6984 = vpop.f32.mrb[0].mxu0
  %6985 = vmatprep.mubr.f32.mxu0 %v6280
  %6986 = vmatmul.mubr.f32.gmra.mrb[0].mxu0 %v6279
  %v6987 = vpop.f32.mrb[0].mxu0
  %v6988 = vadd.f32 %v6843, %v6987
  %v6989 = vpop.f32.mrb[0].mxu0
  %6990 = vmatprep.mubr.f32.mxu0 %v6291
  %6991 = vmatmul.mubr.f32.gmra.mrb[0].mxu0 %v6290
  %v6992 = vpop.f32.mrb[0].mxu0
  %v6993 = vadd.f32 %v6848, %v6992
  %v6994 = vpop.f32.mrb[0].mxu0
  %6995 = vmatprep.mubr.f32.mxu0 %v6302
  %6996 = vmatmul.mubr.f32.gmra.mrb[0].mxu0 %v6301
  %v6997 = vpop.f32.mrb[0].mxu0
  %v6998 = vadd.f32 %v6853, %v6997
  %v6999 = vpop.f32.mrb[0].mxu0
  %7000 = vmatprep.mubr.f32.mxu0 %v6313
  %7001 = vmatmul.mubr.f32.gmra.mrb[0].mxu0 %v6312
  %v7002 = vpop.f32.mrb[0].mxu0
  %v7003 = vadd.f32 %v6858, %v7002
  %v7004 = vpop.f32.mrb[0].mxu0
  %7005 = vmatprep.mubr.f32.mxu0 %v6324
  %7006 = vmatmul.mubr.f32.gmra.mrb[0].mxu0 %v6323
  %v7007 = vpop.f32.mrb[0].mxu0
  %v7008 = vadd.f32 %v6863, %v7007
  %v7009 = vpop.f32.mrb[0].mxu0
  %7010 = vmatprep.mubr.f32.mxu0 %v6335
  %7011 = vmatmul.mubr.f32.gmra.mrb[0].mxu0 %v6334
  %v7012 = vpop.f32.mrb[0].mxu0
  %v7013 = vadd.f32 %v6868, %v7012
  %v7014 = vpop.f32.mrb[0].mxu0
  %7015 = vmatprep.mubr.f32.mxu0 %v6346
  %7016 = vmatmul.mubr.f32.gmra.mrb[0].mxu0 %v6345
  %v7017 = vpop.f32.mrb[0].mxu0
  %v7018 = vadd.f32 %v6873, %v7017
  %v7019 = vpop.f32.mrb[0].mxu0
  %7020 = vmatprep.mubr.f32.mxu0 %v6357
  %7021 = vmatmul.mubr.f32.gmra.mrb[0].mxu0 %v6356
  %v7022 = vpop.f32.mrb[0].mxu0
  %v7023 = vadd.f32 %v6878, %v7022
  %v7024 = vpop.f32.mrb[0].mxu0
  %7025 = vmatprep.mubr.f32.mxu0 %v6368
  %7026 = vmatmul.mubr.f32.gmra.mrb[0].mxu0 %v6367
  %v7027 = vpop.f32.mrb[0].mxu0
  %v7028 = vadd.f32 %v6883, %v7027
  %v7029 = vpop.f32.mrb[0].mxu0
  %7030 = vmatprep.mubr.f32.mxu0 %v6379
  %7031 = vmatmul.mubr.f32.gmra.mrb[0].mxu0 %v6378
  %v7032 = vpop.f32.mrb[0].mxu0
  %v7033 = vadd.f32 %v6888, %v7032
  %v7034 = vpop.f32.mrb[0].mxu0
  %7035 = vmatprep.mubr.f32.mxu0 %v6390
  %7036 = vmatmul.mubr.f32.gmra.mrb[0].mxu0 %v6389
  %v7037 = vpop.f32.mrb[0].mxu0
  %v7038 = vadd.f32 %v6893, %v7037
  %v7039 = vpop.f32.mrb[0].mxu0
  %7040 = vmatprep.mubr.f32.mxu0 %v6401
  %7041 = vmatmul.mubr.f32.gmra.mrb[0].mxu0 %v6400
  %v7042 = vpop.f32.mrb[0].mxu0
  %v7043 = vadd.f32 %v6898, %v7042
  %v7044 = vpop.f32.mrb[0].mxu0
  %7045 = vmatprep.mubr.f32.mxu0 %v6412
  %7046 = vmatmul.mubr.f32.gmra.mrb[0].mxu0 %v6411
  %v7047 = vpop.f32.mrb[0].mxu0
  %v7048 = vadd.f32 %v6903, %v7047
  %v7049 = vpop.f32.mrb[0].mxu0
  %7050 = vmatprep.mubr.f32.mxu0 %v6423
  %7051 = vmatmul.mubr.f32.gmra.mrb[0].mxu0 %v6422
  %v7052 = vpop.f32.mrb[0].mxu0
  %v7053 = vadd.f32 %v6908, %v7052
  %v7054 = vpop.f32.mrb[0].mxu0
  %7055 = vdwg.mxu0
  %7056 = vmatprep.subr.mxu0 0.0
  %7057 = vmatpush1.msra.mxu0 %v6215
  %7058 = vmatprep.subr.mxu0 0.0
  %7059 = vmatpush1.msra.mxu0 %v6216
  %7060 = vmatprep.subr.mxu0 0.0
  %7061 = vmatpush1.msra.mxu0 %v6217
  %7062 = vmatprep.subr.mxu0 0.0
  %7063 = vmatpush1.msra.mxu0 %v6218
  %7064 = vmatprep.subr.mxu0 0.0
  %7065 = vmatpush1.msra.mxu0 %v6219
  %7066 = vmatprep.subr.mxu0 0.0
  %7067 = vmatpush1.msra.mxu0 %v6220
  %7068 = vmatprep.subr.mxu0 0.0
  %7069 = vmatpush1.msra.mxu0 %v6221
  %7070 = vmatprep.subr.mxu0 0.0
  %7071 = vmatpush1.msra.mxu0 %v6222
  %7072 = vmatprep.subr.mxu0 0.0
  %7073 = vmatpush1.msra.mxu0 %v6223
  %7074 = vmatprep.subr.mxu0 0.0
  %7075 = vmatpush1.msra.mxu0 %v6224
  %7076 = vmatprep.subr.mxu0 0.0
  %7077 = vmatpush1.msra.mxu0 %v6225
  %7078 = vmatprep.subr.mxu0 0.0
  %7079 = vmatpush1.msra.mxu0 %v6226
  %7080 = vmatprep.subr.mxu0 0.0
  %7081 = vmatpush1.msra.mxu0 %v6227
  %7082 = vmatprep.subr.mxu0 0.0
  %7083 = vmatpush1.msra.mxu0 %v6228
  %7084 = vmatprep.subr.mxu0 0.0
  %7085 = vmatpush1.msra.mxu0 %v6229
  %7086 = vmatprep.subr.mxu0 0.0
  %7087 = vmatpush1.msra.mxu0 %v6230
  %7088 = vmatprep.subr.mxu0 0.0
  %7089 = vmatpush1.msra.mxu0 %v6231
  %7090 = vmatprep.subr.mxu0 0.0
  %7091 = vmatpush1.msra.mxu0 %v6232
  %7092 = vmatprep.subr.mxu0 0.0
  %7093 = vmatpush1.msra.mxu0 %v6233
  %7094 = vmatprep.subr.mxu0 0.0
  %7095 = vmatpush1.msra.mxu0 %v6234
  %7096 = vmatprep.subr.mxu0 0.0
  %7097 = vmatpush1.msra.mxu0 %v6235
  %7098 = vmatprep.subr.mxu0 0.0
  %7099 = vmatpush1.msra.mxu0 %v6236
  %7100 = vmatprep.subr.mxu0 0.0
  %7101 = vmatpush1.msra.mxu0 %v6237
  %7102 = vmatprep.subr.mxu0 0.0
  %7103 = vmatpush1.msra.mxu0 %v6238
  %7104 = vmatprep.subr.mxu0 0.0
  %7105 = vmatpush1.msra.mxu0 %v6239
  %7106 = vmatprep.subr.mxu0 0.0
  %7107 = vmatpush1.msra.mxu0 %v6240
  %7108 = vmatprep.subr.mxu0 0.0
  %7109 = vmatpush1.msra.mxu0 %v6241
  %7110 = vmatprep.subr.mxu0 0.0
  %7111 = vmatpush1.msra.mxu0 %v6242
  %7112 = vmatprep.subr.mxu0 0.0
  %7113 = vmatpush1.msra.mxu0 %v6243
  %7114 = vmatprep.subr.mxu0 0.0
  %7115 = vmatpush1.msra.mxu0 %v6244
  %7116 = vmatprep.subr.mxu0 0.0
  %7117 = vmatpush1.msra.mxu0 %v6245
  %7118 = vmatprep.subr.mxu0 0.0
  %7119 = vmatpush1.msra.mxu0 %v6246
  %7120 = vmatprep.mubr.f32.mxu0 %v6260
  %7121 = vmatmul.mubr.f32.gmra.mrb[0].mxu0 %v6259
  %v7122 = vpop.f32.mrb[0].mxu0
  %v7123 = vadd.f32 %v6978, %v7122
  %v7124 = vpop.f32.mrb[0].mxu0
  %7125 = vmatprep.mubr.f32.mxu0 %v6271
  %7126 = vmatmul.mubr.f32.gmra.mrb[0].mxu0 %v6270
  %v7127 = vpop.f32.mrb[0].mxu0
  %v7128 = vadd.f32 %v6983, %v7127
  %v7129 = vpop.f32.mrb[0].mxu0
  %7130 = vmatprep.mubr.f32.mxu0 %v6282
  %7131 = vmatmul.mubr.f32.gmra.mrb[0].mxu0 %v6281
  %v7132 = vpop.f32.mrb[0].mxu0
  %v7133 = vadd.f32 %v6988, %v7132
  %v7134 = vpop.f32.mrb[0].mxu0
  %7135 = vmatprep.mubr.f32.mxu0 %v6293
  %7136 = vmatmul.mubr.f32.gmra.mrb[0].mxu0 %v6292
  %v7137 = vpop.f32.mrb[0].mxu0
  %v7138 = vadd.f32 %v6993, %v7137
  %v7139 = vpop.f32.mrb[0].mxu0
  %7140 = vmatprep.mubr.f32.mxu0 %v6304
  %7141 = vmatmul.mubr.f32.gmra.mrb[0].mxu0 %v6303
  %v7142 = vpop.f32.mrb[0].mxu0
  %v7143 = vadd.f32 %v6998, %v7142
  %v7144 = vpop.f32.mrb[0].mxu0
  %7145 = vmatprep.mubr.f32.mxu0 %v6315
  %7146 = vmatmul.mubr.f32.gmra.mrb[0].mxu0 %v6314
  %v7147 = vpop.f32.mrb[0].mxu0
  %v7148 = vadd.f32 %v7003, %v7147
  %v7149 = vpop.f32.mrb[0].mxu0
  %7150 = vmatprep.mubr.f32.mxu0 %v6326
  %7151 = vmatmul.mubr.f32.gmra.mrb[0].mxu0 %v6325
  %v7152 = vpop.f32.mrb[0].mxu0
  %v7153 = vadd.f32 %v7008, %v7152
  %v7154 = vpop.f32.mrb[0].mxu0
  %7155 = vmatprep.mubr.f32.mxu0 %v6337
  %7156 = vmatmul.mubr.f32.gmra.mrb[0].mxu0 %v6336
  %v7157 = vpop.f32.mrb[0].mxu0
  %v7158 = vadd.f32 %v7013, %v7157
  %v7159 = vpop.f32.mrb[0].mxu0
  %7160 = vmatprep.mubr.f32.mxu0 %v6348
  %7161 = vmatmul.mubr.f32.gmra.mrb[0].mxu0 %v6347
  %v7162 = vpop.f32.mrb[0].mxu0
  %v7163 = vadd.f32 %v7018, %v7162
  %v7164 = vpop.f32.mrb[0].mxu0
  %7165 = vmatprep.mubr.f32.mxu0 %v6359
  %7166 = vmatmul.mubr.f32.gmra.mrb[0].mxu0 %v6358
  %v7167 = vpop.f32.mrb[0].mxu0
  %v7168 = vadd.f32 %v7023, %v7167
  %v7169 = vpop.f32.mrb[0].mxu0
  %7170 = vmatprep.mubr.f32.mxu0 %v6370
  %7171 = vmatmul.mubr.f32.gmra.mrb[0].mxu0 %v6369
  %v7172 = vpop.f32.mrb[0].mxu0
  %v7173 = vadd.f32 %v7028, %v7172
  %v7174 = vpop.f32.mrb[0].mxu0
  %7175 = vmatprep.mubr.f32.mxu0 %v6381
  %7176 = vmatmul.mubr.f32.gmra.mrb[0].mxu0 %v6380
  %v7177 = vpop.f32.mrb[0].mxu0
  %v7178 = vadd.f32 %v7033, %v7177
  %v7179 = vpop.f32.mrb[0].mxu0
  %7180 = vmatprep.mubr.f32.mxu0 %v6392
  %7181 = vmatmul.mubr.f32.gmra.mrb[0].mxu0 %v6391
  %v7182 = vpop.f32.mrb[0].mxu0
  %v7183 = vadd.f32 %v7038, %v7182
  %v7184 = vpop.f32.mrb[0].mxu0
  %7185 = vmatprep.mubr.f32.mxu0 %v6403
  %7186 = vmatmul.mubr.f32.gmra.mrb[0].mxu0 %v6402
  %v7187 = vpop.f32.mrb[0].mxu0
  %v7188 = vadd.f32 %v7043, %v7187
  %v7189 = vpop.f32.mrb[0].mxu0
  %7190 = vmatprep.mubr.f32.mxu0 %v6414
  %7191 = vmatmul.mubr.f32.gmra.mrb[0].mxu0 %v6413
  %v7192 = vpop.f32.mrb[0].mxu0
  %v7193 = vadd.f32 %v7048, %v7192
  %v7194 = vpop.f32.mrb[0].mxu0
  %7195 = vmatprep.mubr.f32.mxu0 %v6425
  %7196 = vmatmul.mubr.f32.gmra.mrb[0].mxu0 %v6424
  %v7197 = vpop.f32.mrb[0].mxu0
  %v7198 = vadd.f32 %v7053, %v7197
  %v7199 = vpop.f32.mrb[0].mxu0
  %7200 = vdwg.mxu0
  %7201 = vmatprep.subr.mxu0 0.0
  %7202 = vmatpush1.msra.mxu0 %v6247
  %7203 = vmatprep.subr.mxu0 0.0
  %7204 = vmatpush1.msra.mxu0 %v6248
  %7205 = vmatprep.subr.mxu0 0.0
  %7206 = vmatpush1.msra.mxu0 %v6249
  %7207 = vmatprep.subr.mxu0 0.0
  %7208 = vmatpush1.msra.mxu0 %v6250
  %7209 = vmatprep.subr.mxu0 0.0
  %7210 = vmatpush1.msra.mxu0 0.0
  %7211 = vmatprep.subr.mxu0 0.0
  %7212 = vmatpush1.msra.mxu0 0.0
  %7213 = vmatprep.subr.mxu0 0.0
  %7214 = vmatpush1.msra.mxu0 0.0
  %7215 = vmatprep.subr.mxu0 0.0
  %7216 = vmatpush1.msra.mxu0 0.0
  %7217 = vmatprep.subr.mxu0 0.0
  %7218 = vmatpush1.msra.mxu0 0.0
  %7219 = vmatprep.subr.mxu0 0.0
  %7220 = vmatpush1.msra.mxu0 0.0
  %7221 = vmatprep.subr.mxu0 0.0
  %7222 = vmatpush1.msra.mxu0 0.0
  %7223 = vmatprep.subr.mxu0 0.0
  %7224 = vmatpush1.msra.mxu0 0.0
  %7225 = vmatprep.subr.mxu0 0.0
  %7226 = vmatpush1.msra.mxu0 0.0
  %7227 = vmatprep.subr.mxu0 0.0
  %7228 = vmatpush1.msra.mxu0 0.0
  %7229 = vmatprep.subr.mxu0 0.0
  %7230 = vmatpush1.msra.mxu0 0.0
  %7231 = vmatprep.subr.mxu0 0.0
  %7232 = vmatpush1.msra.mxu0 0.0
  %7233 = vmatprep.subr.mxu0 0.0
  %7234 = vmatpush1.msra.mxu0 0.0
  %7235 = vmatprep.subr.mxu0 0.0
  %7236 = vmatpush1.msra.mxu0 0.0
  %7237 = vmatprep.subr.mxu0 0.0
  %7238 = vmatpush1.msra.mxu0 0.0
  %7239 = vmatprep.subr.mxu0 0.0
  %7240 = vmatpush1.msra.mxu0 0.0
  %7241 = vmatprep.subr.mxu0 0.0
  %7242 = vmatpush1.msra.mxu0 0.0
  %7243 = vmatprep.subr.mxu0 0.0
  %7244 = vmatpush1.msra.mxu0 0.0
  %7245 = vmatprep.subr.mxu0 0.0
  %7246 = vmatpush1.msra.mxu0 0.0
  %7247 = vmatprep.subr.mxu0 0.0
  %7248 = vmatpush1.msra.mxu0 0.0
  %7249 = vmatprep.subr.mxu0 0.0
  %7250 = vmatpush1.msra.mxu0 0.0
  %7251 = vmatprep.subr.mxu0 0.0
  %7252 = vmatpush1.msra.mxu0 0.0
  %7253 = vmatprep.subr.mxu0 0.0
  %7254 = vmatpush1.msra.mxu0 0.0
  %7255 = vmatprep.subr.mxu0 0.0
  %7256 = vmatpush1.msra.mxu0 0.0
  %7257 = vmatprep.subr.mxu0 0.0
  %7258 = vmatpush1.msra.mxu0 0.0
  %7259 = vmatprep.subr.mxu0 0.0
  %7260 = vmatpush1.msra.mxu0 0.0
  %7261 = vmatprep.subr.mxu0 0.0
  %7262 = vmatpush1.msra.mxu0 0.0
  %7263 = vmatprep.subr.mxu0 0.0
  %7264 = vmatpush1.msra.mxu0 0.0
  %7265 = vmatprep.mubr.f32.mxu0 0.0
  %7266 = vmatmul.mubr.f32.gmra.mrb[0].mxu0 %v6429
  %v7267 = vpop.f32.mrb[0].mxu0
  %v7268 = vadd.f32 %v7123, %v7267
  %v7269 = vpop.f32.mrb[0].mxu0
  %7270 = vmatprep.mubr.f32.mxu0 0.0
  %7271 = vmatmul.mubr.f32.gmra.mrb[0].mxu0 %v6432
  %v7272 = vpop.f32.mrb[0].mxu0
  %v7273 = vadd.f32 %v7128, %v7272
  %v7274 = vpop.f32.mrb[0].mxu0
  %7275 = vmatprep.mubr.f32.mxu0 0.0
  %7276 = vmatmul.mubr.f32.gmra.mrb[0].mxu0 %v6435
  %v7277 = vpop.f32.mrb[0].mxu0
  %v7278 = vadd.f32 %v7133, %v7277
  %v7279 = vpop.f32.mrb[0].mxu0
  %7280 = vmatprep.mubr.f32.mxu0 0.0
  %7281 = vmatmul.mubr.f32.gmra.mrb[0].mxu0 %v6438
  %v7282 = vpop.f32.mrb[0].mxu0
  %v7283 = vadd.f32 %v7138, %v7282
  %v7284 = vpop.f32.mrb[0].mxu0
  %7285 = vmatprep.mubr.f32.mxu0 0.0
  %7286 = vmatmul.mubr.f32.gmra.mrb[0].mxu0 %v6441
  %v7287 = vpop.f32.mrb[0].mxu0
  %v7288 = vadd.f32 %v7143, %v7287
  %v7289 = vpop.f32.mrb[0].mxu0
  %7290 = vmatprep.mubr.f32.mxu0 0.0
  %7291 = vmatmul.mubr.f32.gmra.mrb[0].mxu0 %v6444
  %v7292 = vpop.f32.mrb[0].mxu0
  %v7293 = vadd.f32 %v7148, %v7292
  %v7294 = vpop.f32.mrb[0].mxu0
  %7295 = vmatprep.mubr.f32.mxu0 0.0
  %7296 = vmatmul.mubr.f32.gmra.mrb[0].mxu0 %v6447
  %v7297 = vpop.f32.mrb[0].mxu0
  %v7298 = vadd.f32 %v7153, %v7297
  %v7299 = vpop.f32.mrb[0].mxu0
  %7300 = vmatprep.mubr.f32.mxu0 0.0
  %7301 = vmatmul.mubr.f32.gmra.mrb[0].mxu0 %v6450
  %v7302 = vpop.f32.mrb[0].mxu0
  %v7303 = vadd.f32 %v7158, %v7302
  %v7304 = vpop.f32.mrb[0].mxu0
  %7305 = vmatprep.mubr.f32.mxu0 0.0
  %7306 = vmatmul.mubr.f32.gmra.mrb[0].mxu0 %v6453
  %v7307 = vpop.f32.mrb[0].mxu0
  %v7308 = vadd.f32 %v7163, %v7307
  %v7309 = vpop.f32.mrb[0].mxu0
  %7310 = vmatprep.mubr.f32.mxu0 0.0
  %7311 = vmatmul.mubr.f32.gmra.mrb[0].mxu0 %v6456
  %v7312 = vpop.f32.mrb[0].mxu0
  %v7313 = vadd.f32 %v7168, %v7312
  %v7314 = vpop.f32.mrb[0].mxu0
  %7315 = vmatprep.mubr.f32.mxu0 0.0
  %7316 = vmatmul.mubr.f32.gmra.mrb[0].mxu0 %v6459
  %v7317 = vpop.f32.mrb[0].mxu0
  %v7318 = vadd.f32 %v7173, %v7317
  %v7319 = vpop.f32.mrb[0].mxu0
  %7320 = vmatprep.mubr.f32.mxu0 0.0
  %7321 = vmatmul.mubr.f32.gmra.mrb[0].mxu0 %v6462
  %v7322 = vpop.f32.mrb[0].mxu0
  %v7323 = vadd.f32 %v7178, %v7322
  %v7324 = vpop.f32.mrb[0].mxu0
  %7325 = vmatprep.mubr.f32.mxu0 0.0
  %7326 = vmatmul.mubr.f32.gmra.mrb[0].mxu0 %v6465
  %v7327 = vpop.f32.mrb[0].mxu0
  %v7328 = vadd.f32 %v7183, %v7327
  %v7329 = vpop.f32.mrb[0].mxu0
  %7330 = vmatprep.mubr.f32.mxu0 0.0
  %7331 = vmatmul.mubr.f32.gmra.mrb[0].mxu0 %v6468
  %v7332 = vpop.f32.mrb[0].mxu0
  %v7333 = vadd.f32 %v7188, %v7332
  %v7334 = vpop.f32.mrb[0].mxu0
  %7335 = vmatprep.mubr.f32.mxu0 0.0
  %7336 = vmatmul.mubr.f32.gmra.mrb[0].mxu0 %v6471
  %v7337 = vpop.f32.mrb[0].mxu0
  %v7338 = vadd.f32 %v7193, %v7337
  %v7339 = vpop.f32.mrb[0].mxu0
  %7340 = vmatprep.mubr.f32.mxu0 0.0
  %7341 = vmatmul.mubr.f32.gmra.mrb[0].mxu0 %v6474
  %v7342 = vpop.f32.mrb[0].mxu0
  %v7343 = vadd.f32 %v7198, %v7342
  %v7344 = vpop.f32.mrb[0].mxu0
  %7345 = vdwg.mxu0
  %7346 = vst.msk [vmem:[%s4] sm:$0xff] %vm58, %v7268
  %7347 = vst.msk [vmem:[%s4 + $0x8] sm:$0xff] %vm58, %v7273
  %7348 = vst.msk [vmem:[%s4 + $0x10] sm:$0xff] %vm58, %v7278
  %7349 = vst.msk [vmem:[%s4 + $0x18] sm:$0xff] %vm58, %v7283
  %7350 = vst.msk [vmem:[%s4 + $0x20] sm:$0xff] %vm58, %v7288
  %7351 = vst.msk [vmem:[%s4 + $0x28] sm:$0xff] %vm58, %v7293
  %7352 = vst.msk [vmem:[%s4 + $0x30] sm:$0xff] %vm58, %v7298
  %7353 = vst.msk [vmem:[%s4 + $0x38] sm:$0xff] %vm58, %v7303
  %7354 = vst.msk [vmem:[%s4 + $0x40] sm:$0xff] %vm58, %v7308
  %7355 = vst.msk [vmem:[%s4 + $0x48] sm:$0xff] %vm58, %v7313
  %7356 = vst.msk [vmem:[%s4 + $0x50] sm:$0xff] %vm58, %v7318
  %7357 = vst.msk [vmem:[%s4 + $0x58] sm:$0xff] %vm58, %v7323
  %7358 = vst.msk [vmem:[%s4 + $0x60] sm:$0xff] %vm58, %v7328
  %7359 = vst.msk [vmem:[%s4 + $0x68] sm:$0xff] %vm58, %v7333
  %7360 = vst.msk [vmem:[%s4 + $0x70] sm:$0xff] %vm58, %v7338
  %7361 = vst.msk [vmem:[%s4 + $0x78] sm:$0xff] %vm58, %v7343
  // Predicated region
  $region18: #{tpu_custom_call.1} parent=0 // pred_check
    _
  $region19: #{tpu_custom_call.1} parent=0 // pred_check_branch
    %7363 = sbr.rel (0) target = $region21
  $region20: #{tpu_custom_call.1} parent=0 // pred_region
    _
  $region21: #{tpu_custom_call.1} parent=0 // pred_fallthru
    _
  // Predicated region
  $region22: #{tpu_custom_call.1} parent=0 // pred_check
    _
  $region23: #{tpu_custom_call.1} parent=0 // pred_check_branch
    %7365 = sbr.rel (0) target = $region25
  $region24: #{tpu_custom_call.1} parent=0 // pred_region
    _
  $region25: #{tpu_custom_call.1} parent=0 // pred_fallthru
    _

</llo_original>
